<compile_context>
chip_gen: v5e
topology: v5e:2x2
jax: 0.10.0
libtpu: 0.0.40
codegen_flags: <defaults>
</compile_context>

<pallas_src>
import jax
import jax.numpy as jnp
from jax.experimental import pallas as pl
from jax.experimental.pallas import tpu as pltpu

SRC_VOCAB = 20
TRG_VOCAB = 24
EMB_DIM = 16
ENC_HID = 32
DEC_HID = 32
SRC_PAD_IDX = 0
V_PAD = 128          # fc_out logits padded to a full 128-lane vreg (lane-dense stores)

WEIGHT_KEYS = (
    'enc_emb', 'dec_emb',
    'enc_wih_f', 'enc_whh_f', 'enc_bih_f', 'enc_bhh_f',
    'enc_wih_b', 'enc_whh_b', 'enc_bih_b', 'enc_bhh_b',
    'enc_fc_w_f', 'enc_fc_w_b', 'enc_fc_b',
    'attn_wh', 'attn_we_f', 'attn_we_b', 'attn_b', 'attn_v',
    'dec_w_e', 'dec_w_cf', 'dec_w_cb', 'dec_whh', 'dec_bih', 'dec_bhh',
    'fcw_h', 'fcw_cf', 'fcw_cb', 'fcw_e', 'fcb',
)


# ------------------------------ fused Pallas kernel --------------------------

def seq2seq_kernel(tf_ref, src_tb_ref, src_bt_ref, len_ref, trg_ref,
                   enc_emb_ref, dec_emb_ref,
                   e_wih_f_ref, e_whh_f_ref, e_bih_f_ref, e_bhh_f_ref,
                   e_wih_b_ref, e_whh_b_ref, e_bih_b_ref, e_bhh_b_ref,
                   e_fcw_f_ref, e_fcw_b_ref, e_fcb_ref,
                   a_wh_ref, a_we_f_ref, a_we_b_ref, a_b_ref, a_v_ref,
                   d_we_ref, d_wcf_ref, d_wcb_ref, d_whh_ref, d_bih_ref, d_bhh_ref,
                   f_wh_ref, f_wcf_ref, f_wcb_ref, f_we_ref, f_b_ref,
                   out_ref, enc_f_scr, enc_b_scr):
    """Whole Seq2Seq forward (encoder + attention decoder) in one kernel."""
    T_src, B = src_tb_ref.shape
    T_trg = out_ref.shape[0]
    H = e_whh_f_ref.shape[0]          # ENC_HID
    Hd = d_whh_ref.shape[0]           # DEC_HID
    SV = enc_emb_ref.shape[0]
    TV = dec_emb_ref.shape[0]
    Vp = out_ref.shape[-1]
    f32 = jnp.float32

    # Token / length data. Batch-major layouts keep B on the sublane axis so all
    # per-row one-hot builds are plain lane-splat compares (no relayouts).
    src_bt = src_bt_ref[...]                 # (B, T_src) int32
    trg_bt = trg_ref[...]                    # (B, T_trg) int32
    len_col = len_ref[...]                   # (B, 1)     int32

    enc_emb = enc_emb_ref[...]
    sv_iota = jax.lax.broadcasted_iota(jnp.int32, (B, SV), 1)

    # ---------------- encoder: bidirectional GRU, fwd+bwd per unrolled step ----
    wih_f = e_wih_f_ref[...]; whh_f = e_whh_f_ref[...]
    bih_f = e_bih_f_ref[...]; bhh_f = e_bhh_f_ref[...]
    wih_b = e_wih_b_ref[...]; whh_b = e_whh_b_ref[...]
    bih_b = e_bih_b_ref[...]; bhh_b = e_bhh_b_ref[...]

    def gru_cell(x, h, wih, whh, bih, bhh, Hh):
        gi = jnp.dot(x, wih, preferred_element_type=f32) + bih
        gh = jnp.dot(h, whh, preferred_element_type=f32) + bhh
        r = jax.nn.sigmoid(gi[:, :Hh] + gh[:, :Hh])
        z = jax.nn.sigmoid(gi[:, Hh:2 * Hh] + gh[:, Hh:2 * Hh])
        n = jnp.tanh(gi[:, 2 * Hh:] + r * gh[:, 2 * Hh:])
        return (1.0 - z) * n + z * h

    h_f = jnp.zeros((B, H), f32)
    h_b = jnp.zeros((B, H), f32)
    for i in range(T_src):                   # static unroll (T_src is small)
        j = T_src - 1 - i                    # backward-direction timestep
        # in-kernel embedding lookup via one-hot matmul (off the critical path)
        x_f = jnp.dot((src_bt[:, i:i + 1] == sv_iota).astype(f32), enc_emb,
                      preferred_element_type=f32)                        # (B, EMB)
        x_b = jnp.dot((src_bt[:, j:j + 1] == sv_iota).astype(f32), enc_emb,
                      preferred_element_type=f32)
        hf_new = gru_cell(x_f, h_f, wih_f, whh_f, bih_f, bhh_f, H)
        hb_new = gru_cell(x_b, h_b, wih_b, whh_b, bih_b, bhh_b, H)
        v_f = len_col > i                                                # (B,1) bool
        v_b = len_col > j
        # emulate pack_padded_sequence: zero outputs / hold hidden at padded steps
        enc_f_scr[i] = jnp.where(v_f, hf_new, 0.0)                       # stream out
        enc_b_scr[j] = jnp.where(v_b, hb_new, 0.0)
        h_f = jnp.where(v_f, hf_new, h_f)
        h_b = jnp.where(v_b, hb_new, h_b)

    # initial decoder hidden: tanh(fc([h_fwd; h_bwd])) via split row-block dots
    hidden = jnp.tanh(
        jnp.dot(h_f, e_fcw_f_ref[...], preferred_element_type=f32)
        + jnp.dot(h_b, e_fcw_b_ref[...], preferred_element_type=f32)
        + e_fcb_ref[...])

    # ---------------- decoder prep (hoisted out of the decode loop) ------------
    enc_f = enc_f_scr[...]                   # (T_src, B, H)
    enc_b = enc_b_scr[...]
    mask = src_tb_ref[...] != SRC_PAD_IDX    # (T_src, B) bool

    eproj = (jnp.dot(enc_f.reshape(T_src * B, H), a_we_f_ref[...],
                     preferred_element_type=f32)
             + jnp.dot(enc_b.reshape(T_src * B, H), a_we_b_ref[...],
                       preferred_element_type=f32)
             ).reshape(T_src, B, Hd) + a_b_ref[...]
    attn_v = a_v_ref[...]
    a_wh = a_wh_ref[...]

    dec_emb = dec_emb_ref[...]
    d_we = d_we_ref[...]; d_wcf = d_wcf_ref[...]; d_wcb = d_wcb_ref[...]
    d_whh = d_whh_ref[...]; d_bih = d_bih_ref[...]; d_bhh = d_bhh_ref[...]
    f_wh = f_wh_ref[...]; f_wcf = f_wcf_ref[...]; f_wcb = f_wcb_ref[...]
    f_we = f_we_ref[...]; f_b = f_b_ref[...]

    lane_pad = jax.lax.broadcasted_iota(jnp.int32, (B, Vp), 1)
    lane_voc = jax.lax.broadcasted_iota(jnp.int32, (B, TV), 1)
    lane_is_vocab = lane_pad < TV

    inp_oh = (trg_bt[:, 0:1] == lane_voc).astype(f32)        # <sos> one-hot
    out_ref[0] = jnp.zeros((B, Vp), f32)                     # outputs[0] stays zero

    for t in range(1, T_trg):                # static unroll (T_trg is small)
        emb = jnp.dot(inp_oh, dec_emb, preferred_element_type=f32)       # (B, EMB)

        # --- attention: masked softmax over source positions ---
        hproj = jnp.dot(hidden, a_wh, preferred_element_type=f32)        # (B, Hd)
        energy = jnp.tanh(hproj[None, :, :] + eproj)                     # (T_src,B,Hd)
        scores = jnp.sum(energy * attn_v, axis=-1)                       # (T_src, B)
        scores = jnp.where(mask, scores, f32(-1e10))
        scores = scores - jnp.max(scores, axis=0, keepdims=True)
        num = jnp.exp(scores)
        att = num * pl.reciprocal(jnp.sum(num, axis=0, keepdims=True), approx=True)
        ctx_f = jnp.sum(att[:, :, None] * enc_f, axis=0)                 # (B, H)
        ctx_b = jnp.sum(att[:, :, None] * enc_b, axis=0)

        # --- GRU cell (PyTorch gate order r, z, n); split-weight dots, no concat ---
        gi = (jnp.dot(emb, d_we, preferred_element_type=f32)
              + jnp.dot(ctx_f, d_wcf, preferred_element_type=f32)
              + jnp.dot(ctx_b, d_wcb, preferred_element_type=f32) + d_bih)
        gh = jnp.dot(hidden, d_whh, preferred_element_type=f32) + d_bhh
        r = jax.nn.sigmoid(gi[:, :Hd] + gh[:, :Hd])
        z = jax.nn.sigmoid(gi[:, Hd:2 * Hd] + gh[:, Hd:2 * Hd])
        n = jnp.tanh(gi[:, 2 * Hd:] + r * gh[:, 2 * Hd:])
        hidden = (1.0 - z) * n + z * hidden

        # --- fc_out([hidden; ctx; emb]) via split row-blocks; lane-dense logits ---
        logits = (jnp.dot(hidden, f_wh, preferred_element_type=f32)
                  + jnp.dot(ctx_f, f_wcf, preferred_element_type=f32)
                  + jnp.dot(ctx_b, f_wcb, preferred_element_type=f32)
                  + jnp.dot(emb, f_we, preferred_element_type=f32) + f_b)
        out_ref[t] = logits                                              # (B, V_PAD)

        # --- greedy argmax (first max index) + teacher forcing, fully on-chip ---
        masked = jnp.where(lane_is_vocab, logits, f32(-1e30))
        mx = jnp.max(masked, axis=-1, keepdims=True)
        idx = jnp.min(jnp.where((masked == mx) & lane_is_vocab, lane_pad, Vp),
                      axis=-1, keepdims=True)                            # (B, 1)
        pred_oh = (lane_voc == idx).astype(f32)
        teach_oh = (trg_bt[:, t:t + 1] == lane_voc).astype(f32)
        inp_oh = jnp.where(tf_ref[t] != 0, teach_oh, pred_oh)            # single select


# ------------------------------ pallas_call wrapper --------------------------

def _vmem():
    return pl.BlockSpec(memory_space=pltpu.MemorySpace.VMEM)


def seq2seq_pallas(kp, tf_flags, src_tb, src_bt, len_col, trg_bt):
    T_src, B = src_tb.shape
    T_trg = trg_bt.shape[1]
    weights = [kp[k] for k in WEIGHT_KEYS]
    args = (tf_flags, src_tb, src_bt, len_col, trg_bt, *weights)

    # advisory cost estimate so XLA can schedule surrounding tiny ops sensibly
    H, Hd, E = ENC_HID, DEC_HID, EMB_DIM
    enc_flops = (2 * T_src * B * 2 * (SRC_VOCAB * E + E * 3 * H + H * 3 * H)
                 + 2 * B * 2 * H * Hd + 2 * T_src * B * 2 * H * Hd)
    dec_flops = (T_trg - 1) * 2 * B * (TRG_VOCAB * E + Hd * Hd + (E + 2 * H) * 3 * Hd
                                       + Hd * 3 * Hd + (Hd + 2 * H + E) * V_PAD
                                       + 2 * T_src * Hd)
    trans = T_src * B * 6 * H + (T_trg - 1) * B * (T_src * Hd + T_src + 6 * Hd)
    in_bytes = sum(int(a.size) * a.dtype.itemsize for a in args)
    out_bytes = T_trg * B * V_PAD * 4

    return pl.pallas_call(
        seq2seq_kernel,
        out_shape=jax.ShapeDtypeStruct((T_trg, B, V_PAD), jnp.float32),
        in_specs=([pl.BlockSpec(memory_space=pltpu.MemorySpace.SMEM)]
                  + [_vmem() for _ in range(len(args) - 1)]),
        out_specs=_vmem(),
        scratch_shapes=[pltpu.VMEM((T_src, B, ENC_HID), jnp.float32),
                        pltpu.VMEM((T_src, B, ENC_HID), jnp.float32)],
        cost_estimate=pl.CostEstimate(flops=enc_flops + dec_flops,
                                      transcendentals=trans,
                                      bytes_accessed=in_bytes + out_bytes),
    )(*args)


# ------------------------------ parameters ----------------------------------

def init_params(key):
    ks = jax.random.split(key, 22)

    def rnd(k, shape, scale=0.1):
        return (scale * jax.random.normal(k, shape)).astype(jnp.float32)

    p = {}
    p['enc_emb'] = rnd(ks[0], (SRC_VOCAB, EMB_DIM))
    p['dec_emb'] = rnd(ks[1], (TRG_VOCAB, EMB_DIM))
    # encoder bidirectional GRU (weights pre-transposed: [in, 3H])
    p['enc_wih_f'] = rnd(ks[2], (EMB_DIM, 3 * ENC_HID))
    p['enc_whh_f'] = rnd(ks[3], (ENC_HID, 3 * ENC_HID))
    p['enc_bih_f'] = rnd(ks[4], (1, 3 * ENC_HID))
    p['enc_bhh_f'] = rnd(ks[5], (1, 3 * ENC_HID))
    p['enc_wih_b'] = rnd(ks[6], (EMB_DIM, 3 * ENC_HID))
    p['enc_whh_b'] = rnd(ks[7], (ENC_HID, 3 * ENC_HID))
    p['enc_bih_b'] = rnd(ks[8], (1, 3 * ENC_HID))
    p['enc_bhh_b'] = rnd(ks[9], (1, 3 * ENC_HID))
    p['enc_fc_w'] = rnd(ks[10], (2 * ENC_HID, DEC_HID))
    p['enc_fc_b'] = rnd(ks[11], (1, DEC_HID))
    # attention:  energy = tanh(hidden @ Wh + enc @ We + b);  score = energy . v
    p['attn_wh'] = rnd(ks[12], (DEC_HID, DEC_HID))
    p['attn_we'] = rnd(ks[13], (2 * ENC_HID, DEC_HID))
    p['attn_b'] = rnd(ks[14], (1, DEC_HID))
    p['attn_v'] = rnd(ks[15], (1, DEC_HID))
    # decoder GRU: input = [embedded ; context]
    p['dec_wih'] = rnd(ks[16], (EMB_DIM + 2 * ENC_HID, 3 * DEC_HID))
    p['dec_whh'] = rnd(ks[17], (DEC_HID, 3 * DEC_HID))
    p['dec_bih'] = rnd(ks[18], (1, 3 * DEC_HID))
    p['dec_bhh'] = rnd(ks[19], (1, 3 * DEC_HID))
    # fc_out: input = [hidden ; context ; embedded]
    p['fc_out_w'] = rnd(ks[20], (DEC_HID + 2 * ENC_HID + EMB_DIM, TRG_VOCAB))
    p['fc_out_b'] = rnd(ks[21], (1, TRG_VOCAB))
    return p


def pack_params(p):
    """Host-side, one-time split of concatenated-input weights into row blocks
    (so the kernel sums small dots instead of concatenating activations) and
    lane-padding of fc_out to V_PAD."""
    H, Hd, E = ENC_HID, DEC_HID, EMB_DIM
    pad_v = lambda w: jnp.pad(w, ((0, 0), (0, V_PAD - TRG_VOCAB)))
    return {
        'enc_emb': p['enc_emb'], 'dec_emb': p['dec_emb'],
        'enc_wih_f': p['enc_wih_f'], 'enc_whh_f': p['enc_whh_f'],
        'enc_bih_f': p['enc_bih_f'], 'enc_bhh_f': p['enc_bhh_f'],
        'enc_wih_b': p['enc_wih_b'], 'enc_whh_b': p['enc_whh_b'],
        'enc_bih_b': p['enc_bih_b'], 'enc_bhh_b': p['enc_bhh_b'],
        'enc_fc_w_f': p['enc_fc_w'][:H], 'enc_fc_w_b': p['enc_fc_w'][H:],
        'enc_fc_b': p['enc_fc_b'],
        'attn_wh': p['attn_wh'],
        'attn_we_f': p['attn_we'][:H], 'attn_we_b': p['attn_we'][H:],
        'attn_b': p['attn_b'], 'attn_v': p['attn_v'],
        'dec_w_e': p['dec_wih'][:E],
        'dec_w_cf': p['dec_wih'][E:E + H],
        'dec_w_cb': p['dec_wih'][E + H:],
        'dec_whh': p['dec_whh'], 'dec_bih': p['dec_bih'], 'dec_bhh': p['dec_bhh'],
        'fcw_h': pad_v(p['fc_out_w'][:Hd]),
        'fcw_cf': pad_v(p['fc_out_w'][Hd:Hd + H]),
        'fcw_cb': pad_v(p['fc_out_w'][Hd + H:Hd + 2 * H]),
        'fcw_e': pad_v(p['fc_out_w'][Hd + 2 * H:]),
        'fcb': pad_v(p['fc_out_b']),
    }


# ------------------------------ model glue -----------------------------------

@jax.jit
def seq2seq_forward(kp, src, src_len, trg, tf_key, teacher_forcing_ratio=0.5):
    """src: (T_src, B) int32, src_len: (B,) int32, trg: (T_trg, B) int32."""
    T_trg = trg.shape[0]
    tf_flags = (jax.random.uniform(tf_key, (T_trg,))
                < teacher_forcing_ratio).astype(jnp.int32)        # per-step coin flips
    out_pad = seq2seq_pallas(
        kp, tf_flags,
        src.astype(jnp.int32),                 # (T_src, B)  -> pad mask
        src.T.astype(jnp.int32),               # (B, T_src)  -> embeddings
        src_len[:, None].astype(jnp.int32),    # (B, 1)      -> pack_padded emulation
        trg.T.astype(jnp.int32))               # (B, T_trg)  -> teacher one-hots
    return out_pad[:, :, :TRG_VOCAB]


# ------------------------------ main -----------------------------------------

if __name__ == "__main__":
    key = jax.random.PRNGKey(0)
    k_param, k_src, k_trg, k_tf = jax.random.split(key, 4)

    T_SRC, T_TRG, BATCH = 8, 7, 8   # batch = 8 fills all f32 sublanes
    raw_params = init_params(k_param)
    params = pack_params(raw_params)

    src = jax.random.randint(k_src, (T_SRC, BATCH), 1, SRC_VOCAB).astype(jnp.int32)
    src_len = jnp.array([8, 6, 7, 5, 8, 4, 8, 3], dtype=jnp.int32)
    # pad each sequence's tail with src_pad_idx
    pad_mask = (jnp.arange(T_SRC)[:, None] < src_len[None, :])
    src = jnp.where(pad_mask, src, SRC_PAD_IDX).astype(jnp.int32)

    trg = jax.random.randint(k_trg, (T_TRG, BATCH), 1, TRG_VOCAB).astype(jnp.int32)

    out = seq2seq_forward(params, src, src_len, trg, k_tf, 0.5)
    out = jax.block_until_ready(out)
    assert out.shape == (T_TRG, BATCH, TRG_VOCAB)
    assert bool(jnp.all(jnp.isfinite(out)))
    print("KERNEL_OK")
</pallas_src>

<mosaic_0001>
module attributes {stable_mosaic.version = 11 : i64} {
  func.func @seq2seq_kernel(%arg0: memref<7xi32, #tpu.memory_space<smem>>, %arg1: memref<8x8xi32, #tpu.memory_space<vmem>>, %arg2: memref<8x8xi32, #tpu.memory_space<vmem>>, %arg3: memref<8x1xi32, #tpu.memory_space<vmem>>, %arg4: memref<8x7xi32, #tpu.memory_space<vmem>>, %arg5: memref<20x16xf32, #tpu.memory_space<vmem>>, %arg6: memref<24x16xf32, #tpu.memory_space<vmem>>, %arg7: memref<16x96xf32, #tpu.memory_space<vmem>>, %arg8: memref<32x96xf32, #tpu.memory_space<vmem>>, %arg9: memref<1x96xf32, #tpu.memory_space<vmem>>, %arg10: memref<1x96xf32, #tpu.memory_space<vmem>>, %arg11: memref<16x96xf32, #tpu.memory_space<vmem>>, %arg12: memref<32x96xf32, #tpu.memory_space<vmem>>, %arg13: memref<1x96xf32, #tpu.memory_space<vmem>>, %arg14: memref<1x96xf32, #tpu.memory_space<vmem>>, %arg15: memref<32x32xf32, #tpu.memory_space<vmem>>, %arg16: memref<32x32xf32, #tpu.memory_space<vmem>>, %arg17: memref<1x32xf32, #tpu.memory_space<vmem>>, %arg18: memref<32x32xf32, #tpu.memory_space<vmem>>, %arg19: memref<32x32xf32, #tpu.memory_space<vmem>>, %arg20: memref<32x32xf32, #tpu.memory_space<vmem>>, %arg21: memref<1x32xf32, #tpu.memory_space<vmem>>, %arg22: memref<1x32xf32, #tpu.memory_space<vmem>>, %arg23: memref<16x96xf32, #tpu.memory_space<vmem>>, %arg24: memref<32x96xf32, #tpu.memory_space<vmem>>, %arg25: memref<32x96xf32, #tpu.memory_space<vmem>>, %arg26: memref<32x96xf32, #tpu.memory_space<vmem>>, %arg27: memref<1x96xf32, #tpu.memory_space<vmem>>, %arg28: memref<1x96xf32, #tpu.memory_space<vmem>>, %arg29: memref<32x128xf32, #tpu.memory_space<vmem>>, %arg30: memref<32x128xf32, #tpu.memory_space<vmem>>, %arg31: memref<32x128xf32, #tpu.memory_space<vmem>>, %arg32: memref<16x128xf32, #tpu.memory_space<vmem>>, %arg33: memref<1x128xf32, #tpu.memory_space<vmem>>, %arg34: memref<7x8x128xf32, #tpu.memory_space<vmem>>, %arg35: memref<8x8x32xf32, #tpu.memory_space<vmem>>, %arg36: memref<8x8x32xf32, #tpu.memory_space<vmem>>) attributes {dimension_semantics = [], scalar_prefetch = 0 : i64, scratch_operands = 2 : i64, tpu.core_type = #tpu.core_type<tc>} {
    %c0 = arith.constant 0 : index
    %c0_0 = arith.constant 0 : index
    %0 = vector.load %arg2[%c0, %c0_0] : memref<8x8xi32, #tpu.memory_space<vmem>>, vector<8x8xi32>
    %c0_1 = arith.constant 0 : index
    %c0_2 = arith.constant 0 : index
    %1 = vector.load %arg4[%c0_1, %c0_2] : memref<8x7xi32, #tpu.memory_space<vmem>>, vector<8x7xi32>
    %c0_3 = arith.constant 0 : index
    %c0_4 = arith.constant 0 : index
    %2 = vector.load %arg3[%c0_3, %c0_4] : memref<8x1xi32, #tpu.memory_space<vmem>>, vector<8x1xi32>
    %c0_5 = arith.constant 0 : index
    %c0_6 = arith.constant 0 : index
    %3 = vector.load %arg5[%c0_5, %c0_6] : memref<20x16xf32, #tpu.memory_space<vmem>>, vector<20x16xf32>
    %4 = tpu.iota {dimensions = array<i32: 1>} : vector<8x20xi32>
    %c0_7 = arith.constant 0 : index
    %c0_8 = arith.constant 0 : index
    %5 = vector.load %arg7[%c0_7, %c0_8] : memref<16x96xf32, #tpu.memory_space<vmem>>, vector<16x96xf32>
    %c0_9 = arith.constant 0 : index
    %c0_10 = arith.constant 0 : index
    %6 = vector.load %arg8[%c0_9, %c0_10] : memref<32x96xf32, #tpu.memory_space<vmem>>, vector<32x96xf32>
    %c0_11 = arith.constant 0 : index
    %c0_12 = arith.constant 0 : index
    %7 = vector.load %arg9[%c0_11, %c0_12] : memref<1x96xf32, #tpu.memory_space<vmem>>, vector<1x96xf32>
    %c0_13 = arith.constant 0 : index
    %c0_14 = arith.constant 0 : index
    %8 = vector.load %arg10[%c0_13, %c0_14] : memref<1x96xf32, #tpu.memory_space<vmem>>, vector<1x96xf32>
    %c0_15 = arith.constant 0 : index
    %c0_16 = arith.constant 0 : index
    %9 = vector.load %arg11[%c0_15, %c0_16] : memref<16x96xf32, #tpu.memory_space<vmem>>, vector<16x96xf32>
    %c0_17 = arith.constant 0 : index
    %c0_18 = arith.constant 0 : index
    %10 = vector.load %arg12[%c0_17, %c0_18] : memref<32x96xf32, #tpu.memory_space<vmem>>, vector<32x96xf32>
    %c0_19 = arith.constant 0 : index
    %c0_20 = arith.constant 0 : index
    %11 = vector.load %arg13[%c0_19, %c0_20] : memref<1x96xf32, #tpu.memory_space<vmem>>, vector<1x96xf32>
    %c0_21 = arith.constant 0 : index
    %c0_22 = arith.constant 0 : index
    %12 = vector.load %arg14[%c0_21, %c0_22] : memref<1x96xf32, #tpu.memory_space<vmem>>, vector<1x96xf32>
    %cst = arith.constant 0.000000e+00 : f32
    %13 = vector.broadcast %cst : f32 to vector<8x32xf32>
    %cst_23 = arith.constant 0.000000e+00 : f32
    %14 = vector.broadcast %cst_23 : f32 to vector<8x32xf32>
    %15 = vector.extract_strided_slice %0 {offsets = [0, 0], sizes = [8, 1], strides = [1, 1]} : vector<8x8xi32> to vector<8x1xi32>
    %16 = vector.broadcast %15 : vector<8x1xi32> to vector<8x20xi32>
    %17 = arith.cmpi eq, %16, %4 : vector<8x20xi32>
    %18 = arith.extui %17 : vector<8x20xi1> to vector<8x20xi32>
    %19 = arith.sitofp %18 : vector<8x20xi32> to vector<8x20xf32>
    %cst_24 = arith.constant dense<0.000000e+00> : vector<8x16xf32>
    %20 = tpu.matmul %19, %3, %cst_24 {dimension_numbers = #tpu.dot_dimension_numbers<[1], [0], [0], [1], [0, 0, 1, 1], [], []>} : vector<8x20xf32>, vector<20x16xf32>, vector<8x16xf32> -> vector<8x16xf32>
    %21 = vector.extract_strided_slice %0 {offsets = [0, 7], sizes = [8, 1], strides = [1, 1]} : vector<8x8xi32> to vector<8x1xi32>
    %22 = vector.broadcast %21 : vector<8x1xi32> to vector<8x20xi32>
    %23 = arith.cmpi eq, %22, %4 : vector<8x20xi32>
    %24 = arith.extui %23 : vector<8x20xi1> to vector<8x20xi32>
    %25 = arith.sitofp %24 : vector<8x20xi32> to vector<8x20xf32>
    %cst_25 = arith.constant dense<0.000000e+00> : vector<8x16xf32>
    %26 = tpu.matmul %25, %3, %cst_25 {dimension_numbers = #tpu.dot_dimension_numbers<[1], [0], [0], [1], [0, 0, 1, 1], [], []>} : vector<8x20xf32>, vector<20x16xf32>, vector<8x16xf32> -> vector<8x16xf32>
    %cst_26 = arith.constant dense<0.000000e+00> : vector<8x96xf32>
    %27 = tpu.matmul %20, %5, %cst_26 {dimension_numbers = #tpu.dot_dimension_numbers<[1], [0], [0], [1], [0, 0, 1, 1], [], []>} : vector<8x16xf32>, vector<16x96xf32>, vector<8x96xf32> -> vector<8x96xf32>
    %28 = vector.broadcast %7 : vector<1x96xf32> to vector<8x96xf32>
    %29 = arith.addf %27, %28 : vector<8x96xf32>
    %cst_27 = arith.constant dense<0.000000e+00> : vector<8x96xf32>
    %30 = tpu.matmul %13, %6, %cst_27 {dimension_numbers = #tpu.dot_dimension_numbers<[1], [0], [0], [1], [0, 0, 1, 1], [], []>} : vector<8x32xf32>, vector<32x96xf32>, vector<8x96xf32> -> vector<8x96xf32>
    %31 = vector.broadcast %8 : vector<1x96xf32> to vector<8x96xf32>
    %32 = arith.addf %30, %31 : vector<8x96xf32>
    %33 = vector.extract_strided_slice %29 {offsets = [0, 0], sizes = [8, 32], strides = [1, 1]} : vector<8x96xf32> to vector<8x32xf32>
    %34 = vector.extract_strided_slice %32 {offsets = [0, 0], sizes = [8, 32], strides = [1, 1]} : vector<8x96xf32> to vector<8x32xf32>
    %35 = arith.addf %33, %34 : vector<8x32xf32>
    %36 = arith.negf %35 : vector<8x32xf32>
    %37 = math.exp %36 : vector<8x32xf32>
    %cst_28 = arith.constant 1.000000e+00 : f32
    %38 = vector.broadcast %cst_28 : f32 to vector<8x32xf32>
    %39 = arith.addf %38, %37 : vector<8x32xf32>
    %40 = arith.divf %38, %39 : vector<8x32xf32>
    %41 = vector.extract_strided_slice %29 {offsets = [0, 32], sizes = [8, 32], strides = [1, 1]} : vector<8x96xf32> to vector<8x32xf32>
    %42 = vector.extract_strided_slice %32 {offsets = [0, 32], sizes = [8, 32], strides = [1, 1]} : vector<8x96xf32> to vector<8x32xf32>
    %43 = arith.addf %41, %42 : vector<8x32xf32>
    %44 = arith.negf %43 : vector<8x32xf32>
    %45 = math.exp %44 : vector<8x32xf32>
    %cst_29 = arith.constant 1.000000e+00 : f32
    %46 = vector.broadcast %cst_29 : f32 to vector<8x32xf32>
    %47 = arith.addf %46, %45 : vector<8x32xf32>
    %48 = arith.divf %46, %47 : vector<8x32xf32>
    %49 = vector.extract_strided_slice %29 {offsets = [0, 64], sizes = [8, 32], strides = [1, 1]} : vector<8x96xf32> to vector<8x32xf32>
    %50 = vector.extract_strided_slice %32 {offsets = [0, 64], sizes = [8, 32], strides = [1, 1]} : vector<8x96xf32> to vector<8x32xf32>
    %51 = arith.mulf %40, %50 : vector<8x32xf32>
    %52 = arith.addf %49, %51 : vector<8x32xf32>
    %53 = math.tanh %52 : vector<8x32xf32>
    %cst_30 = arith.constant 1.000000e+00 : f32
    %54 = vector.broadcast %cst_30 : f32 to vector<8x32xf32>
    %55 = arith.subf %54, %48 : vector<8x32xf32>
    %56 = arith.mulf %55, %53 : vector<8x32xf32>
    %57 = arith.mulf %48, %13 : vector<8x32xf32>
    %58 = arith.addf %56, %57 : vector<8x32xf32>
    %cst_31 = arith.constant dense<0.000000e+00> : vector<8x96xf32>
    %59 = tpu.matmul %26, %9, %cst_31 {dimension_numbers = #tpu.dot_dimension_numbers<[1], [0], [0], [1], [0, 0, 1, 1], [], []>} : vector<8x16xf32>, vector<16x96xf32>, vector<8x96xf32> -> vector<8x96xf32>
    %60 = vector.broadcast %11 : vector<1x96xf32> to vector<8x96xf32>
    %61 = arith.addf %59, %60 : vector<8x96xf32>
    %cst_32 = arith.constant dense<0.000000e+00> : vector<8x96xf32>
    %62 = tpu.matmul %14, %10, %cst_32 {dimension_numbers = #tpu.dot_dimension_numbers<[1], [0], [0], [1], [0, 0, 1, 1], [], []>} : vector<8x32xf32>, vector<32x96xf32>, vector<8x96xf32> -> vector<8x96xf32>
    %63 = vector.broadcast %12 : vector<1x96xf32> to vector<8x96xf32>
    %64 = arith.addf %62, %63 : vector<8x96xf32>
    %65 = vector.extract_strided_slice %61 {offsets = [0, 0], sizes = [8, 32], strides = [1, 1]} : vector<8x96xf32> to vector<8x32xf32>
    %66 = vector.extract_strided_slice %64 {offsets = [0, 0], sizes = [8, 32], strides = [1, 1]} : vector<8x96xf32> to vector<8x32xf32>
    %67 = arith.addf %65, %66 : vector<8x32xf32>
    %68 = arith.negf %67 : vector<8x32xf32>
    %69 = math.exp %68 : vector<8x32xf32>
    %cst_33 = arith.constant 1.000000e+00 : f32
    %70 = vector.broadcast %cst_33 : f32 to vector<8x32xf32>
    %71 = arith.addf %70, %69 : vector<8x32xf32>
    %72 = arith.divf %70, %71 : vector<8x32xf32>
    %73 = vector.extract_strided_slice %61 {offsets = [0, 32], sizes = [8, 32], strides = [1, 1]} : vector<8x96xf32> to vector<8x32xf32>
    %74 = vector.extract_strided_slice %64 {offsets = [0, 32], sizes = [8, 32], strides = [1, 1]} : vector<8x96xf32> to vector<8x32xf32>
    %75 = arith.addf %73, %74 : vector<8x32xf32>
    %76 = arith.negf %75 : vector<8x32xf32>
    %77 = math.exp %76 : vector<8x32xf32>
    %cst_34 = arith.constant 1.000000e+00 : f32
    %78 = vector.broadcast %cst_34 : f32 to vector<8x32xf32>
    %79 = arith.addf %78, %77 : vector<8x32xf32>
    %80 = arith.divf %78, %79 : vector<8x32xf32>
    %81 = vector.extract_strided_slice %61 {offsets = [0, 64], sizes = [8, 32], strides = [1, 1]} : vector<8x96xf32> to vector<8x32xf32>
    %82 = vector.extract_strided_slice %64 {offsets = [0, 64], sizes = [8, 32], strides = [1, 1]} : vector<8x96xf32> to vector<8x32xf32>
    %83 = arith.mulf %72, %82 : vector<8x32xf32>
    %84 = arith.addf %81, %83 : vector<8x32xf32>
    %85 = math.tanh %84 : vector<8x32xf32>
    %cst_35 = arith.constant 1.000000e+00 : f32
    %86 = vector.broadcast %cst_35 : f32 to vector<8x32xf32>
    %87 = arith.subf %86, %80 : vector<8x32xf32>
    %88 = arith.mulf %87, %85 : vector<8x32xf32>
    %89 = arith.mulf %80, %14 : vector<8x32xf32>
    %90 = arith.addf %88, %89 : vector<8x32xf32>
    %c0_i32 = arith.constant 0 : i32
    %91 = vector.broadcast %c0_i32 : i32 to vector<8x1xi32>
    %92 = arith.cmpi sgt, %2, %91 : vector<8x1xi32>
    %c7_i32 = arith.constant 7 : i32
    %93 = vector.broadcast %c7_i32 : i32 to vector<8x1xi32>
    %94 = arith.cmpi sgt, %2, %93 : vector<8x1xi32>
    %cst_36 = arith.constant 0.000000e+00 : f32
    %95 = vector.shape_cast %92 : vector<8x1xi1> to vector<8x1xi1>
    %96 = vector.broadcast %95 : vector<8x1xi1> to vector<8x32xi1>
    %97 = vector.broadcast %cst_36 : f32 to vector<8x32xf32>
    %98 = arith.select %96, %58, %97 : vector<8x32xi1>, vector<8x32xf32>
    %c0_37 = arith.constant 0 : index
    %c0_38 = arith.constant 0 : index
    %c0_39 = arith.constant 0 : index
    %99 = vector.load %arg35[%c0_37, %c0_38, %c0_39] : memref<8x8x32xf32, #tpu.memory_space<vmem>>, vector<1x8x32xf32>
    %100 = vector.shape_cast %99 : vector<1x8x32xf32> to vector<8x32xf32>
    %101 = vector.shape_cast %98 : vector<8x32xf32> to vector<1x8x32xf32>
    tpu.vector_store %arg35[%c0_37, %c0_38, %c0_39], %101 {strides = array<i32>} : memref<8x8x32xf32, #tpu.memory_space<vmem>>, vector<1x8x32xf32>,
    %cst_40 = arith.constant 0.000000e+00 : f32
    %102 = vector.shape_cast %94 : vector<8x1xi1> to vector<8x1xi1>
    %103 = vector.broadcast %102 : vector<8x1xi1> to vector<8x32xi1>
    %104 = vector.broadcast %cst_40 : f32 to vector<8x32xf32>
    %105 = arith.select %103, %90, %104 : vector<8x32xi1>, vector<8x32xf32>
    %c7 = arith.constant 7 : index
    %c0_41 = arith.constant 0 : index
    %c0_42 = arith.constant 0 : index
    %106 = vector.load %arg36[%c7, %c0_41, %c0_42] : memref<8x8x32xf32, #tpu.memory_space<vmem>>, vector<1x8x32xf32>
    %107 = vector.shape_cast %106 : vector<1x8x32xf32> to vector<8x32xf32>
    %108 = vector.shape_cast %105 : vector<8x32xf32> to vector<1x8x32xf32>
    tpu.vector_store %arg36[%c7, %c0_41, %c0_42], %108 {strides = array<i32>} : memref<8x8x32xf32, #tpu.memory_space<vmem>>, vector<1x8x32xf32>,
    %109 = vector.shape_cast %92 : vector<8x1xi1> to vector<8x1xi1>
    %110 = vector.broadcast %109 : vector<8x1xi1> to vector<8x32xi1>
    %111 = arith.select %110, %58, %13 : vector<8x32xi1>, vector<8x32xf32>
    %112 = vector.shape_cast %94 : vector<8x1xi1> to vector<8x1xi1>
    %113 = vector.broadcast %112 : vector<8x1xi1> to vector<8x32xi1>
    %114 = arith.select %113, %90, %14 : vector<8x32xi1>, vector<8x32xf32>
    %115 = vector.extract_strided_slice %0 {offsets = [0, 1], sizes = [8, 1], strides = [1, 1]} : vector<8x8xi32> to vector<8x1xi32>
    %116 = vector.broadcast %115 : vector<8x1xi32> to vector<8x20xi32>
    %117 = arith.cmpi eq, %116, %4 : vector<8x20xi32>
    %118 = arith.extui %117 : vector<8x20xi1> to vector<8x20xi32>
    %119 = arith.sitofp %118 : vector<8x20xi32> to vector<8x20xf32>
    %cst_43 = arith.constant dense<0.000000e+00> : vector<8x16xf32>
    %120 = tpu.matmul %119, %3, %cst_43 {dimension_numbers = #tpu.dot_dimension_numbers<[1], [0], [0], [1], [0, 0, 1, 1], [], []>} : vector<8x20xf32>, vector<20x16xf32>, vector<8x16xf32> -> vector<8x16xf32>
    %121 = vector.extract_strided_slice %0 {offsets = [0, 6], sizes = [8, 1], strides = [1, 1]} : vector<8x8xi32> to vector<8x1xi32>
    %122 = vector.broadcast %121 : vector<8x1xi32> to vector<8x20xi32>
    %123 = arith.cmpi eq, %122, %4 : vector<8x20xi32>
    %124 = arith.extui %123 : vector<8x20xi1> to vector<8x20xi32>
    %125 = arith.sitofp %124 : vector<8x20xi32> to vector<8x20xf32>
    %cst_44 = arith.constant dense<0.000000e+00> : vector<8x16xf32>
    %126 = tpu.matmul %125, %3, %cst_44 {dimension_numbers = #tpu.dot_dimension_numbers<[1], [0], [0], [1], [0, 0, 1, 1], [], []>} : vector<8x20xf32>, vector<20x16xf32>, vector<8x16xf32> -> vector<8x16xf32>
    %cst_45 = arith.constant dense<0.000000e+00> : vector<8x96xf32>
    %127 = tpu.matmul %120, %5, %cst_45 {dimension_numbers = #tpu.dot_dimension_numbers<[1], [0], [0], [1], [0, 0, 1, 1], [], []>} : vector<8x16xf32>, vector<16x96xf32>, vector<8x96xf32> -> vector<8x96xf32>
    %128 = vector.broadcast %7 : vector<1x96xf32> to vector<8x96xf32>
    %129 = arith.addf %127, %128 : vector<8x96xf32>
    %cst_46 = arith.constant dense<0.000000e+00> : vector<8x96xf32>
    %130 = tpu.matmul %111, %6, %cst_46 {dimension_numbers = #tpu.dot_dimension_numbers<[1], [0], [0], [1], [0, 0, 1, 1], [], []>} : vector<8x32xf32>, vector<32x96xf32>, vector<8x96xf32> -> vector<8x96xf32>
    %131 = vector.broadcast %8 : vector<1x96xf32> to vector<8x96xf32>
    %132 = arith.addf %130, %131 : vector<8x96xf32>
    %133 = vector.extract_strided_slice %129 {offsets = [0, 0], sizes = [8, 32], strides = [1, 1]} : vector<8x96xf32> to vector<8x32xf32>
    %134 = vector.extract_strided_slice %132 {offsets = [0, 0], sizes = [8, 32], strides = [1, 1]} : vector<8x96xf32> to vector<8x32xf32>
    %135 = arith.addf %133, %134 : vector<8x32xf32>
    %136 = arith.negf %135 : vector<8x32xf32>
    %137 = math.exp %136 : vector<8x32xf32>
    %cst_47 = arith.constant 1.000000e+00 : f32
    %138 = vector.broadcast %cst_47 : f32 to vector<8x32xf32>
    %139 = arith.addf %138, %137 : vector<8x32xf32>
    %140 = arith.divf %138, %139 : vector<8x32xf32>
    %141 = vector.extract_strided_slice %129 {offsets = [0, 32], sizes = [8, 32], strides = [1, 1]} : vector<8x96xf32> to vector<8x32xf32>
    %142 = vector.extract_strided_slice %132 {offsets = [0, 32], sizes = [8, 32], strides = [1, 1]} : vector<8x96xf32> to vector<8x32xf32>
    %143 = arith.addf %141, %142 : vector<8x32xf32>
    %144 = arith.negf %143 : vector<8x32xf32>
    %145 = math.exp %144 : vector<8x32xf32>
    %cst_48 = arith.constant 1.000000e+00 : f32
    %146 = vector.broadcast %cst_48 : f32 to vector<8x32xf32>
    %147 = arith.addf %146, %145 : vector<8x32xf32>
    %148 = arith.divf %146, %147 : vector<8x32xf32>
    %149 = vector.extract_strided_slice %129 {offsets = [0, 64], sizes = [8, 32], strides = [1, 1]} : vector<8x96xf32> to vector<8x32xf32>
    %150 = vector.extract_strided_slice %132 {offsets = [0, 64], sizes = [8, 32], strides = [1, 1]} : vector<8x96xf32> to vector<8x32xf32>
    %151 = arith.mulf %140, %150 : vector<8x32xf32>
    %152 = arith.addf %149, %151 : vector<8x32xf32>
    %153 = math.tanh %152 : vector<8x32xf32>
    %cst_49 = arith.constant 1.000000e+00 : f32
    %154 = vector.broadcast %cst_49 : f32 to vector<8x32xf32>
    %155 = arith.subf %154, %148 : vector<8x32xf32>
    %156 = arith.mulf %155, %153 : vector<8x32xf32>
    %157 = arith.mulf %148, %111 : vector<8x32xf32>
    %158 = arith.addf %156, %157 : vector<8x32xf32>
    %cst_50 = arith.constant dense<0.000000e+00> : vector<8x96xf32>
    %159 = tpu.matmul %126, %9, %cst_50 {dimension_numbers = #tpu.dot_dimension_numbers<[1], [0], [0], [1], [0, 0, 1, 1], [], []>} : vector<8x16xf32>, vector<16x96xf32>, vector<8x96xf32> -> vector<8x96xf32>
    %160 = vector.broadcast %11 : vector<1x96xf32> to vector<8x96xf32>
    %161 = arith.addf %159, %160 : vector<8x96xf32>
    %cst_51 = arith.constant dense<0.000000e+00> : vector<8x96xf32>
    %162 = tpu.matmul %114, %10, %cst_51 {dimension_numbers = #tpu.dot_dimension_numbers<[1], [0], [0], [1], [0, 0, 1, 1], [], []>} : vector<8x32xf32>, vector<32x96xf32>, vector<8x96xf32> -> vector<8x96xf32>
    %163 = vector.broadcast %12 : vector<1x96xf32> to vector<8x96xf32>
    %164 = arith.addf %162, %163 : vector<8x96xf32>
    %165 = vector.extract_strided_slice %161 {offsets = [0, 0], sizes = [8, 32], strides = [1, 1]} : vector<8x96xf32> to vector<8x32xf32>
    %166 = vector.extract_strided_slice %164 {offsets = [0, 0], sizes = [8, 32], strides = [1, 1]} : vector<8x96xf32> to vector<8x32xf32>
    %167 = arith.addf %165, %166 : vector<8x32xf32>
    %168 = arith.negf %167 : vector<8x32xf32>
    %169 = math.exp %168 : vector<8x32xf32>
    %cst_52 = arith.constant 1.000000e+00 : f32
    %170 = vector.broadcast %cst_52 : f32 to vector<8x32xf32>
    %171 = arith.addf %170, %169 : vector<8x32xf32>
    %172 = arith.divf %170, %171 : vector<8x32xf32>
    %173 = vector.extract_strided_slice %161 {offsets = [0, 32], sizes = [8, 32], strides = [1, 1]} : vector<8x96xf32> to vector<8x32xf32>
    %174 = vector.extract_strided_slice %164 {offsets = [0, 32], sizes = [8, 32], strides = [1, 1]} : vector<8x96xf32> to vector<8x32xf32>
    %175 = arith.addf %173, %174 : vector<8x32xf32>
    %176 = arith.negf %175 : vector<8x32xf32>
    %177 = math.exp %176 : vector<8x32xf32>
    %cst_53 = arith.constant 1.000000e+00 : f32
    %178 = vector.broadcast %cst_53 : f32 to vector<8x32xf32>
    %179 = arith.addf %178, %177 : vector<8x32xf32>
    %180 = arith.divf %178, %179 : vector<8x32xf32>
    %181 = vector.extract_strided_slice %161 {offsets = [0, 64], sizes = [8, 32], strides = [1, 1]} : vector<8x96xf32> to vector<8x32xf32>
    %182 = vector.extract_strided_slice %164 {offsets = [0, 64], sizes = [8, 32], strides = [1, 1]} : vector<8x96xf32> to vector<8x32xf32>
    %183 = arith.mulf %172, %182 : vector<8x32xf32>
    %184 = arith.addf %181, %183 : vector<8x32xf32>
    %185 = math.tanh %184 : vector<8x32xf32>
    %cst_54 = arith.constant 1.000000e+00 : f32
    %186 = vector.broadcast %cst_54 : f32 to vector<8x32xf32>
    %187 = arith.subf %186, %180 : vector<8x32xf32>
    %188 = arith.mulf %187, %185 : vector<8x32xf32>
    %189 = arith.mulf %180, %114 : vector<8x32xf32>
    %190 = arith.addf %188, %189 : vector<8x32xf32>
    %c1_i32 = arith.constant 1 : i32
    %191 = vector.broadcast %c1_i32 : i32 to vector<8x1xi32>
    %192 = arith.cmpi sgt, %2, %191 : vector<8x1xi32>
    %c6_i32 = arith.constant 6 : i32
    %193 = vector.broadcast %c6_i32 : i32 to vector<8x1xi32>
    %194 = arith.cmpi sgt, %2, %193 : vector<8x1xi32>
    %cst_55 = arith.constant 0.000000e+00 : f32
    %195 = vector.shape_cast %192 : vector<8x1xi1> to vector<8x1xi1>
    %196 = vector.broadcast %195 : vector<8x1xi1> to vector<8x32xi1>
    %197 = vector.broadcast %cst_55 : f32 to vector<8x32xf32>
    %198 = arith.select %196, %158, %197 : vector<8x32xi1>, vector<8x32xf32>
    %c1 = arith.constant 1 : index
    %c0_56 = arith.constant 0 : index
    %c0_57 = arith.constant 0 : index
    %199 = vector.load %arg35[%c1, %c0_56, %c0_57] : memref<8x8x32xf32, #tpu.memory_space<vmem>>, vector<1x8x32xf32>
    %200 = vector.shape_cast %199 : vector<1x8x32xf32> to vector<8x32xf32>
    %201 = vector.shape_cast %198 : vector<8x32xf32> to vector<1x8x32xf32>
    tpu.vector_store %arg35[%c1, %c0_56, %c0_57], %201 {strides = array<i32>} : memref<8x8x32xf32, #tpu.memory_space<vmem>>, vector<1x8x32xf32>,
    %cst_58 = arith.constant 0.000000e+00 : f32
    %202 = vector.shape_cast %194 : vector<8x1xi1> to vector<8x1xi1>
    %203 = vector.broadcast %202 : vector<8x1xi1> to vector<8x32xi1>
    %204 = vector.broadcast %cst_58 : f32 to vector<8x32xf32>
    %205 = arith.select %203, %190, %204 : vector<8x32xi1>, vector<8x32xf32>
    %c6 = arith.constant 6 : index
    %c0_59 = arith.constant 0 : index
    %c0_60 = arith.constant 0 : index
    %206 = vector.load %arg36[%c6, %c0_59, %c0_60] : memref<8x8x32xf32, #tpu.memory_space<vmem>>, vector<1x8x32xf32>
    %207 = vector.shape_cast %206 : vector<1x8x32xf32> to vector<8x32xf32>
    %208 = vector.shape_cast %205 : vector<8x32xf32> to vector<1x8x32xf32>
    tpu.vector_store %arg36[%c6, %c0_59, %c0_60], %208 {strides = array<i32>} : memref<8x8x32xf32, #tpu.memory_space<vmem>>, vector<1x8x32xf32>,
    %209 = vector.shape_cast %192 : vector<8x1xi1> to vector<8x1xi1>
    %210 = vector.broadcast %209 : vector<8x1xi1> to vector<8x32xi1>
    %211 = arith.select %210, %158, %111 : vector<8x32xi1>, vector<8x32xf32>
    %212 = vector.shape_cast %194 : vector<8x1xi1> to vector<8x1xi1>
    %213 = vector.broadcast %212 : vector<8x1xi1> to vector<8x32xi1>
    %214 = arith.select %213, %190, %114 : vector<8x32xi1>, vector<8x32xf32>
    %215 = vector.extract_strided_slice %0 {offsets = [0, 2], sizes = [8, 1], strides = [1, 1]} : vector<8x8xi32> to vector<8x1xi32>
    %216 = vector.broadcast %215 : vector<8x1xi32> to vector<8x20xi32>
    %217 = arith.cmpi eq, %216, %4 : vector<8x20xi32>
    %218 = arith.extui %217 : vector<8x20xi1> to vector<8x20xi32>
    %219 = arith.sitofp %218 : vector<8x20xi32> to vector<8x20xf32>
    %cst_61 = arith.constant dense<0.000000e+00> : vector<8x16xf32>
    %220 = tpu.matmul %219, %3, %cst_61 {dimension_numbers = #tpu.dot_dimension_numbers<[1], [0], [0], [1], [0, 0, 1, 1], [], []>} : vector<8x20xf32>, vector<20x16xf32>, vector<8x16xf32> -> vector<8x16xf32>
    %221 = vector.extract_strided_slice %0 {offsets = [0, 5], sizes = [8, 1], strides = [1, 1]} : vector<8x8xi32> to vector<8x1xi32>
    %222 = vector.broadcast %221 : vector<8x1xi32> to vector<8x20xi32>
    %223 = arith.cmpi eq, %222, %4 : vector<8x20xi32>
    %224 = arith.extui %223 : vector<8x20xi1> to vector<8x20xi32>
    %225 = arith.sitofp %224 : vector<8x20xi32> to vector<8x20xf32>
    %cst_62 = arith.constant dense<0.000000e+00> : vector<8x16xf32>
    %226 = tpu.matmul %225, %3, %cst_62 {dimension_numbers = #tpu.dot_dimension_numbers<[1], [0], [0], [1], [0, 0, 1, 1], [], []>} : vector<8x20xf32>, vector<20x16xf32>, vector<8x16xf32> -> vector<8x16xf32>
    %cst_63 = arith.constant dense<0.000000e+00> : vector<8x96xf32>
    %227 = tpu.matmul %220, %5, %cst_63 {dimension_numbers = #tpu.dot_dimension_numbers<[1], [0], [0], [1], [0, 0, 1, 1], [], []>} : vector<8x16xf32>, vector<16x96xf32>, vector<8x96xf32> -> vector<8x96xf32>
    %228 = vector.broadcast %7 : vector<1x96xf32> to vector<8x96xf32>
    %229 = arith.addf %227, %228 : vector<8x96xf32>
    %cst_64 = arith.constant dense<0.000000e+00> : vector<8x96xf32>
    %230 = tpu.matmul %211, %6, %cst_64 {dimension_numbers = #tpu.dot_dimension_numbers<[1], [0], [0], [1], [0, 0, 1, 1], [], []>} : vector<8x32xf32>, vector<32x96xf32>, vector<8x96xf32> -> vector<8x96xf32>
    %231 = vector.broadcast %8 : vector<1x96xf32> to vector<8x96xf32>
    %232 = arith.addf %230, %231 : vector<8x96xf32>
    %233 = vector.extract_strided_slice %229 {offsets = [0, 0], sizes = [8, 32], strides = [1, 1]} : vector<8x96xf32> to vector<8x32xf32>
    %234 = vector.extract_strided_slice %232 {offsets = [0, 0], sizes = [8, 32], strides = [1, 1]} : vector<8x96xf32> to vector<8x32xf32>
    %235 = arith.addf %233, %234 : vector<8x32xf32>
    %236 = arith.negf %235 : vector<8x32xf32>
    %237 = math.exp %236 : vector<8x32xf32>
    %cst_65 = arith.constant 1.000000e+00 : f32
    %238 = vector.broadcast %cst_65 : f32 to vector<8x32xf32>
    %239 = arith.addf %238, %237 : vector<8x32xf32>
    %240 = arith.divf %238, %239 : vector<8x32xf32>
    %241 = vector.extract_strided_slice %229 {offsets = [0, 32], sizes = [8, 32], strides = [1, 1]} : vector<8x96xf32> to vector<8x32xf32>
    %242 = vector.extract_strided_slice %232 {offsets = [0, 32], sizes = [8, 32], strides = [1, 1]} : vector<8x96xf32> to vector<8x32xf32>
    %243 = arith.addf %241, %242 : vector<8x32xf32>
    %244 = arith.negf %243 : vector<8x32xf32>
    %245 = math.exp %244 : vector<8x32xf32>
    %cst_66 = arith.constant 1.000000e+00 : f32
    %246 = vector.broadcast %cst_66 : f32 to vector<8x32xf32>
    %247 = arith.addf %246, %245 : vector<8x32xf32>
    %248 = arith.divf %246, %247 : vector<8x32xf32>
    %249 = vector.extract_strided_slice %229 {offsets = [0, 64], sizes = [8, 32], strides = [1, 1]} : vector<8x96xf32> to vector<8x32xf32>
    %250 = vector.extract_strided_slice %232 {offsets = [0, 64], sizes = [8, 32], strides = [1, 1]} : vector<8x96xf32> to vector<8x32xf32>
    %251 = arith.mulf %240, %250 : vector<8x32xf32>
    %252 = arith.addf %249, %251 : vector<8x32xf32>
    %253 = math.tanh %252 : vector<8x32xf32>
    %cst_67 = arith.constant 1.000000e+00 : f32
    %254 = vector.broadcast %cst_67 : f32 to vector<8x32xf32>
    %255 = arith.subf %254, %248 : vector<8x32xf32>
    %256 = arith.mulf %255, %253 : vector<8x32xf32>
    %257 = arith.mulf %248, %211 : vector<8x32xf32>
    %258 = arith.addf %256, %257 : vector<8x32xf32>
    %cst_68 = arith.constant dense<0.000000e+00> : vector<8x96xf32>
    %259 = tpu.matmul %226, %9, %cst_68 {dimension_numbers = #tpu.dot_dimension_numbers<[1], [0], [0], [1], [0, 0, 1, 1], [], []>} : vector<8x16xf32>, vector<16x96xf32>, vector<8x96xf32> -> vector<8x96xf32>
    %260 = vector.broadcast %11 : vector<1x96xf32> to vector<8x96xf32>
    %261 = arith.addf %259, %260 : vector<8x96xf32>
    %cst_69 = arith.constant dense<0.000000e+00> : vector<8x96xf32>
    %262 = tpu.matmul %214, %10, %cst_69 {dimension_numbers = #tpu.dot_dimension_numbers<[1], [0], [0], [1], [0, 0, 1, 1], [], []>} : vector<8x32xf32>, vector<32x96xf32>, vector<8x96xf32> -> vector<8x96xf32>
    %263 = vector.broadcast %12 : vector<1x96xf32> to vector<8x96xf32>
    %264 = arith.addf %262, %263 : vector<8x96xf32>
    %265 = vector.extract_strided_slice %261 {offsets = [0, 0], sizes = [8, 32], strides = [1, 1]} : vector<8x96xf32> to vector<8x32xf32>
    %266 = vector.extract_strided_slice %264 {offsets = [0, 0], sizes = [8, 32], strides = [1, 1]} : vector<8x96xf32> to vector<8x32xf32>
    %267 = arith.addf %265, %266 : vector<8x32xf32>
    %268 = arith.negf %267 : vector<8x32xf32>
    %269 = math.exp %268 : vector<8x32xf32>
    %cst_70 = arith.constant 1.000000e+00 : f32
    %270 = vector.broadcast %cst_70 : f32 to vector<8x32xf32>
    %271 = arith.addf %270, %269 : vector<8x32xf32>
    %272 = arith.divf %270, %271 : vector<8x32xf32>
    %273 = vector.extract_strided_slice %261 {offsets = [0, 32], sizes = [8, 32], strides = [1, 1]} : vector<8x96xf32> to vector<8x32xf32>
    %274 = vector.extract_strided_slice %264 {offsets = [0, 32], sizes = [8, 32], strides = [1, 1]} : vector<8x96xf32> to vector<8x32xf32>
    %275 = arith.addf %273, %274 : vector<8x32xf32>
    %276 = arith.negf %275 : vector<8x32xf32>
    %277 = math.exp %276 : vector<8x32xf32>
    %cst_71 = arith.constant 1.000000e+00 : f32
    %278 = vector.broadcast %cst_71 : f32 to vector<8x32xf32>
    %279 = arith.addf %278, %277 : vector<8x32xf32>
    %280 = arith.divf %278, %279 : vector<8x32xf32>
    %281 = vector.extract_strided_slice %261 {offsets = [0, 64], sizes = [8, 32], strides = [1, 1]} : vector<8x96xf32> to vector<8x32xf32>
    %282 = vector.extract_strided_slice %264 {offsets = [0, 64], sizes = [8, 32], strides = [1, 1]} : vector<8x96xf32> to vector<8x32xf32>
    %283 = arith.mulf %272, %282 : vector<8x32xf32>
    %284 = arith.addf %281, %283 : vector<8x32xf32>
    %285 = math.tanh %284 : vector<8x32xf32>
    %cst_72 = arith.constant 1.000000e+00 : f32
    %286 = vector.broadcast %cst_72 : f32 to vector<8x32xf32>
    %287 = arith.subf %286, %280 : vector<8x32xf32>
    %288 = arith.mulf %287, %285 : vector<8x32xf32>
    %289 = arith.mulf %280, %214 : vector<8x32xf32>
    %290 = arith.addf %288, %289 : vector<8x32xf32>
    %c2_i32 = arith.constant 2 : i32
    %291 = vector.broadcast %c2_i32 : i32 to vector<8x1xi32>
    %292 = arith.cmpi sgt, %2, %291 : vector<8x1xi32>
    %c5_i32 = arith.constant 5 : i32
    %293 = vector.broadcast %c5_i32 : i32 to vector<8x1xi32>
    %294 = arith.cmpi sgt, %2, %293 : vector<8x1xi32>
    %cst_73 = arith.constant 0.000000e+00 : f32
    %295 = vector.shape_cast %292 : vector<8x1xi1> to vector<8x1xi1>
    %296 = vector.broadcast %295 : vector<8x1xi1> to vector<8x32xi1>
    %297 = vector.broadcast %cst_73 : f32 to vector<8x32xf32>
    %298 = arith.select %296, %258, %297 : vector<8x32xi1>, vector<8x32xf32>
    %c2 = arith.constant 2 : index
    %c0_74 = arith.constant 0 : index
    %c0_75 = arith.constant 0 : index
    %299 = vector.load %arg35[%c2, %c0_74, %c0_75] : memref<8x8x32xf32, #tpu.memory_space<vmem>>, vector<1x8x32xf32>
    %300 = vector.shape_cast %299 : vector<1x8x32xf32> to vector<8x32xf32>
    %301 = vector.shape_cast %298 : vector<8x32xf32> to vector<1x8x32xf32>
    tpu.vector_store %arg35[%c2, %c0_74, %c0_75], %301 {strides = array<i32>} : memref<8x8x32xf32, #tpu.memory_space<vmem>>, vector<1x8x32xf32>,
    %cst_76 = arith.constant 0.000000e+00 : f32
    %302 = vector.shape_cast %294 : vector<8x1xi1> to vector<8x1xi1>
    %303 = vector.broadcast %302 : vector<8x1xi1> to vector<8x32xi1>
    %304 = vector.broadcast %cst_76 : f32 to vector<8x32xf32>
    %305 = arith.select %303, %290, %304 : vector<8x32xi1>, vector<8x32xf32>
    %c5 = arith.constant 5 : index
    %c0_77 = arith.constant 0 : index
    %c0_78 = arith.constant 0 : index
    %306 = vector.load %arg36[%c5, %c0_77, %c0_78] : memref<8x8x32xf32, #tpu.memory_space<vmem>>, vector<1x8x32xf32>
    %307 = vector.shape_cast %306 : vector<1x8x32xf32> to vector<8x32xf32>
    %308 = vector.shape_cast %305 : vector<8x32xf32> to vector<1x8x32xf32>
    tpu.vector_store %arg36[%c5, %c0_77, %c0_78], %308 {strides = array<i32>} : memref<8x8x32xf32, #tpu.memory_space<vmem>>, vector<1x8x32xf32>,
    %309 = vector.shape_cast %292 : vector<8x1xi1> to vector<8x1xi1>
    %310 = vector.broadcast %309 : vector<8x1xi1> to vector<8x32xi1>
    %311 = arith.select %310, %258, %211 : vector<8x32xi1>, vector<8x32xf32>
    %312 = vector.shape_cast %294 : vector<8x1xi1> to vector<8x1xi1>
    %313 = vector.broadcast %312 : vector<8x1xi1> to vector<8x32xi1>
    %314 = arith.select %313, %290, %214 : vector<8x32xi1>, vector<8x32xf32>
    %315 = vector.extract_strided_slice %0 {offsets = [0, 3], sizes = [8, 1], strides = [1, 1]} : vector<8x8xi32> to vector<8x1xi32>
    %316 = vector.broadcast %315 : vector<8x1xi32> to vector<8x20xi32>
    %317 = arith.cmpi eq, %316, %4 : vector<8x20xi32>
    %318 = arith.extui %317 : vector<8x20xi1> to vector<8x20xi32>
    %319 = arith.sitofp %318 : vector<8x20xi32> to vector<8x20xf32>
    %cst_79 = arith.constant dense<0.000000e+00> : vector<8x16xf32>
    %320 = tpu.matmul %319, %3, %cst_79 {dimension_numbers = #tpu.dot_dimension_numbers<[1], [0], [0], [1], [0, 0, 1, 1], [], []>} : vector<8x20xf32>, vector<20x16xf32>, vector<8x16xf32> -> vector<8x16xf32>
    %321 = vector.extract_strided_slice %0 {offsets = [0, 4], sizes = [8, 1], strides = [1, 1]} : vector<8x8xi32> to vector<8x1xi32>
    %322 = vector.broadcast %321 : vector<8x1xi32> to vector<8x20xi32>
    %323 = arith.cmpi eq, %322, %4 : vector<8x20xi32>
    %324 = arith.extui %323 : vector<8x20xi1> to vector<8x20xi32>
    %325 = arith.sitofp %324 : vector<8x20xi32> to vector<8x20xf32>
    %cst_80 = arith.constant dense<0.000000e+00> : vector<8x16xf32>
    %326 = tpu.matmul %325, %3, %cst_80 {dimension_numbers = #tpu.dot_dimension_numbers<[1], [0], [0], [1], [0, 0, 1, 1], [], []>} : vector<8x20xf32>, vector<20x16xf32>, vector<8x16xf32> -> vector<8x16xf32>
    %cst_81 = arith.constant dense<0.000000e+00> : vector<8x96xf32>
    %327 = tpu.matmul %320, %5, %cst_81 {dimension_numbers = #tpu.dot_dimension_numbers<[1], [0], [0], [1], [0, 0, 1, 1], [], []>} : vector<8x16xf32>, vector<16x96xf32>, vector<8x96xf32> -> vector<8x96xf32>
    %328 = vector.broadcast %7 : vector<1x96xf32> to vector<8x96xf32>
    %329 = arith.addf %327, %328 : vector<8x96xf32>
    %cst_82 = arith.constant dense<0.000000e+00> : vector<8x96xf32>
    %330 = tpu.matmul %311, %6, %cst_82 {dimension_numbers = #tpu.dot_dimension_numbers<[1], [0], [0], [1], [0, 0, 1, 1], [], []>} : vector<8x32xf32>, vector<32x96xf32>, vector<8x96xf32> -> vector<8x96xf32>
    %331 = vector.broadcast %8 : vector<1x96xf32> to vector<8x96xf32>
    %332 = arith.addf %330, %331 : vector<8x96xf32>
    %333 = vector.extract_strided_slice %329 {offsets = [0, 0], sizes = [8, 32], strides = [1, 1]} : vector<8x96xf32> to vector<8x32xf32>
    %334 = vector.extract_strided_slice %332 {offsets = [0, 0], sizes = [8, 32], strides = [1, 1]} : vector<8x96xf32> to vector<8x32xf32>
    %335 = arith.addf %333, %334 : vector<8x32xf32>
    %336 = arith.negf %335 : vector<8x32xf32>
    %337 = math.exp %336 : vector<8x32xf32>
    %cst_83 = arith.constant 1.000000e+00 : f32
    %338 = vector.broadcast %cst_83 : f32 to vector<8x32xf32>
    %339 = arith.addf %338, %337 : vector<8x32xf32>
    %340 = arith.divf %338, %339 : vector<8x32xf32>
    %341 = vector.extract_strided_slice %329 {offsets = [0, 32], sizes = [8, 32], strides = [1, 1]} : vector<8x96xf32> to vector<8x32xf32>
    %342 = vector.extract_strided_slice %332 {offsets = [0, 32], sizes = [8, 32], strides = [1, 1]} : vector<8x96xf32> to vector<8x32xf32>
    %343 = arith.addf %341, %342 : vector<8x32xf32>
    %344 = arith.negf %343 : vector<8x32xf32>
    %345 = math.exp %344 : vector<8x32xf32>
    %cst_84 = arith.constant 1.000000e+00 : f32
    %346 = vector.broadcast %cst_84 : f32 to vector<8x32xf32>
    %347 = arith.addf %346, %345 : vector<8x32xf32>
    %348 = arith.divf %346, %347 : vector<8x32xf32>
    %349 = vector.extract_strided_slice %329 {offsets = [0, 64], sizes = [8, 32], strides = [1, 1]} : vector<8x96xf32> to vector<8x32xf32>
    %350 = vector.extract_strided_slice %332 {offsets = [0, 64], sizes = [8, 32], strides = [1, 1]} : vector<8x96xf32> to vector<8x32xf32>
    %351 = arith.mulf %340, %350 : vector<8x32xf32>
    %352 = arith.addf %349, %351 : vector<8x32xf32>
    %353 = math.tanh %352 : vector<8x32xf32>
    %cst_85 = arith.constant 1.000000e+00 : f32
    %354 = vector.broadcast %cst_85 : f32 to vector<8x32xf32>
    %355 = arith.subf %354, %348 : vector<8x32xf32>
    %356 = arith.mulf %355, %353 : vector<8x32xf32>
    %357 = arith.mulf %348, %311 : vector<8x32xf32>
    %358 = arith.addf %356, %357 : vector<8x32xf32>
    %cst_86 = arith.constant dense<0.000000e+00> : vector<8x96xf32>
    %359 = tpu.matmul %326, %9, %cst_86 {dimension_numbers = #tpu.dot_dimension_numbers<[1], [0], [0], [1], [0, 0, 1, 1], [], []>} : vector<8x16xf32>, vector<16x96xf32>, vector<8x96xf32> -> vector<8x96xf32>
    %360 = vector.broadcast %11 : vector<1x96xf32> to vector<8x96xf32>
    %361 = arith.addf %359, %360 : vector<8x96xf32>
    %cst_87 = arith.constant dense<0.000000e+00> : vector<8x96xf32>
    %362 = tpu.matmul %314, %10, %cst_87 {dimension_numbers = #tpu.dot_dimension_numbers<[1], [0], [0], [1], [0, 0, 1, 1], [], []>} : vector<8x32xf32>, vector<32x96xf32>, vector<8x96xf32> -> vector<8x96xf32>
    %363 = vector.broadcast %12 : vector<1x96xf32> to vector<8x96xf32>
    %364 = arith.addf %362, %363 : vector<8x96xf32>
    %365 = vector.extract_strided_slice %361 {offsets = [0, 0], sizes = [8, 32], strides = [1, 1]} : vector<8x96xf32> to vector<8x32xf32>
    %366 = vector.extract_strided_slice %364 {offsets = [0, 0], sizes = [8, 32], strides = [1, 1]} : vector<8x96xf32> to vector<8x32xf32>
    %367 = arith.addf %365, %366 : vector<8x32xf32>
    %368 = arith.negf %367 : vector<8x32xf32>
    %369 = math.exp %368 : vector<8x32xf32>
    %cst_88 = arith.constant 1.000000e+00 : f32
    %370 = vector.broadcast %cst_88 : f32 to vector<8x32xf32>
    %371 = arith.addf %370, %369 : vector<8x32xf32>
    %372 = arith.divf %370, %371 : vector<8x32xf32>
    %373 = vector.extract_strided_slice %361 {offsets = [0, 32], sizes = [8, 32], strides = [1, 1]} : vector<8x96xf32> to vector<8x32xf32>
    %374 = vector.extract_strided_slice %364 {offsets = [0, 32], sizes = [8, 32], strides = [1, 1]} : vector<8x96xf32> to vector<8x32xf32>
    %375 = arith.addf %373, %374 : vector<8x32xf32>
    %376 = arith.negf %375 : vector<8x32xf32>
    %377 = math.exp %376 : vector<8x32xf32>
    %cst_89 = arith.constant 1.000000e+00 : f32
    %378 = vector.broadcast %cst_89 : f32 to vector<8x32xf32>
    %379 = arith.addf %378, %377 : vector<8x32xf32>
    %380 = arith.divf %378, %379 : vector<8x32xf32>
    %381 = vector.extract_strided_slice %361 {offsets = [0, 64], sizes = [8, 32], strides = [1, 1]} : vector<8x96xf32> to vector<8x32xf32>
    %382 = vector.extract_strided_slice %364 {offsets = [0, 64], sizes = [8, 32], strides = [1, 1]} : vector<8x96xf32> to vector<8x32xf32>
    %383 = arith.mulf %372, %382 : vector<8x32xf32>
    %384 = arith.addf %381, %383 : vector<8x32xf32>
    %385 = math.tanh %384 : vector<8x32xf32>
    %cst_90 = arith.constant 1.000000e+00 : f32
    %386 = vector.broadcast %cst_90 : f32 to vector<8x32xf32>
    %387 = arith.subf %386, %380 : vector<8x32xf32>
    %388 = arith.mulf %387, %385 : vector<8x32xf32>
    %389 = arith.mulf %380, %314 : vector<8x32xf32>
    %390 = arith.addf %388, %389 : vector<8x32xf32>
    %c3_i32 = arith.constant 3 : i32
    %391 = vector.broadcast %c3_i32 : i32 to vector<8x1xi32>
    %392 = arith.cmpi sgt, %2, %391 : vector<8x1xi32>
    %c4_i32 = arith.constant 4 : i32
    %393 = vector.broadcast %c4_i32 : i32 to vector<8x1xi32>
    %394 = arith.cmpi sgt, %2, %393 : vector<8x1xi32>
    %cst_91 = arith.constant 0.000000e+00 : f32
    %395 = vector.shape_cast %392 : vector<8x1xi1> to vector<8x1xi1>
    %396 = vector.broadcast %395 : vector<8x1xi1> to vector<8x32xi1>
    %397 = vector.broadcast %cst_91 : f32 to vector<8x32xf32>
    %398 = arith.select %396, %358, %397 : vector<8x32xi1>, vector<8x32xf32>
    %c3 = arith.constant 3 : index
    %c0_92 = arith.constant 0 : index
    %c0_93 = arith.constant 0 : index
    %399 = vector.load %arg35[%c3, %c0_92, %c0_93] : memref<8x8x32xf32, #tpu.memory_space<vmem>>, vector<1x8x32xf32>
    %400 = vector.shape_cast %399 : vector<1x8x32xf32> to vector<8x32xf32>
    %401 = vector.shape_cast %398 : vector<8x32xf32> to vector<1x8x32xf32>
    tpu.vector_store %arg35[%c3, %c0_92, %c0_93], %401 {strides = array<i32>} : memref<8x8x32xf32, #tpu.memory_space<vmem>>, vector<1x8x32xf32>,
    %cst_94 = arith.constant 0.000000e+00 : f32
    %402 = vector.shape_cast %394 : vector<8x1xi1> to vector<8x1xi1>
    %403 = vector.broadcast %402 : vector<8x1xi1> to vector<8x32xi1>
    %404 = vector.broadcast %cst_94 : f32 to vector<8x32xf32>
    %405 = arith.select %403, %390, %404 : vector<8x32xi1>, vector<8x32xf32>
    %c4 = arith.constant 4 : index
    %c0_95 = arith.constant 0 : index
    %c0_96 = arith.constant 0 : index
    %406 = vector.load %arg36[%c4, %c0_95, %c0_96] : memref<8x8x32xf32, #tpu.memory_space<vmem>>, vector<1x8x32xf32>
    %407 = vector.shape_cast %406 : vector<1x8x32xf32> to vector<8x32xf32>
    %408 = vector.shape_cast %405 : vector<8x32xf32> to vector<1x8x32xf32>
    tpu.vector_store %arg36[%c4, %c0_95, %c0_96], %408 {strides = array<i32>} : memref<8x8x32xf32, #tpu.memory_space<vmem>>, vector<1x8x32xf32>,
    %409 = vector.shape_cast %392 : vector<8x1xi1> to vector<8x1xi1>
    %410 = vector.broadcast %409 : vector<8x1xi1> to vector<8x32xi1>
    %411 = arith.select %410, %358, %311 : vector<8x32xi1>, vector<8x32xf32>
    %412 = vector.shape_cast %394 : vector<8x1xi1> to vector<8x1xi1>
    %413 = vector.broadcast %412 : vector<8x1xi1> to vector<8x32xi1>
    %414 = arith.select %413, %390, %314 : vector<8x32xi1>, vector<8x32xf32>
    %415 = vector.extract_strided_slice %0 {offsets = [0, 4], sizes = [8, 1], strides = [1, 1]} : vector<8x8xi32> to vector<8x1xi32>
    %416 = vector.broadcast %415 : vector<8x1xi32> to vector<8x20xi32>
    %417 = arith.cmpi eq, %416, %4 : vector<8x20xi32>
    %418 = arith.extui %417 : vector<8x20xi1> to vector<8x20xi32>
    %419 = arith.sitofp %418 : vector<8x20xi32> to vector<8x20xf32>
    %cst_97 = arith.constant dense<0.000000e+00> : vector<8x16xf32>
    %420 = tpu.matmul %419, %3, %cst_97 {dimension_numbers = #tpu.dot_dimension_numbers<[1], [0], [0], [1], [0, 0, 1, 1], [], []>} : vector<8x20xf32>, vector<20x16xf32>, vector<8x16xf32> -> vector<8x16xf32>
    %421 = vector.extract_strided_slice %0 {offsets = [0, 3], sizes = [8, 1], strides = [1, 1]} : vector<8x8xi32> to vector<8x1xi32>
    %422 = vector.broadcast %421 : vector<8x1xi32> to vector<8x20xi32>
    %423 = arith.cmpi eq, %422, %4 : vector<8x20xi32>
    %424 = arith.extui %423 : vector<8x20xi1> to vector<8x20xi32>
    %425 = arith.sitofp %424 : vector<8x20xi32> to vector<8x20xf32>
    %cst_98 = arith.constant dense<0.000000e+00> : vector<8x16xf32>
    %426 = tpu.matmul %425, %3, %cst_98 {dimension_numbers = #tpu.dot_dimension_numbers<[1], [0], [0], [1], [0, 0, 1, 1], [], []>} : vector<8x20xf32>, vector<20x16xf32>, vector<8x16xf32> -> vector<8x16xf32>
    %cst_99 = arith.constant dense<0.000000e+00> : vector<8x96xf32>
    %427 = tpu.matmul %420, %5, %cst_99 {dimension_numbers = #tpu.dot_dimension_numbers<[1], [0], [0], [1], [0, 0, 1, 1], [], []>} : vector<8x16xf32>, vector<16x96xf32>, vector<8x96xf32> -> vector<8x96xf32>
    %428 = vector.broadcast %7 : vector<1x96xf32> to vector<8x96xf32>
    %429 = arith.addf %427, %428 : vector<8x96xf32>
    %cst_100 = arith.constant dense<0.000000e+00> : vector<8x96xf32>
    %430 = tpu.matmul %411, %6, %cst_100 {dimension_numbers = #tpu.dot_dimension_numbers<[1], [0], [0], [1], [0, 0, 1, 1], [], []>} : vector<8x32xf32>, vector<32x96xf32>, vector<8x96xf32> -> vector<8x96xf32>
    %431 = vector.broadcast %8 : vector<1x96xf32> to vector<8x96xf32>
    %432 = arith.addf %430, %431 : vector<8x96xf32>
    %433 = vector.extract_strided_slice %429 {offsets = [0, 0], sizes = [8, 32], strides = [1, 1]} : vector<8x96xf32> to vector<8x32xf32>
    %434 = vector.extract_strided_slice %432 {offsets = [0, 0], sizes = [8, 32], strides = [1, 1]} : vector<8x96xf32> to vector<8x32xf32>
    %435 = arith.addf %433, %434 : vector<8x32xf32>
    %436 = arith.negf %435 : vector<8x32xf32>
    %437 = math.exp %436 : vector<8x32xf32>
    %cst_101 = arith.constant 1.000000e+00 : f32
    %438 = vector.broadcast %cst_101 : f32 to vector<8x32xf32>
    %439 = arith.addf %438, %437 : vector<8x32xf32>
    %440 = arith.divf %438, %439 : vector<8x32xf32>
    %441 = vector.extract_strided_slice %429 {offsets = [0, 32], sizes = [8, 32], strides = [1, 1]} : vector<8x96xf32> to vector<8x32xf32>
    %442 = vector.extract_strided_slice %432 {offsets = [0, 32], sizes = [8, 32], strides = [1, 1]} : vector<8x96xf32> to vector<8x32xf32>
    %443 = arith.addf %441, %442 : vector<8x32xf32>
    %444 = arith.negf %443 : vector<8x32xf32>
    %445 = math.exp %444 : vector<8x32xf32>
    %cst_102 = arith.constant 1.000000e+00 : f32
    %446 = vector.broadcast %cst_102 : f32 to vector<8x32xf32>
    %447 = arith.addf %446, %445 : vector<8x32xf32>
    %448 = arith.divf %446, %447 : vector<8x32xf32>
    %449 = vector.extract_strided_slice %429 {offsets = [0, 64], sizes = [8, 32], strides = [1, 1]} : vector<8x96xf32> to vector<8x32xf32>
    %450 = vector.extract_strided_slice %432 {offsets = [0, 64], sizes = [8, 32], strides = [1, 1]} : vector<8x96xf32> to vector<8x32xf32>
    %451 = arith.mulf %440, %450 : vector<8x32xf32>
    %452 = arith.addf %449, %451 : vector<8x32xf32>
    %453 = math.tanh %452 : vector<8x32xf32>
    %cst_103 = arith.constant 1.000000e+00 : f32
    %454 = vector.broadcast %cst_103 : f32 to vector<8x32xf32>
    %455 = arith.subf %454, %448 : vector<8x32xf32>
    %456 = arith.mulf %455, %453 : vector<8x32xf32>
    %457 = arith.mulf %448, %411 : vector<8x32xf32>
    %458 = arith.addf %456, %457 : vector<8x32xf32>
    %cst_104 = arith.constant dense<0.000000e+00> : vector<8x96xf32>
    %459 = tpu.matmul %426, %9, %cst_104 {dimension_numbers = #tpu.dot_dimension_numbers<[1], [0], [0], [1], [0, 0, 1, 1], [], []>} : vector<8x16xf32>, vector<16x96xf32>, vector<8x96xf32> -> vector<8x96xf32>
    %460 = vector.broadcast %11 : vector<1x96xf32> to vector<8x96xf32>
    %461 = arith.addf %459, %460 : vector<8x96xf32>
    %cst_105 = arith.constant dense<0.000000e+00> : vector<8x96xf32>
    %462 = tpu.matmul %414, %10, %cst_105 {dimension_numbers = #tpu.dot_dimension_numbers<[1], [0], [0], [1], [0, 0, 1, 1], [], []>} : vector<8x32xf32>, vector<32x96xf32>, vector<8x96xf32> -> vector<8x96xf32>
    %463 = vector.broadcast %12 : vector<1x96xf32> to vector<8x96xf32>
    %464 = arith.addf %462, %463 : vector<8x96xf32>
    %465 = vector.extract_strided_slice %461 {offsets = [0, 0], sizes = [8, 32], strides = [1, 1]} : vector<8x96xf32> to vector<8x32xf32>
    %466 = vector.extract_strided_slice %464 {offsets = [0, 0], sizes = [8, 32], strides = [1, 1]} : vector<8x96xf32> to vector<8x32xf32>
    %467 = arith.addf %465, %466 : vector<8x32xf32>
    %468 = arith.negf %467 : vector<8x32xf32>
    %469 = math.exp %468 : vector<8x32xf32>
    %cst_106 = arith.constant 1.000000e+00 : f32
    %470 = vector.broadcast %cst_106 : f32 to vector<8x32xf32>
    %471 = arith.addf %470, %469 : vector<8x32xf32>
    %472 = arith.divf %470, %471 : vector<8x32xf32>
    %473 = vector.extract_strided_slice %461 {offsets = [0, 32], sizes = [8, 32], strides = [1, 1]} : vector<8x96xf32> to vector<8x32xf32>
    %474 = vector.extract_strided_slice %464 {offsets = [0, 32], sizes = [8, 32], strides = [1, 1]} : vector<8x96xf32> to vector<8x32xf32>
    %475 = arith.addf %473, %474 : vector<8x32xf32>
    %476 = arith.negf %475 : vector<8x32xf32>
    %477 = math.exp %476 : vector<8x32xf32>
    %cst_107 = arith.constant 1.000000e+00 : f32
    %478 = vector.broadcast %cst_107 : f32 to vector<8x32xf32>
    %479 = arith.addf %478, %477 : vector<8x32xf32>
    %480 = arith.divf %478, %479 : vector<8x32xf32>
    %481 = vector.extract_strided_slice %461 {offsets = [0, 64], sizes = [8, 32], strides = [1, 1]} : vector<8x96xf32> to vector<8x32xf32>
    %482 = vector.extract_strided_slice %464 {offsets = [0, 64], sizes = [8, 32], strides = [1, 1]} : vector<8x96xf32> to vector<8x32xf32>
    %483 = arith.mulf %472, %482 : vector<8x32xf32>
    %484 = arith.addf %481, %483 : vector<8x32xf32>
    %485 = math.tanh %484 : vector<8x32xf32>
    %cst_108 = arith.constant 1.000000e+00 : f32
    %486 = vector.broadcast %cst_108 : f32 to vector<8x32xf32>
    %487 = arith.subf %486, %480 : vector<8x32xf32>
    %488 = arith.mulf %487, %485 : vector<8x32xf32>
    %489 = arith.mulf %480, %414 : vector<8x32xf32>
    %490 = arith.addf %488, %489 : vector<8x32xf32>
    %c4_i32_109 = arith.constant 4 : i32
    %491 = vector.broadcast %c4_i32_109 : i32 to vector<8x1xi32>
    %492 = arith.cmpi sgt, %2, %491 : vector<8x1xi32>
    %c3_i32_110 = arith.constant 3 : i32
    %493 = vector.broadcast %c3_i32_110 : i32 to vector<8x1xi32>
    %494 = arith.cmpi sgt, %2, %493 : vector<8x1xi32>
    %cst_111 = arith.constant 0.000000e+00 : f32
    %495 = vector.shape_cast %492 : vector<8x1xi1> to vector<8x1xi1>
    %496 = vector.broadcast %495 : vector<8x1xi1> to vector<8x32xi1>
    %497 = vector.broadcast %cst_111 : f32 to vector<8x32xf32>
    %498 = arith.select %496, %458, %497 : vector<8x32xi1>, vector<8x32xf32>
    %c4_112 = arith.constant 4 : index
    %c0_113 = arith.constant 0 : index
    %c0_114 = arith.constant 0 : index
    %499 = vector.load %arg35[%c4_112, %c0_113, %c0_114] : memref<8x8x32xf32, #tpu.memory_space<vmem>>, vector<1x8x32xf32>
    %500 = vector.shape_cast %499 : vector<1x8x32xf32> to vector<8x32xf32>
    %501 = vector.shape_cast %498 : vector<8x32xf32> to vector<1x8x32xf32>
    tpu.vector_store %arg35[%c4_112, %c0_113, %c0_114], %501 {strides = array<i32>} : memref<8x8x32xf32, #tpu.memory_space<vmem>>, vector<1x8x32xf32>,
    %cst_115 = arith.constant 0.000000e+00 : f32
    %502 = vector.shape_cast %494 : vector<8x1xi1> to vector<8x1xi1>
    %503 = vector.broadcast %502 : vector<8x1xi1> to vector<8x32xi1>
    %504 = vector.broadcast %cst_115 : f32 to vector<8x32xf32>
    %505 = arith.select %503, %490, %504 : vector<8x32xi1>, vector<8x32xf32>
    %c3_116 = arith.constant 3 : index
    %c0_117 = arith.constant 0 : index
    %c0_118 = arith.constant 0 : index
    %506 = vector.load %arg36[%c3_116, %c0_117, %c0_118] : memref<8x8x32xf32, #tpu.memory_space<vmem>>, vector<1x8x32xf32>
    %507 = vector.shape_cast %506 : vector<1x8x32xf32> to vector<8x32xf32>
    %508 = vector.shape_cast %505 : vector<8x32xf32> to vector<1x8x32xf32>
    tpu.vector_store %arg36[%c3_116, %c0_117, %c0_118], %508 {strides = array<i32>} : memref<8x8x32xf32, #tpu.memory_space<vmem>>, vector<1x8x32xf32>,
    %509 = vector.shape_cast %492 : vector<8x1xi1> to vector<8x1xi1>
    %510 = vector.broadcast %509 : vector<8x1xi1> to vector<8x32xi1>
    %511 = arith.select %510, %458, %411 : vector<8x32xi1>, vector<8x32xf32>
    %512 = vector.shape_cast %494 : vector<8x1xi1> to vector<8x1xi1>
    %513 = vector.broadcast %512 : vector<8x1xi1> to vector<8x32xi1>
    %514 = arith.select %513, %490, %414 : vector<8x32xi1>, vector<8x32xf32>
    %515 = vector.extract_strided_slice %0 {offsets = [0, 5], sizes = [8, 1], strides = [1, 1]} : vector<8x8xi32> to vector<8x1xi32>
    %516 = vector.broadcast %515 : vector<8x1xi32> to vector<8x20xi32>
    %517 = arith.cmpi eq, %516, %4 : vector<8x20xi32>
    %518 = arith.extui %517 : vector<8x20xi1> to vector<8x20xi32>
    %519 = arith.sitofp %518 : vector<8x20xi32> to vector<8x20xf32>
    %cst_119 = arith.constant dense<0.000000e+00> : vector<8x16xf32>
    %520 = tpu.matmul %519, %3, %cst_119 {dimension_numbers = #tpu.dot_dimension_numbers<[1], [0], [0], [1], [0, 0, 1, 1], [], []>} : vector<8x20xf32>, vector<20x16xf32>, vector<8x16xf32> -> vector<8x16xf32>
    %521 = vector.extract_strided_slice %0 {offsets = [0, 2], sizes = [8, 1], strides = [1, 1]} : vector<8x8xi32> to vector<8x1xi32>
    %522 = vector.broadcast %521 : vector<8x1xi32> to vector<8x20xi32>
    %523 = arith.cmpi eq, %522, %4 : vector<8x20xi32>
    %524 = arith.extui %523 : vector<8x20xi1> to vector<8x20xi32>
    %525 = arith.sitofp %524 : vector<8x20xi32> to vector<8x20xf32>
    %cst_120 = arith.constant dense<0.000000e+00> : vector<8x16xf32>
    %526 = tpu.matmul %525, %3, %cst_120 {dimension_numbers = #tpu.dot_dimension_numbers<[1], [0], [0], [1], [0, 0, 1, 1], [], []>} : vector<8x20xf32>, vector<20x16xf32>, vector<8x16xf32> -> vector<8x16xf32>
    %cst_121 = arith.constant dense<0.000000e+00> : vector<8x96xf32>
    %527 = tpu.matmul %520, %5, %cst_121 {dimension_numbers = #tpu.dot_dimension_numbers<[1], [0], [0], [1], [0, 0, 1, 1], [], []>} : vector<8x16xf32>, vector<16x96xf32>, vector<8x96xf32> -> vector<8x96xf32>
    %528 = vector.broadcast %7 : vector<1x96xf32> to vector<8x96xf32>
    %529 = arith.addf %527, %528 : vector<8x96xf32>
    %cst_122 = arith.constant dense<0.000000e+00> : vector<8x96xf32>
    %530 = tpu.matmul %511, %6, %cst_122 {dimension_numbers = #tpu.dot_dimension_numbers<[1], [0], [0], [1], [0, 0, 1, 1], [], []>} : vector<8x32xf32>, vector<32x96xf32>, vector<8x96xf32> -> vector<8x96xf32>
    %531 = vector.broadcast %8 : vector<1x96xf32> to vector<8x96xf32>
    %532 = arith.addf %530, %531 : vector<8x96xf32>
    %533 = vector.extract_strided_slice %529 {offsets = [0, 0], sizes = [8, 32], strides = [1, 1]} : vector<8x96xf32> to vector<8x32xf32>
    %534 = vector.extract_strided_slice %532 {offsets = [0, 0], sizes = [8, 32], strides = [1, 1]} : vector<8x96xf32> to vector<8x32xf32>
    %535 = arith.addf %533, %534 : vector<8x32xf32>
    %536 = arith.negf %535 : vector<8x32xf32>
    %537 = math.exp %536 : vector<8x32xf32>
    %cst_123 = arith.constant 1.000000e+00 : f32
    %538 = vector.broadcast %cst_123 : f32 to vector<8x32xf32>
    %539 = arith.addf %538, %537 : vector<8x32xf32>
    %540 = arith.divf %538, %539 : vector<8x32xf32>
    %541 = vector.extract_strided_slice %529 {offsets = [0, 32], sizes = [8, 32], strides = [1, 1]} : vector<8x96xf32> to vector<8x32xf32>
    %542 = vector.extract_strided_slice %532 {offsets = [0, 32], sizes = [8, 32], strides = [1, 1]} : vector<8x96xf32> to vector<8x32xf32>
    %543 = arith.addf %541, %542 : vector<8x32xf32>
    %544 = arith.negf %543 : vector<8x32xf32>
    %545 = math.exp %544 : vector<8x32xf32>
    %cst_124 = arith.constant 1.000000e+00 : f32
    %546 = vector.broadcast %cst_124 : f32 to vector<8x32xf32>
    %547 = arith.addf %546, %545 : vector<8x32xf32>
    %548 = arith.divf %546, %547 : vector<8x32xf32>
    %549 = vector.extract_strided_slice %529 {offsets = [0, 64], sizes = [8, 32], strides = [1, 1]} : vector<8x96xf32> to vector<8x32xf32>
    %550 = vector.extract_strided_slice %532 {offsets = [0, 64], sizes = [8, 32], strides = [1, 1]} : vector<8x96xf32> to vector<8x32xf32>
    %551 = arith.mulf %540, %550 : vector<8x32xf32>
    %552 = arith.addf %549, %551 : vector<8x32xf32>
    %553 = math.tanh %552 : vector<8x32xf32>
    %cst_125 = arith.constant 1.000000e+00 : f32
    %554 = vector.broadcast %cst_125 : f32 to vector<8x32xf32>
    %555 = arith.subf %554, %548 : vector<8x32xf32>
    %556 = arith.mulf %555, %553 : vector<8x32xf32>
    %557 = arith.mulf %548, %511 : vector<8x32xf32>
    %558 = arith.addf %556, %557 : vector<8x32xf32>
    %cst_126 = arith.constant dense<0.000000e+00> : vector<8x96xf32>
    %559 = tpu.matmul %526, %9, %cst_126 {dimension_numbers = #tpu.dot_dimension_numbers<[1], [0], [0], [1], [0, 0, 1, 1], [], []>} : vector<8x16xf32>, vector<16x96xf32>, vector<8x96xf32> -> vector<8x96xf32>
    %560 = vector.broadcast %11 : vector<1x96xf32> to vector<8x96xf32>
    %561 = arith.addf %559, %560 : vector<8x96xf32>
    %cst_127 = arith.constant dense<0.000000e+00> : vector<8x96xf32>
    %562 = tpu.matmul %514, %10, %cst_127 {dimension_numbers = #tpu.dot_dimension_numbers<[1], [0], [0], [1], [0, 0, 1, 1], [], []>} : vector<8x32xf32>, vector<32x96xf32>, vector<8x96xf32> -> vector<8x96xf32>
    %563 = vector.broadcast %12 : vector<1x96xf32> to vector<8x96xf32>
    %564 = arith.addf %562, %563 : vector<8x96xf32>
    %565 = vector.extract_strided_slice %561 {offsets = [0, 0], sizes = [8, 32], strides = [1, 1]} : vector<8x96xf32> to vector<8x32xf32>
    %566 = vector.extract_strided_slice %564 {offsets = [0, 0], sizes = [8, 32], strides = [1, 1]} : vector<8x96xf32> to vector<8x32xf32>
    %567 = arith.addf %565, %566 : vector<8x32xf32>
    %568 = arith.negf %567 : vector<8x32xf32>
    %569 = math.exp %568 : vector<8x32xf32>
    %cst_128 = arith.constant 1.000000e+00 : f32
    %570 = vector.broadcast %cst_128 : f32 to vector<8x32xf32>
    %571 = arith.addf %570, %569 : vector<8x32xf32>
    %572 = arith.divf %570, %571 : vector<8x32xf32>
    %573 = vector.extract_strided_slice %561 {offsets = [0, 32], sizes = [8, 32], strides = [1, 1]} : vector<8x96xf32> to vector<8x32xf32>
    %574 = vector.extract_strided_slice %564 {offsets = [0, 32], sizes = [8, 32], strides = [1, 1]} : vector<8x96xf32> to vector<8x32xf32>
    %575 = arith.addf %573, %574 : vector<8x32xf32>
    %576 = arith.negf %575 : vector<8x32xf32>
    %577 = math.exp %576 : vector<8x32xf32>
    %cst_129 = arith.constant 1.000000e+00 : f32
    %578 = vector.broadcast %cst_129 : f32 to vector<8x32xf32>
    %579 = arith.addf %578, %577 : vector<8x32xf32>
    %580 = arith.divf %578, %579 : vector<8x32xf32>
    %581 = vector.extract_strided_slice %561 {offsets = [0, 64], sizes = [8, 32], strides = [1, 1]} : vector<8x96xf32> to vector<8x32xf32>
    %582 = vector.extract_strided_slice %564 {offsets = [0, 64], sizes = [8, 32], strides = [1, 1]} : vector<8x96xf32> to vector<8x32xf32>
    %583 = arith.mulf %572, %582 : vector<8x32xf32>
    %584 = arith.addf %581, %583 : vector<8x32xf32>
    %585 = math.tanh %584 : vector<8x32xf32>
    %cst_130 = arith.constant 1.000000e+00 : f32
    %586 = vector.broadcast %cst_130 : f32 to vector<8x32xf32>
    %587 = arith.subf %586, %580 : vector<8x32xf32>
    %588 = arith.mulf %587, %585 : vector<8x32xf32>
    %589 = arith.mulf %580, %514 : vector<8x32xf32>
    %590 = arith.addf %588, %589 : vector<8x32xf32>
    %c5_i32_131 = arith.constant 5 : i32
    %591 = vector.broadcast %c5_i32_131 : i32 to vector<8x1xi32>
    %592 = arith.cmpi sgt, %2, %591 : vector<8x1xi32>
    %c2_i32_132 = arith.constant 2 : i32
    %593 = vector.broadcast %c2_i32_132 : i32 to vector<8x1xi32>
    %594 = arith.cmpi sgt, %2, %593 : vector<8x1xi32>
    %cst_133 = arith.constant 0.000000e+00 : f32
    %595 = vector.shape_cast %592 : vector<8x1xi1> to vector<8x1xi1>
    %596 = vector.broadcast %595 : vector<8x1xi1> to vector<8x32xi1>
    %597 = vector.broadcast %cst_133 : f32 to vector<8x32xf32>
    %598 = arith.select %596, %558, %597 : vector<8x32xi1>, vector<8x32xf32>
    %c5_134 = arith.constant 5 : index
    %c0_135 = arith.constant 0 : index
    %c0_136 = arith.constant 0 : index
    %599 = vector.load %arg35[%c5_134, %c0_135, %c0_136] : memref<8x8x32xf32, #tpu.memory_space<vmem>>, vector<1x8x32xf32>
    %600 = vector.shape_cast %599 : vector<1x8x32xf32> to vector<8x32xf32>
    %601 = vector.shape_cast %598 : vector<8x32xf32> to vector<1x8x32xf32>
    tpu.vector_store %arg35[%c5_134, %c0_135, %c0_136], %601 {strides = array<i32>} : memref<8x8x32xf32, #tpu.memory_space<vmem>>, vector<1x8x32xf32>,
    %cst_137 = arith.constant 0.000000e+00 : f32
    %602 = vector.shape_cast %594 : vector<8x1xi1> to vector<8x1xi1>
    %603 = vector.broadcast %602 : vector<8x1xi1> to vector<8x32xi1>
    %604 = vector.broadcast %cst_137 : f32 to vector<8x32xf32>
    %605 = arith.select %603, %590, %604 : vector<8x32xi1>, vector<8x32xf32>
    %c2_138 = arith.constant 2 : index
    %c0_139 = arith.constant 0 : index
    %c0_140 = arith.constant 0 : index
    %606 = vector.load %arg36[%c2_138, %c0_139, %c0_140] : memref<8x8x32xf32, #tpu.memory_space<vmem>>, vector<1x8x32xf32>
    %607 = vector.shape_cast %606 : vector<1x8x32xf32> to vector<8x32xf32>
    %608 = vector.shape_cast %605 : vector<8x32xf32> to vector<1x8x32xf32>
    tpu.vector_store %arg36[%c2_138, %c0_139, %c0_140], %608 {strides = array<i32>} : memref<8x8x32xf32, #tpu.memory_space<vmem>>, vector<1x8x32xf32>,
    %609 = vector.shape_cast %592 : vector<8x1xi1> to vector<8x1xi1>
    %610 = vector.broadcast %609 : vector<8x1xi1> to vector<8x32xi1>
    %611 = arith.select %610, %558, %511 : vector<8x32xi1>, vector<8x32xf32>
    %612 = vector.shape_cast %594 : vector<8x1xi1> to vector<8x1xi1>
    %613 = vector.broadcast %612 : vector<8x1xi1> to vector<8x32xi1>
    %614 = arith.select %613, %590, %514 : vector<8x32xi1>, vector<8x32xf32>
    %615 = vector.extract_strided_slice %0 {offsets = [0, 6], sizes = [8, 1], strides = [1, 1]} : vector<8x8xi32> to vector<8x1xi32>
    %616 = vector.broadcast %615 : vector<8x1xi32> to vector<8x20xi32>
    %617 = arith.cmpi eq, %616, %4 : vector<8x20xi32>
    %618 = arith.extui %617 : vector<8x20xi1> to vector<8x20xi32>
    %619 = arith.sitofp %618 : vector<8x20xi32> to vector<8x20xf32>
    %cst_141 = arith.constant dense<0.000000e+00> : vector<8x16xf32>
    %620 = tpu.matmul %619, %3, %cst_141 {dimension_numbers = #tpu.dot_dimension_numbers<[1], [0], [0], [1], [0, 0, 1, 1], [], []>} : vector<8x20xf32>, vector<20x16xf32>, vector<8x16xf32> -> vector<8x16xf32>
    %621 = vector.extract_strided_slice %0 {offsets = [0, 1], sizes = [8, 1], strides = [1, 1]} : vector<8x8xi32> to vector<8x1xi32>
    %622 = vector.broadcast %621 : vector<8x1xi32> to vector<8x20xi32>
    %623 = arith.cmpi eq, %622, %4 : vector<8x20xi32>
    %624 = arith.extui %623 : vector<8x20xi1> to vector<8x20xi32>
    %625 = arith.sitofp %624 : vector<8x20xi32> to vector<8x20xf32>
    %cst_142 = arith.constant dense<0.000000e+00> : vector<8x16xf32>
    %626 = tpu.matmul %625, %3, %cst_142 {dimension_numbers = #tpu.dot_dimension_numbers<[1], [0], [0], [1], [0, 0, 1, 1], [], []>} : vector<8x20xf32>, vector<20x16xf32>, vector<8x16xf32> -> vector<8x16xf32>
    %cst_143 = arith.constant dense<0.000000e+00> : vector<8x96xf32>
    %627 = tpu.matmul %620, %5, %cst_143 {dimension_numbers = #tpu.dot_dimension_numbers<[1], [0], [0], [1], [0, 0, 1, 1], [], []>} : vector<8x16xf32>, vector<16x96xf32>, vector<8x96xf32> -> vector<8x96xf32>
    %628 = vector.broadcast %7 : vector<1x96xf32> to vector<8x96xf32>
    %629 = arith.addf %627, %628 : vector<8x96xf32>
    %cst_144 = arith.constant dense<0.000000e+00> : vector<8x96xf32>
    %630 = tpu.matmul %611, %6, %cst_144 {dimension_numbers = #tpu.dot_dimension_numbers<[1], [0], [0], [1], [0, 0, 1, 1], [], []>} : vector<8x32xf32>, vector<32x96xf32>, vector<8x96xf32> -> vector<8x96xf32>
    %631 = vector.broadcast %8 : vector<1x96xf32> to vector<8x96xf32>
    %632 = arith.addf %630, %631 : vector<8x96xf32>
    %633 = vector.extract_strided_slice %629 {offsets = [0, 0], sizes = [8, 32], strides = [1, 1]} : vector<8x96xf32> to vector<8x32xf32>
    %634 = vector.extract_strided_slice %632 {offsets = [0, 0], sizes = [8, 32], strides = [1, 1]} : vector<8x96xf32> to vector<8x32xf32>
    %635 = arith.addf %633, %634 : vector<8x32xf32>
    %636 = arith.negf %635 : vector<8x32xf32>
    %637 = math.exp %636 : vector<8x32xf32>
    %cst_145 = arith.constant 1.000000e+00 : f32
    %638 = vector.broadcast %cst_145 : f32 to vector<8x32xf32>
    %639 = arith.addf %638, %637 : vector<8x32xf32>
    %640 = arith.divf %638, %639 : vector<8x32xf32>
    %641 = vector.extract_strided_slice %629 {offsets = [0, 32], sizes = [8, 32], strides = [1, 1]} : vector<8x96xf32> to vector<8x32xf32>
    %642 = vector.extract_strided_slice %632 {offsets = [0, 32], sizes = [8, 32], strides = [1, 1]} : vector<8x96xf32> to vector<8x32xf32>
    %643 = arith.addf %641, %642 : vector<8x32xf32>
    %644 = arith.negf %643 : vector<8x32xf32>
    %645 = math.exp %644 : vector<8x32xf32>
    %cst_146 = arith.constant 1.000000e+00 : f32
    %646 = vector.broadcast %cst_146 : f32 to vector<8x32xf32>
    %647 = arith.addf %646, %645 : vector<8x32xf32>
    %648 = arith.divf %646, %647 : vector<8x32xf32>
    %649 = vector.extract_strided_slice %629 {offsets = [0, 64], sizes = [8, 32], strides = [1, 1]} : vector<8x96xf32> to vector<8x32xf32>
    %650 = vector.extract_strided_slice %632 {offsets = [0, 64], sizes = [8, 32], strides = [1, 1]} : vector<8x96xf32> to vector<8x32xf32>
    %651 = arith.mulf %640, %650 : vector<8x32xf32>
    %652 = arith.addf %649, %651 : vector<8x32xf32>
    %653 = math.tanh %652 : vector<8x32xf32>
    %cst_147 = arith.constant 1.000000e+00 : f32
    %654 = vector.broadcast %cst_147 : f32 to vector<8x32xf32>
    %655 = arith.subf %654, %648 : vector<8x32xf32>
    %656 = arith.mulf %655, %653 : vector<8x32xf32>
    %657 = arith.mulf %648, %611 : vector<8x32xf32>
    %658 = arith.addf %656, %657 : vector<8x32xf32>
    %cst_148 = arith.constant dense<0.000000e+00> : vector<8x96xf32>
    %659 = tpu.matmul %626, %9, %cst_148 {dimension_numbers = #tpu.dot_dimension_numbers<[1], [0], [0], [1], [0, 0, 1, 1], [], []>} : vector<8x16xf32>, vector<16x96xf32>, vector<8x96xf32> -> vector<8x96xf32>
    %660 = vector.broadcast %11 : vector<1x96xf32> to vector<8x96xf32>
    %661 = arith.addf %659, %660 : vector<8x96xf32>
    %cst_149 = arith.constant dense<0.000000e+00> : vector<8x96xf32>
    %662 = tpu.matmul %614, %10, %cst_149 {dimension_numbers = #tpu.dot_dimension_numbers<[1], [0], [0], [1], [0, 0, 1, 1], [], []>} : vector<8x32xf32>, vector<32x96xf32>, vector<8x96xf32> -> vector<8x96xf32>
    %663 = vector.broadcast %12 : vector<1x96xf32> to vector<8x96xf32>
    %664 = arith.addf %662, %663 : vector<8x96xf32>
    %665 = vector.extract_strided_slice %661 {offsets = [0, 0], sizes = [8, 32], strides = [1, 1]} : vector<8x96xf32> to vector<8x32xf32>
    %666 = vector.extract_strided_slice %664 {offsets = [0, 0], sizes = [8, 32], strides = [1, 1]} : vector<8x96xf32> to vector<8x32xf32>
    %667 = arith.addf %665, %666 : vector<8x32xf32>
    %668 = arith.negf %667 : vector<8x32xf32>
    %669 = math.exp %668 : vector<8x32xf32>
    %cst_150 = arith.constant 1.000000e+00 : f32
    %670 = vector.broadcast %cst_150 : f32 to vector<8x32xf32>
    %671 = arith.addf %670, %669 : vector<8x32xf32>
    %672 = arith.divf %670, %671 : vector<8x32xf32>
    %673 = vector.extract_strided_slice %661 {offsets = [0, 32], sizes = [8, 32], strides = [1, 1]} : vector<8x96xf32> to vector<8x32xf32>
    %674 = vector.extract_strided_slice %664 {offsets = [0, 32], sizes = [8, 32], strides = [1, 1]} : vector<8x96xf32> to vector<8x32xf32>
    %675 = arith.addf %673, %674 : vector<8x32xf32>
    %676 = arith.negf %675 : vector<8x32xf32>
    %677 = math.exp %676 : vector<8x32xf32>
    %cst_151 = arith.constant 1.000000e+00 : f32
    %678 = vector.broadcast %cst_151 : f32 to vector<8x32xf32>
    %679 = arith.addf %678, %677 : vector<8x32xf32>
    %680 = arith.divf %678, %679 : vector<8x32xf32>
    %681 = vector.extract_strided_slice %661 {offsets = [0, 64], sizes = [8, 32], strides = [1, 1]} : vector<8x96xf32> to vector<8x32xf32>
    %682 = vector.extract_strided_slice %664 {offsets = [0, 64], sizes = [8, 32], strides = [1, 1]} : vector<8x96xf32> to vector<8x32xf32>
    %683 = arith.mulf %672, %682 : vector<8x32xf32>
    %684 = arith.addf %681, %683 : vector<8x32xf32>
    %685 = math.tanh %684 : vector<8x32xf32>
    %cst_152 = arith.constant 1.000000e+00 : f32
    %686 = vector.broadcast %cst_152 : f32 to vector<8x32xf32>
    %687 = arith.subf %686, %680 : vector<8x32xf32>
    %688 = arith.mulf %687, %685 : vector<8x32xf32>
    %689 = arith.mulf %680, %614 : vector<8x32xf32>
    %690 = arith.addf %688, %689 : vector<8x32xf32>
    %c6_i32_153 = arith.constant 6 : i32
    %691 = vector.broadcast %c6_i32_153 : i32 to vector<8x1xi32>
    %692 = arith.cmpi sgt, %2, %691 : vector<8x1xi32>
    %c1_i32_154 = arith.constant 1 : i32
    %693 = vector.broadcast %c1_i32_154 : i32 to vector<8x1xi32>
    %694 = arith.cmpi sgt, %2, %693 : vector<8x1xi32>
    %cst_155 = arith.constant 0.000000e+00 : f32
    %695 = vector.shape_cast %692 : vector<8x1xi1> to vector<8x1xi1>
    %696 = vector.broadcast %695 : vector<8x1xi1> to vector<8x32xi1>
    %697 = vector.broadcast %cst_155 : f32 to vector<8x32xf32>
    %698 = arith.select %696, %658, %697 : vector<8x32xi1>, vector<8x32xf32>
    %c6_156 = arith.constant 6 : index
    %c0_157 = arith.constant 0 : index
    %c0_158 = arith.constant 0 : index
    %699 = vector.load %arg35[%c6_156, %c0_157, %c0_158] : memref<8x8x32xf32, #tpu.memory_space<vmem>>, vector<1x8x32xf32>
    %700 = vector.shape_cast %699 : vector<1x8x32xf32> to vector<8x32xf32>
    %701 = vector.shape_cast %698 : vector<8x32xf32> to vector<1x8x32xf32>
    tpu.vector_store %arg35[%c6_156, %c0_157, %c0_158], %701 {strides = array<i32>} : memref<8x8x32xf32, #tpu.memory_space<vmem>>, vector<1x8x32xf32>,
    %cst_159 = arith.constant 0.000000e+00 : f32
    %702 = vector.shape_cast %694 : vector<8x1xi1> to vector<8x1xi1>
    %703 = vector.broadcast %702 : vector<8x1xi1> to vector<8x32xi1>
    %704 = vector.broadcast %cst_159 : f32 to vector<8x32xf32>
    %705 = arith.select %703, %690, %704 : vector<8x32xi1>, vector<8x32xf32>
    %c1_160 = arith.constant 1 : index
    %c0_161 = arith.constant 0 : index
    %c0_162 = arith.constant 0 : index
    %706 = vector.load %arg36[%c1_160, %c0_161, %c0_162] : memref<8x8x32xf32, #tpu.memory_space<vmem>>, vector<1x8x32xf32>
    %707 = vector.shape_cast %706 : vector<1x8x32xf32> to vector<8x32xf32>
    %708 = vector.shape_cast %705 : vector<8x32xf32> to vector<1x8x32xf32>
    tpu.vector_store %arg36[%c1_160, %c0_161, %c0_162], %708 {strides = array<i32>} : memref<8x8x32xf32, #tpu.memory_space<vmem>>, vector<1x8x32xf32>,
    %709 = vector.shape_cast %692 : vector<8x1xi1> to vector<8x1xi1>
    %710 = vector.broadcast %709 : vector<8x1xi1> to vector<8x32xi1>
    %711 = arith.select %710, %658, %611 : vector<8x32xi1>, vector<8x32xf32>
    %712 = vector.shape_cast %694 : vector<8x1xi1> to vector<8x1xi1>
    %713 = vector.broadcast %712 : vector<8x1xi1> to vector<8x32xi1>
    %714 = arith.select %713, %690, %614 : vector<8x32xi1>, vector<8x32xf32>
    %715 = vector.extract_strided_slice %0 {offsets = [0, 7], sizes = [8, 1], strides = [1, 1]} : vector<8x8xi32> to vector<8x1xi32>
    %716 = vector.broadcast %715 : vector<8x1xi32> to vector<8x20xi32>
    %717 = arith.cmpi eq, %716, %4 : vector<8x20xi32>
    %718 = arith.extui %717 : vector<8x20xi1> to vector<8x20xi32>
    %719 = arith.sitofp %718 : vector<8x20xi32> to vector<8x20xf32>
    %cst_163 = arith.constant dense<0.000000e+00> : vector<8x16xf32>
    %720 = tpu.matmul %719, %3, %cst_163 {dimension_numbers = #tpu.dot_dimension_numbers<[1], [0], [0], [1], [0, 0, 1, 1], [], []>} : vector<8x20xf32>, vector<20x16xf32>, vector<8x16xf32> -> vector<8x16xf32>
    %721 = vector.extract_strided_slice %0 {offsets = [0, 0], sizes = [8, 1], strides = [1, 1]} : vector<8x8xi32> to vector<8x1xi32>
    %722 = vector.broadcast %721 : vector<8x1xi32> to vector<8x20xi32>
    %723 = arith.cmpi eq, %722, %4 : vector<8x20xi32>
    %724 = arith.extui %723 : vector<8x20xi1> to vector<8x20xi32>
    %725 = arith.sitofp %724 : vector<8x20xi32> to vector<8x20xf32>
    %cst_164 = arith.constant dense<0.000000e+00> : vector<8x16xf32>
    %726 = tpu.matmul %725, %3, %cst_164 {dimension_numbers = #tpu.dot_dimension_numbers<[1], [0], [0], [1], [0, 0, 1, 1], [], []>} : vector<8x20xf32>, vector<20x16xf32>, vector<8x16xf32> -> vector<8x16xf32>
    %cst_165 = arith.constant dense<0.000000e+00> : vector<8x96xf32>
    %727 = tpu.matmul %720, %5, %cst_165 {dimension_numbers = #tpu.dot_dimension_numbers<[1], [0], [0], [1], [0, 0, 1, 1], [], []>} : vector<8x16xf32>, vector<16x96xf32>, vector<8x96xf32> -> vector<8x96xf32>
    %728 = vector.broadcast %7 : vector<1x96xf32> to vector<8x96xf32>
    %729 = arith.addf %727, %728 : vector<8x96xf32>
    %cst_166 = arith.constant dense<0.000000e+00> : vector<8x96xf32>
    %730 = tpu.matmul %711, %6, %cst_166 {dimension_numbers = #tpu.dot_dimension_numbers<[1], [0], [0], [1], [0, 0, 1, 1], [], []>} : vector<8x32xf32>, vector<32x96xf32>, vector<8x96xf32> -> vector<8x96xf32>
    %731 = vector.broadcast %8 : vector<1x96xf32> to vector<8x96xf32>
    %732 = arith.addf %730, %731 : vector<8x96xf32>
    %733 = vector.extract_strided_slice %729 {offsets = [0, 0], sizes = [8, 32], strides = [1, 1]} : vector<8x96xf32> to vector<8x32xf32>
    %734 = vector.extract_strided_slice %732 {offsets = [0, 0], sizes = [8, 32], strides = [1, 1]} : vector<8x96xf32> to vector<8x32xf32>
    %735 = arith.addf %733, %734 : vector<8x32xf32>
    %736 = arith.negf %735 : vector<8x32xf32>
    %737 = math.exp %736 : vector<8x32xf32>
    %cst_167 = arith.constant 1.000000e+00 : f32
    %738 = vector.broadcast %cst_167 : f32 to vector<8x32xf32>
    %739 = arith.addf %738, %737 : vector<8x32xf32>
    %740 = arith.divf %738, %739 : vector<8x32xf32>
    %741 = vector.extract_strided_slice %729 {offsets = [0, 32], sizes = [8, 32], strides = [1, 1]} : vector<8x96xf32> to vector<8x32xf32>
    %742 = vector.extract_strided_slice %732 {offsets = [0, 32], sizes = [8, 32], strides = [1, 1]} : vector<8x96xf32> to vector<8x32xf32>
    %743 = arith.addf %741, %742 : vector<8x32xf32>
    %744 = arith.negf %743 : vector<8x32xf32>
    %745 = math.exp %744 : vector<8x32xf32>
    %cst_168 = arith.constant 1.000000e+00 : f32
    %746 = vector.broadcast %cst_168 : f32 to vector<8x32xf32>
    %747 = arith.addf %746, %745 : vector<8x32xf32>
    %748 = arith.divf %746, %747 : vector<8x32xf32>
    %749 = vector.extract_strided_slice %729 {offsets = [0, 64], sizes = [8, 32], strides = [1, 1]} : vector<8x96xf32> to vector<8x32xf32>
    %750 = vector.extract_strided_slice %732 {offsets = [0, 64], sizes = [8, 32], strides = [1, 1]} : vector<8x96xf32> to vector<8x32xf32>
    %751 = arith.mulf %740, %750 : vector<8x32xf32>
    %752 = arith.addf %749, %751 : vector<8x32xf32>
    %753 = math.tanh %752 : vector<8x32xf32>
    %cst_169 = arith.constant 1.000000e+00 : f32
    %754 = vector.broadcast %cst_169 : f32 to vector<8x32xf32>
    %755 = arith.subf %754, %748 : vector<8x32xf32>
    %756 = arith.mulf %755, %753 : vector<8x32xf32>
    %757 = arith.mulf %748, %711 : vector<8x32xf32>
    %758 = arith.addf %756, %757 : vector<8x32xf32>
    %cst_170 = arith.constant dense<0.000000e+00> : vector<8x96xf32>
    %759 = tpu.matmul %726, %9, %cst_170 {dimension_numbers = #tpu.dot_dimension_numbers<[1], [0], [0], [1], [0, 0, 1, 1], [], []>} : vector<8x16xf32>, vector<16x96xf32>, vector<8x96xf32> -> vector<8x96xf32>
    %760 = vector.broadcast %11 : vector<1x96xf32> to vector<8x96xf32>
    %761 = arith.addf %759, %760 : vector<8x96xf32>
    %cst_171 = arith.constant dense<0.000000e+00> : vector<8x96xf32>
    %762 = tpu.matmul %714, %10, %cst_171 {dimension_numbers = #tpu.dot_dimension_numbers<[1], [0], [0], [1], [0, 0, 1, 1], [], []>} : vector<8x32xf32>, vector<32x96xf32>, vector<8x96xf32> -> vector<8x96xf32>
    %763 = vector.broadcast %12 : vector<1x96xf32> to vector<8x96xf32>
    %764 = arith.addf %762, %763 : vector<8x96xf32>
    %765 = vector.extract_strided_slice %761 {offsets = [0, 0], sizes = [8, 32], strides = [1, 1]} : vector<8x96xf32> to vector<8x32xf32>
    %766 = vector.extract_strided_slice %764 {offsets = [0, 0], sizes = [8, 32], strides = [1, 1]} : vector<8x96xf32> to vector<8x32xf32>
    %767 = arith.addf %765, %766 : vector<8x32xf32>
    %768 = arith.negf %767 : vector<8x32xf32>
    %769 = math.exp %768 : vector<8x32xf32>
    %cst_172 = arith.constant 1.000000e+00 : f32
    %770 = vector.broadcast %cst_172 : f32 to vector<8x32xf32>
    %771 = arith.addf %770, %769 : vector<8x32xf32>
    %772 = arith.divf %770, %771 : vector<8x32xf32>
    %773 = vector.extract_strided_slice %761 {offsets = [0, 32], sizes = [8, 32], strides = [1, 1]} : vector<8x96xf32> to vector<8x32xf32>
    %774 = vector.extract_strided_slice %764 {offsets = [0, 32], sizes = [8, 32], strides = [1, 1]} : vector<8x96xf32> to vector<8x32xf32>
    %775 = arith.addf %773, %774 : vector<8x32xf32>
    %776 = arith.negf %775 : vector<8x32xf32>
    %777 = math.exp %776 : vector<8x32xf32>
    %cst_173 = arith.constant 1.000000e+00 : f32
    %778 = vector.broadcast %cst_173 : f32 to vector<8x32xf32>
    %779 = arith.addf %778, %777 : vector<8x32xf32>
    %780 = arith.divf %778, %779 : vector<8x32xf32>
    %781 = vector.extract_strided_slice %761 {offsets = [0, 64], sizes = [8, 32], strides = [1, 1]} : vector<8x96xf32> to vector<8x32xf32>
    %782 = vector.extract_strided_slice %764 {offsets = [0, 64], sizes = [8, 32], strides = [1, 1]} : vector<8x96xf32> to vector<8x32xf32>
    %783 = arith.mulf %772, %782 : vector<8x32xf32>
    %784 = arith.addf %781, %783 : vector<8x32xf32>
    %785 = math.tanh %784 : vector<8x32xf32>
    %cst_174 = arith.constant 1.000000e+00 : f32
    %786 = vector.broadcast %cst_174 : f32 to vector<8x32xf32>
    %787 = arith.subf %786, %780 : vector<8x32xf32>
    %788 = arith.mulf %787, %785 : vector<8x32xf32>
    %789 = arith.mulf %780, %714 : vector<8x32xf32>
    %790 = arith.addf %788, %789 : vector<8x32xf32>
    %c7_i32_175 = arith.constant 7 : i32
    %791 = vector.broadcast %c7_i32_175 : i32 to vector<8x1xi32>
    %792 = arith.cmpi sgt, %2, %791 : vector<8x1xi32>
    %c0_i32_176 = arith.constant 0 : i32
    %793 = vector.broadcast %c0_i32_176 : i32 to vector<8x1xi32>
    %794 = arith.cmpi sgt, %2, %793 : vector<8x1xi32>
    %cst_177 = arith.constant 0.000000e+00 : f32
    %795 = vector.shape_cast %792 : vector<8x1xi1> to vector<8x1xi1>
    %796 = vector.broadcast %795 : vector<8x1xi1> to vector<8x32xi1>
    %797 = vector.broadcast %cst_177 : f32 to vector<8x32xf32>
    %798 = arith.select %796, %758, %797 : vector<8x32xi1>, vector<8x32xf32>
    %c7_178 = arith.constant 7 : index
    %c0_179 = arith.constant 0 : index
    %c0_180 = arith.constant 0 : index
    %799 = vector.load %arg35[%c7_178, %c0_179, %c0_180] : memref<8x8x32xf32, #tpu.memory_space<vmem>>, vector<1x8x32xf32>
    %800 = vector.shape_cast %799 : vector<1x8x32xf32> to vector<8x32xf32>
    %801 = vector.shape_cast %798 : vector<8x32xf32> to vector<1x8x32xf32>
    tpu.vector_store %arg35[%c7_178, %c0_179, %c0_180], %801 {strides = array<i32>} : memref<8x8x32xf32, #tpu.memory_space<vmem>>, vector<1x8x32xf32>,
    %cst_181 = arith.constant 0.000000e+00 : f32
    %802 = vector.shape_cast %794 : vector<8x1xi1> to vector<8x1xi1>
    %803 = vector.broadcast %802 : vector<8x1xi1> to vector<8x32xi1>
    %804 = vector.broadcast %cst_181 : f32 to vector<8x32xf32>
    %805 = arith.select %803, %790, %804 : vector<8x32xi1>, vector<8x32xf32>
    %c0_182 = arith.constant 0 : index
    %c0_183 = arith.constant 0 : index
    %c0_184 = arith.constant 0 : index
    %806 = vector.load %arg36[%c0_182, %c0_183, %c0_184] : memref<8x8x32xf32, #tpu.memory_space<vmem>>, vector<1x8x32xf32>
    %807 = vector.shape_cast %806 : vector<1x8x32xf32> to vector<8x32xf32>
    %808 = vector.shape_cast %805 : vector<8x32xf32> to vector<1x8x32xf32>
    tpu.vector_store %arg36[%c0_182, %c0_183, %c0_184], %808 {strides = array<i32>} : memref<8x8x32xf32, #tpu.memory_space<vmem>>, vector<1x8x32xf32>,
    %809 = vector.shape_cast %792 : vector<8x1xi1> to vector<8x1xi1>
    %810 = vector.broadcast %809 : vector<8x1xi1> to vector<8x32xi1>
    %811 = arith.select %810, %758, %711 : vector<8x32xi1>, vector<8x32xf32>
    %812 = vector.shape_cast %794 : vector<8x1xi1> to vector<8x1xi1>
    %813 = vector.broadcast %812 : vector<8x1xi1> to vector<8x32xi1>
    %814 = arith.select %813, %790, %714 : vector<8x32xi1>, vector<8x32xf32>
    %c0_185 = arith.constant 0 : index
    %c0_186 = arith.constant 0 : index
    %815 = vector.load %arg15[%c0_185, %c0_186] : memref<32x32xf32, #tpu.memory_space<vmem>>, vector<32x32xf32>
    %cst_187 = arith.constant dense<0.000000e+00> : vector<8x32xf32>
    %816 = tpu.matmul %811, %815, %cst_187 {dimension_numbers = #tpu.dot_dimension_numbers<[1], [0], [0], [1], [0, 0, 1, 1], [], []>} : vector<8x32xf32>, vector<32x32xf32>, vector<8x32xf32> -> vector<8x32xf32>
    %c0_188 = arith.constant 0 : index
    %c0_189 = arith.constant 0 : index
    %817 = vector.load %arg16[%c0_188, %c0_189] : memref<32x32xf32, #tpu.memory_space<vmem>>, vector<32x32xf32>
    %cst_190 = arith.constant dense<0.000000e+00> : vector<8x32xf32>
    %818 = tpu.matmul %814, %817, %cst_190 {dimension_numbers = #tpu.dot_dimension_numbers<[1], [0], [0], [1], [0, 0, 1, 1], [], []>} : vector<8x32xf32>, vector<32x32xf32>, vector<8x32xf32> -> vector<8x32xf32>
    %819 = arith.addf %816, %818 : vector<8x32xf32>
    %c0_191 = arith.constant 0 : index
    %c0_192 = arith.constant 0 : index
    %820 = vector.load %arg17[%c0_191, %c0_192] : memref<1x32xf32, #tpu.memory_space<vmem>>, vector<1x32xf32>
    %821 = vector.broadcast %820 : vector<1x32xf32> to vector<8x32xf32>
    %822 = arith.addf %819, %821 : vector<8x32xf32>
    %823 = math.tanh %822 : vector<8x32xf32>
    %c0_193 = arith.constant 0 : index
    %c0_194 = arith.constant 0 : index
    %c0_195 = arith.constant 0 : index
    %824 = vector.load %arg35[%c0_193, %c0_194, %c0_195] : memref<8x8x32xf32, #tpu.memory_space<vmem>>, vector<8x8x32xf32>
    %c0_196 = arith.constant 0 : index
    %c0_197 = arith.constant 0 : index
    %c0_198 = arith.constant 0 : index
    %825 = vector.load %arg36[%c0_196, %c0_197, %c0_198] : memref<8x8x32xf32, #tpu.memory_space<vmem>>, vector<8x8x32xf32>
    %c0_199 = arith.constant 0 : index
    %c0_200 = arith.constant 0 : index
    %826 = vector.load %arg1[%c0_199, %c0_200] : memref<8x8xi32, #tpu.memory_space<vmem>>, vector<8x8xi32>
    %c0_i32_201 = arith.constant 0 : i32
    %827 = vector.broadcast %c0_i32_201 : i32 to vector<8x8xi32>
    %828 = arith.cmpi ne, %826, %827 : vector<8x8xi32>
    %829 = vector.shape_cast %824 : vector<8x8x32xf32> to vector<64x32xf32>
    %c0_202 = arith.constant 0 : index
    %c0_203 = arith.constant 0 : index
    %830 = vector.load %arg19[%c0_202, %c0_203] : memref<32x32xf32, #tpu.memory_space<vmem>>, vector<32x32xf32>
    %cst_204 = arith.constant dense<0.000000e+00> : vector<64x32xf32>
    %831 = tpu.matmul %829, %830, %cst_204 {dimension_numbers = #tpu.dot_dimension_numbers<[1], [0], [0], [1], [0, 0, 1, 1], [], []>} : vector<64x32xf32>, vector<32x32xf32>, vector<64x32xf32> -> vector<64x32xf32>
    %832 = vector.shape_cast %825 : vector<8x8x32xf32> to vector<64x32xf32>
    %c0_205 = arith.constant 0 : index
    %c0_206 = arith.constant 0 : index
    %833 = vector.load %arg20[%c0_205, %c0_206] : memref<32x32xf32, #tpu.memory_space<vmem>>, vector<32x32xf32>
    %cst_207 = arith.constant dense<0.000000e+00> : vector<64x32xf32>
    %834 = tpu.matmul %832, %833, %cst_207 {dimension_numbers = #tpu.dot_dimension_numbers<[1], [0], [0], [1], [0, 0, 1, 1], [], []>} : vector<64x32xf32>, vector<32x32xf32>, vector<64x32xf32> -> vector<64x32xf32>
    %835 = arith.addf %831, %834 : vector<64x32xf32>
    %836 = vector.shape_cast %835 : vector<64x32xf32> to vector<8x8x32xf32>
    %c0_208 = arith.constant 0 : index
    %c0_209 = arith.constant 0 : index
    %837 = vector.load %arg21[%c0_208, %c0_209] : memref<1x32xf32, #tpu.memory_space<vmem>>, vector<1x32xf32>
    %838 = vector.shape_cast %837 : vector<1x32xf32> to vector<1x1x32xf32>
    %839 = vector.broadcast %838 : vector<1x1x32xf32> to vector<8x8x32xf32>
    %840 = arith.addf %836, %839 : vector<8x8x32xf32>
    %c0_210 = arith.constant 0 : index
    %c0_211 = arith.constant 0 : index
    %841 = vector.load %arg22[%c0_210, %c0_211] : memref<1x32xf32, #tpu.memory_space<vmem>>, vector<1x32xf32>
    %c0_212 = arith.constant 0 : index
    %c0_213 = arith.constant 0 : index
    %842 = vector.load %arg18[%c0_212, %c0_213] : memref<32x32xf32, #tpu.memory_space<vmem>>, vector<32x32xf32>
    %c0_214 = arith.constant 0 : index
    %c0_215 = arith.constant 0 : index
    %843 = vector.load %arg6[%c0_214, %c0_215] : memref<24x16xf32, #tpu.memory_space<vmem>>, vector<24x16xf32>
    %c0_216 = arith.constant 0 : index
    %c0_217 = arith.constant 0 : index
    %844 = vector.load %arg23[%c0_216, %c0_217] : memref<16x96xf32, #tpu.memory_space<vmem>>, vector<16x96xf32>
    %c0_218 = arith.constant 0 : index
    %c0_219 = arith.constant 0 : index
    %845 = vector.load %arg24[%c0_218, %c0_219] : memref<32x96xf32, #tpu.memory_space<vmem>>, vector<32x96xf32>
    %c0_220 = arith.constant 0 : index
    %c0_221 = arith.constant 0 : index
    %846 = vector.load %arg25[%c0_220, %c0_221] : memref<32x96xf32, #tpu.memory_space<vmem>>, vector<32x96xf32>
    %c0_222 = arith.constant 0 : index
    %c0_223 = arith.constant 0 : index
    %847 = vector.load %arg26[%c0_222, %c0_223] : memref<32x96xf32, #tpu.memory_space<vmem>>, vector<32x96xf32>
    %c0_224 = arith.constant 0 : index
    %c0_225 = arith.constant 0 : index
    %848 = vector.load %arg27[%c0_224, %c0_225] : memref<1x96xf32, #tpu.memory_space<vmem>>, vector<1x96xf32>
    %c0_226 = arith.constant 0 : index
    %c0_227 = arith.constant 0 : index
    %849 = vector.load %arg28[%c0_226, %c0_227] : memref<1x96xf32, #tpu.memory_space<vmem>>, vector<1x96xf32>
    %c0_228 = arith.constant 0 : index
    %c0_229 = arith.constant 0 : index
    %850 = vector.load %arg29[%c0_228, %c0_229] : memref<32x128xf32, #tpu.memory_space<vmem>>, vector<32x128xf32>
    %c0_230 = arith.constant 0 : index
    %c0_231 = arith.constant 0 : index
    %851 = vector.load %arg30[%c0_230, %c0_231] : memref<32x128xf32, #tpu.memory_space<vmem>>, vector<32x128xf32>
    %c0_232 = arith.constant 0 : index
    %c0_233 = arith.constant 0 : index
    %852 = vector.load %arg31[%c0_232, %c0_233] : memref<32x128xf32, #tpu.memory_space<vmem>>, vector<32x128xf32>
    %c0_234 = arith.constant 0 : index
    %c0_235 = arith.constant 0 : index
    %853 = vector.load %arg32[%c0_234, %c0_235] : memref<16x128xf32, #tpu.memory_space<vmem>>, vector<16x128xf32>
    %c0_236 = arith.constant 0 : index
    %c0_237 = arith.constant 0 : index
    %854 = vector.load %arg33[%c0_236, %c0_237] : memref<1x128xf32, #tpu.memory_space<vmem>>, vector<1x128xf32>
    %855 = tpu.iota {dimensions = array<i32: 1>} : vector<8x128xi32>
    %856 = tpu.iota {dimensions = array<i32: 1>} : vector<8x24xi32>
    %c24_i32 = arith.constant 24 : i32
    %857 = vector.broadcast %c24_i32 : i32 to vector<8x128xi32>
    %858 = arith.cmpi slt, %855, %857 : vector<8x128xi32>
    %859 = vector.extract_strided_slice %1 {offsets = [0, 0], sizes = [8, 1], strides = [1, 1]} : vector<8x7xi32> to vector<8x1xi32>
    %860 = vector.broadcast %859 : vector<8x1xi32> to vector<8x24xi32>
    %861 = arith.cmpi eq, %860, %856 : vector<8x24xi32>
    %862 = arith.extui %861 : vector<8x24xi1> to vector<8x24xi32>
    %863 = arith.sitofp %862 : vector<8x24xi32> to vector<8x24xf32>
    %cst_238 = arith.constant 0.000000e+00 : f32
    %864 = vector.broadcast %cst_238 : f32 to vector<8x128xf32>
    %c0_239 = arith.constant 0 : index
    %c0_240 = arith.constant 0 : index
    %c0_241 = arith.constant 0 : index
    %865 = vector.load %arg34[%c0_239, %c0_240, %c0_241] : memref<7x8x128xf32, #tpu.memory_space<vmem>>, vector<1x8x128xf32>
    %866 = vector.shape_cast %865 : vector<1x8x128xf32> to vector<8x128xf32>
    %867 = vector.shape_cast %864 : vector<8x128xf32> to vector<1x8x128xf32>
    tpu.vector_store %arg34[%c0_239, %c0_240, %c0_241], %867 {strides = array<i32>} : memref<7x8x128xf32, #tpu.memory_space<vmem>>, vector<1x8x128xf32>,
    %cst_242 = arith.constant dense<0.000000e+00> : vector<8x16xf32>
    %868 = tpu.matmul %863, %843, %cst_242 {dimension_numbers = #tpu.dot_dimension_numbers<[1], [0], [0], [1], [0, 0, 1, 1], [], []>} : vector<8x24xf32>, vector<24x16xf32>, vector<8x16xf32> -> vector<8x16xf32>
    %cst_243 = arith.constant dense<0.000000e+00> : vector<8x32xf32>
    %869 = tpu.matmul %823, %842, %cst_243 {dimension_numbers = #tpu.dot_dimension_numbers<[1], [0], [0], [1], [0, 0, 1, 1], [], []>} : vector<8x32xf32>, vector<32x32xf32>, vector<8x32xf32> -> vector<8x32xf32>
    %870 = vector.shape_cast %869 : vector<8x32xf32> to vector<1x8x32xf32>
    %871 = vector.broadcast %870 : vector<1x8x32xf32> to vector<8x8x32xf32>
    %872 = arith.addf %871, %840 : vector<8x8x32xf32>
    %873 = math.tanh %872 : vector<8x8x32xf32>
    %874 = vector.shape_cast %841 : vector<1x32xf32> to vector<1x1x32xf32>
    %875 = vector.broadcast %874 : vector<1x1x32xf32> to vector<8x8x32xf32>
    %876 = arith.mulf %873, %875 : vector<8x8x32xf32>
    %cst_244 = arith.constant dense<0.000000e+00> : vector<8x8xf32>
    %877 = vector.multi_reduction <add>, %876, %cst_244 [2] : vector<8x8x32xf32> to vector<8x8xf32>
    %cst_245 = arith.constant -1.000000e+10 : f32
    %878 = vector.broadcast %cst_245 : f32 to vector<8x8xf32>
    %879 = arith.select %828, %877, %878 : vector<8x8xi1>, vector<8x8xf32>
    %cst_246 = arith.constant dense<0xFF800000> : vector<8xf32>
    %880 = vector.multi_reduction <maximumf>, %879, %cst_246 [0] : vector<8x8xf32> to vector<8xf32>
    %881 = vector.shape_cast %880 : vector<8xf32> to vector<1x8xf32>
    %882 = vector.broadcast %881 : vector<1x8xf32> to vector<8x8xf32>
    %883 = arith.subf %879, %882 : vector<8x8xf32>
    %884 = math.exp %883 : vector<8x8xf32>
    %cst_247 = arith.constant dense<0.000000e+00> : vector<8xf32>
    %885 = vector.multi_reduction <add>, %884, %cst_247 [0] : vector<8x8xf32> to vector<8xf32>
    %886 = vector.shape_cast %885 : vector<8xf32> to vector<1x8xf32>
    %887 = tpu.reciprocal %886 {approx = true} : vector<1x8xf32> -> vector<1x8xf32>
    %888 = vector.broadcast %887 : vector<1x8xf32> to vector<8x8xf32>
    %889 = arith.mulf %884, %888 : vector<8x8xf32>
    %890 = vector.shape_cast %889 : vector<8x8xf32> to vector<8x8x1xf32>
    %891 = vector.broadcast %890 : vector<8x8x1xf32> to vector<8x8x32xf32>
    %892 = arith.mulf %891, %824 : vector<8x8x32xf32>
    %cst_248 = arith.constant dense<0.000000e+00> : vector<8x32xf32>
    %893 = vector.multi_reduction <add>, %892, %cst_248 [0] : vector<8x8x32xf32> to vector<8x32xf32>
    %894 = vector.shape_cast %889 : vector<8x8xf32> to vector<8x8x1xf32>
    %895 = vector.broadcast %894 : vector<8x8x1xf32> to vector<8x8x32xf32>
    %896 = arith.mulf %895, %825 : vector<8x8x32xf32>
    %cst_249 = arith.constant dense<0.000000e+00> : vector<8x32xf32>
    %897 = vector.multi_reduction <add>, %896, %cst_249 [0] : vector<8x8x32xf32> to vector<8x32xf32>
    %cst_250 = arith.constant dense<0.000000e+00> : vector<8x96xf32>
    %898 = tpu.matmul %868, %844, %cst_250 {dimension_numbers = #tpu.dot_dimension_numbers<[1], [0], [0], [1], [0, 0, 1, 1], [], []>} : vector<8x16xf32>, vector<16x96xf32>, vector<8x96xf32> -> vector<8x96xf32>
    %cst_251 = arith.constant dense<0.000000e+00> : vector<8x96xf32>
    %899 = tpu.matmul %893, %845, %cst_251 {dimension_numbers = #tpu.dot_dimension_numbers<[1], [0], [0], [1], [0, 0, 1, 1], [], []>} : vector<8x32xf32>, vector<32x96xf32>, vector<8x96xf32> -> vector<8x96xf32>
    %900 = arith.addf %898, %899 : vector<8x96xf32>
    %cst_252 = arith.constant dense<0.000000e+00> : vector<8x96xf32>
    %901 = tpu.matmul %897, %846, %cst_252 {dimension_numbers = #tpu.dot_dimension_numbers<[1], [0], [0], [1], [0, 0, 1, 1], [], []>} : vector<8x32xf32>, vector<32x96xf32>, vector<8x96xf32> -> vector<8x96xf32>
    %902 = arith.addf %900, %901 : vector<8x96xf32>
    %903 = vector.broadcast %848 : vector<1x96xf32> to vector<8x96xf32>
    %904 = arith.addf %902, %903 : vector<8x96xf32>
    %cst_253 = arith.constant dense<0.000000e+00> : vector<8x96xf32>
    %905 = tpu.matmul %823, %847, %cst_253 {dimension_numbers = #tpu.dot_dimension_numbers<[1], [0], [0], [1], [0, 0, 1, 1], [], []>} : vector<8x32xf32>, vector<32x96xf32>, vector<8x96xf32> -> vector<8x96xf32>
    %906 = vector.broadcast %849 : vector<1x96xf32> to vector<8x96xf32>
    %907 = arith.addf %905, %906 : vector<8x96xf32>
    %908 = vector.extract_strided_slice %904 {offsets = [0, 0], sizes = [8, 32], strides = [1, 1]} : vector<8x96xf32> to vector<8x32xf32>
    %909 = vector.extract_strided_slice %907 {offsets = [0, 0], sizes = [8, 32], strides = [1, 1]} : vector<8x96xf32> to vector<8x32xf32>
    %910 = arith.addf %908, %909 : vector<8x32xf32>
    %911 = arith.negf %910 : vector<8x32xf32>
    %912 = math.exp %911 : vector<8x32xf32>
    %cst_254 = arith.constant 1.000000e+00 : f32
    %913 = vector.broadcast %cst_254 : f32 to vector<8x32xf32>
    %914 = arith.addf %913, %912 : vector<8x32xf32>
    %915 = arith.divf %913, %914 : vector<8x32xf32>
    %916 = vector.extract_strided_slice %904 {offsets = [0, 32], sizes = [8, 32], strides = [1, 1]} : vector<8x96xf32> to vector<8x32xf32>
    %917 = vector.extract_strided_slice %907 {offsets = [0, 32], sizes = [8, 32], strides = [1, 1]} : vector<8x96xf32> to vector<8x32xf32>
    %918 = arith.addf %916, %917 : vector<8x32xf32>
    %919 = arith.negf %918 : vector<8x32xf32>
    %920 = math.exp %919 : vector<8x32xf32>
    %cst_255 = arith.constant 1.000000e+00 : f32
    %921 = vector.broadcast %cst_255 : f32 to vector<8x32xf32>
    %922 = arith.addf %921, %920 : vector<8x32xf32>
    %923 = arith.divf %921, %922 : vector<8x32xf32>
    %924 = vector.extract_strided_slice %904 {offsets = [0, 64], sizes = [8, 32], strides = [1, 1]} : vector<8x96xf32> to vector<8x32xf32>
    %925 = vector.extract_strided_slice %907 {offsets = [0, 64], sizes = [8, 32], strides = [1, 1]} : vector<8x96xf32> to vector<8x32xf32>
    %926 = arith.mulf %915, %925 : vector<8x32xf32>
    %927 = arith.addf %924, %926 : vector<8x32xf32>
    %928 = math.tanh %927 : vector<8x32xf32>
    %cst_256 = arith.constant 1.000000e+00 : f32
    %929 = vector.broadcast %cst_256 : f32 to vector<8x32xf32>
    %930 = arith.subf %929, %923 : vector<8x32xf32>
    %931 = arith.mulf %930, %928 : vector<8x32xf32>
    %932 = arith.mulf %923, %823 : vector<8x32xf32>
    %933 = arith.addf %931, %932 : vector<8x32xf32>
    %cst_257 = arith.constant dense<0.000000e+00> : vector<8x128xf32>
    %934 = tpu.matmul %933, %850, %cst_257 {dimension_numbers = #tpu.dot_dimension_numbers<[1], [0], [0], [1], [0, 0, 1, 1], [], []>} : vector<8x32xf32>, vector<32x128xf32>, vector<8x128xf32> -> vector<8x128xf32>
    %cst_258 = arith.constant dense<0.000000e+00> : vector<8x128xf32>
    %935 = tpu.matmul %893, %851, %cst_258 {dimension_numbers = #tpu.dot_dimension_numbers<[1], [0], [0], [1], [0, 0, 1, 1], [], []>} : vector<8x32xf32>, vector<32x128xf32>, vector<8x128xf32> -> vector<8x128xf32>
    %936 = arith.addf %934, %935 : vector<8x128xf32>
    %cst_259 = arith.constant dense<0.000000e+00> : vector<8x128xf32>
    %937 = tpu.matmul %897, %852, %cst_259 {dimension_numbers = #tpu.dot_dimension_numbers<[1], [0], [0], [1], [0, 0, 1, 1], [], []>} : vector<8x32xf32>, vector<32x128xf32>, vector<8x128xf32> -> vector<8x128xf32>
    %938 = arith.addf %936, %937 : vector<8x128xf32>
    %cst_260 = arith.constant dense<0.000000e+00> : vector<8x128xf32>
    %939 = tpu.matmul %868, %853, %cst_260 {dimension_numbers = #tpu.dot_dimension_numbers<[1], [0], [0], [1], [0, 0, 1, 1], [], []>} : vector<8x16xf32>, vector<16x128xf32>, vector<8x128xf32> -> vector<8x128xf32>
    %940 = arith.addf %938, %939 : vector<8x128xf32>
    %941 = vector.broadcast %854 : vector<1x128xf32> to vector<8x128xf32>
    %942 = arith.addf %940, %941 : vector<8x128xf32>
    %c1_261 = arith.constant 1 : index
    %c0_262 = arith.constant 0 : index
    %c0_263 = arith.constant 0 : index
    %943 = vector.load %arg34[%c1_261, %c0_262, %c0_263] : memref<7x8x128xf32, #tpu.memory_space<vmem>>, vector<1x8x128xf32>
    %944 = vector.shape_cast %943 : vector<1x8x128xf32> to vector<8x128xf32>
    %945 = vector.shape_cast %942 : vector<8x128xf32> to vector<1x8x128xf32>
    tpu.vector_store %arg34[%c1_261, %c0_262, %c0_263], %945 {strides = array<i32>} : memref<7x8x128xf32, #tpu.memory_space<vmem>>, vector<1x8x128xf32>,
    %cst_264 = arith.constant -1.000000e+30 : f32
    %946 = vector.broadcast %cst_264 : f32 to vector<8x128xf32>
    %947 = arith.select %858, %942, %946 : vector<8x128xi1>, vector<8x128xf32>
    %cst_265 = arith.constant dense<0xFF800000> : vector<8xf32>
    %948 = vector.multi_reduction <maximumf>, %947, %cst_265 [1] : vector<8x128xf32> to vector<8xf32>
    %949 = vector.shape_cast %948 : vector<8xf32> to vector<8x1xf32>
    %950 = vector.broadcast %949 : vector<8x1xf32> to vector<8x128xf32>
    %951 = arith.cmpf oeq, %947, %950 : vector<8x128xf32>
    %952 = arith.andi %951, %858 : vector<8x128xi1>
    %c128_i32 = arith.constant 128 : i32
    %953 = vector.broadcast %c128_i32 : i32 to vector<8x128xi32>
    %954 = arith.select %952, %855, %953 : vector<8x128xi1>, vector<8x128xi32>
    %cst_266 = arith.constant dense<2147483647> : vector<8xi32>
    %955 = vector.multi_reduction <minsi>, %954, %cst_266 [1] : vector<8x128xi32> to vector<8xi32>
    %956 = vector.shape_cast %955 : vector<8xi32> to vector<8x1xi32>
    %957 = vector.broadcast %956 : vector<8x1xi32> to vector<8x24xi32>
    %958 = arith.cmpi eq, %856, %957 : vector<8x24xi32>
    %959 = arith.extui %958 : vector<8x24xi1> to vector<8x24xi32>
    %960 = arith.sitofp %959 : vector<8x24xi32> to vector<8x24xf32>
    %961 = vector.extract_strided_slice %1 {offsets = [0, 1], sizes = [8, 1], strides = [1, 1]} : vector<8x7xi32> to vector<8x1xi32>
    %962 = vector.broadcast %961 : vector<8x1xi32> to vector<8x24xi32>
    %963 = arith.cmpi eq, %962, %856 : vector<8x24xi32>
    %964 = arith.extui %963 : vector<8x24xi1> to vector<8x24xi32>
    %965 = arith.sitofp %964 : vector<8x24xi32> to vector<8x24xf32>
    %c1_267 = arith.constant 1 : index
    %966 = memref.load %arg0[%c1_267] : memref<7xi32, #tpu.memory_space<smem>>
    %c0_i32_268 = arith.constant 0 : i32
    %967 = arith.cmpi ne, %966, %c0_i32_268 : i32
    %968 = arith.select %967, %965, %960 : vector<8x24xf32>
    %cst_269 = arith.constant dense<0.000000e+00> : vector<8x16xf32>
    %969 = tpu.matmul %968, %843, %cst_269 {dimension_numbers = #tpu.dot_dimension_numbers<[1], [0], [0], [1], [0, 0, 1, 1], [], []>} : vector<8x24xf32>, vector<24x16xf32>, vector<8x16xf32> -> vector<8x16xf32>
    %cst_270 = arith.constant dense<0.000000e+00> : vector<8x32xf32>
    %970 = tpu.matmul %933, %842, %cst_270 {dimension_numbers = #tpu.dot_dimension_numbers<[1], [0], [0], [1], [0, 0, 1, 1], [], []>} : vector<8x32xf32>, vector<32x32xf32>, vector<8x32xf32> -> vector<8x32xf32>
    %971 = vector.shape_cast %970 : vector<8x32xf32> to vector<1x8x32xf32>
    %972 = vector.broadcast %971 : vector<1x8x32xf32> to vector<8x8x32xf32>
    %973 = arith.addf %972, %840 : vector<8x8x32xf32>
    %974 = math.tanh %973 : vector<8x8x32xf32>
    %975 = vector.shape_cast %841 : vector<1x32xf32> to vector<1x1x32xf32>
    %976 = vector.broadcast %975 : vector<1x1x32xf32> to vector<8x8x32xf32>
    %977 = arith.mulf %974, %976 : vector<8x8x32xf32>
    %cst_271 = arith.constant dense<0.000000e+00> : vector<8x8xf32>
    %978 = vector.multi_reduction <add>, %977, %cst_271 [2] : vector<8x8x32xf32> to vector<8x8xf32>
    %cst_272 = arith.constant -1.000000e+10 : f32
    %979 = vector.broadcast %cst_272 : f32 to vector<8x8xf32>
    %980 = arith.select %828, %978, %979 : vector<8x8xi1>, vector<8x8xf32>
    %cst_273 = arith.constant dense<0xFF800000> : vector<8xf32>
    %981 = vector.multi_reduction <maximumf>, %980, %cst_273 [0] : vector<8x8xf32> to vector<8xf32>
    %982 = vector.shape_cast %981 : vector<8xf32> to vector<1x8xf32>
    %983 = vector.broadcast %982 : vector<1x8xf32> to vector<8x8xf32>
    %984 = arith.subf %980, %983 : vector<8x8xf32>
    %985 = math.exp %984 : vector<8x8xf32>
    %cst_274 = arith.constant dense<0.000000e+00> : vector<8xf32>
    %986 = vector.multi_reduction <add>, %985, %cst_274 [0] : vector<8x8xf32> to vector<8xf32>
    %987 = vector.shape_cast %986 : vector<8xf32> to vector<1x8xf32>
    %988 = tpu.reciprocal %987 {approx = true} : vector<1x8xf32> -> vector<1x8xf32>
    %989 = vector.broadcast %988 : vector<1x8xf32> to vector<8x8xf32>
    %990 = arith.mulf %985, %989 : vector<8x8xf32>
    %991 = vector.shape_cast %990 : vector<8x8xf32> to vector<8x8x1xf32>
    %992 = vector.broadcast %991 : vector<8x8x1xf32> to vector<8x8x32xf32>
    %993 = arith.mulf %992, %824 : vector<8x8x32xf32>
    %cst_275 = arith.constant dense<0.000000e+00> : vector<8x32xf32>
    %994 = vector.multi_reduction <add>, %993, %cst_275 [0] : vector<8x8x32xf32> to vector<8x32xf32>
    %995 = vector.shape_cast %990 : vector<8x8xf32> to vector<8x8x1xf32>
    %996 = vector.broadcast %995 : vector<8x8x1xf32> to vector<8x8x32xf32>
    %997 = arith.mulf %996, %825 : vector<8x8x32xf32>
    %cst_276 = arith.constant dense<0.000000e+00> : vector<8x32xf32>
    %998 = vector.multi_reduction <add>, %997, %cst_276 [0] : vector<8x8x32xf32> to vector<8x32xf32>
    %cst_277 = arith.constant dense<0.000000e+00> : vector<8x96xf32>
    %999 = tpu.matmul %969, %844, %cst_277 {dimension_numbers = #tpu.dot_dimension_numbers<[1], [0], [0], [1], [0, 0, 1, 1], [], []>} : vector<8x16xf32>, vector<16x96xf32>, vector<8x96xf32> -> vector<8x96xf32>
    %cst_278 = arith.constant dense<0.000000e+00> : vector<8x96xf32>
    %1000 = tpu.matmul %994, %845, %cst_278 {dimension_numbers = #tpu.dot_dimension_numbers<[1], [0], [0], [1], [0, 0, 1, 1], [], []>} : vector<8x32xf32>, vector<32x96xf32>, vector<8x96xf32> -> vector<8x96xf32>
    %1001 = arith.addf %999, %1000 : vector<8x96xf32>
    %cst_279 = arith.constant dense<0.000000e+00> : vector<8x96xf32>
    %1002 = tpu.matmul %998, %846, %cst_279 {dimension_numbers = #tpu.dot_dimension_numbers<[1], [0], [0], [1], [0, 0, 1, 1], [], []>} : vector<8x32xf32>, vector<32x96xf32>, vector<8x96xf32> -> vector<8x96xf32>
    %1003 = arith.addf %1001, %1002 : vector<8x96xf32>
    %1004 = vector.broadcast %848 : vector<1x96xf32> to vector<8x96xf32>
    %1005 = arith.addf %1003, %1004 : vector<8x96xf32>
    %cst_280 = arith.constant dense<0.000000e+00> : vector<8x96xf32>
    %1006 = tpu.matmul %933, %847, %cst_280 {dimension_numbers = #tpu.dot_dimension_numbers<[1], [0], [0], [1], [0, 0, 1, 1], [], []>} : vector<8x32xf32>, vector<32x96xf32>, vector<8x96xf32> -> vector<8x96xf32>
    %1007 = vector.broadcast %849 : vector<1x96xf32> to vector<8x96xf32>
    %1008 = arith.addf %1006, %1007 : vector<8x96xf32>
    %1009 = vector.extract_strided_slice %1005 {offsets = [0, 0], sizes = [8, 32], strides = [1, 1]} : vector<8x96xf32> to vector<8x32xf32>
    %1010 = vector.extract_strided_slice %1008 {offsets = [0, 0], sizes = [8, 32], strides = [1, 1]} : vector<8x96xf32> to vector<8x32xf32>
    %1011 = arith.addf %1009, %1010 : vector<8x32xf32>
    %1012 = arith.negf %1011 : vector<8x32xf32>
    %1013 = math.exp %1012 : vector<8x32xf32>
    %cst_281 = arith.constant 1.000000e+00 : f32
    %1014 = vector.broadcast %cst_281 : f32 to vector<8x32xf32>
    %1015 = arith.addf %1014, %1013 : vector<8x32xf32>
    %1016 = arith.divf %1014, %1015 : vector<8x32xf32>
    %1017 = vector.extract_strided_slice %1005 {offsets = [0, 32], sizes = [8, 32], strides = [1, 1]} : vector<8x96xf32> to vector<8x32xf32>
    %1018 = vector.extract_strided_slice %1008 {offsets = [0, 32], sizes = [8, 32], strides = [1, 1]} : vector<8x96xf32> to vector<8x32xf32>
    %1019 = arith.addf %1017, %1018 : vector<8x32xf32>
    %1020 = arith.negf %1019 : vector<8x32xf32>
    %1021 = math.exp %1020 : vector<8x32xf32>
    %cst_282 = arith.constant 1.000000e+00 : f32
    %1022 = vector.broadcast %cst_282 : f32 to vector<8x32xf32>
    %1023 = arith.addf %1022, %1021 : vector<8x32xf32>
    %1024 = arith.divf %1022, %1023 : vector<8x32xf32>
    %1025 = vector.extract_strided_slice %1005 {offsets = [0, 64], sizes = [8, 32], strides = [1, 1]} : vector<8x96xf32> to vector<8x32xf32>
    %1026 = vector.extract_strided_slice %1008 {offsets = [0, 64], sizes = [8, 32], strides = [1, 1]} : vector<8x96xf32> to vector<8x32xf32>
    %1027 = arith.mulf %1016, %1026 : vector<8x32xf32>
    %1028 = arith.addf %1025, %1027 : vector<8x32xf32>
    %1029 = math.tanh %1028 : vector<8x32xf32>
    %cst_283 = arith.constant 1.000000e+00 : f32
    %1030 = vector.broadcast %cst_283 : f32 to vector<8x32xf32>
    %1031 = arith.subf %1030, %1024 : vector<8x32xf32>
    %1032 = arith.mulf %1031, %1029 : vector<8x32xf32>
    %1033 = arith.mulf %1024, %933 : vector<8x32xf32>
    %1034 = arith.addf %1032, %1033 : vector<8x32xf32>
    %cst_284 = arith.constant dense<0.000000e+00> : vector<8x128xf32>
    %1035 = tpu.matmul %1034, %850, %cst_284 {dimension_numbers = #tpu.dot_dimension_numbers<[1], [0], [0], [1], [0, 0, 1, 1], [], []>} : vector<8x32xf32>, vector<32x128xf32>, vector<8x128xf32> -> vector<8x128xf32>
    %cst_285 = arith.constant dense<0.000000e+00> : vector<8x128xf32>
    %1036 = tpu.matmul %994, %851, %cst_285 {dimension_numbers = #tpu.dot_dimension_numbers<[1], [0], [0], [1], [0, 0, 1, 1], [], []>} : vector<8x32xf32>, vector<32x128xf32>, vector<8x128xf32> -> vector<8x128xf32>
    %1037 = arith.addf %1035, %1036 : vector<8x128xf32>
    %cst_286 = arith.constant dense<0.000000e+00> : vector<8x128xf32>
    %1038 = tpu.matmul %998, %852, %cst_286 {dimension_numbers = #tpu.dot_dimension_numbers<[1], [0], [0], [1], [0, 0, 1, 1], [], []>} : vector<8x32xf32>, vector<32x128xf32>, vector<8x128xf32> -> vector<8x128xf32>
    %1039 = arith.addf %1037, %1038 : vector<8x128xf32>
    %cst_287 = arith.constant dense<0.000000e+00> : vector<8x128xf32>
    %1040 = tpu.matmul %969, %853, %cst_287 {dimension_numbers = #tpu.dot_dimension_numbers<[1], [0], [0], [1], [0, 0, 1, 1], [], []>} : vector<8x16xf32>, vector<16x128xf32>, vector<8x128xf32> -> vector<8x128xf32>
    %1041 = arith.addf %1039, %1040 : vector<8x128xf32>
    %1042 = vector.broadcast %854 : vector<1x128xf32> to vector<8x128xf32>
    %1043 = arith.addf %1041, %1042 : vector<8x128xf32>
    %c2_288 = arith.constant 2 : index
    %c0_289 = arith.constant 0 : index
    %c0_290 = arith.constant 0 : index
    %1044 = vector.load %arg34[%c2_288, %c0_289, %c0_290] : memref<7x8x128xf32, #tpu.memory_space<vmem>>, vector<1x8x128xf32>
    %1045 = vector.shape_cast %1044 : vector<1x8x128xf32> to vector<8x128xf32>
    %1046 = vector.shape_cast %1043 : vector<8x128xf32> to vector<1x8x128xf32>
    tpu.vector_store %arg34[%c2_288, %c0_289, %c0_290], %1046 {strides = array<i32>} : memref<7x8x128xf32, #tpu.memory_space<vmem>>, vector<1x8x128xf32>,
    %cst_291 = arith.constant -1.000000e+30 : f32
    %1047 = vector.broadcast %cst_291 : f32 to vector<8x128xf32>
    %1048 = arith.select %858, %1043, %1047 : vector<8x128xi1>, vector<8x128xf32>
    %cst_292 = arith.constant dense<0xFF800000> : vector<8xf32>
    %1049 = vector.multi_reduction <maximumf>, %1048, %cst_292 [1] : vector<8x128xf32> to vector<8xf32>
    %1050 = vector.shape_cast %1049 : vector<8xf32> to vector<8x1xf32>
    %1051 = vector.broadcast %1050 : vector<8x1xf32> to vector<8x128xf32>
    %1052 = arith.cmpf oeq, %1048, %1051 : vector<8x128xf32>
    %1053 = arith.andi %1052, %858 : vector<8x128xi1>
    %c128_i32_293 = arith.constant 128 : i32
    %1054 = vector.broadcast %c128_i32_293 : i32 to vector<8x128xi32>
    %1055 = arith.select %1053, %855, %1054 : vector<8x128xi1>, vector<8x128xi32>
    %cst_294 = arith.constant dense<2147483647> : vector<8xi32>
    %1056 = vector.multi_reduction <minsi>, %1055, %cst_294 [1] : vector<8x128xi32> to vector<8xi32>
    %1057 = vector.shape_cast %1056 : vector<8xi32> to vector<8x1xi32>
    %1058 = vector.broadcast %1057 : vector<8x1xi32> to vector<8x24xi32>
    %1059 = arith.cmpi eq, %856, %1058 : vector<8x24xi32>
    %1060 = arith.extui %1059 : vector<8x24xi1> to vector<8x24xi32>
    %1061 = arith.sitofp %1060 : vector<8x24xi32> to vector<8x24xf32>
    %1062 = vector.extract_strided_slice %1 {offsets = [0, 2], sizes = [8, 1], strides = [1, 1]} : vector<8x7xi32> to vector<8x1xi32>
    %1063 = vector.broadcast %1062 : vector<8x1xi32> to vector<8x24xi32>
    %1064 = arith.cmpi eq, %1063, %856 : vector<8x24xi32>
    %1065 = arith.extui %1064 : vector<8x24xi1> to vector<8x24xi32>
    %1066 = arith.sitofp %1065 : vector<8x24xi32> to vector<8x24xf32>
    %c2_295 = arith.constant 2 : index
    %1067 = memref.load %arg0[%c2_295] : memref<7xi32, #tpu.memory_space<smem>>
    %c0_i32_296 = arith.constant 0 : i32
    %1068 = arith.cmpi ne, %1067, %c0_i32_296 : i32
    %1069 = arith.select %1068, %1066, %1061 : vector<8x24xf32>
    %cst_297 = arith.constant dense<0.000000e+00> : vector<8x16xf32>
    %1070 = tpu.matmul %1069, %843, %cst_297 {dimension_numbers = #tpu.dot_dimension_numbers<[1], [0], [0], [1], [0, 0, 1, 1], [], []>} : vector<8x24xf32>, vector<24x16xf32>, vector<8x16xf32> -> vector<8x16xf32>
    %cst_298 = arith.constant dense<0.000000e+00> : vector<8x32xf32>
    %1071 = tpu.matmul %1034, %842, %cst_298 {dimension_numbers = #tpu.dot_dimension_numbers<[1], [0], [0], [1], [0, 0, 1, 1], [], []>} : vector<8x32xf32>, vector<32x32xf32>, vector<8x32xf32> -> vector<8x32xf32>
    %1072 = vector.shape_cast %1071 : vector<8x32xf32> to vector<1x8x32xf32>
    %1073 = vector.broadcast %1072 : vector<1x8x32xf32> to vector<8x8x32xf32>
    %1074 = arith.addf %1073, %840 : vector<8x8x32xf32>
    %1075 = math.tanh %1074 : vector<8x8x32xf32>
    %1076 = vector.shape_cast %841 : vector<1x32xf32> to vector<1x1x32xf32>
    %1077 = vector.broadcast %1076 : vector<1x1x32xf32> to vector<8x8x32xf32>
    %1078 = arith.mulf %1075, %1077 : vector<8x8x32xf32>
    %cst_299 = arith.constant dense<0.000000e+00> : vector<8x8xf32>
    %1079 = vector.multi_reduction <add>, %1078, %cst_299 [2] : vector<8x8x32xf32> to vector<8x8xf32>
    %cst_300 = arith.constant -1.000000e+10 : f32
    %1080 = vector.broadcast %cst_300 : f32 to vector<8x8xf32>
    %1081 = arith.select %828, %1079, %1080 : vector<8x8xi1>, vector<8x8xf32>
    %cst_301 = arith.constant dense<0xFF800000> : vector<8xf32>
    %1082 = vector.multi_reduction <maximumf>, %1081, %cst_301 [0] : vector<8x8xf32> to vector<8xf32>
    %1083 = vector.shape_cast %1082 : vector<8xf32> to vector<1x8xf32>
    %1084 = vector.broadcast %1083 : vector<1x8xf32> to vector<8x8xf32>
    %1085 = arith.subf %1081, %1084 : vector<8x8xf32>
    %1086 = math.exp %1085 : vector<8x8xf32>
    %cst_302 = arith.constant dense<0.000000e+00> : vector<8xf32>
    %1087 = vector.multi_reduction <add>, %1086, %cst_302 [0] : vector<8x8xf32> to vector<8xf32>
    %1088 = vector.shape_cast %1087 : vector<8xf32> to vector<1x8xf32>
    %1089 = tpu.reciprocal %1088 {approx = true} : vector<1x8xf32> -> vector<1x8xf32>
    %1090 = vector.broadcast %1089 : vector<1x8xf32> to vector<8x8xf32>
    %1091 = arith.mulf %1086, %1090 : vector<8x8xf32>
    %1092 = vector.shape_cast %1091 : vector<8x8xf32> to vector<8x8x1xf32>
    %1093 = vector.broadcast %1092 : vector<8x8x1xf32> to vector<8x8x32xf32>
    %1094 = arith.mulf %1093, %824 : vector<8x8x32xf32>
    %cst_303 = arith.constant dense<0.000000e+00> : vector<8x32xf32>
    %1095 = vector.multi_reduction <add>, %1094, %cst_303 [0] : vector<8x8x32xf32> to vector<8x32xf32>
    %1096 = vector.shape_cast %1091 : vector<8x8xf32> to vector<8x8x1xf32>
    %1097 = vector.broadcast %1096 : vector<8x8x1xf32> to vector<8x8x32xf32>
    %1098 = arith.mulf %1097, %825 : vector<8x8x32xf32>
    %cst_304 = arith.constant dense<0.000000e+00> : vector<8x32xf32>
    %1099 = vector.multi_reduction <add>, %1098, %cst_304 [0] : vector<8x8x32xf32> to vector<8x32xf32>
    %cst_305 = arith.constant dense<0.000000e+00> : vector<8x96xf32>
    %1100 = tpu.matmul %1070, %844, %cst_305 {dimension_numbers = #tpu.dot_dimension_numbers<[1], [0], [0], [1], [0, 0, 1, 1], [], []>} : vector<8x16xf32>, vector<16x96xf32>, vector<8x96xf32> -> vector<8x96xf32>
    %cst_306 = arith.constant dense<0.000000e+00> : vector<8x96xf32>
    %1101 = tpu.matmul %1095, %845, %cst_306 {dimension_numbers = #tpu.dot_dimension_numbers<[1], [0], [0], [1], [0, 0, 1, 1], [], []>} : vector<8x32xf32>, vector<32x96xf32>, vector<8x96xf32> -> vector<8x96xf32>
    %1102 = arith.addf %1100, %1101 : vector<8x96xf32>
    %cst_307 = arith.constant dense<0.000000e+00> : vector<8x96xf32>
    %1103 = tpu.matmul %1099, %846, %cst_307 {dimension_numbers = #tpu.dot_dimension_numbers<[1], [0], [0], [1], [0, 0, 1, 1], [], []>} : vector<8x32xf32>, vector<32x96xf32>, vector<8x96xf32> -> vector<8x96xf32>
    %1104 = arith.addf %1102, %1103 : vector<8x96xf32>
    %1105 = vector.broadcast %848 : vector<1x96xf32> to vector<8x96xf32>
    %1106 = arith.addf %1104, %1105 : vector<8x96xf32>
    %cst_308 = arith.constant dense<0.000000e+00> : vector<8x96xf32>
    %1107 = tpu.matmul %1034, %847, %cst_308 {dimension_numbers = #tpu.dot_dimension_numbers<[1], [0], [0], [1], [0, 0, 1, 1], [], []>} : vector<8x32xf32>, vector<32x96xf32>, vector<8x96xf32> -> vector<8x96xf32>
    %1108 = vector.broadcast %849 : vector<1x96xf32> to vector<8x96xf32>
    %1109 = arith.addf %1107, %1108 : vector<8x96xf32>
    %1110 = vector.extract_strided_slice %1106 {offsets = [0, 0], sizes = [8, 32], strides = [1, 1]} : vector<8x96xf32> to vector<8x32xf32>
    %1111 = vector.extract_strided_slice %1109 {offsets = [0, 0], sizes = [8, 32], strides = [1, 1]} : vector<8x96xf32> to vector<8x32xf32>
    %1112 = arith.addf %1110, %1111 : vector<8x32xf32>
    %1113 = arith.negf %1112 : vector<8x32xf32>
    %1114 = math.exp %1113 : vector<8x32xf32>
    %cst_309 = arith.constant 1.000000e+00 : f32
    %1115 = vector.broadcast %cst_309 : f32 to vector<8x32xf32>
    %1116 = arith.addf %1115, %1114 : vector<8x32xf32>
    %1117 = arith.divf %1115, %1116 : vector<8x32xf32>
    %1118 = vector.extract_strided_slice %1106 {offsets = [0, 32], sizes = [8, 32], strides = [1, 1]} : vector<8x96xf32> to vector<8x32xf32>
    %1119 = vector.extract_strided_slice %1109 {offsets = [0, 32], sizes = [8, 32], strides = [1, 1]} : vector<8x96xf32> to vector<8x32xf32>
    %1120 = arith.addf %1118, %1119 : vector<8x32xf32>
    %1121 = arith.negf %1120 : vector<8x32xf32>
    %1122 = math.exp %1121 : vector<8x32xf32>
    %cst_310 = arith.constant 1.000000e+00 : f32
    %1123 = vector.broadcast %cst_310 : f32 to vector<8x32xf32>
    %1124 = arith.addf %1123, %1122 : vector<8x32xf32>
    %1125 = arith.divf %1123, %1124 : vector<8x32xf32>
    %1126 = vector.extract_strided_slice %1106 {offsets = [0, 64], sizes = [8, 32], strides = [1, 1]} : vector<8x96xf32> to vector<8x32xf32>
    %1127 = vector.extract_strided_slice %1109 {offsets = [0, 64], sizes = [8, 32], strides = [1, 1]} : vector<8x96xf32> to vector<8x32xf32>
    %1128 = arith.mulf %1117, %1127 : vector<8x32xf32>
    %1129 = arith.addf %1126, %1128 : vector<8x32xf32>
    %1130 = math.tanh %1129 : vector<8x32xf32>
    %cst_311 = arith.constant 1.000000e+00 : f32
    %1131 = vector.broadcast %cst_311 : f32 to vector<8x32xf32>
    %1132 = arith.subf %1131, %1125 : vector<8x32xf32>
    %1133 = arith.mulf %1132, %1130 : vector<8x32xf32>
    %1134 = arith.mulf %1125, %1034 : vector<8x32xf32>
    %1135 = arith.addf %1133, %1134 : vector<8x32xf32>
    %cst_312 = arith.constant dense<0.000000e+00> : vector<8x128xf32>
    %1136 = tpu.matmul %1135, %850, %cst_312 {dimension_numbers = #tpu.dot_dimension_numbers<[1], [0], [0], [1], [0, 0, 1, 1], [], []>} : vector<8x32xf32>, vector<32x128xf32>, vector<8x128xf32> -> vector<8x128xf32>
    %cst_313 = arith.constant dense<0.000000e+00> : vector<8x128xf32>
    %1137 = tpu.matmul %1095, %851, %cst_313 {dimension_numbers = #tpu.dot_dimension_numbers<[1], [0], [0], [1], [0, 0, 1, 1], [], []>} : vector<8x32xf32>, vector<32x128xf32>, vector<8x128xf32> -> vector<8x128xf32>
    %1138 = arith.addf %1136, %1137 : vector<8x128xf32>
    %cst_314 = arith.constant dense<0.000000e+00> : vector<8x128xf32>
    %1139 = tpu.matmul %1099, %852, %cst_314 {dimension_numbers = #tpu.dot_dimension_numbers<[1], [0], [0], [1], [0, 0, 1, 1], [], []>} : vector<8x32xf32>, vector<32x128xf32>, vector<8x128xf32> -> vector<8x128xf32>
    %1140 = arith.addf %1138, %1139 : vector<8x128xf32>
    %cst_315 = arith.constant dense<0.000000e+00> : vector<8x128xf32>
    %1141 = tpu.matmul %1070, %853, %cst_315 {dimension_numbers = #tpu.dot_dimension_numbers<[1], [0], [0], [1], [0, 0, 1, 1], [], []>} : vector<8x16xf32>, vector<16x128xf32>, vector<8x128xf32> -> vector<8x128xf32>
    %1142 = arith.addf %1140, %1141 : vector<8x128xf32>
    %1143 = vector.broadcast %854 : vector<1x128xf32> to vector<8x128xf32>
    %1144 = arith.addf %1142, %1143 : vector<8x128xf32>
    %c3_316 = arith.constant 3 : index
    %c0_317 = arith.constant 0 : index
    %c0_318 = arith.constant 0 : index
    %1145 = vector.load %arg34[%c3_316, %c0_317, %c0_318] : memref<7x8x128xf32, #tpu.memory_space<vmem>>, vector<1x8x128xf32>
    %1146 = vector.shape_cast %1145 : vector<1x8x128xf32> to vector<8x128xf32>
    %1147 = vector.shape_cast %1144 : vector<8x128xf32> to vector<1x8x128xf32>
    tpu.vector_store %arg34[%c3_316, %c0_317, %c0_318], %1147 {strides = array<i32>} : memref<7x8x128xf32, #tpu.memory_space<vmem>>, vector<1x8x128xf32>,
    %cst_319 = arith.constant -1.000000e+30 : f32
    %1148 = vector.broadcast %cst_319 : f32 to vector<8x128xf32>
    %1149 = arith.select %858, %1144, %1148 : vector<8x128xi1>, vector<8x128xf32>
    %cst_320 = arith.constant dense<0xFF800000> : vector<8xf32>
    %1150 = vector.multi_reduction <maximumf>, %1149, %cst_320 [1] : vector<8x128xf32> to vector<8xf32>
    %1151 = vector.shape_cast %1150 : vector<8xf32> to vector<8x1xf32>
    %1152 = vector.broadcast %1151 : vector<8x1xf32> to vector<8x128xf32>
    %1153 = arith.cmpf oeq, %1149, %1152 : vector<8x128xf32>
    %1154 = arith.andi %1153, %858 : vector<8x128xi1>
    %c128_i32_321 = arith.constant 128 : i32
    %1155 = vector.broadcast %c128_i32_321 : i32 to vector<8x128xi32>
    %1156 = arith.select %1154, %855, %1155 : vector<8x128xi1>, vector<8x128xi32>
    %cst_322 = arith.constant dense<2147483647> : vector<8xi32>
    %1157 = vector.multi_reduction <minsi>, %1156, %cst_322 [1] : vector<8x128xi32> to vector<8xi32>
    %1158 = vector.shape_cast %1157 : vector<8xi32> to vector<8x1xi32>
    %1159 = vector.broadcast %1158 : vector<8x1xi32> to vector<8x24xi32>
    %1160 = arith.cmpi eq, %856, %1159 : vector<8x24xi32>
    %1161 = arith.extui %1160 : vector<8x24xi1> to vector<8x24xi32>
    %1162 = arith.sitofp %1161 : vector<8x24xi32> to vector<8x24xf32>
    %1163 = vector.extract_strided_slice %1 {offsets = [0, 3], sizes = [8, 1], strides = [1, 1]} : vector<8x7xi32> to vector<8x1xi32>
    %1164 = vector.broadcast %1163 : vector<8x1xi32> to vector<8x24xi32>
    %1165 = arith.cmpi eq, %1164, %856 : vector<8x24xi32>
    %1166 = arith.extui %1165 : vector<8x24xi1> to vector<8x24xi32>
    %1167 = arith.sitofp %1166 : vector<8x24xi32> to vector<8x24xf32>
    %c3_323 = arith.constant 3 : index
    %1168 = memref.load %arg0[%c3_323] : memref<7xi32, #tpu.memory_space<smem>>
    %c0_i32_324 = arith.constant 0 : i32
    %1169 = arith.cmpi ne, %1168, %c0_i32_324 : i32
    %1170 = arith.select %1169, %1167, %1162 : vector<8x24xf32>
    %cst_325 = arith.constant dense<0.000000e+00> : vector<8x16xf32>
    %1171 = tpu.matmul %1170, %843, %cst_325 {dimension_numbers = #tpu.dot_dimension_numbers<[1], [0], [0], [1], [0, 0, 1, 1], [], []>} : vector<8x24xf32>, vector<24x16xf32>, vector<8x16xf32> -> vector<8x16xf32>
    %cst_326 = arith.constant dense<0.000000e+00> : vector<8x32xf32>
    %1172 = tpu.matmul %1135, %842, %cst_326 {dimension_numbers = #tpu.dot_dimension_numbers<[1], [0], [0], [1], [0, 0, 1, 1], [], []>} : vector<8x32xf32>, vector<32x32xf32>, vector<8x32xf32> -> vector<8x32xf32>
    %1173 = vector.shape_cast %1172 : vector<8x32xf32> to vector<1x8x32xf32>
    %1174 = vector.broadcast %1173 : vector<1x8x32xf32> to vector<8x8x32xf32>
    %1175 = arith.addf %1174, %840 : vector<8x8x32xf32>
    %1176 = math.tanh %1175 : vector<8x8x32xf32>
    %1177 = vector.shape_cast %841 : vector<1x32xf32> to vector<1x1x32xf32>
    %1178 = vector.broadcast %1177 : vector<1x1x32xf32> to vector<8x8x32xf32>
    %1179 = arith.mulf %1176, %1178 : vector<8x8x32xf32>
    %cst_327 = arith.constant dense<0.000000e+00> : vector<8x8xf32>
    %1180 = vector.multi_reduction <add>, %1179, %cst_327 [2] : vector<8x8x32xf32> to vector<8x8xf32>
    %cst_328 = arith.constant -1.000000e+10 : f32
    %1181 = vector.broadcast %cst_328 : f32 to vector<8x8xf32>
    %1182 = arith.select %828, %1180, %1181 : vector<8x8xi1>, vector<8x8xf32>
    %cst_329 = arith.constant dense<0xFF800000> : vector<8xf32>
    %1183 = vector.multi_reduction <maximumf>, %1182, %cst_329 [0] : vector<8x8xf32> to vector<8xf32>
    %1184 = vector.shape_cast %1183 : vector<8xf32> to vector<1x8xf32>
    %1185 = vector.broadcast %1184 : vector<1x8xf32> to vector<8x8xf32>
    %1186 = arith.subf %1182, %1185 : vector<8x8xf32>
    %1187 = math.exp %1186 : vector<8x8xf32>
    %cst_330 = arith.constant dense<0.000000e+00> : vector<8xf32>
    %1188 = vector.multi_reduction <add>, %1187, %cst_330 [0] : vector<8x8xf32> to vector<8xf32>
    %1189 = vector.shape_cast %1188 : vector<8xf32> to vector<1x8xf32>
    %1190 = tpu.reciprocal %1189 {approx = true} : vector<1x8xf32> -> vector<1x8xf32>
    %1191 = vector.broadcast %1190 : vector<1x8xf32> to vector<8x8xf32>
    %1192 = arith.mulf %1187, %1191 : vector<8x8xf32>
    %1193 = vector.shape_cast %1192 : vector<8x8xf32> to vector<8x8x1xf32>
    %1194 = vector.broadcast %1193 : vector<8x8x1xf32> to vector<8x8x32xf32>
    %1195 = arith.mulf %1194, %824 : vector<8x8x32xf32>
    %cst_331 = arith.constant dense<0.000000e+00> : vector<8x32xf32>
    %1196 = vector.multi_reduction <add>, %1195, %cst_331 [0] : vector<8x8x32xf32> to vector<8x32xf32>
    %1197 = vector.shape_cast %1192 : vector<8x8xf32> to vector<8x8x1xf32>
    %1198 = vector.broadcast %1197 : vector<8x8x1xf32> to vector<8x8x32xf32>
    %1199 = arith.mulf %1198, %825 : vector<8x8x32xf32>
    %cst_332 = arith.constant dense<0.000000e+00> : vector<8x32xf32>
    %1200 = vector.multi_reduction <add>, %1199, %cst_332 [0] : vector<8x8x32xf32> to vector<8x32xf32>
    %cst_333 = arith.constant dense<0.000000e+00> : vector<8x96xf32>
    %1201 = tpu.matmul %1171, %844, %cst_333 {dimension_numbers = #tpu.dot_dimension_numbers<[1], [0], [0], [1], [0, 0, 1, 1], [], []>} : vector<8x16xf32>, vector<16x96xf32>, vector<8x96xf32> -> vector<8x96xf32>
    %cst_334 = arith.constant dense<0.000000e+00> : vector<8x96xf32>
    %1202 = tpu.matmul %1196, %845, %cst_334 {dimension_numbers = #tpu.dot_dimension_numbers<[1], [0], [0], [1], [0, 0, 1, 1], [], []>} : vector<8x32xf32>, vector<32x96xf32>, vector<8x96xf32> -> vector<8x96xf32>
    %1203 = arith.addf %1201, %1202 : vector<8x96xf32>
    %cst_335 = arith.constant dense<0.000000e+00> : vector<8x96xf32>
    %1204 = tpu.matmul %1200, %846, %cst_335 {dimension_numbers = #tpu.dot_dimension_numbers<[1], [0], [0], [1], [0, 0, 1, 1], [], []>} : vector<8x32xf32>, vector<32x96xf32>, vector<8x96xf32> -> vector<8x96xf32>
    %1205 = arith.addf %1203, %1204 : vector<8x96xf32>
    %1206 = vector.broadcast %848 : vector<1x96xf32> to vector<8x96xf32>
    %1207 = arith.addf %1205, %1206 : vector<8x96xf32>
    %cst_336 = arith.constant dense<0.000000e+00> : vector<8x96xf32>
    %1208 = tpu.matmul %1135, %847, %cst_336 {dimension_numbers = #tpu.dot_dimension_numbers<[1], [0], [0], [1], [0, 0, 1, 1], [], []>} : vector<8x32xf32>, vector<32x96xf32>, vector<8x96xf32> -> vector<8x96xf32>
    %1209 = vector.broadcast %849 : vector<1x96xf32> to vector<8x96xf32>
    %1210 = arith.addf %1208, %1209 : vector<8x96xf32>
    %1211 = vector.extract_strided_slice %1207 {offsets = [0, 0], sizes = [8, 32], strides = [1, 1]} : vector<8x96xf32> to vector<8x32xf32>
    %1212 = vector.extract_strided_slice %1210 {offsets = [0, 0], sizes = [8, 32], strides = [1, 1]} : vector<8x96xf32> to vector<8x32xf32>
    %1213 = arith.addf %1211, %1212 : vector<8x32xf32>
    %1214 = arith.negf %1213 : vector<8x32xf32>
    %1215 = math.exp %1214 : vector<8x32xf32>
    %cst_337 = arith.constant 1.000000e+00 : f32
    %1216 = vector.broadcast %cst_337 : f32 to vector<8x32xf32>
    %1217 = arith.addf %1216, %1215 : vector<8x32xf32>
    %1218 = arith.divf %1216, %1217 : vector<8x32xf32>
    %1219 = vector.extract_strided_slice %1207 {offsets = [0, 32], sizes = [8, 32], strides = [1, 1]} : vector<8x96xf32> to vector<8x32xf32>
    %1220 = vector.extract_strided_slice %1210 {offsets = [0, 32], sizes = [8, 32], strides = [1, 1]} : vector<8x96xf32> to vector<8x32xf32>
    %1221 = arith.addf %1219, %1220 : vector<8x32xf32>
    %1222 = arith.negf %1221 : vector<8x32xf32>
    %1223 = math.exp %1222 : vector<8x32xf32>
    %cst_338 = arith.constant 1.000000e+00 : f32
    %1224 = vector.broadcast %cst_338 : f32 to vector<8x32xf32>
    %1225 = arith.addf %1224, %1223 : vector<8x32xf32>
    %1226 = arith.divf %1224, %1225 : vector<8x32xf32>
    %1227 = vector.extract_strided_slice %1207 {offsets = [0, 64], sizes = [8, 32], strides = [1, 1]} : vector<8x96xf32> to vector<8x32xf32>
    %1228 = vector.extract_strided_slice %1210 {offsets = [0, 64], sizes = [8, 32], strides = [1, 1]} : vector<8x96xf32> to vector<8x32xf32>
    %1229 = arith.mulf %1218, %1228 : vector<8x32xf32>
    %1230 = arith.addf %1227, %1229 : vector<8x32xf32>
    %1231 = math.tanh %1230 : vector<8x32xf32>
    %cst_339 = arith.constant 1.000000e+00 : f32
    %1232 = vector.broadcast %cst_339 : f32 to vector<8x32xf32>
    %1233 = arith.subf %1232, %1226 : vector<8x32xf32>
    %1234 = arith.mulf %1233, %1231 : vector<8x32xf32>
    %1235 = arith.mulf %1226, %1135 : vector<8x32xf32>
    %1236 = arith.addf %1234, %1235 : vector<8x32xf32>
    %cst_340 = arith.constant dense<0.000000e+00> : vector<8x128xf32>
    %1237 = tpu.matmul %1236, %850, %cst_340 {dimension_numbers = #tpu.dot_dimension_numbers<[1], [0], [0], [1], [0, 0, 1, 1], [], []>} : vector<8x32xf32>, vector<32x128xf32>, vector<8x128xf32> -> vector<8x128xf32>
    %cst_341 = arith.constant dense<0.000000e+00> : vector<8x128xf32>
    %1238 = tpu.matmul %1196, %851, %cst_341 {dimension_numbers = #tpu.dot_dimension_numbers<[1], [0], [0], [1], [0, 0, 1, 1], [], []>} : vector<8x32xf32>, vector<32x128xf32>, vector<8x128xf32> -> vector<8x128xf32>
    %1239 = arith.addf %1237, %1238 : vector<8x128xf32>
    %cst_342 = arith.constant dense<0.000000e+00> : vector<8x128xf32>
    %1240 = tpu.matmul %1200, %852, %cst_342 {dimension_numbers = #tpu.dot_dimension_numbers<[1], [0], [0], [1], [0, 0, 1, 1], [], []>} : vector<8x32xf32>, vector<32x128xf32>, vector<8x128xf32> -> vector<8x128xf32>
    %1241 = arith.addf %1239, %1240 : vector<8x128xf32>
    %cst_343 = arith.constant dense<0.000000e+00> : vector<8x128xf32>
    %1242 = tpu.matmul %1171, %853, %cst_343 {dimension_numbers = #tpu.dot_dimension_numbers<[1], [0], [0], [1], [0, 0, 1, 1], [], []>} : vector<8x16xf32>, vector<16x128xf32>, vector<8x128xf32> -> vector<8x128xf32>
    %1243 = arith.addf %1241, %1242 : vector<8x128xf32>
    %1244 = vector.broadcast %854 : vector<1x128xf32> to vector<8x128xf32>
    %1245 = arith.addf %1243, %1244 : vector<8x128xf32>
    %c4_344 = arith.constant 4 : index
    %c0_345 = arith.constant 0 : index
    %c0_346 = arith.constant 0 : index
    %1246 = vector.load %arg34[%c4_344, %c0_345, %c0_346] : memref<7x8x128xf32, #tpu.memory_space<vmem>>, vector<1x8x128xf32>
    %1247 = vector.shape_cast %1246 : vector<1x8x128xf32> to vector<8x128xf32>
    %1248 = vector.shape_cast %1245 : vector<8x128xf32> to vector<1x8x128xf32>
    tpu.vector_store %arg34[%c4_344, %c0_345, %c0_346], %1248 {strides = array<i32>} : memref<7x8x128xf32, #tpu.memory_space<vmem>>, vector<1x8x128xf32>,
    %cst_347 = arith.constant -1.000000e+30 : f32
    %1249 = vector.broadcast %cst_347 : f32 to vector<8x128xf32>
    %1250 = arith.select %858, %1245, %1249 : vector<8x128xi1>, vector<8x128xf32>
    %cst_348 = arith.constant dense<0xFF800000> : vector<8xf32>
    %1251 = vector.multi_reduction <maximumf>, %1250, %cst_348 [1] : vector<8x128xf32> to vector<8xf32>
    %1252 = vector.shape_cast %1251 : vector<8xf32> to vector<8x1xf32>
    %1253 = vector.broadcast %1252 : vector<8x1xf32> to vector<8x128xf32>
    %1254 = arith.cmpf oeq, %1250, %1253 : vector<8x128xf32>
    %1255 = arith.andi %1254, %858 : vector<8x128xi1>
    %c128_i32_349 = arith.constant 128 : i32
    %1256 = vector.broadcast %c128_i32_349 : i32 to vector<8x128xi32>
    %1257 = arith.select %1255, %855, %1256 : vector<8x128xi1>, vector<8x128xi32>
    %cst_350 = arith.constant dense<2147483647> : vector<8xi32>
    %1258 = vector.multi_reduction <minsi>, %1257, %cst_350 [1] : vector<8x128xi32> to vector<8xi32>
    %1259 = vector.shape_cast %1258 : vector<8xi32> to vector<8x1xi32>
    %1260 = vector.broadcast %1259 : vector<8x1xi32> to vector<8x24xi32>
    %1261 = arith.cmpi eq, %856, %1260 : vector<8x24xi32>
    %1262 = arith.extui %1261 : vector<8x24xi1> to vector<8x24xi32>
    %1263 = arith.sitofp %1262 : vector<8x24xi32> to vector<8x24xf32>
    %1264 = vector.extract_strided_slice %1 {offsets = [0, 4], sizes = [8, 1], strides = [1, 1]} : vector<8x7xi32> to vector<8x1xi32>
    %1265 = vector.broadcast %1264 : vector<8x1xi32> to vector<8x24xi32>
    %1266 = arith.cmpi eq, %1265, %856 : vector<8x24xi32>
    %1267 = arith.extui %1266 : vector<8x24xi1> to vector<8x24xi32>
    %1268 = arith.sitofp %1267 : vector<8x24xi32> to vector<8x24xf32>
    %c4_351 = arith.constant 4 : index
    %1269 = memref.load %arg0[%c4_351] : memref<7xi32, #tpu.memory_space<smem>>
    %c0_i32_352 = arith.constant 0 : i32
    %1270 = arith.cmpi ne, %1269, %c0_i32_352 : i32
    %1271 = arith.select %1270, %1268, %1263 : vector<8x24xf32>
    %cst_353 = arith.constant dense<0.000000e+00> : vector<8x16xf32>
    %1272 = tpu.matmul %1271, %843, %cst_353 {dimension_numbers = #tpu.dot_dimension_numbers<[1], [0], [0], [1], [0, 0, 1, 1], [], []>} : vector<8x24xf32>, vector<24x16xf32>, vector<8x16xf32> -> vector<8x16xf32>
    %cst_354 = arith.constant dense<0.000000e+00> : vector<8x32xf32>
    %1273 = tpu.matmul %1236, %842, %cst_354 {dimension_numbers = #tpu.dot_dimension_numbers<[1], [0], [0], [1], [0, 0, 1, 1], [], []>} : vector<8x32xf32>, vector<32x32xf32>, vector<8x32xf32> -> vector<8x32xf32>
    %1274 = vector.shape_cast %1273 : vector<8x32xf32> to vector<1x8x32xf32>
    %1275 = vector.broadcast %1274 : vector<1x8x32xf32> to vector<8x8x32xf32>
    %1276 = arith.addf %1275, %840 : vector<8x8x32xf32>
    %1277 = math.tanh %1276 : vector<8x8x32xf32>
    %1278 = vector.shape_cast %841 : vector<1x32xf32> to vector<1x1x32xf32>
    %1279 = vector.broadcast %1278 : vector<1x1x32xf32> to vector<8x8x32xf32>
    %1280 = arith.mulf %1277, %1279 : vector<8x8x32xf32>
    %cst_355 = arith.constant dense<0.000000e+00> : vector<8x8xf32>
    %1281 = vector.multi_reduction <add>, %1280, %cst_355 [2] : vector<8x8x32xf32> to vector<8x8xf32>
    %cst_356 = arith.constant -1.000000e+10 : f32
    %1282 = vector.broadcast %cst_356 : f32 to vector<8x8xf32>
    %1283 = arith.select %828, %1281, %1282 : vector<8x8xi1>, vector<8x8xf32>
    %cst_357 = arith.constant dense<0xFF800000> : vector<8xf32>
    %1284 = vector.multi_reduction <maximumf>, %1283, %cst_357 [0] : vector<8x8xf32> to vector<8xf32>
    %1285 = vector.shape_cast %1284 : vector<8xf32> to vector<1x8xf32>
    %1286 = vector.broadcast %1285 : vector<1x8xf32> to vector<8x8xf32>
    %1287 = arith.subf %1283, %1286 : vector<8x8xf32>
    %1288 = math.exp %1287 : vector<8x8xf32>
    %cst_358 = arith.constant dense<0.000000e+00> : vector<8xf32>
    %1289 = vector.multi_reduction <add>, %1288, %cst_358 [0] : vector<8x8xf32> to vector<8xf32>
    %1290 = vector.shape_cast %1289 : vector<8xf32> to vector<1x8xf32>
    %1291 = tpu.reciprocal %1290 {approx = true} : vector<1x8xf32> -> vector<1x8xf32>
    %1292 = vector.broadcast %1291 : vector<1x8xf32> to vector<8x8xf32>
    %1293 = arith.mulf %1288, %1292 : vector<8x8xf32>
    %1294 = vector.shape_cast %1293 : vector<8x8xf32> to vector<8x8x1xf32>
    %1295 = vector.broadcast %1294 : vector<8x8x1xf32> to vector<8x8x32xf32>
    %1296 = arith.mulf %1295, %824 : vector<8x8x32xf32>
    %cst_359 = arith.constant dense<0.000000e+00> : vector<8x32xf32>
    %1297 = vector.multi_reduction <add>, %1296, %cst_359 [0] : vector<8x8x32xf32> to vector<8x32xf32>
    %1298 = vector.shape_cast %1293 : vector<8x8xf32> to vector<8x8x1xf32>
    %1299 = vector.broadcast %1298 : vector<8x8x1xf32> to vector<8x8x32xf32>
    %1300 = arith.mulf %1299, %825 : vector<8x8x32xf32>
    %cst_360 = arith.constant dense<0.000000e+00> : vector<8x32xf32>
    %1301 = vector.multi_reduction <add>, %1300, %cst_360 [0] : vector<8x8x32xf32> to vector<8x32xf32>
    %cst_361 = arith.constant dense<0.000000e+00> : vector<8x96xf32>
    %1302 = tpu.matmul %1272, %844, %cst_361 {dimension_numbers = #tpu.dot_dimension_numbers<[1], [0], [0], [1], [0, 0, 1, 1], [], []>} : vector<8x16xf32>, vector<16x96xf32>, vector<8x96xf32> -> vector<8x96xf32>
    %cst_362 = arith.constant dense<0.000000e+00> : vector<8x96xf32>
    %1303 = tpu.matmul %1297, %845, %cst_362 {dimension_numbers = #tpu.dot_dimension_numbers<[1], [0], [0], [1], [0, 0, 1, 1], [], []>} : vector<8x32xf32>, vector<32x96xf32>, vector<8x96xf32> -> vector<8x96xf32>
    %1304 = arith.addf %1302, %1303 : vector<8x96xf32>
    %cst_363 = arith.constant dense<0.000000e+00> : vector<8x96xf32>
    %1305 = tpu.matmul %1301, %846, %cst_363 {dimension_numbers = #tpu.dot_dimension_numbers<[1], [0], [0], [1], [0, 0, 1, 1], [], []>} : vector<8x32xf32>, vector<32x96xf32>, vector<8x96xf32> -> vector<8x96xf32>
    %1306 = arith.addf %1304, %1305 : vector<8x96xf32>
    %1307 = vector.broadcast %848 : vector<1x96xf32> to vector<8x96xf32>
    %1308 = arith.addf %1306, %1307 : vector<8x96xf32>
    %cst_364 = arith.constant dense<0.000000e+00> : vector<8x96xf32>
    %1309 = tpu.matmul %1236, %847, %cst_364 {dimension_numbers = #tpu.dot_dimension_numbers<[1], [0], [0], [1], [0, 0, 1, 1], [], []>} : vector<8x32xf32>, vector<32x96xf32>, vector<8x96xf32> -> vector<8x96xf32>
    %1310 = vector.broadcast %849 : vector<1x96xf32> to vector<8x96xf32>
    %1311 = arith.addf %1309, %1310 : vector<8x96xf32>
    %1312 = vector.extract_strided_slice %1308 {offsets = [0, 0], sizes = [8, 32], strides = [1, 1]} : vector<8x96xf32> to vector<8x32xf32>
    %1313 = vector.extract_strided_slice %1311 {offsets = [0, 0], sizes = [8, 32], strides = [1, 1]} : vector<8x96xf32> to vector<8x32xf32>
    %1314 = arith.addf %1312, %1313 : vector<8x32xf32>
    %1315 = arith.negf %1314 : vector<8x32xf32>
    %1316 = math.exp %1315 : vector<8x32xf32>
    %cst_365 = arith.constant 1.000000e+00 : f32
    %1317 = vector.broadcast %cst_365 : f32 to vector<8x32xf32>
    %1318 = arith.addf %1317, %1316 : vector<8x32xf32>
    %1319 = arith.divf %1317, %1318 : vector<8x32xf32>
    %1320 = vector.extract_strided_slice %1308 {offsets = [0, 32], sizes = [8, 32], strides = [1, 1]} : vector<8x96xf32> to vector<8x32xf32>
    %1321 = vector.extract_strided_slice %1311 {offsets = [0, 32], sizes = [8, 32], strides = [1, 1]} : vector<8x96xf32> to vector<8x32xf32>
    %1322 = arith.addf %1320, %1321 : vector<8x32xf32>
    %1323 = arith.negf %1322 : vector<8x32xf32>
    %1324 = math.exp %1323 : vector<8x32xf32>
    %cst_366 = arith.constant 1.000000e+00 : f32
    %1325 = vector.broadcast %cst_366 : f32 to vector<8x32xf32>
    %1326 = arith.addf %1325, %1324 : vector<8x32xf32>
    %1327 = arith.divf %1325, %1326 : vector<8x32xf32>
    %1328 = vector.extract_strided_slice %1308 {offsets = [0, 64], sizes = [8, 32], strides = [1, 1]} : vector<8x96xf32> to vector<8x32xf32>
    %1329 = vector.extract_strided_slice %1311 {offsets = [0, 64], sizes = [8, 32], strides = [1, 1]} : vector<8x96xf32> to vector<8x32xf32>
    %1330 = arith.mulf %1319, %1329 : vector<8x32xf32>
    %1331 = arith.addf %1328, %1330 : vector<8x32xf32>
    %1332 = math.tanh %1331 : vector<8x32xf32>
    %cst_367 = arith.constant 1.000000e+00 : f32
    %1333 = vector.broadcast %cst_367 : f32 to vector<8x32xf32>
    %1334 = arith.subf %1333, %1327 : vector<8x32xf32>
    %1335 = arith.mulf %1334, %1332 : vector<8x32xf32>
    %1336 = arith.mulf %1327, %1236 : vector<8x32xf32>
    %1337 = arith.addf %1335, %1336 : vector<8x32xf32>
    %cst_368 = arith.constant dense<0.000000e+00> : vector<8x128xf32>
    %1338 = tpu.matmul %1337, %850, %cst_368 {dimension_numbers = #tpu.dot_dimension_numbers<[1], [0], [0], [1], [0, 0, 1, 1], [], []>} : vector<8x32xf32>, vector<32x128xf32>, vector<8x128xf32> -> vector<8x128xf32>
    %cst_369 = arith.constant dense<0.000000e+00> : vector<8x128xf32>
    %1339 = tpu.matmul %1297, %851, %cst_369 {dimension_numbers = #tpu.dot_dimension_numbers<[1], [0], [0], [1], [0, 0, 1, 1], [], []>} : vector<8x32xf32>, vector<32x128xf32>, vector<8x128xf32> -> vector<8x128xf32>
    %1340 = arith.addf %1338, %1339 : vector<8x128xf32>
    %cst_370 = arith.constant dense<0.000000e+00> : vector<8x128xf32>
    %1341 = tpu.matmul %1301, %852, %cst_370 {dimension_numbers = #tpu.dot_dimension_numbers<[1], [0], [0], [1], [0, 0, 1, 1], [], []>} : vector<8x32xf32>, vector<32x128xf32>, vector<8x128xf32> -> vector<8x128xf32>
    %1342 = arith.addf %1340, %1341 : vector<8x128xf32>
    %cst_371 = arith.constant dense<0.000000e+00> : vector<8x128xf32>
    %1343 = tpu.matmul %1272, %853, %cst_371 {dimension_numbers = #tpu.dot_dimension_numbers<[1], [0], [0], [1], [0, 0, 1, 1], [], []>} : vector<8x16xf32>, vector<16x128xf32>, vector<8x128xf32> -> vector<8x128xf32>
    %1344 = arith.addf %1342, %1343 : vector<8x128xf32>
    %1345 = vector.broadcast %854 : vector<1x128xf32> to vector<8x128xf32>
    %1346 = arith.addf %1344, %1345 : vector<8x128xf32>
    %c5_372 = arith.constant 5 : index
    %c0_373 = arith.constant 0 : index
    %c0_374 = arith.constant 0 : index
    %1347 = vector.load %arg34[%c5_372, %c0_373, %c0_374] : memref<7x8x128xf32, #tpu.memory_space<vmem>>, vector<1x8x128xf32>
    %1348 = vector.shape_cast %1347 : vector<1x8x128xf32> to vector<8x128xf32>
    %1349 = vector.shape_cast %1346 : vector<8x128xf32> to vector<1x8x128xf32>
    tpu.vector_store %arg34[%c5_372, %c0_373, %c0_374], %1349 {strides = array<i32>} : memref<7x8x128xf32, #tpu.memory_space<vmem>>, vector<1x8x128xf32>,
    %cst_375 = arith.constant -1.000000e+30 : f32
    %1350 = vector.broadcast %cst_375 : f32 to vector<8x128xf32>
    %1351 = arith.select %858, %1346, %1350 : vector<8x128xi1>, vector<8x128xf32>
    %cst_376 = arith.constant dense<0xFF800000> : vector<8xf32>
    %1352 = vector.multi_reduction <maximumf>, %1351, %cst_376 [1] : vector<8x128xf32> to vector<8xf32>
    %1353 = vector.shape_cast %1352 : vector<8xf32> to vector<8x1xf32>
    %1354 = vector.broadcast %1353 : vector<8x1xf32> to vector<8x128xf32>
    %1355 = arith.cmpf oeq, %1351, %1354 : vector<8x128xf32>
    %1356 = arith.andi %1355, %858 : vector<8x128xi1>
    %c128_i32_377 = arith.constant 128 : i32
    %1357 = vector.broadcast %c128_i32_377 : i32 to vector<8x128xi32>
    %1358 = arith.select %1356, %855, %1357 : vector<8x128xi1>, vector<8x128xi32>
    %cst_378 = arith.constant dense<2147483647> : vector<8xi32>
    %1359 = vector.multi_reduction <minsi>, %1358, %cst_378 [1] : vector<8x128xi32> to vector<8xi32>
    %1360 = vector.shape_cast %1359 : vector<8xi32> to vector<8x1xi32>
    %1361 = vector.broadcast %1360 : vector<8x1xi32> to vector<8x24xi32>
    %1362 = arith.cmpi eq, %856, %1361 : vector<8x24xi32>
    %1363 = arith.extui %1362 : vector<8x24xi1> to vector<8x24xi32>
    %1364 = arith.sitofp %1363 : vector<8x24xi32> to vector<8x24xf32>
    %1365 = vector.extract_strided_slice %1 {offsets = [0, 5], sizes = [8, 1], strides = [1, 1]} : vector<8x7xi32> to vector<8x1xi32>
    %1366 = vector.broadcast %1365 : vector<8x1xi32> to vector<8x24xi32>
    %1367 = arith.cmpi eq, %1366, %856 : vector<8x24xi32>
    %1368 = arith.extui %1367 : vector<8x24xi1> to vector<8x24xi32>
    %1369 = arith.sitofp %1368 : vector<8x24xi32> to vector<8x24xf32>
    %c5_379 = arith.constant 5 : index
    %1370 = memref.load %arg0[%c5_379] : memref<7xi32, #tpu.memory_space<smem>>
    %c0_i32_380 = arith.constant 0 : i32
    %1371 = arith.cmpi ne, %1370, %c0_i32_380 : i32
    %1372 = arith.select %1371, %1369, %1364 : vector<8x24xf32>
    %cst_381 = arith.constant dense<0.000000e+00> : vector<8x16xf32>
    %1373 = tpu.matmul %1372, %843, %cst_381 {dimension_numbers = #tpu.dot_dimension_numbers<[1], [0], [0], [1], [0, 0, 1, 1], [], []>} : vector<8x24xf32>, vector<24x16xf32>, vector<8x16xf32> -> vector<8x16xf32>
    %cst_382 = arith.constant dense<0.000000e+00> : vector<8x32xf32>
    %1374 = tpu.matmul %1337, %842, %cst_382 {dimension_numbers = #tpu.dot_dimension_numbers<[1], [0], [0], [1], [0, 0, 1, 1], [], []>} : vector<8x32xf32>, vector<32x32xf32>, vector<8x32xf32> -> vector<8x32xf32>
    %1375 = vector.shape_cast %1374 : vector<8x32xf32> to vector<1x8x32xf32>
    %1376 = vector.broadcast %1375 : vector<1x8x32xf32> to vector<8x8x32xf32>
    %1377 = arith.addf %1376, %840 : vector<8x8x32xf32>
    %1378 = math.tanh %1377 : vector<8x8x32xf32>
    %1379 = vector.shape_cast %841 : vector<1x32xf32> to vector<1x1x32xf32>
    %1380 = vector.broadcast %1379 : vector<1x1x32xf32> to vector<8x8x32xf32>
    %1381 = arith.mulf %1378, %1380 : vector<8x8x32xf32>
    %cst_383 = arith.constant dense<0.000000e+00> : vector<8x8xf32>
    %1382 = vector.multi_reduction <add>, %1381, %cst_383 [2] : vector<8x8x32xf32> to vector<8x8xf32>
    %cst_384 = arith.constant -1.000000e+10 : f32
    %1383 = vector.broadcast %cst_384 : f32 to vector<8x8xf32>
    %1384 = arith.select %828, %1382, %1383 : vector<8x8xi1>, vector<8x8xf32>
    %cst_385 = arith.constant dense<0xFF800000> : vector<8xf32>
    %1385 = vector.multi_reduction <maximumf>, %1384, %cst_385 [0] : vector<8x8xf32> to vector<8xf32>
    %1386 = vector.shape_cast %1385 : vector<8xf32> to vector<1x8xf32>
    %1387 = vector.broadcast %1386 : vector<1x8xf32> to vector<8x8xf32>
    %1388 = arith.subf %1384, %1387 : vector<8x8xf32>
    %1389 = math.exp %1388 : vector<8x8xf32>
    %cst_386 = arith.constant dense<0.000000e+00> : vector<8xf32>
    %1390 = vector.multi_reduction <add>, %1389, %cst_386 [0] : vector<8x8xf32> to vector<8xf32>
    %1391 = vector.shape_cast %1390 : vector<8xf32> to vector<1x8xf32>
    %1392 = tpu.reciprocal %1391 {approx = true} : vector<1x8xf32> -> vector<1x8xf32>
    %1393 = vector.broadcast %1392 : vector<1x8xf32> to vector<8x8xf32>
    %1394 = arith.mulf %1389, %1393 : vector<8x8xf32>
    %1395 = vector.shape_cast %1394 : vector<8x8xf32> to vector<8x8x1xf32>
    %1396 = vector.broadcast %1395 : vector<8x8x1xf32> to vector<8x8x32xf32>
    %1397 = arith.mulf %1396, %824 : vector<8x8x32xf32>
    %cst_387 = arith.constant dense<0.000000e+00> : vector<8x32xf32>
    %1398 = vector.multi_reduction <add>, %1397, %cst_387 [0] : vector<8x8x32xf32> to vector<8x32xf32>
    %1399 = vector.shape_cast %1394 : vector<8x8xf32> to vector<8x8x1xf32>
    %1400 = vector.broadcast %1399 : vector<8x8x1xf32> to vector<8x8x32xf32>
    %1401 = arith.mulf %1400, %825 : vector<8x8x32xf32>
    %cst_388 = arith.constant dense<0.000000e+00> : vector<8x32xf32>
    %1402 = vector.multi_reduction <add>, %1401, %cst_388 [0] : vector<8x8x32xf32> to vector<8x32xf32>
    %cst_389 = arith.constant dense<0.000000e+00> : vector<8x96xf32>
    %1403 = tpu.matmul %1373, %844, %cst_389 {dimension_numbers = #tpu.dot_dimension_numbers<[1], [0], [0], [1], [0, 0, 1, 1], [], []>} : vector<8x16xf32>, vector<16x96xf32>, vector<8x96xf32> -> vector<8x96xf32>
    %cst_390 = arith.constant dense<0.000000e+00> : vector<8x96xf32>
    %1404 = tpu.matmul %1398, %845, %cst_390 {dimension_numbers = #tpu.dot_dimension_numbers<[1], [0], [0], [1], [0, 0, 1, 1], [], []>} : vector<8x32xf32>, vector<32x96xf32>, vector<8x96xf32> -> vector<8x96xf32>
    %1405 = arith.addf %1403, %1404 : vector<8x96xf32>
    %cst_391 = arith.constant dense<0.000000e+00> : vector<8x96xf32>
    %1406 = tpu.matmul %1402, %846, %cst_391 {dimension_numbers = #tpu.dot_dimension_numbers<[1], [0], [0], [1], [0, 0, 1, 1], [], []>} : vector<8x32xf32>, vector<32x96xf32>, vector<8x96xf32> -> vector<8x96xf32>
    %1407 = arith.addf %1405, %1406 : vector<8x96xf32>
    %1408 = vector.broadcast %848 : vector<1x96xf32> to vector<8x96xf32>
    %1409 = arith.addf %1407, %1408 : vector<8x96xf32>
    %cst_392 = arith.constant dense<0.000000e+00> : vector<8x96xf32>
    %1410 = tpu.matmul %1337, %847, %cst_392 {dimension_numbers = #tpu.dot_dimension_numbers<[1], [0], [0], [1], [0, 0, 1, 1], [], []>} : vector<8x32xf32>, vector<32x96xf32>, vector<8x96xf32> -> vector<8x96xf32>
    %1411 = vector.broadcast %849 : vector<1x96xf32> to vector<8x96xf32>
    %1412 = arith.addf %1410, %1411 : vector<8x96xf32>
    %1413 = vector.extract_strided_slice %1409 {offsets = [0, 0], sizes = [8, 32], strides = [1, 1]} : vector<8x96xf32> to vector<8x32xf32>
    %1414 = vector.extract_strided_slice %1412 {offsets = [0, 0], sizes = [8, 32], strides = [1, 1]} : vector<8x96xf32> to vector<8x32xf32>
    %1415 = arith.addf %1413, %1414 : vector<8x32xf32>
    %1416 = arith.negf %1415 : vector<8x32xf32>
    %1417 = math.exp %1416 : vector<8x32xf32>
    %cst_393 = arith.constant 1.000000e+00 : f32
    %1418 = vector.broadcast %cst_393 : f32 to vector<8x32xf32>
    %1419 = arith.addf %1418, %1417 : vector<8x32xf32>
    %1420 = arith.divf %1418, %1419 : vector<8x32xf32>
    %1421 = vector.extract_strided_slice %1409 {offsets = [0, 32], sizes = [8, 32], strides = [1, 1]} : vector<8x96xf32> to vector<8x32xf32>
    %1422 = vector.extract_strided_slice %1412 {offsets = [0, 32], sizes = [8, 32], strides = [1, 1]} : vector<8x96xf32> to vector<8x32xf32>
    %1423 = arith.addf %1421, %1422 : vector<8x32xf32>
    %1424 = arith.negf %1423 : vector<8x32xf32>
    %1425 = math.exp %1424 : vector<8x32xf32>
    %cst_394 = arith.constant 1.000000e+00 : f32
    %1426 = vector.broadcast %cst_394 : f32 to vector<8x32xf32>
    %1427 = arith.addf %1426, %1425 : vector<8x32xf32>
    %1428 = arith.divf %1426, %1427 : vector<8x32xf32>
    %1429 = vector.extract_strided_slice %1409 {offsets = [0, 64], sizes = [8, 32], strides = [1, 1]} : vector<8x96xf32> to vector<8x32xf32>
    %1430 = vector.extract_strided_slice %1412 {offsets = [0, 64], sizes = [8, 32], strides = [1, 1]} : vector<8x96xf32> to vector<8x32xf32>
    %1431 = arith.mulf %1420, %1430 : vector<8x32xf32>
    %1432 = arith.addf %1429, %1431 : vector<8x32xf32>
    %1433 = math.tanh %1432 : vector<8x32xf32>
    %cst_395 = arith.constant 1.000000e+00 : f32
    %1434 = vector.broadcast %cst_395 : f32 to vector<8x32xf32>
    %1435 = arith.subf %1434, %1428 : vector<8x32xf32>
    %1436 = arith.mulf %1435, %1433 : vector<8x32xf32>
    %1437 = arith.mulf %1428, %1337 : vector<8x32xf32>
    %1438 = arith.addf %1436, %1437 : vector<8x32xf32>
    %cst_396 = arith.constant dense<0.000000e+00> : vector<8x128xf32>
    %1439 = tpu.matmul %1438, %850, %cst_396 {dimension_numbers = #tpu.dot_dimension_numbers<[1], [0], [0], [1], [0, 0, 1, 1], [], []>} : vector<8x32xf32>, vector<32x128xf32>, vector<8x128xf32> -> vector<8x128xf32>
    %cst_397 = arith.constant dense<0.000000e+00> : vector<8x128xf32>
    %1440 = tpu.matmul %1398, %851, %cst_397 {dimension_numbers = #tpu.dot_dimension_numbers<[1], [0], [0], [1], [0, 0, 1, 1], [], []>} : vector<8x32xf32>, vector<32x128xf32>, vector<8x128xf32> -> vector<8x128xf32>
    %1441 = arith.addf %1439, %1440 : vector<8x128xf32>
    %cst_398 = arith.constant dense<0.000000e+00> : vector<8x128xf32>
    %1442 = tpu.matmul %1402, %852, %cst_398 {dimension_numbers = #tpu.dot_dimension_numbers<[1], [0], [0], [1], [0, 0, 1, 1], [], []>} : vector<8x32xf32>, vector<32x128xf32>, vector<8x128xf32> -> vector<8x128xf32>
    %1443 = arith.addf %1441, %1442 : vector<8x128xf32>
    %cst_399 = arith.constant dense<0.000000e+00> : vector<8x128xf32>
    %1444 = tpu.matmul %1373, %853, %cst_399 {dimension_numbers = #tpu.dot_dimension_numbers<[1], [0], [0], [1], [0, 0, 1, 1], [], []>} : vector<8x16xf32>, vector<16x128xf32>, vector<8x128xf32> -> vector<8x128xf32>
    %1445 = arith.addf %1443, %1444 : vector<8x128xf32>
    %1446 = vector.broadcast %854 : vector<1x128xf32> to vector<8x128xf32>
    %1447 = arith.addf %1445, %1446 : vector<8x128xf32>
    %c6_400 = arith.constant 6 : index
    %c0_401 = arith.constant 0 : index
    %c0_402 = arith.constant 0 : index
    %1448 = vector.load %arg34[%c6_400, %c0_401, %c0_402] : memref<7x8x128xf32, #tpu.memory_space<vmem>>, vector<1x8x128xf32>
    %1449 = vector.shape_cast %1448 : vector<1x8x128xf32> to vector<8x128xf32>
    %1450 = vector.shape_cast %1447 : vector<8x128xf32> to vector<1x8x128xf32>
    tpu.vector_store %arg34[%c6_400, %c0_401, %c0_402], %1450 {strides = array<i32>} : memref<7x8x128xf32, #tpu.memory_space<vmem>>, vector<1x8x128xf32>,
    return
  }
}

</mosaic_0001>

<llo_original>
// kernel: seq2seq_forward.1
$region0: #{seq2seq_forward.1}
  #allocation0 [shape = 'u32[]', space=smem, size = 0x4, offset = 0x4, fixed_abs, tag = 'smem constant byte address 0x4 - core index']
  #allocation1 [shape = 'u32[72,128]{1,0:T(1,128)}', space=vmem, size = 0x9000, scoped, tag = 'internal scratch']
  #allocation2 [shape = 'f32[8,8,32]{2,1,0:T(8,128)}', space=vmem, size = 0x8000, scoped, tag = 'scratch operand']
  #allocation3 [shape = 'f32[8,8,32]{2,1,0:T(8,128)}', space=vmem, size = 0x8000, scoped, tag = 'scratch operand']
  %s0 = inlined_call_operand.smem [shape: u32[35], index: -1, kind: input, shape index: {}]
  %s1 = sld [smem:[%s0]]
  %s2 = scalar_lea.smem %s0, 1
  %s3 = sld [smem:[%s2]]
  %s4 = scalar_lea.smem %s0, 2
  %s5 = sld [smem:[%s4]]
  %s6 = scalar_lea.smem %s0, 3
  %s7 = sld [smem:[%s6]]
  %s8 = scalar_lea.smem %s0, 4
  %s9 = sld [smem:[%s8]]
  %s10 = scalar_lea.smem %s0, 5
  %s11 = sld [smem:[%s10]]
  %s12 = scalar_lea.smem %s0, 6
  %s13 = sld [smem:[%s12]]
  %s14 = scalar_lea.smem %s0, 7
  %s15 = sld [smem:[%s14]]
  %s16 = scalar_lea.smem %s0, 8
  %s17 = sld [smem:[%s16]]
  %s18 = scalar_lea.smem %s0, 9
  %s19 = sld [smem:[%s18]]
  %s20 = scalar_lea.smem %s0, 10
  %s21 = sld [smem:[%s20]]
  %s22 = scalar_lea.smem %s0, 11
  %s23 = sld [smem:[%s22]]
  %s24 = scalar_lea.smem %s0, 12
  %s25 = sld [smem:[%s24]]
  %s26 = scalar_lea.smem %s0, 13
  %s27 = sld [smem:[%s26]]
  %s28 = scalar_lea.smem %s0, 14
  %s29 = sld [smem:[%s28]]
  %s30 = scalar_lea.smem %s0, 15
  %s31 = sld [smem:[%s30]]
  %s32 = scalar_lea.smem %s0, 16
  %s33 = sld [smem:[%s32]]
  %s34 = scalar_lea.smem %s0, 17
  %s35 = sld [smem:[%s34]]
  %s36 = scalar_lea.smem %s0, 18
  %s37 = sld [smem:[%s36]]
  %s38 = scalar_lea.smem %s0, 19
  %s39 = sld [smem:[%s38]]
  %s40 = scalar_lea.smem %s0, 20
  %s41 = sld [smem:[%s40]]
  %s42 = scalar_lea.smem %s0, 21
  %s43 = sld [smem:[%s42]]
  %s44 = scalar_lea.smem %s0, 22
  %s45 = sld [smem:[%s44]]
  %s46 = scalar_lea.smem %s0, 23
  %s47 = sld [smem:[%s46]]
  %s48 = scalar_lea.smem %s0, 24
  %s49 = sld [smem:[%s48]]
  %s50 = scalar_lea.smem %s0, 25
  %s51 = sld [smem:[%s50]]
  %s52 = scalar_lea.smem %s0, 26
  %s53 = sld [smem:[%s52]]
  %s54 = scalar_lea.smem %s0, 27
  %s55 = sld [smem:[%s54]]
  %s56 = scalar_lea.smem %s0, 28
  %s57 = sld [smem:[%s56]]
  %s58 = scalar_lea.smem %s0, 29
  %s59 = sld [smem:[%s58]]
  %s60 = scalar_lea.smem %s0, 30
  %s61 = sld [smem:[%s60]]
  %s62 = scalar_lea.smem %s0, 31
  %s63 = sld [smem:[%s62]]
  %s64 = scalar_lea.smem %s0, 32
  %s65 = sld [smem:[%s64]]
  %s66 = scalar_lea.smem %s0, 33
  %s67 = sld [smem:[%s66]]
  %s68 = scalar_lea.smem %s0, 34
  %s69 = sld [smem:[%s68]]
  %s70 = sld [smem:[#allocation0]]
  $region230: #{seq2seq_forward.1} parent=0
    _
  %s72 = ssub.s32 1, %s70
  %s73 = scalar_select 0, %s72, %s70
  $region1: #{seq2seq_forward.1} parent=0
    #allocation4 [shape = 'u8[512]{0}', space=smem, size = 0x200, scoped, tag = 'input window, operand 0, single buffered']
    #allocation5 [shape = 's32[1]{0}', space=sflag, size = 0x4, scoped, tag = 'scoped memory for seq2seq_forward.1']
    #allocation6 [shape = 's32[1]{0}', space=sflag, size = 0x4, scoped, tag = 'scoped memory for seq2seq_forward.1']
    #allocation7 [shape = 's32[1]{0}', space=sflag, size = 0x4, scoped, tag = 'scoped memory for seq2seq_forward.1']
    #allocation8 [shape = 'u8[8192]{0}', space=vmem, size = 0x2000, scoped, tag = 'input window, operand 7, single buffered']
    #allocation9 [shape = 'u8[512]{0}', space=vmem, size = 0x400, scoped, tag = 'input window, operand 9, single buffered']
    #allocation10 [shape = 's32[1]{0}', space=sflag, size = 0x4, scoped, tag = 'scoped memory for seq2seq_forward.1']
    #allocation11 [shape = 'u8[512]{0}', space=vmem, size = 0x400, scoped, tag = 'input window, operand 10, single buffered']
    #allocation12 [shape = 'u8[8192]{0}', space=vmem, size = 0x2000, scoped, tag = 'input window, operand 11, single buffered']
    #allocation13 [shape = 's32[1]{0}', space=sflag, size = 0x4, scoped, tag = 'scoped memory for seq2seq_forward.1']
    #allocation14 [shape = 'u8[512]{0}', space=vmem, size = 0x400, scoped, tag = 'input window, operand 13, single buffered']
    #allocation15 [shape = 'u8[512]{0}', space=vmem, size = 0x400, scoped, tag = 'input window, operand 14, single buffered']
    #allocation16 [shape = 's32[1]{0}', space=sflag, size = 0x4, scoped, tag = 'scoped memory for seq2seq_forward.1']
    #allocation17 [shape = 'u8[512]{0}', space=vmem, size = 0x400, scoped, tag = 'input window, operand 17, single buffered']
    #allocation18 [shape = 'u8[16384]{0}', space=vmem, size = 0x4000, scoped, tag = 'input window, operand 19, single buffered']
    #allocation19 [shape = 's32[1]{0}', space=sflag, size = 0x4, scoped, tag = 'scoped memory for seq2seq_forward.1']
    #allocation20 [shape = 'u8[16384]{0}', space=vmem, size = 0x4000, scoped, tag = 'input window, operand 20, single buffered']
    #allocation21 [shape = 'u8[512]{0}', space=vmem, size = 0x400, scoped, tag = 'input window, operand 21, single buffered']
    #allocation22 [shape = 's32[1]{0}', space=sflag, size = 0x4, scoped, tag = 'scoped memory for seq2seq_forward.1']
    #allocation23 [shape = 'u8[512]{0}', space=vmem, size = 0x400, scoped, tag = 'input window, operand 22, single buffered']
    #allocation24 [shape = 'u8[8192]{0}', space=vmem, size = 0x2000, scoped, tag = 'input window, operand 23, single buffered']
    #allocation25 [shape = 's32[1]{0}', space=sflag, size = 0x4, scoped, tag = 'scoped memory for seq2seq_forward.1']
    #allocation26 [shape = 'u8[16384]{0}', space=vmem, size = 0x4000, scoped, tag = 'input window, operand 24, single buffered']
    #allocation27 [shape = 'u8[16384]{0}', space=vmem, size = 0x4000, scoped, tag = 'input window, operand 25, single buffered']
    #allocation28 [shape = 's32[1]{0}', space=sflag, size = 0x4, scoped, tag = 'scoped memory for seq2seq_forward.1']
    #allocation29 [shape = 'u8[16384]{0}', space=vmem, size = 0x4000, scoped, tag = 'input window, operand 26, single buffered']
    #allocation30 [shape = 'u8[512]{0}', space=vmem, size = 0x400, scoped, tag = 'input window, operand 27, single buffered']
    #allocation31 [shape = 's32[1]{0}', space=sflag, size = 0x4, scoped, tag = 'scoped memory for seq2seq_forward.1']
    #allocation32 [shape = 'u8[16384]{0}', space=vmem, size = 0x4000, scoped, tag = 'input window, operand 29, single buffered']
    #allocation33 [shape = 'u8[16384]{0}', space=vmem, size = 0x4000, scoped, tag = 'input window, operand 30, single buffered']
    #allocation34 [shape = 's32[1]{0}', space=sflag, size = 0x4, scoped, tag = 'scoped memory for seq2seq_forward.1']
    #allocation35 [shape = 'u8[16384]{0}', space=vmem, size = 0x4000, scoped, tag = 'input window, operand 31, single buffered']
    #allocation36 [shape = 'u8[8192]{0}', space=vmem, size = 0x2000, scoped, tag = 'input window, operand 32, single buffered']
    #allocation37 [shape = 's32[1]{0}', space=sflag, size = 0x4, scoped, tag = 'scoped memory for seq2seq_forward.1']
    #allocation38 [shape = 'u8[28672]{0}', space=vmem, size = 0x7000, scoped, tag = 'output window, operand 0, single buffered']
    %74 = vsyncpa [#allocation7], 0
    %75 = vsyncpa [#allocation5], 0
    %76 = vsyncpa [#allocation10], 0
    %77 = vsyncpa [#allocation13], 0
    %78 = vsyncpa [#allocation16], 0
    %79 = vsyncpa [#allocation19], 0
    %80 = vsyncpa [#allocation22], 0
    %81 = vsyncpa [#allocation25], 0
    %82 = vsyncpa [#allocation28], 0
    %83 = vsyncpa [#allocation31], 0
    %84 = vsyncpa [#allocation34], 0
    %85 = vsyncpa [#allocation37], 0
    %86 = vsyncpa [#allocation6], 0
    // Predicated region
    $region2: #{seq2seq_forward.1} parent=1 // pred_check
      _
    $region3: #{seq2seq_forward.1} parent=1 // pred_check_branch
      %88 = sbr.rel (0) target = $region5
    $region4: #{seq2seq_forward.1} parent=1 // pred_region
      %90 = vsyncadd [#allocation7], 0
      %s92 = sshll.u32 %s1, 4
      %s93 = int_to_ptr.vmem [resolvable:$true] %s92
      %95 = dma.vmem_to_smem %s93, 16, [#allocation4], [#allocation7]
    $region5: #{seq2seq_forward.1} parent=1 // pred_fallthru
      _
    // Predicated region
    $region6: #{seq2seq_forward.1} parent=1 // pred_check
      _
    $region7: #{seq2seq_forward.1} parent=1 // pred_check_branch
      %97 = sbr.rel (0) target = $region9
    $region8: #{seq2seq_forward.1} parent=1 // pred_region
      _
    $region9: #{seq2seq_forward.1} parent=1 // pred_fallthru
      _
    // Predicated region
    $region10: #{seq2seq_forward.1} parent=1 // pred_check
      _
    $region11: #{seq2seq_forward.1} parent=1 // pred_check_branch
      %99 = sbr.rel (0) target = $region13
    $region12: #{seq2seq_forward.1} parent=1 // pred_region
      _
    $region13: #{seq2seq_forward.1} parent=1 // pred_fallthru
      _
    // Predicated region
    $region14: #{seq2seq_forward.1} parent=1 // pred_check
      _
    $region15: #{seq2seq_forward.1} parent=1 // pred_check_branch
      %101 = sbr.rel (0) target = $region17
    $region16: #{seq2seq_forward.1} parent=1 // pred_region
      _
    $region17: #{seq2seq_forward.1} parent=1 // pred_fallthru
      _
    // Predicated region
    $region18: #{seq2seq_forward.1} parent=1 // pred_check
      _
    $region19: #{seq2seq_forward.1} parent=1 // pred_check_branch
      %103 = sbr.rel (0) target = $region21
    $region20: #{seq2seq_forward.1} parent=1 // pred_region
      _
    $region21: #{seq2seq_forward.1} parent=1 // pred_fallthru
      _
    // Predicated region
    $region22: #{seq2seq_forward.1} parent=1 // pred_check
      _
    $region23: #{seq2seq_forward.1} parent=1 // pred_check_branch
      %105 = sbr.rel (0) target = $region25
    $region24: #{seq2seq_forward.1} parent=1 // pred_region
      _
    $region25: #{seq2seq_forward.1} parent=1 // pred_fallthru
      _
    // Predicated region
    $region26: #{seq2seq_forward.1} parent=1 // pred_check
      _
    $region27: #{seq2seq_forward.1} parent=1 // pred_check_branch
      %107 = sbr.rel (0) target = $region29
    $region28: #{seq2seq_forward.1} parent=1 // pred_region
      _
    $region29: #{seq2seq_forward.1} parent=1 // pred_fallthru
      _
    // Predicated region
    $region30: #{seq2seq_forward.1} parent=1 // pred_check
      _
    $region31: #{seq2seq_forward.1} parent=1 // pred_check_branch
      %109 = sbr.rel (0) target = $region33
    $region32: #{seq2seq_forward.1} parent=1 // pred_region
      %111 = vsyncadd [#allocation5], 0
      %s112 = sshll.u32 %s15, 4
      %s113 = int_to_ptr.hbm [resolvable:$true] %s112
      %s114 = sshll.u32 [#allocation8], 4
      %s115 = int_to_ptr.vmem [resolvable:$true] %s114
      %120 = dma.hbm_to_vmem [thread:$0]  %s113, 256, %s115, [#allocation5], 128, 128, 8
    $region33: #{seq2seq_forward.1} parent=1 // pred_fallthru
      _
    // Predicated region
    $region34: #{seq2seq_forward.1} parent=1 // pred_check
      _
    $region35: #{seq2seq_forward.1} parent=1 // pred_check_branch
      %122 = sbr.rel (0) target = $region37
    $region36: #{seq2seq_forward.1} parent=1 // pred_region
      _
    $region37: #{seq2seq_forward.1} parent=1 // pred_fallthru
      _
    // Predicated region
    $region38: #{seq2seq_forward.1} parent=1 // pred_check
      _
    $region39: #{seq2seq_forward.1} parent=1 // pred_check_branch
      %124 = sbr.rel (0) target = $region41
    $region40: #{seq2seq_forward.1} parent=1 // pred_region
      %126 = vsyncadd [#allocation10], 0
      %s128 = sshll.u32 %s19, 4
      %s129 = int_to_ptr.hbm [resolvable:$true] %s128
      %s130 = sshll.u32 [#allocation9], 4
      %s131 = int_to_ptr.vmem [resolvable:$true] %s130
      %133 = dma.hbm_to_vmem [thread:$0]  %s129, 16, %s131, [#allocation10]
    $region41: #{seq2seq_forward.1} parent=1 // pred_fallthru
      _
    // Predicated region
    $region42: #{seq2seq_forward.1} parent=1 // pred_check
      _
    $region43: #{seq2seq_forward.1} parent=1 // pred_check_branch
      %135 = sbr.rel (0) target = $region45
    $region44: #{seq2seq_forward.1} parent=1 // pred_region
      %137 = vsyncadd [#allocation10], 0
      %s139 = sshll.u32 %s21, 4
      %s140 = int_to_ptr.hbm [resolvable:$true] %s139
      %s141 = sshll.u32 [#allocation11], 4
      %s142 = int_to_ptr.vmem [resolvable:$true] %s141
      %144 = dma.hbm_to_vmem [thread:$0]  %s140, 16, %s142, [#allocation10]
    $region45: #{seq2seq_forward.1} parent=1 // pred_fallthru
      _
    // Predicated region
    $region46: #{seq2seq_forward.1} parent=1 // pred_check
      _
    $region47: #{seq2seq_forward.1} parent=1 // pred_check_branch
      %146 = sbr.rel (0) target = $region49
    $region48: #{seq2seq_forward.1} parent=1 // pred_region
      %148 = vsyncadd [#allocation13], 0
      %s149 = sshll.u32 %s23, 4
      %s150 = int_to_ptr.hbm [resolvable:$true] %s149
      %s151 = sshll.u32 [#allocation12], 4
      %s152 = int_to_ptr.vmem [resolvable:$true] %s151
      %157 = dma.hbm_to_vmem [thread:$0]  %s150, 256, %s152, [#allocation13], 128, 128, 8
    $region49: #{seq2seq_forward.1} parent=1 // pred_fallthru
      _
    // Predicated region
    $region50: #{seq2seq_forward.1} parent=1 // pred_check
      _
    $region51: #{seq2seq_forward.1} parent=1 // pred_check_branch
      %159 = sbr.rel (0) target = $region53
    $region52: #{seq2seq_forward.1} parent=1 // pred_region
      _
    $region53: #{seq2seq_forward.1} parent=1 // pred_fallthru
      _
    // Predicated region
    $region54: #{seq2seq_forward.1} parent=1 // pred_check
      _
    $region55: #{seq2seq_forward.1} parent=1 // pred_check_branch
      %161 = sbr.rel (0) target = $region57
    $region56: #{seq2seq_forward.1} parent=1 // pred_region
      %163 = vsyncadd [#allocation13], 0
      %s165 = sshll.u32 %s27, 4
      %s166 = int_to_ptr.hbm [resolvable:$true] %s165
      %s167 = sshll.u32 [#allocation14], 4
      %s168 = int_to_ptr.vmem [resolvable:$true] %s167
      %170 = dma.hbm_to_vmem [thread:$0]  %s166, 16, %s168, [#allocation13]
    $region57: #{seq2seq_forward.1} parent=1 // pred_fallthru
      _
    // Predicated region
    $region58: #{seq2seq_forward.1} parent=1 // pred_check
      _
    $region59: #{seq2seq_forward.1} parent=1 // pred_check_branch
      %172 = sbr.rel (0) target = $region61
    $region60: #{seq2seq_forward.1} parent=1 // pred_region
      %174 = vsyncadd [#allocation16], 0
      %s176 = sshll.u32 %s29, 4
      %s177 = int_to_ptr.hbm [resolvable:$true] %s176
      %s178 = sshll.u32 [#allocation15], 4
      %s179 = int_to_ptr.vmem [resolvable:$true] %s178
      %181 = dma.hbm_to_vmem [thread:$0]  %s177, 16, %s179, [#allocation16]
    $region61: #{seq2seq_forward.1} parent=1 // pred_fallthru
      _
    // Predicated region
    $region62: #{seq2seq_forward.1} parent=1 // pred_check
      _
    $region63: #{seq2seq_forward.1} parent=1 // pred_check_branch
      %183 = sbr.rel (0) target = $region65
    $region64: #{seq2seq_forward.1} parent=1 // pred_region
      _
    $region65: #{seq2seq_forward.1} parent=1 // pred_fallthru
      _
    // Predicated region
    $region66: #{seq2seq_forward.1} parent=1 // pred_check
      _
    $region67: #{seq2seq_forward.1} parent=1 // pred_check_branch
      %185 = sbr.rel (0) target = $region69
    $region68: #{seq2seq_forward.1} parent=1 // pred_region
      _
    $region69: #{seq2seq_forward.1} parent=1 // pred_fallthru
      _
    // Predicated region
    $region70: #{seq2seq_forward.1} parent=1 // pred_check
      _
    $region71: #{seq2seq_forward.1} parent=1 // pred_check_branch
      %187 = sbr.rel (0) target = $region73
    $region72: #{seq2seq_forward.1} parent=1 // pred_region
      %189 = vsyncadd [#allocation16], 0
      %s191 = sshll.u32 %s35, 4
      %s192 = int_to_ptr.hbm [resolvable:$true] %s191
      %s193 = sshll.u32 [#allocation17], 4
      %s194 = int_to_ptr.vmem [resolvable:$true] %s193
      %196 = dma.hbm_to_vmem [thread:$0]  %s192, 16, %s194, [#allocation16]
    $region73: #{seq2seq_forward.1} parent=1 // pred_fallthru
      _
    // Predicated region
    $region74: #{seq2seq_forward.1} parent=1 // pred_check
      _
    $region75: #{seq2seq_forward.1} parent=1 // pred_check_branch
      %198 = sbr.rel (0) target = $region77
    $region76: #{seq2seq_forward.1} parent=1 // pred_region
      _
    $region77: #{seq2seq_forward.1} parent=1 // pred_fallthru
      _
    // Predicated region
    $region78: #{seq2seq_forward.1} parent=1 // pred_check
      _
    $region79: #{seq2seq_forward.1} parent=1 // pred_check_branch
      %200 = sbr.rel (0) target = $region81
    $region80: #{seq2seq_forward.1} parent=1 // pred_region
      %202 = vsyncadd [#allocation19], 0
      %s203 = sshll.u32 %s39, 4
      %s204 = int_to_ptr.hbm [resolvable:$true] %s203
      %s205 = sshll.u32 [#allocation18], 4
      %s206 = int_to_ptr.vmem [resolvable:$true] %s205
      %211 = dma.hbm_to_vmem [thread:$0]  %s204, 512, %s206, [#allocation19], 128, 128, 8
    $region81: #{seq2seq_forward.1} parent=1 // pred_fallthru
      _
    // Predicated region
    $region82: #{seq2seq_forward.1} parent=1 // pred_check
      _
    $region83: #{seq2seq_forward.1} parent=1 // pred_check_branch
      %213 = sbr.rel (0) target = $region85
    $region84: #{seq2seq_forward.1} parent=1 // pred_region
      %215 = vsyncadd [#allocation19], 0
      %s216 = sshll.u32 %s41, 4
      %s217 = int_to_ptr.hbm [resolvable:$true] %s216
      %s218 = sshll.u32 [#allocation20], 4
      %s219 = int_to_ptr.vmem [resolvable:$true] %s218
      %224 = dma.hbm_to_vmem [thread:$0]  %s217, 512, %s219, [#allocation19], 128, 128, 8
    $region85: #{seq2seq_forward.1} parent=1 // pred_fallthru
      _
    // Predicated region
    $region86: #{seq2seq_forward.1} parent=1 // pred_check
      _
    $region87: #{seq2seq_forward.1} parent=1 // pred_check_branch
      %226 = sbr.rel (0) target = $region89
    $region88: #{seq2seq_forward.1} parent=1 // pred_region
      %228 = vsyncadd [#allocation22], 0
      %s230 = sshll.u32 %s43, 4
      %s231 = int_to_ptr.hbm [resolvable:$true] %s230
      %s232 = sshll.u32 [#allocation21], 4
      %s233 = int_to_ptr.vmem [resolvable:$true] %s232
      %235 = dma.hbm_to_vmem [thread:$0]  %s231, 16, %s233, [#allocation22]
    $region89: #{seq2seq_forward.1} parent=1 // pred_fallthru
      _
    // Predicated region
    $region90: #{seq2seq_forward.1} parent=1 // pred_check
      _
    $region91: #{seq2seq_forward.1} parent=1 // pred_check_branch
      %237 = sbr.rel (0) target = $region93
    $region92: #{seq2seq_forward.1} parent=1 // pred_region
      %239 = vsyncadd [#allocation22], 0
      %s241 = sshll.u32 %s45, 4
      %s242 = int_to_ptr.hbm [resolvable:$true] %s241
      %s243 = sshll.u32 [#allocation23], 4
      %s244 = int_to_ptr.vmem [resolvable:$true] %s243
      %246 = dma.hbm_to_vmem [thread:$0]  %s242, 16, %s244, [#allocation22]
    $region93: #{seq2seq_forward.1} parent=1 // pred_fallthru
      _
    // Predicated region
    $region94: #{seq2seq_forward.1} parent=1 // pred_check
      _
    $region95: #{seq2seq_forward.1} parent=1 // pred_check_branch
      %248 = sbr.rel (0) target = $region97
    $region96: #{seq2seq_forward.1} parent=1 // pred_region
      %250 = vsyncadd [#allocation25], 0
      %s251 = sshll.u32 %s47, 4
      %s252 = int_to_ptr.hbm [resolvable:$true] %s251
      %s253 = sshll.u32 [#allocation24], 4
      %s254 = int_to_ptr.vmem [resolvable:$true] %s253
      %259 = dma.hbm_to_vmem [thread:$0]  %s252, 256, %s254, [#allocation25], 128, 128, 8
    $region97: #{seq2seq_forward.1} parent=1 // pred_fallthru
      _
    // Predicated region
    $region98: #{seq2seq_forward.1} parent=1 // pred_check
      _
    $region99: #{seq2seq_forward.1} parent=1 // pred_check_branch
      %261 = sbr.rel (0) target = $region101
    $region100: #{seq2seq_forward.1} parent=1 // pred_region
      %263 = vsyncadd [#allocation25], 0
      %s264 = sshll.u32 %s49, 4
      %s265 = int_to_ptr.hbm [resolvable:$true] %s264
      %s266 = sshll.u32 [#allocation26], 4
      %s267 = int_to_ptr.vmem [resolvable:$true] %s266
      %272 = dma.hbm_to_vmem [thread:$0]  %s265, 512, %s267, [#allocation25], 128, 128, 8
    $region101: #{seq2seq_forward.1} parent=1 // pred_fallthru
      _
    // Predicated region
    $region102: #{seq2seq_forward.1} parent=1 // pred_check
      _
    $region103: #{seq2seq_forward.1} parent=1 // pred_check_branch
      %274 = sbr.rel (0) target = $region105
    $region104: #{seq2seq_forward.1} parent=1 // pred_region
      %276 = vsyncadd [#allocation28], 0
      %s277 = sshll.u32 %s51, 4
      %s278 = int_to_ptr.hbm [resolvable:$true] %s277
      %s279 = sshll.u32 [#allocation27], 4
      %s280 = int_to_ptr.vmem [resolvable:$true] %s279
      %285 = dma.hbm_to_vmem [thread:$0]  %s278, 512, %s280, [#allocation28], 128, 128, 8
    $region105: #{seq2seq_forward.1} parent=1 // pred_fallthru
      _
    // Predicated region
    $region106: #{seq2seq_forward.1} parent=1 // pred_check
      _
    $region107: #{seq2seq_forward.1} parent=1 // pred_check_branch
      %287 = sbr.rel (0) target = $region109
    $region108: #{seq2seq_forward.1} parent=1 // pred_region
      %289 = vsyncadd [#allocation28], 0
      %s290 = sshll.u32 %s53, 4
      %s291 = int_to_ptr.hbm [resolvable:$true] %s290
      %s292 = sshll.u32 [#allocation29], 4
      %s293 = int_to_ptr.vmem [resolvable:$true] %s292
      %298 = dma.hbm_to_vmem [thread:$0]  %s291, 512, %s293, [#allocation28], 128, 128, 8
    $region109: #{seq2seq_forward.1} parent=1 // pred_fallthru
      _
    // Predicated region
    $region110: #{seq2seq_forward.1} parent=1 // pred_check
      _
    $region111: #{seq2seq_forward.1} parent=1 // pred_check_branch
      %300 = sbr.rel (0) target = $region113
    $region112: #{seq2seq_forward.1} parent=1 // pred_region
      %302 = vsyncadd [#allocation31], 0
      %s304 = sshll.u32 %s55, 4
      %s305 = int_to_ptr.hbm [resolvable:$true] %s304
      %s306 = sshll.u32 [#allocation30], 4
      %s307 = int_to_ptr.vmem [resolvable:$true] %s306
      %309 = dma.hbm_to_vmem [thread:$0]  %s305, 16, %s307, [#allocation31]
    $region113: #{seq2seq_forward.1} parent=1 // pred_fallthru
      _
    // Predicated region
    $region114: #{seq2seq_forward.1} parent=1 // pred_check
      _
    $region115: #{seq2seq_forward.1} parent=1 // pred_check_branch
      %311 = sbr.rel (0) target = $region117
    $region116: #{seq2seq_forward.1} parent=1 // pred_region
      _
    $region117: #{seq2seq_forward.1} parent=1 // pred_fallthru
      _
    // Predicated region
    $region118: #{seq2seq_forward.1} parent=1 // pred_check
      _
    $region119: #{seq2seq_forward.1} parent=1 // pred_check_branch
      %313 = sbr.rel (0) target = $region121
    $region120: #{seq2seq_forward.1} parent=1 // pred_region
      %315 = vsyncadd [#allocation31], 0
      %s316 = sshll.u32 %s59, 4
      %s317 = int_to_ptr.hbm [resolvable:$true] %s316
      %s318 = sshll.u32 [#allocation32], 4
      %s319 = int_to_ptr.vmem [resolvable:$true] %s318
      %324 = dma.hbm_to_vmem [thread:$0]  %s317, 512, %s319, [#allocation31], 128, 128, 8
    $region121: #{seq2seq_forward.1} parent=1 // pred_fallthru
      _
    // Predicated region
    $region122: #{seq2seq_forward.1} parent=1 // pred_check
      _
    $region123: #{seq2seq_forward.1} parent=1 // pred_check_branch
      %326 = sbr.rel (0) target = $region125
    $region124: #{seq2seq_forward.1} parent=1 // pred_region
      %328 = vsyncadd [#allocation34], 0
      %s329 = sshll.u32 %s61, 4
      %s330 = int_to_ptr.hbm [resolvable:$true] %s329
      %s331 = sshll.u32 [#allocation33], 4
      %s332 = int_to_ptr.vmem [resolvable:$true] %s331
      %337 = dma.hbm_to_vmem [thread:$0]  %s330, 512, %s332, [#allocation34], 128, 128, 8
    $region125: #{seq2seq_forward.1} parent=1 // pred_fallthru
      _
    // Predicated region
    $region126: #{seq2seq_forward.1} parent=1 // pred_check
      _
    $region127: #{seq2seq_forward.1} parent=1 // pred_check_branch
      %339 = sbr.rel (0) target = $region129
    $region128: #{seq2seq_forward.1} parent=1 // pred_region
      %341 = vsyncadd [#allocation34], 0
      %s342 = sshll.u32 %s63, 4
      %s343 = int_to_ptr.hbm [resolvable:$true] %s342
      %s344 = sshll.u32 [#allocation35], 4
      %s345 = int_to_ptr.vmem [resolvable:$true] %s344
      %350 = dma.hbm_to_vmem [thread:$0]  %s343, 512, %s345, [#allocation34], 128, 128, 8
    $region129: #{seq2seq_forward.1} parent=1 // pred_fallthru
      _
    // Predicated region
    $region130: #{seq2seq_forward.1} parent=1 // pred_check
      _
    $region131: #{seq2seq_forward.1} parent=1 // pred_check_branch
      %352 = sbr.rel (0) target = $region133
    $region132: #{seq2seq_forward.1} parent=1 // pred_region
      %354 = vsyncadd [#allocation37], 0
      %s355 = sshll.u32 %s65, 4
      %s356 = int_to_ptr.hbm [resolvable:$true] %s355
      %s357 = sshll.u32 [#allocation36], 4
      %s358 = int_to_ptr.vmem [resolvable:$true] %s357
      %363 = dma.hbm_to_vmem [thread:$0]  %s356, 256, %s358, [#allocation37], 128, 128, 8
    $region133: #{seq2seq_forward.1} parent=1 // pred_fallthru
      _
    // Predicated region
    $region134: #{seq2seq_forward.1} parent=1 // pred_check
      _
    $region135: #{seq2seq_forward.1} parent=1 // pred_check_branch
      %365 = sbr.rel (0) target = $region137
    $region136: #{seq2seq_forward.1} parent=1 // pred_region
      _
    $region137: #{seq2seq_forward.1} parent=1 // pred_fallthru
      _
    // Predicated region
    $region138: #{seq2seq_forward.1} parent=1 // pred_check
      _
    $region139: #{seq2seq_forward.1} parent=1 // pred_check_branch
      %367 = sbr.rel (0) target = $region141
    $region140: #{seq2seq_forward.1} parent=1 // pred_region
      %369 = dma.done [#allocation7], 16
    $region141: #{seq2seq_forward.1} parent=1 // pred_fallthru
      _
    // Predicated region
    $region142: #{seq2seq_forward.1} parent=1 // pred_check
      _
    $region143: #{seq2seq_forward.1} parent=1 // pred_check_branch
      %371 = sbr.rel (0) target = $region145
    $region144: #{seq2seq_forward.1} parent=1 // pred_region
      %373 = dma.done [#allocation5], 256
    $region145: #{seq2seq_forward.1} parent=1 // pred_fallthru
      _
    // Predicated region
    $region146: #{seq2seq_forward.1} parent=1 // pred_check
      _
    $region147: #{seq2seq_forward.1} parent=1 // pred_check_branch
      %375 = sbr.rel (0) target = $region149
    $region148: #{seq2seq_forward.1} parent=1 // pred_region
      %377 = dma.done [#allocation10], 16
    $region149: #{seq2seq_forward.1} parent=1 // pred_fallthru
      _
    // Predicated region
    $region150: #{seq2seq_forward.1} parent=1 // pred_check
      _
    $region151: #{seq2seq_forward.1} parent=1 // pred_check_branch
      %379 = sbr.rel (0) target = $region153
    $region152: #{seq2seq_forward.1} parent=1 // pred_region
      %381 = dma.done [#allocation10], 16
    $region153: #{seq2seq_forward.1} parent=1 // pred_fallthru
      _
    // Predicated region
    $region154: #{seq2seq_forward.1} parent=1 // pred_check
      _
    $region155: #{seq2seq_forward.1} parent=1 // pred_check_branch
      %383 = sbr.rel (0) target = $region157
    $region156: #{seq2seq_forward.1} parent=1 // pred_region
      %385 = dma.done [#allocation13], 256
    $region157: #{seq2seq_forward.1} parent=1 // pred_fallthru
      _
    // Predicated region
    $region158: #{seq2seq_forward.1} parent=1 // pred_check
      _
    $region159: #{seq2seq_forward.1} parent=1 // pred_check_branch
      %387 = sbr.rel (0) target = $region161
    $region160: #{seq2seq_forward.1} parent=1 // pred_region
      %389 = dma.done [#allocation13], 16
    $region161: #{seq2seq_forward.1} parent=1 // pred_fallthru
      _
    // Predicated region
    $region162: #{seq2seq_forward.1} parent=1 // pred_check
      _
    $region163: #{seq2seq_forward.1} parent=1 // pred_check_branch
      %391 = sbr.rel (0) target = $region165
    $region164: #{seq2seq_forward.1} parent=1 // pred_region
      %393 = dma.done [#allocation16], 16
    $region165: #{seq2seq_forward.1} parent=1 // pred_fallthru
      _
    // Predicated region
    $region166: #{seq2seq_forward.1} parent=1 // pred_check
      _
    $region167: #{seq2seq_forward.1} parent=1 // pred_check_branch
      %395 = sbr.rel (0) target = $region169
    $region168: #{seq2seq_forward.1} parent=1 // pred_region
      %397 = dma.done [#allocation16], 16
    $region169: #{seq2seq_forward.1} parent=1 // pred_fallthru
      _
    // Predicated region
    $region170: #{seq2seq_forward.1} parent=1 // pred_check
      _
    $region171: #{seq2seq_forward.1} parent=1 // pred_check_branch
      %399 = sbr.rel (0) target = $region173
    $region172: #{seq2seq_forward.1} parent=1 // pred_region
      %401 = dma.done [#allocation19], 512
    $region173: #{seq2seq_forward.1} parent=1 // pred_fallthru
      _
    // Predicated region
    $region174: #{seq2seq_forward.1} parent=1 // pred_check
      _
    $region175: #{seq2seq_forward.1} parent=1 // pred_check_branch
      %403 = sbr.rel (0) target = $region177
    $region176: #{seq2seq_forward.1} parent=1 // pred_region
      %405 = dma.done [#allocation19], 512
    $region177: #{seq2seq_forward.1} parent=1 // pred_fallthru
      _
    // Predicated region
    $region178: #{seq2seq_forward.1} parent=1 // pred_check
      _
    $region179: #{seq2seq_forward.1} parent=1 // pred_check_branch
      %407 = sbr.rel (0) target = $region181
    $region180: #{seq2seq_forward.1} parent=1 // pred_region
      %409 = dma.done [#allocation22], 16
    $region181: #{seq2seq_forward.1} parent=1 // pred_fallthru
      _
    // Predicated region
    $region182: #{seq2seq_forward.1} parent=1 // pred_check
      _
    $region183: #{seq2seq_forward.1} parent=1 // pred_check_branch
      %411 = sbr.rel (0) target = $region185
    $region184: #{seq2seq_forward.1} parent=1 // pred_region
      %413 = dma.done [#allocation22], 16
    $region185: #{seq2seq_forward.1} parent=1 // pred_fallthru
      _
    // Predicated region
    $region186: #{seq2seq_forward.1} parent=1 // pred_check
      _
    $region187: #{seq2seq_forward.1} parent=1 // pred_check_branch
      %415 = sbr.rel (0) target = $region189
    $region188: #{seq2seq_forward.1} parent=1 // pred_region
      %417 = dma.done [#allocation25], 256
    $region189: #{seq2seq_forward.1} parent=1 // pred_fallthru
      _
    // Predicated region
    $region190: #{seq2seq_forward.1} parent=1 // pred_check
      _
    $region191: #{seq2seq_forward.1} parent=1 // pred_check_branch
      %419 = sbr.rel (0) target = $region193
    $region192: #{seq2seq_forward.1} parent=1 // pred_region
      %421 = dma.done [#allocation25], 512
    $region193: #{seq2seq_forward.1} parent=1 // pred_fallthru
      _
    // Predicated region
    $region194: #{seq2seq_forward.1} parent=1 // pred_check
      _
    $region195: #{seq2seq_forward.1} parent=1 // pred_check_branch
      %423 = sbr.rel (0) target = $region197
    $region196: #{seq2seq_forward.1} parent=1 // pred_region
      %425 = dma.done [#allocation28], 512
    $region197: #{seq2seq_forward.1} parent=1 // pred_fallthru
      _
    // Predicated region
    $region198: #{seq2seq_forward.1} parent=1 // pred_check
      _
    $region199: #{seq2seq_forward.1} parent=1 // pred_check_branch
      %427 = sbr.rel (0) target = $region201
    $region200: #{seq2seq_forward.1} parent=1 // pred_region
      %429 = dma.done [#allocation28], 512
    $region201: #{seq2seq_forward.1} parent=1 // pred_fallthru
      _
    // Predicated region
    $region202: #{seq2seq_forward.1} parent=1 // pred_check
      _
    $region203: #{seq2seq_forward.1} parent=1 // pred_check_branch
      %431 = sbr.rel (0) target = $region205
    $region204: #{seq2seq_forward.1} parent=1 // pred_region
      %433 = dma.done [#allocation31], 16
    $region205: #{seq2seq_forward.1} parent=1 // pred_fallthru
      _
    // Predicated region
    $region206: #{seq2seq_forward.1} parent=1 // pred_check
      _
    $region207: #{seq2seq_forward.1} parent=1 // pred_check_branch
      %435 = sbr.rel (0) target = $region209
    $region208: #{seq2seq_forward.1} parent=1 // pred_region
      %437 = dma.done [#allocation31], 512
    $region209: #{seq2seq_forward.1} parent=1 // pred_fallthru
      _
    // Predicated region
    $region210: #{seq2seq_forward.1} parent=1 // pred_check
      _
    $region211: #{seq2seq_forward.1} parent=1 // pred_check_branch
      %439 = sbr.rel (0) target = $region213
    $region212: #{seq2seq_forward.1} parent=1 // pred_region
      %441 = dma.done [#allocation34], 512
    $region213: #{seq2seq_forward.1} parent=1 // pred_fallthru
      _
    // Predicated region
    $region214: #{seq2seq_forward.1} parent=1 // pred_check
      _
    $region215: #{seq2seq_forward.1} parent=1 // pred_check_branch
      %443 = sbr.rel (0) target = $region217
    $region216: #{seq2seq_forward.1} parent=1 // pred_region
      %445 = dma.done [#allocation34], 512
    $region217: #{seq2seq_forward.1} parent=1 // pred_fallthru
      _
    // Predicated region
    $region218: #{seq2seq_forward.1} parent=1 // pred_check
      _
    $region219: #{seq2seq_forward.1} parent=1 // pred_check_branch
      %447 = sbr.rel (0) target = $region221
    $region220: #{seq2seq_forward.1} parent=1 // pred_region
      %449 = dma.done [#allocation37], 256
    $region221: #{seq2seq_forward.1} parent=1 // pred_fallthru
      _
    %450 = sfence
    %v451 = vld [vmem:[%s5] sm:$0xff]
    %v452 = vld [vmem:[%s9] sm:$0xff]
    %v453 = vld [vmem:[%s7] sm:$0xff]
    %v454 = vld [vmem:[%s11] sm:$0xff]
    %v455 = vld [vmem:[%s11 + $0x8] sm:$0xff]
    %v456 = vld [vmem:[%s11 + $0x10] sm:$0xf]
    %v457 = vlaneseq
    %v458 = vand.u32 %v457, 127
    %v459 = vld [vmem:[#allocation8] sm:$0xff]
    %v460 = vld [vmem:[#allocation8 + $0x8] sm:$0xff]
    %v461 = vld [vmem:[%s17] sm:$0xff]
    %v462 = vld [vmem:[%s17 + $0x8] sm:$0xff]
    %v463 = vld [vmem:[%s17 + $0x10] sm:$0xff]
    %v464 = vld [vmem:[%s17 + $0x18] sm:$0xff]
    %v465 = vld [vmem:[#allocation9] sm:$0x1]
    %v466 = vld [vmem:[#allocation11] sm:$0x1]
    %v467 = vld [vmem:[#allocation12] sm:$0xff]
    %v468 = vld [vmem:[#allocation12 + $0x8] sm:$0xff]
    %v469 = vld [vmem:[%s25] sm:$0xff]
    %v470 = vld [vmem:[%s25 + $0x8] sm:$0xff]
    %v471 = vld [vmem:[%s25 + $0x10] sm:$0xff]
    %v472 = vld [vmem:[%s25 + $0x18] sm:$0xff]
    %v473 = vld [vmem:[#allocation14] sm:$0x1]
    %v474 = vld [vmem:[#allocation15] sm:$0x1]
    %475 = vset.pattern.permute.xlu0 0
    %476 = vperm.xlu0 %475, %v451
    %v477 = vpop.permute.xlu0 %476
    %vm478 = vcmp.eq.s32.totalorder %v477, %v458
    %v479 = vsel %vm478, 1, 0
    %v480 = vcvt.s32.f32 %v479
    %vm481 = vcmask 162816
    %v483 = vsel %vm481, %v480, 0
    %vm485 = vcmask 1043456
    %v487 = vsel %vm485, %v456, 0
    %489 = vmatpush.msra.mxu0 0.0
    %490 = vmatpush.msra.mxu0 0.0
    %491 = vmatpush.msra.mxu0 0.0
    %492 = vmatpush.msra.mxu0 0.0
    %493 = vmatpush.msra.mxu0 0.0
    %494 = vmatpush.msra.mxu0 0.0
    %495 = vmatpush.msra.mxu0 0.0
    %496 = vmatpush.msra.mxu0 0.0
    %497 = vmatpush.msra.mxu0 0.0
    %498 = vmatpush.msra.mxu0 0.0
    %499 = vmatpush.msra.mxu0 0.0
    %500 = vmatpush.msra.mxu0 0.0
    %501 = vmatpush.msra.mxu0 0.0
    %502 = vmatpush.msra.mxu0 %v487
    %503 = vmatpush.msra.mxu0 %v455
    %504 = vmatpush.msra.mxu0 %v454
    %505 = vmatmul.f32.gmra.mxu0 %v483
    %v506 = vpop.f32.mrf.mxu0
    %v507 = vadd.f32 0.0, %v506
    %508 = vdwg.mxu0
    %509 = vset.pattern.permute.xlu0 7
    %510 = vperm.xlu0 %509, %v451
    %v511 = vpop.permute.xlu0 %510
    %vm512 = vcmp.eq.s32.totalorder %v511, %v458
    %v513 = vsel %vm512, 1, 0
    %v514 = vcvt.s32.f32 %v513
    %v516 = vsel %vm481, %v514, 0
    %518 = vmatpush.msra.mxu0 0.0
    %519 = vmatpush.msra.mxu0 0.0
    %520 = vmatpush.msra.mxu0 0.0
    %521 = vmatpush.msra.mxu0 0.0
    %522 = vmatpush.msra.mxu0 0.0
    %523 = vmatpush.msra.mxu0 0.0
    %524 = vmatpush.msra.mxu0 0.0
    %525 = vmatpush.msra.mxu0 0.0
    %526 = vmatpush.msra.mxu0 0.0
    %527 = vmatpush.msra.mxu0 0.0
    %528 = vmatpush.msra.mxu0 0.0
    %529 = vmatpush.msra.mxu0 0.0
    %530 = vmatpush.msra.mxu0 0.0
    %531 = vmatpush.msra.mxu0 %v487
    %532 = vmatpush.msra.mxu0 %v455
    %533 = vmatpush.msra.mxu0 %v454
    %534 = vmatmul.f32.gmra.mxu0 %v516
    %v535 = vpop.f32.mrf.mxu0
    %v536 = vadd.f32 0.0, %v535
    %537 = vdwg.mxu0
    %v539 = vperm.slane %v465, 0
    %vm541 = vcmask 130048
    %v543 = vsel %vm541, %v507, 0
    %545 = vmatpush.msra.mxu0 0.0
    %546 = vmatpush.msra.mxu0 0.0
    %547 = vmatpush.msra.mxu0 0.0
    %548 = vmatpush.msra.mxu0 0.0
    %549 = vmatpush.msra.mxu0 0.0
    %550 = vmatpush.msra.mxu0 0.0
    %551 = vmatpush.msra.mxu0 0.0
    %552 = vmatpush.msra.mxu0 0.0
    %553 = vmatpush.msra.mxu0 0.0
    %554 = vmatpush.msra.mxu0 0.0
    %555 = vmatpush.msra.mxu0 0.0
    %556 = vmatpush.msra.mxu0 0.0
    %557 = vmatpush.msra.mxu0 0.0
    %558 = vmatpush.msra.mxu0 0.0
    %559 = vmatpush.msra.mxu0 %v460
    %560 = vmatpush.msra.mxu0 %v459
    %561 = vmatmul.f32.gmra.mxu0 %v543
    %v562 = vpop.f32.mrf.mxu0
    %v563 = vadd.f32 %v539, %v562
    %564 = vdwg.mxu0
    %v566 = vperm.slane %v466, 0
    %vm568 = vcmask 261120
    %v570 = vsel %vm568, 0.0, 0
    %572 = vmatpush.msra.mxu0 0.0
    %573 = vmatpush.msra.mxu0 0.0
    %574 = vmatpush.msra.mxu0 0.0
    %575 = vmatpush.msra.mxu0 0.0
    %576 = vmatpush.msra.mxu0 0.0
    %577 = vmatpush.msra.mxu0 0.0
    %578 = vmatpush.msra.mxu0 0.0
    %579 = vmatpush.msra.mxu0 0.0
    %580 = vmatpush.msra.mxu0 0.0
    %581 = vmatpush.msra.mxu0 0.0
    %582 = vmatpush.msra.mxu0 0.0
    %583 = vmatpush.msra.mxu0 0.0
    %584 = vmatpush.msra.mxu0 %v464
    %585 = vmatpush.msra.mxu0 %v463
    %586 = vmatpush.msra.mxu0 %v462
    %587 = vmatpush.msra.mxu0 %v461
    %588 = vmatmul.f32.gmra.mxu0 %v570
    %v589 = vpop.f32.mrf.mxu0
    %v590 = vadd.f32 %v566, %v589
    %591 = vdwg.mxu0
    %v592 = vadd.f32 %v563, %v590
    %v593 = vxor.u32 %v592, 2147483648
    %v594 = vmul.f32 %v593, 1.442695
    %v595 = vpow.pop %v594
    %v596 = vadd.f32 %v595, 1.0
    %v597 = vrcp.pop %v596
    %v598 = vmul.f32 %v596, %v597
    %v599 = vsub.f32 1.0, %v598
    %v600 = vmul.f32 %v597, %v599
    %v601 = vadd.f32 %v597, %v600
    %vm602 = vweird.f32 %v596
    %vm603 = vweird.f32 %v597
    %vm604 = vmor %vm602, %vm603
    %v605 = vsel %vm604, %v597, %v601
    %v606 = vand.u32 2147483647, %v596
    %vm607 = vcmp.eq.f32.partialorder %v606, 8.507059e+37
    %v608 = vand.u32 %v596, 2147483648
    %v609 = vor.u32 1.1754944e-38, %v608
    %v610 = vsel %vm607, %v609, %v605
    %v611 = vmul.f32 1.0, %v610
    %613 = vrot.lane.b32.xlu0 %v590, 64
    %v614 = vpop.permute.xlu0 %613
    %v616 = vmul.f32 %v611, %v614
    %618 = vrot.lane.b32.xlu0 %v616, 64
    %v619 = vpop.permute.xlu0 %618
    %v621 = vadd.f32 %v563, %v619
    %v622 = vtanh.pop %v621
    %v623 = vsub.f32 1.0, %v611
    %625 = vrot.lane.b32.xlu0 %v622, 96
    %v626 = vpop.permute.xlu0 %625
    %v628 = vmul.f32 %v623, %v626
    %v629 = vmul.f32 %v611, 0.0
    %v630 = vadd.f32 %v628, %v629
    %v632 = vperm.slane %v473, 0
    %v635 = vsel %vm541, %v536, 0
    %637 = vmatpush.msra.mxu0 0.0
    %638 = vmatpush.msra.mxu0 0.0
    %639 = vmatpush.msra.mxu0 0.0
    %640 = vmatpush.msra.mxu0 0.0
    %641 = vmatpush.msra.mxu0 0.0
    %642 = vmatpush.msra.mxu0 0.0
    %643 = vmatpush.msra.mxu0 0.0
    %644 = vmatpush.msra.mxu0 0.0
    %645 = vmatpush.msra.mxu0 0.0
    %646 = vmatpush.msra.mxu0 0.0
    %647 = vmatpush.msra.mxu0 0.0
    %648 = vmatpush.msra.mxu0 0.0
    %649 = vmatpush.msra.mxu0 0.0
    %650 = vmatpush.msra.mxu0 0.0
    %651 = vmatpush.msra.mxu0 %v468
    %652 = vmatpush.msra.mxu0 %v467
    %653 = vmatmul.f32.gmra.mxu0 %v635
    %v654 = vpop.f32.mrf.mxu0
    %v655 = vadd.f32 %v632, %v654
    %656 = vdwg.mxu0
    %v658 = vperm.slane %v474, 0
    %660 = vmatpush.msra.mxu0 0.0
    %661 = vmatpush.msra.mxu0 0.0
    %662 = vmatpush.msra.mxu0 0.0
    %663 = vmatpush.msra.mxu0 0.0
    %664 = vmatpush.msra.mxu0 0.0
    %665 = vmatpush.msra.mxu0 0.0
    %666 = vmatpush.msra.mxu0 0.0
    %667 = vmatpush.msra.mxu0 0.0
    %668 = vmatpush.msra.mxu0 0.0
    %669 = vmatpush.msra.mxu0 0.0
    %670 = vmatpush.msra.mxu0 0.0
    %671 = vmatpush.msra.mxu0 0.0
    %672 = vmatpush.msra.mxu0 %v472
    %673 = vmatpush.msra.mxu0 %v471
    %674 = vmatpush.msra.mxu0 %v470
    %675 = vmatpush.msra.mxu0 %v469
    %676 = vmatmul.f32.gmra.mxu0 %v570
    %v677 = vpop.f32.mrf.mxu0
    %v678 = vadd.f32 %v658, %v677
    %679 = vdwg.mxu0
    %v680 = vadd.f32 %v655, %v678
    %v681 = vxor.u32 %v680, 2147483648
    %v682 = vmul.f32 %v681, 1.442695
    %v683 = vpow.pop %v682
    %v684 = vadd.f32 %v683, 1.0
    %v685 = vrcp.pop %v684
    %v686 = vmul.f32 %v684, %v685
    %v687 = vsub.f32 1.0, %v686
    %v688 = vmul.f32 %v685, %v687
    %v689 = vadd.f32 %v685, %v688
    %vm690 = vweird.f32 %v684
    %vm691 = vweird.f32 %v685
    %vm692 = vmor %vm690, %vm691
    %v693 = vsel %vm692, %v685, %v689
    %v694 = vand.u32 2147483647, %v684
    %vm695 = vcmp.eq.f32.partialorder %v694, 8.507059e+37
    %v696 = vand.u32 %v684, 2147483648
    %v697 = vor.u32 1.1754944e-38, %v696
    %v698 = vsel %vm695, %v697, %v693
    %v699 = vmul.f32 1.0, %v698
    %701 = vrot.lane.b32.xlu0 %v678, 64
    %v702 = vpop.permute.xlu0 %701
    %v704 = vmul.f32 %v699, %v702
    %706 = vrot.lane.b32.xlu0 %v704, 64
    %v707 = vpop.permute.xlu0 %706
    %v709 = vadd.f32 %v655, %v707
    %v710 = vtanh.pop %v709
    %v711 = vsub.f32 1.0, %v699
    %713 = vrot.lane.b32.xlu0 %v710, 96
    %v714 = vpop.permute.xlu0 %713
    %v716 = vmul.f32 %v711, %v714
    %v717 = vmul.f32 %v699, 0.0
    %v718 = vadd.f32 %v716, %v717
    %vm719 = vcmp.gt.s32.totalorder %v453, 0
    %vm720 = vcmp.gt.s32.totalorder %v453, 7
    %v721 = vsel %vm719, 1, 0
    %722 = vset.pattern.permute.xlu0 0
    %723 = vperm.xlu0 %722, %v721
    %v724 = vpop.permute.xlu0 %723
    %vm725 = vcmp.eq.s32.totalorder %v724, 1
    %v726 = vsel %vm725, %v630, 0.0
    %728 = vrot.lane.b32.xlu0 %v726, 96
    %v729 = vpop.permute.xlu0 %728
    %731 = vst.msk [vmem:[#allocation2] sm:$0xff] %vm568, %v729
    %v732 = vsel %vm720, 1, 0
    %733 = vset.pattern.permute.xlu0 0
    %734 = vperm.xlu0 %733, %v732
    %v735 = vpop.permute.xlu0 %734
    %vm736 = vcmp.eq.s32.totalorder %v735, 1
    %v737 = vsel %vm736, %v718, 0.0
    %739 = vrot.lane.b32.xlu0 %v737, 96
    %v740 = vpop.permute.xlu0 %739
    %s742 = scalar_lea.vmem [#allocation3], 56
    %743 = vst.msk [vmem:[%s742] sm:$0xff] %vm568, %v740
    %744 = vset.pattern.permute.xlu0 1
    %745 = vperm.xlu0 %744, %v451
    %v746 = vpop.permute.xlu0 %745
    %vm747 = vcmp.eq.s32.totalorder %v746, %v458
    %v748 = vsel %vm747, 1, 0
    %v749 = vcvt.s32.f32 %v748
    %v751 = vsel %vm481, %v749, 0
    %753 = vmatpush.msra.mxu0 0.0
    %754 = vmatpush.msra.mxu0 0.0
    %755 = vmatpush.msra.mxu0 0.0
    %756 = vmatpush.msra.mxu0 0.0
    %757 = vmatpush.msra.mxu0 0.0
    %758 = vmatpush.msra.mxu0 0.0
    %759 = vmatpush.msra.mxu0 0.0
    %760 = vmatpush.msra.mxu0 0.0
    %761 = vmatpush.msra.mxu0 0.0
    %762 = vmatpush.msra.mxu0 0.0
    %763 = vmatpush.msra.mxu0 0.0
    %764 = vmatpush.msra.mxu0 0.0
    %765 = vmatpush.msra.mxu0 0.0
    %766 = vmatpush.msra.mxu0 %v487
    %767 = vmatpush.msra.mxu0 %v455
    %768 = vmatpush.msra.mxu0 %v454
    %769 = vmatmul.f32.gmra.mxu0 %v751
    %v770 = vpop.f32.mrf.mxu0
    %v771 = vadd.f32 0.0, %v770
    %772 = vdwg.mxu0
    %773 = vset.pattern.permute.xlu0 6
    %774 = vperm.xlu0 %773, %v451
    %v775 = vpop.permute.xlu0 %774
    %vm776 = vcmp.eq.s32.totalorder %v775, %v458
    %v777 = vsel %vm776, 1, 0
    %v778 = vcvt.s32.f32 %v777
    %v780 = vsel %vm481, %v778, 0
    %782 = vmatpush.msra.mxu0 0.0
    %783 = vmatpush.msra.mxu0 0.0
    %784 = vmatpush.msra.mxu0 0.0
    %785 = vmatpush.msra.mxu0 0.0
    %786 = vmatpush.msra.mxu0 0.0
    %787 = vmatpush.msra.mxu0 0.0
    %788 = vmatpush.msra.mxu0 0.0
    %789 = vmatpush.msra.mxu0 0.0
    %790 = vmatpush.msra.mxu0 0.0
    %791 = vmatpush.msra.mxu0 0.0
    %792 = vmatpush.msra.mxu0 0.0
    %793 = vmatpush.msra.mxu0 0.0
    %794 = vmatpush.msra.mxu0 0.0
    %795 = vmatpush.msra.mxu0 %v487
    %796 = vmatpush.msra.mxu0 %v455
    %797 = vmatpush.msra.mxu0 %v454
    %798 = vmatmul.f32.gmra.mxu0 %v780
    %v799 = vpop.f32.mrf.mxu0
    %v800 = vadd.f32 0.0, %v799
    %801 = vdwg.mxu0
    %v803 = vsel %vm541, %v771, 0
    %805 = vmatpush.msra.mxu0 0.0
    %806 = vmatpush.msra.mxu0 0.0
    %807 = vmatpush.msra.mxu0 0.0
    %808 = vmatpush.msra.mxu0 0.0
    %809 = vmatpush.msra.mxu0 0.0
    %810 = vmatpush.msra.mxu0 0.0
    %811 = vmatpush.msra.mxu0 0.0
    %812 = vmatpush.msra.mxu0 0.0
    %813 = vmatpush.msra.mxu0 0.0
    %814 = vmatpush.msra.mxu0 0.0
    %815 = vmatpush.msra.mxu0 0.0
    %816 = vmatpush.msra.mxu0 0.0
    %817 = vmatpush.msra.mxu0 0.0
    %818 = vmatpush.msra.mxu0 0.0
    %819 = vmatpush.msra.mxu0 %v460
    %820 = vmatpush.msra.mxu0 %v459
    %821 = vmatmul.f32.gmra.mxu0 %v803
    %v822 = vpop.f32.mrf.mxu0
    %v823 = vadd.f32 %v539, %v822
    %824 = vdwg.mxu0
    %v825 = vsel %vm568, %v729, 0
    %827 = vmatpush.msra.mxu0 0.0
    %828 = vmatpush.msra.mxu0 0.0
    %829 = vmatpush.msra.mxu0 0.0
    %830 = vmatpush.msra.mxu0 0.0
    %831 = vmatpush.msra.mxu0 0.0
    %832 = vmatpush.msra.mxu0 0.0
    %833 = vmatpush.msra.mxu0 0.0
    %834 = vmatpush.msra.mxu0 0.0
    %835 = vmatpush.msra.mxu0 0.0
    %836 = vmatpush.msra.mxu0 0.0
    %837 = vmatpush.msra.mxu0 0.0
    %838 = vmatpush.msra.mxu0 0.0
    %839 = vmatpush.msra.mxu0 %v464
    %840 = vmatpush.msra.mxu0 %v463
    %841 = vmatpush.msra.mxu0 %v462
    %842 = vmatpush.msra.mxu0 %v461
    %843 = vmatmul.f32.gmra.mxu0 %v825
    %v844 = vpop.f32.mrf.mxu0
    %v845 = vadd.f32 %v566, %v844
    %846 = vdwg.mxu0
    %v847 = vadd.f32 %v823, %v845
    %v848 = vxor.u32 %v847, 2147483648
    %v849 = vmul.f32 %v848, 1.442695
    %v850 = vpow.pop %v849
    %v851 = vadd.f32 %v850, 1.0
    %v852 = vrcp.pop %v851
    %v853 = vmul.f32 %v851, %v852
    %v854 = vsub.f32 1.0, %v853
    %v855 = vmul.f32 %v852, %v854
    %v856 = vadd.f32 %v852, %v855
    %vm857 = vweird.f32 %v851
    %vm858 = vweird.f32 %v852
    %vm859 = vmor %vm857, %vm858
    %v860 = vsel %vm859, %v852, %v856
    %v861 = vand.u32 2147483647, %v851
    %vm862 = vcmp.eq.f32.partialorder %v861, 8.507059e+37
    %v863 = vand.u32 %v851, 2147483648
    %v864 = vor.u32 1.1754944e-38, %v863
    %v865 = vsel %vm862, %v864, %v860
    %v866 = vmul.f32 1.0, %v865
    %868 = vrot.lane.b32.xlu0 %v845, 64
    %v869 = vpop.permute.xlu0 %868
    %v871 = vmul.f32 %v866, %v869
    %873 = vrot.lane.b32.xlu0 %v871, 64
    %v874 = vpop.permute.xlu0 %873
    %v876 = vadd.f32 %v823, %v874
    %v877 = vtanh.pop %v876
    %v878 = vsub.f32 1.0, %v866
    %880 = vrot.lane.b32.xlu0 %v877, 96
    %v881 = vpop.permute.xlu0 %880
    %v883 = vmul.f32 %v878, %v881
    %v884 = vmul.f32 %v866, %v726
    %v885 = vadd.f32 %v883, %v884
    %v887 = vsel %vm541, %v800, 0
    %889 = vmatpush.msra.mxu0 0.0
    %890 = vmatpush.msra.mxu0 0.0
    %891 = vmatpush.msra.mxu0 0.0
    %892 = vmatpush.msra.mxu0 0.0
    %893 = vmatpush.msra.mxu0 0.0
    %894 = vmatpush.msra.mxu0 0.0
    %895 = vmatpush.msra.mxu0 0.0
    %896 = vmatpush.msra.mxu0 0.0
    %897 = vmatpush.msra.mxu0 0.0
    %898 = vmatpush.msra.mxu0 0.0
    %899 = vmatpush.msra.mxu0 0.0
    %900 = vmatpush.msra.mxu0 0.0
    %901 = vmatpush.msra.mxu0 0.0
    %902 = vmatpush.msra.mxu0 0.0
    %903 = vmatpush.msra.mxu0 %v468
    %904 = vmatpush.msra.mxu0 %v467
    %905 = vmatmul.f32.gmra.mxu0 %v887
    %v906 = vpop.f32.mrf.mxu0
    %v907 = vadd.f32 %v632, %v906
    %908 = vdwg.mxu0
    %v909 = vsel %vm568, %v740, 0
    %911 = vmatpush.msra.mxu0 0.0
    %912 = vmatpush.msra.mxu0 0.0
    %913 = vmatpush.msra.mxu0 0.0
    %914 = vmatpush.msra.mxu0 0.0
    %915 = vmatpush.msra.mxu0 0.0
    %916 = vmatpush.msra.mxu0 0.0
    %917 = vmatpush.msra.mxu0 0.0
    %918 = vmatpush.msra.mxu0 0.0
    %919 = vmatpush.msra.mxu0 0.0
    %920 = vmatpush.msra.mxu0 0.0
    %921 = vmatpush.msra.mxu0 0.0
    %922 = vmatpush.msra.mxu0 0.0
    %923 = vmatpush.msra.mxu0 %v472
    %924 = vmatpush.msra.mxu0 %v471
    %925 = vmatpush.msra.mxu0 %v470
    %926 = vmatpush.msra.mxu0 %v469
    %927 = vmatmul.f32.gmra.mxu0 %v909
    %v928 = vpop.f32.mrf.mxu0
    %v929 = vadd.f32 %v658, %v928
    %930 = vdwg.mxu0
    %v931 = vadd.f32 %v907, %v929
    %v932 = vxor.u32 %v931, 2147483648
    %v933 = vmul.f32 %v932, 1.442695
    %v934 = vpow.pop %v933
    %v935 = vadd.f32 %v934, 1.0
    %v936 = vrcp.pop %v935
    %v937 = vmul.f32 %v935, %v936
    %v938 = vsub.f32 1.0, %v937
    %v939 = vmul.f32 %v936, %v938
    %v940 = vadd.f32 %v936, %v939
    %vm941 = vweird.f32 %v935
    %vm942 = vweird.f32 %v936
    %vm943 = vmor %vm941, %vm942
    %v944 = vsel %vm943, %v936, %v940
    %v945 = vand.u32 2147483647, %v935
    %vm946 = vcmp.eq.f32.partialorder %v945, 8.507059e+37
    %v947 = vand.u32 %v935, 2147483648
    %v948 = vor.u32 1.1754944e-38, %v947
    %v949 = vsel %vm946, %v948, %v944
    %v950 = vmul.f32 1.0, %v949
    %952 = vrot.lane.b32.xlu0 %v929, 64
    %v953 = vpop.permute.xlu0 %952
    %v955 = vmul.f32 %v950, %v953
    %957 = vrot.lane.b32.xlu0 %v955, 64
    %v958 = vpop.permute.xlu0 %957
    %v960 = vadd.f32 %v907, %v958
    %v961 = vtanh.pop %v960
    %v962 = vsub.f32 1.0, %v950
    %964 = vrot.lane.b32.xlu0 %v961, 96
    %v965 = vpop.permute.xlu0 %964
    %v967 = vmul.f32 %v962, %v965
    %v968 = vmul.f32 %v950, %v737
    %v969 = vadd.f32 %v967, %v968
    %vm970 = vcmp.gt.s32.totalorder %v453, 1
    %vm971 = vcmp.gt.s32.totalorder %v453, 6
    %v972 = vsel %vm970, 1, 0
    %973 = vset.pattern.permute.xlu0 0
    %974 = vperm.xlu0 %973, %v972
    %v975 = vpop.permute.xlu0 %974
    %vm976 = vcmp.eq.s32.totalorder %v975, 1
    %v977 = vsel %vm976, %v885, 0.0
    %979 = vrot.lane.b32.xlu0 %v977, 96
    %v980 = vpop.permute.xlu0 %979
    %s982 = scalar_lea.vmem [#allocation2], 8
    %983 = vst.msk [vmem:[%s982] sm:$0xff] %vm568, %v980
    %v984 = vsel %vm971, 1, 0
    %985 = vset.pattern.permute.xlu0 0
    %986 = vperm.xlu0 %985, %v984
    %v987 = vpop.permute.xlu0 %986
    %vm988 = vcmp.eq.s32.totalorder %v987, 1
    %v989 = vsel %vm988, %v969, 0.0
    %991 = vrot.lane.b32.xlu0 %v989, 96
    %v992 = vpop.permute.xlu0 %991
    %s994 = scalar_lea.vmem [#allocation3], 48
    %995 = vst.msk [vmem:[%s994] sm:$0xff] %vm568, %v992
    %v996 = vsel %vm976, %v885, %v726
    %v997 = vsel %vm988, %v969, %v737
    %998 = vset.pattern.permute.xlu0 2
    %999 = vperm.xlu0 %998, %v451
    %v1000 = vpop.permute.xlu0 %999
    %vm1001 = vcmp.eq.s32.totalorder %v1000, %v458
    %v1002 = vsel %vm1001, 1, 0
    %v1003 = vcvt.s32.f32 %v1002
    %v1005 = vsel %vm481, %v1003, 0
    %1007 = vmatpush.msra.mxu0 0.0
    %1008 = vmatpush.msra.mxu0 0.0
    %1009 = vmatpush.msra.mxu0 0.0
    %1010 = vmatpush.msra.mxu0 0.0
    %1011 = vmatpush.msra.mxu0 0.0
    %1012 = vmatpush.msra.mxu0 0.0
    %1013 = vmatpush.msra.mxu0 0.0
    %1014 = vmatpush.msra.mxu0 0.0
    %1015 = vmatpush.msra.mxu0 0.0
    %1016 = vmatpush.msra.mxu0 0.0
    %1017 = vmatpush.msra.mxu0 0.0
    %1018 = vmatpush.msra.mxu0 0.0
    %1019 = vmatpush.msra.mxu0 0.0
    %1020 = vmatpush.msra.mxu0 %v487
    %1021 = vmatpush.msra.mxu0 %v455
    %1022 = vmatpush.msra.mxu0 %v454
    %1023 = vmatmul.f32.gmra.mxu0 %v1005
    %v1024 = vpop.f32.mrf.mxu0
    %v1025 = vadd.f32 0.0, %v1024
    %1026 = vdwg.mxu0
    %1027 = vset.pattern.permute.xlu0 5
    %1028 = vperm.xlu0 %1027, %v451
    %v1029 = vpop.permute.xlu0 %1028
    %vm1030 = vcmp.eq.s32.totalorder %v1029, %v458
    %v1031 = vsel %vm1030, 1, 0
    %v1032 = vcvt.s32.f32 %v1031
    %v1034 = vsel %vm481, %v1032, 0
    %1036 = vmatpush.msra.mxu0 0.0
    %1037 = vmatpush.msra.mxu0 0.0
    %1038 = vmatpush.msra.mxu0 0.0
    %1039 = vmatpush.msra.mxu0 0.0
    %1040 = vmatpush.msra.mxu0 0.0
    %1041 = vmatpush.msra.mxu0 0.0
    %1042 = vmatpush.msra.mxu0 0.0
    %1043 = vmatpush.msra.mxu0 0.0
    %1044 = vmatpush.msra.mxu0 0.0
    %1045 = vmatpush.msra.mxu0 0.0
    %1046 = vmatpush.msra.mxu0 0.0
    %1047 = vmatpush.msra.mxu0 0.0
    %1048 = vmatpush.msra.mxu0 0.0
    %1049 = vmatpush.msra.mxu0 %v487
    %1050 = vmatpush.msra.mxu0 %v455
    %1051 = vmatpush.msra.mxu0 %v454
    %1052 = vmatmul.f32.gmra.mxu0 %v1034
    %v1053 = vpop.f32.mrf.mxu0
    %v1054 = vadd.f32 0.0, %v1053
    %1055 = vdwg.mxu0
    %v1057 = vsel %vm541, %v1025, 0
    %1059 = vmatpush.msra.mxu0 0.0
    %1060 = vmatpush.msra.mxu0 0.0
    %1061 = vmatpush.msra.mxu0 0.0
    %1062 = vmatpush.msra.mxu0 0.0
    %1063 = vmatpush.msra.mxu0 0.0
    %1064 = vmatpush.msra.mxu0 0.0
    %1065 = vmatpush.msra.mxu0 0.0
    %1066 = vmatpush.msra.mxu0 0.0
    %1067 = vmatpush.msra.mxu0 0.0
    %1068 = vmatpush.msra.mxu0 0.0
    %1069 = vmatpush.msra.mxu0 0.0
    %1070 = vmatpush.msra.mxu0 0.0
    %1071 = vmatpush.msra.mxu0 0.0
    %1072 = vmatpush.msra.mxu0 0.0
    %1073 = vmatpush.msra.mxu0 %v460
    %1074 = vmatpush.msra.mxu0 %v459
    %1075 = vmatmul.f32.gmra.mxu0 %v1057
    %v1076 = vpop.f32.mrf.mxu0
    %v1077 = vadd.f32 %v539, %v1076
    %1078 = vdwg.mxu0
    %1080 = vrot.lane.b32.xlu0 %v996, 96
    %v1081 = vpop.permute.xlu0 %1080
    %v1082 = vsel %vm568, %v1081, 0
    %1084 = vmatpush.msra.mxu0 0.0
    %1085 = vmatpush.msra.mxu0 0.0
    %1086 = vmatpush.msra.mxu0 0.0
    %1087 = vmatpush.msra.mxu0 0.0
    %1088 = vmatpush.msra.mxu0 0.0
    %1089 = vmatpush.msra.mxu0 0.0
    %1090 = vmatpush.msra.mxu0 0.0
    %1091 = vmatpush.msra.mxu0 0.0
    %1092 = vmatpush.msra.mxu0 0.0
    %1093 = vmatpush.msra.mxu0 0.0
    %1094 = vmatpush.msra.mxu0 0.0
    %1095 = vmatpush.msra.mxu0 0.0
    %1096 = vmatpush.msra.mxu0 %v464
    %1097 = vmatpush.msra.mxu0 %v463
    %1098 = vmatpush.msra.mxu0 %v462
    %1099 = vmatpush.msra.mxu0 %v461
    %1100 = vmatmul.f32.gmra.mxu0 %v1082
    %v1101 = vpop.f32.mrf.mxu0
    %v1102 = vadd.f32 %v566, %v1101
    %1103 = vdwg.mxu0
    %v1104 = vadd.f32 %v1077, %v1102
    %v1105 = vxor.u32 %v1104, 2147483648
    %v1106 = vmul.f32 %v1105, 1.442695
    %v1107 = vpow.pop %v1106
    %v1108 = vadd.f32 %v1107, 1.0
    %v1109 = vrcp.pop %v1108
    %v1110 = vmul.f32 %v1108, %v1109
    %v1111 = vsub.f32 1.0, %v1110
    %v1112 = vmul.f32 %v1109, %v1111
    %v1113 = vadd.f32 %v1109, %v1112
    %vm1114 = vweird.f32 %v1108
    %vm1115 = vweird.f32 %v1109
    %vm1116 = vmor %vm1114, %vm1115
    %v1117 = vsel %vm1116, %v1109, %v1113
    %v1118 = vand.u32 2147483647, %v1108
    %vm1119 = vcmp.eq.f32.partialorder %v1118, 8.507059e+37
    %v1120 = vand.u32 %v1108, 2147483648
    %v1121 = vor.u32 1.1754944e-38, %v1120
    %v1122 = vsel %vm1119, %v1121, %v1117
    %v1123 = vmul.f32 1.0, %v1122
    %1125 = vrot.lane.b32.xlu0 %v1102, 64
    %v1126 = vpop.permute.xlu0 %1125
    %v1128 = vmul.f32 %v1123, %v1126
    %1130 = vrot.lane.b32.xlu0 %v1128, 64
    %v1131 = vpop.permute.xlu0 %1130
    %v1133 = vadd.f32 %v1077, %v1131
    %v1134 = vtanh.pop %v1133
    %v1135 = vsub.f32 1.0, %v1123
    %1137 = vrot.lane.b32.xlu0 %v1134, 96
    %v1138 = vpop.permute.xlu0 %1137
    %v1140 = vmul.f32 %v1135, %v1138
    %v1141 = vmul.f32 %v1123, %v996
    %v1142 = vadd.f32 %v1140, %v1141
    %v1144 = vsel %vm541, %v1054, 0
    %1146 = vmatpush.msra.mxu0 0.0
    %1147 = vmatpush.msra.mxu0 0.0
    %1148 = vmatpush.msra.mxu0 0.0
    %1149 = vmatpush.msra.mxu0 0.0
    %1150 = vmatpush.msra.mxu0 0.0
    %1151 = vmatpush.msra.mxu0 0.0
    %1152 = vmatpush.msra.mxu0 0.0
    %1153 = vmatpush.msra.mxu0 0.0
    %1154 = vmatpush.msra.mxu0 0.0
    %1155 = vmatpush.msra.mxu0 0.0
    %1156 = vmatpush.msra.mxu0 0.0
    %1157 = vmatpush.msra.mxu0 0.0
    %1158 = vmatpush.msra.mxu0 0.0
    %1159 = vmatpush.msra.mxu0 0.0
    %1160 = vmatpush.msra.mxu0 %v468
    %1161 = vmatpush.msra.mxu0 %v467
    %1162 = vmatmul.f32.gmra.mxu0 %v1144
    %v1163 = vpop.f32.mrf.mxu0
    %v1164 = vadd.f32 %v632, %v1163
    %1165 = vdwg.mxu0
    %1167 = vrot.lane.b32.xlu0 %v997, 96
    %v1168 = vpop.permute.xlu0 %1167
    %v1169 = vsel %vm568, %v1168, 0
    %1171 = vmatpush.msra.mxu0 0.0
    %1172 = vmatpush.msra.mxu0 0.0
    %1173 = vmatpush.msra.mxu0 0.0
    %1174 = vmatpush.msra.mxu0 0.0
    %1175 = vmatpush.msra.mxu0 0.0
    %1176 = vmatpush.msra.mxu0 0.0
    %1177 = vmatpush.msra.mxu0 0.0
    %1178 = vmatpush.msra.mxu0 0.0
    %1179 = vmatpush.msra.mxu0 0.0
    %1180 = vmatpush.msra.mxu0 0.0
    %1181 = vmatpush.msra.mxu0 0.0
    %1182 = vmatpush.msra.mxu0 0.0
    %1183 = vmatpush.msra.mxu0 %v472
    %1184 = vmatpush.msra.mxu0 %v471
    %1185 = vmatpush.msra.mxu0 %v470
    %1186 = vmatpush.msra.mxu0 %v469
    %1187 = vmatmul.f32.gmra.mxu0 %v1169
    %v1188 = vpop.f32.mrf.mxu0
    %v1189 = vadd.f32 %v658, %v1188
    %1190 = vdwg.mxu0
    %v1191 = vadd.f32 %v1164, %v1189
    %v1192 = vxor.u32 %v1191, 2147483648
    %v1193 = vmul.f32 %v1192, 1.442695
    %v1194 = vpow.pop %v1193
    %v1195 = vadd.f32 %v1194, 1.0
    %v1196 = vrcp.pop %v1195
    %v1197 = vmul.f32 %v1195, %v1196
    %v1198 = vsub.f32 1.0, %v1197
    %v1199 = vmul.f32 %v1196, %v1198
    %v1200 = vadd.f32 %v1196, %v1199
    %vm1201 = vweird.f32 %v1195
    %vm1202 = vweird.f32 %v1196
    %vm1203 = vmor %vm1201, %vm1202
    %v1204 = vsel %vm1203, %v1196, %v1200
    %v1205 = vand.u32 2147483647, %v1195
    %vm1206 = vcmp.eq.f32.partialorder %v1205, 8.507059e+37
    %v1207 = vand.u32 %v1195, 2147483648
    %v1208 = vor.u32 1.1754944e-38, %v1207
    %v1209 = vsel %vm1206, %v1208, %v1204
    %v1210 = vmul.f32 1.0, %v1209
    %1212 = vrot.lane.b32.xlu0 %v1189, 64
    %v1213 = vpop.permute.xlu0 %1212
    %v1215 = vmul.f32 %v1210, %v1213
    %1217 = vrot.lane.b32.xlu0 %v1215, 64
    %v1218 = vpop.permute.xlu0 %1217
    %v1220 = vadd.f32 %v1164, %v1218
    %v1221 = vtanh.pop %v1220
    %v1222 = vsub.f32 1.0, %v1210
    %1224 = vrot.lane.b32.xlu0 %v1221, 96
    %v1225 = vpop.permute.xlu0 %1224
    %v1227 = vmul.f32 %v1222, %v1225
    %v1228 = vmul.f32 %v1210, %v997
    %v1229 = vadd.f32 %v1227, %v1228
    %vm1230 = vcmp.gt.s32.totalorder %v453, 2
    %vm1231 = vcmp.gt.s32.totalorder %v453, 5
    %v1232 = vsel %vm1230, 1, 0
    %1233 = vset.pattern.permute.xlu0 0
    %1234 = vperm.xlu0 %1233, %v1232
    %v1235 = vpop.permute.xlu0 %1234
    %vm1236 = vcmp.eq.s32.totalorder %v1235, 1
    %v1237 = vsel %vm1236, %v1142, 0.0
    %1239 = vrot.lane.b32.xlu0 %v1237, 96
    %v1240 = vpop.permute.xlu0 %1239
    %s1242 = scalar_lea.vmem [#allocation2], 16
    %1243 = vst.msk [vmem:[%s1242] sm:$0xff] %vm568, %v1240
    %v1244 = vsel %vm1231, 1, 0
    %1245 = vset.pattern.permute.xlu0 0
    %1246 = vperm.xlu0 %1245, %v1244
    %v1247 = vpop.permute.xlu0 %1246
    %vm1248 = vcmp.eq.s32.totalorder %v1247, 1
    %v1249 = vsel %vm1248, %v1229, 0.0
    %1251 = vrot.lane.b32.xlu0 %v1249, 96
    %v1252 = vpop.permute.xlu0 %1251
    %s1254 = scalar_lea.vmem [#allocation3], 40
    %1255 = vst.msk [vmem:[%s1254] sm:$0xff] %vm568, %v1252
    %v1256 = vsel %vm1236, %v1142, %v996
    %v1257 = vsel %vm1248, %v1229, %v997
    %1258 = vset.pattern.permute.xlu0 3
    %1259 = vperm.xlu0 %1258, %v451
    %v1260 = vpop.permute.xlu0 %1259
    %vm1261 = vcmp.eq.s32.totalorder %v1260, %v458
    %v1262 = vsel %vm1261, 1, 0
    %v1263 = vcvt.s32.f32 %v1262
    %v1265 = vsel %vm481, %v1263, 0
    %1267 = vmatpush.msra.mxu0 0.0
    %1268 = vmatpush.msra.mxu0 0.0
    %1269 = vmatpush.msra.mxu0 0.0
    %1270 = vmatpush.msra.mxu0 0.0
    %1271 = vmatpush.msra.mxu0 0.0
    %1272 = vmatpush.msra.mxu0 0.0
    %1273 = vmatpush.msra.mxu0 0.0
    %1274 = vmatpush.msra.mxu0 0.0
    %1275 = vmatpush.msra.mxu0 0.0
    %1276 = vmatpush.msra.mxu0 0.0
    %1277 = vmatpush.msra.mxu0 0.0
    %1278 = vmatpush.msra.mxu0 0.0
    %1279 = vmatpush.msra.mxu0 0.0
    %1280 = vmatpush.msra.mxu0 %v487
    %1281 = vmatpush.msra.mxu0 %v455
    %1282 = vmatpush.msra.mxu0 %v454
    %1283 = vmatmul.f32.gmra.mxu0 %v1265
    %v1284 = vpop.f32.mrf.mxu0
    %v1285 = vadd.f32 0.0, %v1284
    %1286 = vdwg.mxu0
    %1287 = vset.pattern.permute.xlu0 4
    %1288 = vperm.xlu0 %1287, %v451
    %v1289 = vpop.permute.xlu0 %1288
    %vm1290 = vcmp.eq.s32.totalorder %v1289, %v458
    %v1291 = vsel %vm1290, 1, 0
    %v1292 = vcvt.s32.f32 %v1291
    %v1294 = vsel %vm481, %v1292, 0
    %1296 = vmatpush.msra.mxu0 0.0
    %1297 = vmatpush.msra.mxu0 0.0
    %1298 = vmatpush.msra.mxu0 0.0
    %1299 = vmatpush.msra.mxu0 0.0
    %1300 = vmatpush.msra.mxu0 0.0
    %1301 = vmatpush.msra.mxu0 0.0
    %1302 = vmatpush.msra.mxu0 0.0
    %1303 = vmatpush.msra.mxu0 0.0
    %1304 = vmatpush.msra.mxu0 0.0
    %1305 = vmatpush.msra.mxu0 0.0
    %1306 = vmatpush.msra.mxu0 0.0
    %1307 = vmatpush.msra.mxu0 0.0
    %1308 = vmatpush.msra.mxu0 0.0
    %1309 = vmatpush.msra.mxu0 %v487
    %1310 = vmatpush.msra.mxu0 %v455
    %1311 = vmatpush.msra.mxu0 %v454
    %1312 = vmatmul.f32.gmra.mxu0 %v1294
    %v1313 = vpop.f32.mrf.mxu0
    %v1314 = vadd.f32 0.0, %v1313
    %1315 = vdwg.mxu0
    %v1317 = vsel %vm541, %v1285, 0
    %1319 = vmatpush.msra.mxu0 0.0
    %1320 = vmatpush.msra.mxu0 0.0
    %1321 = vmatpush.msra.mxu0 0.0
    %1322 = vmatpush.msra.mxu0 0.0
    %1323 = vmatpush.msra.mxu0 0.0
    %1324 = vmatpush.msra.mxu0 0.0
    %1325 = vmatpush.msra.mxu0 0.0
    %1326 = vmatpush.msra.mxu0 0.0
    %1327 = vmatpush.msra.mxu0 0.0
    %1328 = vmatpush.msra.mxu0 0.0
    %1329 = vmatpush.msra.mxu0 0.0
    %1330 = vmatpush.msra.mxu0 0.0
    %1331 = vmatpush.msra.mxu0 0.0
    %1332 = vmatpush.msra.mxu0 0.0
    %1333 = vmatpush.msra.mxu0 %v460
    %1334 = vmatpush.msra.mxu0 %v459
    %1335 = vmatmul.f32.gmra.mxu0 %v1317
    %v1336 = vpop.f32.mrf.mxu0
    %v1337 = vadd.f32 %v539, %v1336
    %1338 = vdwg.mxu0
    %1340 = vrot.lane.b32.xlu0 %v1256, 96
    %v1341 = vpop.permute.xlu0 %1340
    %v1342 = vsel %vm568, %v1341, 0
    %1344 = vmatpush.msra.mxu0 0.0
    %1345 = vmatpush.msra.mxu0 0.0
    %1346 = vmatpush.msra.mxu0 0.0
    %1347 = vmatpush.msra.mxu0 0.0
    %1348 = vmatpush.msra.mxu0 0.0
    %1349 = vmatpush.msra.mxu0 0.0
    %1350 = vmatpush.msra.mxu0 0.0
    %1351 = vmatpush.msra.mxu0 0.0
    %1352 = vmatpush.msra.mxu0 0.0
    %1353 = vmatpush.msra.mxu0 0.0
    %1354 = vmatpush.msra.mxu0 0.0
    %1355 = vmatpush.msra.mxu0 0.0
    %1356 = vmatpush.msra.mxu0 %v464
    %1357 = vmatpush.msra.mxu0 %v463
    %1358 = vmatpush.msra.mxu0 %v462
    %1359 = vmatpush.msra.mxu0 %v461
    %1360 = vmatmul.f32.gmra.mxu0 %v1342
    %v1361 = vpop.f32.mrf.mxu0
    %v1362 = vadd.f32 %v566, %v1361
    %1363 = vdwg.mxu0
    %v1364 = vadd.f32 %v1337, %v1362
    %v1365 = vxor.u32 %v1364, 2147483648
    %v1366 = vmul.f32 %v1365, 1.442695
    %v1367 = vpow.pop %v1366
    %v1368 = vadd.f32 %v1367, 1.0
    %v1369 = vrcp.pop %v1368
    %v1370 = vmul.f32 %v1368, %v1369
    %v1371 = vsub.f32 1.0, %v1370
    %v1372 = vmul.f32 %v1369, %v1371
    %v1373 = vadd.f32 %v1369, %v1372
    %vm1374 = vweird.f32 %v1368
    %vm1375 = vweird.f32 %v1369
    %vm1376 = vmor %vm1374, %vm1375
    %v1377 = vsel %vm1376, %v1369, %v1373
    %v1378 = vand.u32 2147483647, %v1368
    %vm1379 = vcmp.eq.f32.partialorder %v1378, 8.507059e+37
    %v1380 = vand.u32 %v1368, 2147483648
    %v1381 = vor.u32 1.1754944e-38, %v1380
    %v1382 = vsel %vm1379, %v1381, %v1377
    %v1383 = vmul.f32 1.0, %v1382
    %1385 = vrot.lane.b32.xlu0 %v1362, 64
    %v1386 = vpop.permute.xlu0 %1385
    %v1388 = vmul.f32 %v1383, %v1386
    %1390 = vrot.lane.b32.xlu0 %v1388, 64
    %v1391 = vpop.permute.xlu0 %1390
    %v1393 = vadd.f32 %v1337, %v1391
    %v1394 = vtanh.pop %v1393
    %v1395 = vsub.f32 1.0, %v1383
    %1397 = vrot.lane.b32.xlu0 %v1394, 96
    %v1398 = vpop.permute.xlu0 %1397
    %v1400 = vmul.f32 %v1395, %v1398
    %v1401 = vmul.f32 %v1383, %v1256
    %v1402 = vadd.f32 %v1400, %v1401
    %v1404 = vsel %vm541, %v1314, 0
    %1406 = vmatpush.msra.mxu0 0.0
    %1407 = vmatpush.msra.mxu0 0.0
    %1408 = vmatpush.msra.mxu0 0.0
    %1409 = vmatpush.msra.mxu0 0.0
    %1410 = vmatpush.msra.mxu0 0.0
    %1411 = vmatpush.msra.mxu0 0.0
    %1412 = vmatpush.msra.mxu0 0.0
    %1413 = vmatpush.msra.mxu0 0.0
    %1414 = vmatpush.msra.mxu0 0.0
    %1415 = vmatpush.msra.mxu0 0.0
    %1416 = vmatpush.msra.mxu0 0.0
    %1417 = vmatpush.msra.mxu0 0.0
    %1418 = vmatpush.msra.mxu0 0.0
    %1419 = vmatpush.msra.mxu0 0.0
    %1420 = vmatpush.msra.mxu0 %v468
    %1421 = vmatpush.msra.mxu0 %v467
    %1422 = vmatmul.f32.gmra.mxu0 %v1404
    %v1423 = vpop.f32.mrf.mxu0
    %v1424 = vadd.f32 %v632, %v1423
    %1425 = vdwg.mxu0
    %1427 = vrot.lane.b32.xlu0 %v1257, 96
    %v1428 = vpop.permute.xlu0 %1427
    %v1429 = vsel %vm568, %v1428, 0
    %1431 = vmatpush.msra.mxu0 0.0
    %1432 = vmatpush.msra.mxu0 0.0
    %1433 = vmatpush.msra.mxu0 0.0
    %1434 = vmatpush.msra.mxu0 0.0
    %1435 = vmatpush.msra.mxu0 0.0
    %1436 = vmatpush.msra.mxu0 0.0
    %1437 = vmatpush.msra.mxu0 0.0
    %1438 = vmatpush.msra.mxu0 0.0
    %1439 = vmatpush.msra.mxu0 0.0
    %1440 = vmatpush.msra.mxu0 0.0
    %1441 = vmatpush.msra.mxu0 0.0
    %1442 = vmatpush.msra.mxu0 0.0
    %1443 = vmatpush.msra.mxu0 %v472
    %1444 = vmatpush.msra.mxu0 %v471
    %1445 = vmatpush.msra.mxu0 %v470
    %1446 = vmatpush.msra.mxu0 %v469
    %1447 = vmatmul.f32.gmra.mxu0 %v1429
    %v1448 = vpop.f32.mrf.mxu0
    %v1449 = vadd.f32 %v658, %v1448
    %1450 = vdwg.mxu0
    %v1451 = vadd.f32 %v1424, %v1449
    %v1452 = vxor.u32 %v1451, 2147483648
    %v1453 = vmul.f32 %v1452, 1.442695
    %v1454 = vpow.pop %v1453
    %v1455 = vadd.f32 %v1454, 1.0
    %v1456 = vrcp.pop %v1455
    %v1457 = vmul.f32 %v1455, %v1456
    %v1458 = vsub.f32 1.0, %v1457
    %v1459 = vmul.f32 %v1456, %v1458
    %v1460 = vadd.f32 %v1456, %v1459
    %vm1461 = vweird.f32 %v1455
    %vm1462 = vweird.f32 %v1456
    %vm1463 = vmor %vm1461, %vm1462
    %v1464 = vsel %vm1463, %v1456, %v1460
    %v1465 = vand.u32 2147483647, %v1455
    %vm1466 = vcmp.eq.f32.partialorder %v1465, 8.507059e+37
    %v1467 = vand.u32 %v1455, 2147483648
    %v1468 = vor.u32 1.1754944e-38, %v1467
    %v1469 = vsel %vm1466, %v1468, %v1464
    %v1470 = vmul.f32 1.0, %v1469
    %1472 = vrot.lane.b32.xlu0 %v1449, 64
    %v1473 = vpop.permute.xlu0 %1472
    %v1475 = vmul.f32 %v1470, %v1473
    %1477 = vrot.lane.b32.xlu0 %v1475, 64
    %v1478 = vpop.permute.xlu0 %1477
    %v1480 = vadd.f32 %v1424, %v1478
    %v1481 = vtanh.pop %v1480
    %v1482 = vsub.f32 1.0, %v1470
    %1484 = vrot.lane.b32.xlu0 %v1481, 96
    %v1485 = vpop.permute.xlu0 %1484
    %v1487 = vmul.f32 %v1482, %v1485
    %v1488 = vmul.f32 %v1470, %v1257
    %v1489 = vadd.f32 %v1487, %v1488
    %vm1490 = vcmp.gt.s32.totalorder %v453, 3
    %vm1491 = vcmp.gt.s32.totalorder %v453, 4
    %v1492 = vsel %vm1490, 1, 0
    %1493 = vset.pattern.permute.xlu0 0
    %1494 = vperm.xlu0 %1493, %v1492
    %v1495 = vpop.permute.xlu0 %1494
    %vm1496 = vcmp.eq.s32.totalorder %v1495, 1
    %v1497 = vsel %vm1496, %v1402, 0.0
    %1499 = vrot.lane.b32.xlu0 %v1497, 96
    %v1500 = vpop.permute.xlu0 %1499
    %s1502 = scalar_lea.vmem [#allocation2], 24
    %1503 = vst.msk [vmem:[%s1502] sm:$0xff] %vm568, %v1500
    %v1504 = vsel %vm1491, 1, 0
    %1505 = vset.pattern.permute.xlu0 0
    %1506 = vperm.xlu0 %1505, %v1504
    %v1507 = vpop.permute.xlu0 %1506
    %vm1508 = vcmp.eq.s32.totalorder %v1507, 1
    %v1509 = vsel %vm1508, %v1489, 0.0
    %1511 = vrot.lane.b32.xlu0 %v1509, 96
    %v1512 = vpop.permute.xlu0 %1511
    %s1514 = scalar_lea.vmem [#allocation3], 32
    %1515 = vst.msk [vmem:[%s1514] sm:$0xff] %vm568, %v1512
    %v1516 = vsel %vm1496, %v1402, %v1256
    %v1517 = vsel %vm1508, %v1489, %v1257
    %1518 = vmatpush.msra.mxu0 0.0
    %1519 = vmatpush.msra.mxu0 0.0
    %1520 = vmatpush.msra.mxu0 0.0
    %1521 = vmatpush.msra.mxu0 0.0
    %1522 = vmatpush.msra.mxu0 0.0
    %1523 = vmatpush.msra.mxu0 0.0
    %1524 = vmatpush.msra.mxu0 0.0
    %1525 = vmatpush.msra.mxu0 0.0
    %1526 = vmatpush.msra.mxu0 0.0
    %1527 = vmatpush.msra.mxu0 0.0
    %1528 = vmatpush.msra.mxu0 0.0
    %1529 = vmatpush.msra.mxu0 0.0
    %1530 = vmatpush.msra.mxu0 0.0
    %1531 = vmatpush.msra.mxu0 0.0
    %1532 = vmatpush.msra.mxu0 %v460
    %1533 = vmatpush.msra.mxu0 %v459
    %1534 = vmatmul.f32.gmra.mxu0 %v1404
    %v1535 = vpop.f32.mrf.mxu0
    %v1536 = vadd.f32 %v539, %v1535
    %1537 = vdwg.mxu0
    %1539 = vrot.lane.b32.xlu0 %v1516, 96
    %v1540 = vpop.permute.xlu0 %1539
    %v1541 = vsel %vm568, %v1540, 0
    %1543 = vmatpush.msra.mxu0 0.0
    %1544 = vmatpush.msra.mxu0 0.0
    %1545 = vmatpush.msra.mxu0 0.0
    %1546 = vmatpush.msra.mxu0 0.0
    %1547 = vmatpush.msra.mxu0 0.0
    %1548 = vmatpush.msra.mxu0 0.0
    %1549 = vmatpush.msra.mxu0 0.0
    %1550 = vmatpush.msra.mxu0 0.0
    %1551 = vmatpush.msra.mxu0 0.0
    %1552 = vmatpush.msra.mxu0 0.0
    %1553 = vmatpush.msra.mxu0 0.0
    %1554 = vmatpush.msra.mxu0 0.0
    %1555 = vmatpush.msra.mxu0 %v464
    %1556 = vmatpush.msra.mxu0 %v463
    %1557 = vmatpush.msra.mxu0 %v462
    %1558 = vmatpush.msra.mxu0 %v461
    %1559 = vmatmul.f32.gmra.mxu0 %v1541
    %v1560 = vpop.f32.mrf.mxu0
    %v1561 = vadd.f32 %v566, %v1560
    %1562 = vdwg.mxu0
    %v1563 = vadd.f32 %v1536, %v1561
    %v1564 = vxor.u32 %v1563, 2147483648
    %v1565 = vmul.f32 %v1564, 1.442695
    %v1566 = vpow.pop %v1565
    %v1567 = vadd.f32 %v1566, 1.0
    %v1568 = vrcp.pop %v1567
    %v1569 = vmul.f32 %v1567, %v1568
    %v1570 = vsub.f32 1.0, %v1569
    %v1571 = vmul.f32 %v1568, %v1570
    %v1572 = vadd.f32 %v1568, %v1571
    %vm1573 = vweird.f32 %v1567
    %vm1574 = vweird.f32 %v1568
    %vm1575 = vmor %vm1573, %vm1574
    %v1576 = vsel %vm1575, %v1568, %v1572
    %v1577 = vand.u32 2147483647, %v1567
    %vm1578 = vcmp.eq.f32.partialorder %v1577, 8.507059e+37
    %v1579 = vand.u32 %v1567, 2147483648
    %v1580 = vor.u32 1.1754944e-38, %v1579
    %v1581 = vsel %vm1578, %v1580, %v1576
    %v1582 = vmul.f32 1.0, %v1581
    %1584 = vrot.lane.b32.xlu0 %v1561, 64
    %v1585 = vpop.permute.xlu0 %1584
    %v1587 = vmul.f32 %v1582, %v1585
    %1589 = vrot.lane.b32.xlu0 %v1587, 64
    %v1590 = vpop.permute.xlu0 %1589
    %v1592 = vadd.f32 %v1536, %v1590
    %v1593 = vtanh.pop %v1592
    %v1594 = vsub.f32 1.0, %v1582
    %1596 = vrot.lane.b32.xlu0 %v1593, 96
    %v1597 = vpop.permute.xlu0 %1596
    %v1599 = vmul.f32 %v1594, %v1597
    %v1600 = vmul.f32 %v1582, %v1516
    %v1601 = vadd.f32 %v1599, %v1600
    %1602 = vmatpush.msra.mxu0 0.0
    %1603 = vmatpush.msra.mxu0 0.0
    %1604 = vmatpush.msra.mxu0 0.0
    %1605 = vmatpush.msra.mxu0 0.0
    %1606 = vmatpush.msra.mxu0 0.0
    %1607 = vmatpush.msra.mxu0 0.0
    %1608 = vmatpush.msra.mxu0 0.0
    %1609 = vmatpush.msra.mxu0 0.0
    %1610 = vmatpush.msra.mxu0 0.0
    %1611 = vmatpush.msra.mxu0 0.0
    %1612 = vmatpush.msra.mxu0 0.0
    %1613 = vmatpush.msra.mxu0 0.0
    %1614 = vmatpush.msra.mxu0 0.0
    %1615 = vmatpush.msra.mxu0 0.0
    %1616 = vmatpush.msra.mxu0 %v468
    %1617 = vmatpush.msra.mxu0 %v467
    %1618 = vmatmul.f32.gmra.mxu0 %v1317
    %v1619 = vpop.f32.mrf.mxu0
    %v1620 = vadd.f32 %v632, %v1619
    %1621 = vdwg.mxu0
    %1623 = vrot.lane.b32.xlu0 %v1517, 96
    %v1624 = vpop.permute.xlu0 %1623
    %v1625 = vsel %vm568, %v1624, 0
    %1627 = vmatpush.msra.mxu0 0.0
    %1628 = vmatpush.msra.mxu0 0.0
    %1629 = vmatpush.msra.mxu0 0.0
    %1630 = vmatpush.msra.mxu0 0.0
    %1631 = vmatpush.msra.mxu0 0.0
    %1632 = vmatpush.msra.mxu0 0.0
    %1633 = vmatpush.msra.mxu0 0.0
    %1634 = vmatpush.msra.mxu0 0.0
    %1635 = vmatpush.msra.mxu0 0.0
    %1636 = vmatpush.msra.mxu0 0.0
    %1637 = vmatpush.msra.mxu0 0.0
    %1638 = vmatpush.msra.mxu0 0.0
    %1639 = vmatpush.msra.mxu0 %v472
    %1640 = vmatpush.msra.mxu0 %v471
    %1641 = vmatpush.msra.mxu0 %v470
    %1642 = vmatpush.msra.mxu0 %v469
    %1643 = vmatmul.f32.gmra.mxu0 %v1625
    %v1644 = vpop.f32.mrf.mxu0
    %v1645 = vadd.f32 %v658, %v1644
    %1646 = vdwg.mxu0
    %v1647 = vadd.f32 %v1620, %v1645
    %v1648 = vxor.u32 %v1647, 2147483648
    %v1649 = vmul.f32 %v1648, 1.442695
    %v1650 = vpow.pop %v1649
    %v1651 = vadd.f32 %v1650, 1.0
    %v1652 = vrcp.pop %v1651
    %v1653 = vmul.f32 %v1651, %v1652
    %v1654 = vsub.f32 1.0, %v1653
    %v1655 = vmul.f32 %v1652, %v1654
    %v1656 = vadd.f32 %v1652, %v1655
    %vm1657 = vweird.f32 %v1651
    %vm1658 = vweird.f32 %v1652
    %vm1659 = vmor %vm1657, %vm1658
    %v1660 = vsel %vm1659, %v1652, %v1656
    %v1661 = vand.u32 2147483647, %v1651
    %vm1662 = vcmp.eq.f32.partialorder %v1661, 8.507059e+37
    %v1663 = vand.u32 %v1651, 2147483648
    %v1664 = vor.u32 1.1754944e-38, %v1663
    %v1665 = vsel %vm1662, %v1664, %v1660
    %v1666 = vmul.f32 1.0, %v1665
    %1668 = vrot.lane.b32.xlu0 %v1645, 64
    %v1669 = vpop.permute.xlu0 %1668
    %v1671 = vmul.f32 %v1666, %v1669
    %1673 = vrot.lane.b32.xlu0 %v1671, 64
    %v1674 = vpop.permute.xlu0 %1673
    %v1676 = vadd.f32 %v1620, %v1674
    %v1677 = vtanh.pop %v1676
    %v1678 = vsub.f32 1.0, %v1666
    %1680 = vrot.lane.b32.xlu0 %v1677, 96
    %v1681 = vpop.permute.xlu0 %1680
    %v1683 = vmul.f32 %v1678, %v1681
    %v1684 = vmul.f32 %v1666, %v1517
    %v1685 = vadd.f32 %v1683, %v1684
    %v1686 = vsel %vm1508, %v1601, 0.0
    %1688 = vrot.lane.b32.xlu0 %v1686, 96
    %v1689 = vpop.permute.xlu0 %1688
    %s1691 = scalar_lea.vmem [#allocation2], 32
    %1692 = vst.msk [vmem:[%s1691] sm:$0xff] %vm568, %v1689
    %v1693 = vsel %vm1496, %v1685, 0.0
    %1695 = vrot.lane.b32.xlu0 %v1693, 96
    %v1696 = vpop.permute.xlu0 %1695
    %s1698 = scalar_lea.vmem [#allocation3], 24
    %1699 = vst.msk [vmem:[%s1698] sm:$0xff] %vm568, %v1696
    %v1700 = vsel %vm1508, %v1601, %v1516
    %v1701 = vsel %vm1496, %v1685, %v1517
    %1702 = vmatpush.msra.mxu0 0.0
    %1703 = vmatpush.msra.mxu0 0.0
    %1704 = vmatpush.msra.mxu0 0.0
    %1705 = vmatpush.msra.mxu0 0.0
    %1706 = vmatpush.msra.mxu0 0.0
    %1707 = vmatpush.msra.mxu0 0.0
    %1708 = vmatpush.msra.mxu0 0.0
    %1709 = vmatpush.msra.mxu0 0.0
    %1710 = vmatpush.msra.mxu0 0.0
    %1711 = vmatpush.msra.mxu0 0.0
    %1712 = vmatpush.msra.mxu0 0.0
    %1713 = vmatpush.msra.mxu0 0.0
    %1714 = vmatpush.msra.mxu0 0.0
    %1715 = vmatpush.msra.mxu0 0.0
    %1716 = vmatpush.msra.mxu0 %v460
    %1717 = vmatpush.msra.mxu0 %v459
    %1718 = vmatmul.f32.gmra.mxu0 %v1144
    %v1719 = vpop.f32.mrf.mxu0
    %v1720 = vadd.f32 %v539, %v1719
    %1721 = vdwg.mxu0
    %1723 = vrot.lane.b32.xlu0 %v1700, 96
    %v1724 = vpop.permute.xlu0 %1723
    %v1725 = vsel %vm568, %v1724, 0
    %1727 = vmatpush.msra.mxu0 0.0
    %1728 = vmatpush.msra.mxu0 0.0
    %1729 = vmatpush.msra.mxu0 0.0
    %1730 = vmatpush.msra.mxu0 0.0
    %1731 = vmatpush.msra.mxu0 0.0
    %1732 = vmatpush.msra.mxu0 0.0
    %1733 = vmatpush.msra.mxu0 0.0
    %1734 = vmatpush.msra.mxu0 0.0
    %1735 = vmatpush.msra.mxu0 0.0
    %1736 = vmatpush.msra.mxu0 0.0
    %1737 = vmatpush.msra.mxu0 0.0
    %1738 = vmatpush.msra.mxu0 0.0
    %1739 = vmatpush.msra.mxu0 %v464
    %1740 = vmatpush.msra.mxu0 %v463
    %1741 = vmatpush.msra.mxu0 %v462
    %1742 = vmatpush.msra.mxu0 %v461
    %1743 = vmatmul.f32.gmra.mxu0 %v1725
    %v1744 = vpop.f32.mrf.mxu0
    %v1745 = vadd.f32 %v566, %v1744
    %1746 = vdwg.mxu0
    %v1747 = vadd.f32 %v1720, %v1745
    %v1748 = vxor.u32 %v1747, 2147483648
    %v1749 = vmul.f32 %v1748, 1.442695
    %v1750 = vpow.pop %v1749
    %v1751 = vadd.f32 %v1750, 1.0
    %v1752 = vrcp.pop %v1751
    %v1753 = vmul.f32 %v1751, %v1752
    %v1754 = vsub.f32 1.0, %v1753
    %v1755 = vmul.f32 %v1752, %v1754
    %v1756 = vadd.f32 %v1752, %v1755
    %vm1757 = vweird.f32 %v1751
    %vm1758 = vweird.f32 %v1752
    %vm1759 = vmor %vm1757, %vm1758
    %v1760 = vsel %vm1759, %v1752, %v1756
    %v1761 = vand.u32 2147483647, %v1751
    %vm1762 = vcmp.eq.f32.partialorder %v1761, 8.507059e+37
    %v1763 = vand.u32 %v1751, 2147483648
    %v1764 = vor.u32 1.1754944e-38, %v1763
    %v1765 = vsel %vm1762, %v1764, %v1760
    %v1766 = vmul.f32 1.0, %v1765
    %1768 = vrot.lane.b32.xlu0 %v1745, 64
    %v1769 = vpop.permute.xlu0 %1768
    %v1771 = vmul.f32 %v1766, %v1769
    %1773 = vrot.lane.b32.xlu0 %v1771, 64
    %v1774 = vpop.permute.xlu0 %1773
    %v1776 = vadd.f32 %v1720, %v1774
    %v1777 = vtanh.pop %v1776
    %v1778 = vsub.f32 1.0, %v1766
    %1780 = vrot.lane.b32.xlu0 %v1777, 96
    %v1781 = vpop.permute.xlu0 %1780
    %v1783 = vmul.f32 %v1778, %v1781
    %v1784 = vmul.f32 %v1766, %v1700
    %v1785 = vadd.f32 %v1783, %v1784
    %1786 = vmatpush.msra.mxu0 0.0
    %1787 = vmatpush.msra.mxu0 0.0
    %1788 = vmatpush.msra.mxu0 0.0
    %1789 = vmatpush.msra.mxu0 0.0
    %1790 = vmatpush.msra.mxu0 0.0
    %1791 = vmatpush.msra.mxu0 0.0
    %1792 = vmatpush.msra.mxu0 0.0
    %1793 = vmatpush.msra.mxu0 0.0
    %1794 = vmatpush.msra.mxu0 0.0
    %1795 = vmatpush.msra.mxu0 0.0
    %1796 = vmatpush.msra.mxu0 0.0
    %1797 = vmatpush.msra.mxu0 0.0
    %1798 = vmatpush.msra.mxu0 0.0
    %1799 = vmatpush.msra.mxu0 0.0
    %1800 = vmatpush.msra.mxu0 %v468
    %1801 = vmatpush.msra.mxu0 %v467
    %1802 = vmatmul.f32.gmra.mxu0 %v1057
    %v1803 = vpop.f32.mrf.mxu0
    %v1804 = vadd.f32 %v632, %v1803
    %1805 = vdwg.mxu0
    %1807 = vrot.lane.b32.xlu0 %v1701, 96
    %v1808 = vpop.permute.xlu0 %1807
    %v1809 = vsel %vm568, %v1808, 0
    %1811 = vmatpush.msra.mxu0 0.0
    %1812 = vmatpush.msra.mxu0 0.0
    %1813 = vmatpush.msra.mxu0 0.0
    %1814 = vmatpush.msra.mxu0 0.0
    %1815 = vmatpush.msra.mxu0 0.0
    %1816 = vmatpush.msra.mxu0 0.0
    %1817 = vmatpush.msra.mxu0 0.0
    %1818 = vmatpush.msra.mxu0 0.0
    %1819 = vmatpush.msra.mxu0 0.0
    %1820 = vmatpush.msra.mxu0 0.0
    %1821 = vmatpush.msra.mxu0 0.0
    %1822 = vmatpush.msra.mxu0 0.0
    %1823 = vmatpush.msra.mxu0 %v472
    %1824 = vmatpush.msra.mxu0 %v471
    %1825 = vmatpush.msra.mxu0 %v470
    %1826 = vmatpush.msra.mxu0 %v469
    %1827 = vmatmul.f32.gmra.mxu0 %v1809
    %v1828 = vpop.f32.mrf.mxu0
    %v1829 = vadd.f32 %v658, %v1828
    %1830 = vdwg.mxu0
    %v1831 = vadd.f32 %v1804, %v1829
    %v1832 = vxor.u32 %v1831, 2147483648
    %v1833 = vmul.f32 %v1832, 1.442695
    %v1834 = vpow.pop %v1833
    %v1835 = vadd.f32 %v1834, 1.0
    %v1836 = vrcp.pop %v1835
    %v1837 = vmul.f32 %v1835, %v1836
    %v1838 = vsub.f32 1.0, %v1837
    %v1839 = vmul.f32 %v1836, %v1838
    %v1840 = vadd.f32 %v1836, %v1839
    %vm1841 = vweird.f32 %v1835
    %vm1842 = vweird.f32 %v1836
    %vm1843 = vmor %vm1841, %vm1842
    %v1844 = vsel %vm1843, %v1836, %v1840
    %v1845 = vand.u32 2147483647, %v1835
    %vm1846 = vcmp.eq.f32.partialorder %v1845, 8.507059e+37
    %v1847 = vand.u32 %v1835, 2147483648
    %v1848 = vor.u32 1.1754944e-38, %v1847
    %v1849 = vsel %vm1846, %v1848, %v1844
    %v1850 = vmul.f32 1.0, %v1849
    %1852 = vrot.lane.b32.xlu0 %v1829, 64
    %v1853 = vpop.permute.xlu0 %1852
    %v1855 = vmul.f32 %v1850, %v1853
    %1857 = vrot.lane.b32.xlu0 %v1855, 64
    %v1858 = vpop.permute.xlu0 %1857
    %v1860 = vadd.f32 %v1804, %v1858
    %v1861 = vtanh.pop %v1860
    %v1862 = vsub.f32 1.0, %v1850
    %1864 = vrot.lane.b32.xlu0 %v1861, 96
    %v1865 = vpop.permute.xlu0 %1864
    %v1867 = vmul.f32 %v1862, %v1865
    %v1868 = vmul.f32 %v1850, %v1701
    %v1869 = vadd.f32 %v1867, %v1868
    %v1870 = vsel %vm1248, %v1785, 0.0
    %1872 = vrot.lane.b32.xlu0 %v1870, 96
    %v1873 = vpop.permute.xlu0 %1872
    %s1875 = scalar_lea.vmem [#allocation2], 40
    %1876 = vst.msk [vmem:[%s1875] sm:$0xff] %vm568, %v1873
    %v1877 = vsel %vm1236, %v1869, 0.0
    %1879 = vrot.lane.b32.xlu0 %v1877, 96
    %v1880 = vpop.permute.xlu0 %1879
    %s1882 = scalar_lea.vmem [#allocation3], 16
    %1883 = vst.msk [vmem:[%s1882] sm:$0xff] %vm568, %v1880
    %v1884 = vsel %vm1248, %v1785, %v1700
    %v1885 = vsel %vm1236, %v1869, %v1701
    %1886 = vmatpush.msra.mxu0 0.0
    %1887 = vmatpush.msra.mxu0 0.0
    %1888 = vmatpush.msra.mxu0 0.0
    %1889 = vmatpush.msra.mxu0 0.0
    %1890 = vmatpush.msra.mxu0 0.0
    %1891 = vmatpush.msra.mxu0 0.0
    %1892 = vmatpush.msra.mxu0 0.0
    %1893 = vmatpush.msra.mxu0 0.0
    %1894 = vmatpush.msra.mxu0 0.0
    %1895 = vmatpush.msra.mxu0 0.0
    %1896 = vmatpush.msra.mxu0 0.0
    %1897 = vmatpush.msra.mxu0 0.0
    %1898 = vmatpush.msra.mxu0 0.0
    %1899 = vmatpush.msra.mxu0 0.0
    %1900 = vmatpush.msra.mxu0 %v460
    %1901 = vmatpush.msra.mxu0 %v459
    %1902 = vmatmul.f32.gmra.mxu0 %v887
    %v1903 = vpop.f32.mrf.mxu0
    %v1904 = vadd.f32 %v539, %v1903
    %1905 = vdwg.mxu0
    %1907 = vrot.lane.b32.xlu0 %v1884, 96
    %v1908 = vpop.permute.xlu0 %1907
    %v1909 = vsel %vm568, %v1908, 0
    %1911 = vmatpush.msra.mxu0 0.0
    %1912 = vmatpush.msra.mxu0 0.0
    %1913 = vmatpush.msra.mxu0 0.0
    %1914 = vmatpush.msra.mxu0 0.0
    %1915 = vmatpush.msra.mxu0 0.0
    %1916 = vmatpush.msra.mxu0 0.0
    %1917 = vmatpush.msra.mxu0 0.0
    %1918 = vmatpush.msra.mxu0 0.0
    %1919 = vmatpush.msra.mxu0 0.0
    %1920 = vmatpush.msra.mxu0 0.0
    %1921 = vmatpush.msra.mxu0 0.0
    %1922 = vmatpush.msra.mxu0 0.0
    %1923 = vmatpush.msra.mxu0 %v464
    %1924 = vmatpush.msra.mxu0 %v463
    %1925 = vmatpush.msra.mxu0 %v462
    %1926 = vmatpush.msra.mxu0 %v461
    %1927 = vmatmul.f32.gmra.mxu0 %v1909
    %v1928 = vpop.f32.mrf.mxu0
    %v1929 = vadd.f32 %v566, %v1928
    %1930 = vdwg.mxu0
    %v1931 = vadd.f32 %v1904, %v1929
    %v1932 = vxor.u32 %v1931, 2147483648
    %v1933 = vmul.f32 %v1932, 1.442695
    %v1934 = vpow.pop %v1933
    %v1935 = vadd.f32 %v1934, 1.0
    %v1936 = vrcp.pop %v1935
    %v1937 = vmul.f32 %v1935, %v1936
    %v1938 = vsub.f32 1.0, %v1937
    %v1939 = vmul.f32 %v1936, %v1938
    %v1940 = vadd.f32 %v1936, %v1939
    %vm1941 = vweird.f32 %v1935
    %vm1942 = vweird.f32 %v1936
    %vm1943 = vmor %vm1941, %vm1942
    %v1944 = vsel %vm1943, %v1936, %v1940
    %v1945 = vand.u32 2147483647, %v1935
    %vm1946 = vcmp.eq.f32.partialorder %v1945, 8.507059e+37
    %v1947 = vand.u32 %v1935, 2147483648
    %v1948 = vor.u32 1.1754944e-38, %v1947
    %v1949 = vsel %vm1946, %v1948, %v1944
    %v1950 = vmul.f32 1.0, %v1949
    %1952 = vrot.lane.b32.xlu0 %v1929, 64
    %v1953 = vpop.permute.xlu0 %1952
    %v1955 = vmul.f32 %v1950, %v1953
    %1957 = vrot.lane.b32.xlu0 %v1955, 64
    %v1958 = vpop.permute.xlu0 %1957
    %v1960 = vadd.f32 %v1904, %v1958
    %v1961 = vtanh.pop %v1960
    %v1962 = vsub.f32 1.0, %v1950
    %1964 = vrot.lane.b32.xlu0 %v1961, 96
    %v1965 = vpop.permute.xlu0 %1964
    %v1967 = vmul.f32 %v1962, %v1965
    %v1968 = vmul.f32 %v1950, %v1884
    %v1969 = vadd.f32 %v1967, %v1968
    %1970 = vmatpush.msra.mxu0 0.0
    %1971 = vmatpush.msra.mxu0 0.0
    %1972 = vmatpush.msra.mxu0 0.0
    %1973 = vmatpush.msra.mxu0 0.0
    %1974 = vmatpush.msra.mxu0 0.0
    %1975 = vmatpush.msra.mxu0 0.0
    %1976 = vmatpush.msra.mxu0 0.0
    %1977 = vmatpush.msra.mxu0 0.0
    %1978 = vmatpush.msra.mxu0 0.0
    %1979 = vmatpush.msra.mxu0 0.0
    %1980 = vmatpush.msra.mxu0 0.0
    %1981 = vmatpush.msra.mxu0 0.0
    %1982 = vmatpush.msra.mxu0 0.0
    %1983 = vmatpush.msra.mxu0 0.0
    %1984 = vmatpush.msra.mxu0 %v468
    %1985 = vmatpush.msra.mxu0 %v467
    %1986 = vmatmul.f32.gmra.mxu0 %v803
    %v1987 = vpop.f32.mrf.mxu0
    %v1988 = vadd.f32 %v632, %v1987
    %1989 = vdwg.mxu0
    %1991 = vrot.lane.b32.xlu0 %v1885, 96
    %v1992 = vpop.permute.xlu0 %1991
    %v1993 = vsel %vm568, %v1992, 0
    %1995 = vmatpush.msra.mxu0 0.0
    %1996 = vmatpush.msra.mxu0 0.0
    %1997 = vmatpush.msra.mxu0 0.0
    %1998 = vmatpush.msra.mxu0 0.0
    %1999 = vmatpush.msra.mxu0 0.0
    %2000 = vmatpush.msra.mxu0 0.0
    %2001 = vmatpush.msra.mxu0 0.0
    %2002 = vmatpush.msra.mxu0 0.0
    %2003 = vmatpush.msra.mxu0 0.0
    %2004 = vmatpush.msra.mxu0 0.0
    %2005 = vmatpush.msra.mxu0 0.0
    %2006 = vmatpush.msra.mxu0 0.0
    %2007 = vmatpush.msra.mxu0 %v472
    %2008 = vmatpush.msra.mxu0 %v471
    %2009 = vmatpush.msra.mxu0 %v470
    %2010 = vmatpush.msra.mxu0 %v469
    %2011 = vmatmul.f32.gmra.mxu0 %v1993
    %v2012 = vpop.f32.mrf.mxu0
    %v2013 = vadd.f32 %v658, %v2012
    %2014 = vdwg.mxu0
    %v2015 = vadd.f32 %v1988, %v2013
    %v2016 = vxor.u32 %v2015, 2147483648
    %v2017 = vmul.f32 %v2016, 1.442695
    %v2018 = vpow.pop %v2017
    %v2019 = vadd.f32 %v2018, 1.0
    %v2020 = vrcp.pop %v2019
    %v2021 = vmul.f32 %v2019, %v2020
    %v2022 = vsub.f32 1.0, %v2021
    %v2023 = vmul.f32 %v2020, %v2022
    %v2024 = vadd.f32 %v2020, %v2023
    %vm2025 = vweird.f32 %v2019
    %vm2026 = vweird.f32 %v2020
    %vm2027 = vmor %vm2025, %vm2026
    %v2028 = vsel %vm2027, %v2020, %v2024
    %v2029 = vand.u32 2147483647, %v2019
    %vm2030 = vcmp.eq.f32.partialorder %v2029, 8.507059e+37
    %v2031 = vand.u32 %v2019, 2147483648
    %v2032 = vor.u32 1.1754944e-38, %v2031
    %v2033 = vsel %vm2030, %v2032, %v2028
    %v2034 = vmul.f32 1.0, %v2033
    %2036 = vrot.lane.b32.xlu0 %v2013, 64
    %v2037 = vpop.permute.xlu0 %2036
    %v2039 = vmul.f32 %v2034, %v2037
    %2041 = vrot.lane.b32.xlu0 %v2039, 64
    %v2042 = vpop.permute.xlu0 %2041
    %v2044 = vadd.f32 %v1988, %v2042
    %v2045 = vtanh.pop %v2044
    %v2046 = vsub.f32 1.0, %v2034
    %2048 = vrot.lane.b32.xlu0 %v2045, 96
    %v2049 = vpop.permute.xlu0 %2048
    %v2051 = vmul.f32 %v2046, %v2049
    %v2052 = vmul.f32 %v2034, %v1885
    %v2053 = vadd.f32 %v2051, %v2052
    %v2054 = vsel %vm988, %v1969, 0.0
    %2056 = vrot.lane.b32.xlu0 %v2054, 96
    %v2057 = vpop.permute.xlu0 %2056
    %s2059 = scalar_lea.vmem [#allocation2], 48
    %2060 = vst.msk [vmem:[%s2059] sm:$0xff] %vm568, %v2057
    %v2061 = vsel %vm976, %v2053, 0.0
    %2063 = vrot.lane.b32.xlu0 %v2061, 96
    %v2064 = vpop.permute.xlu0 %2063
    %s2066 = scalar_lea.vmem [#allocation3], 8
    %2067 = vst.msk [vmem:[%s2066] sm:$0xff] %vm568, %v2064
    %v2068 = vsel %vm988, %v1969, %v1884
    %v2069 = vsel %vm976, %v2053, %v1885
    %2070 = vmatpush.msra.mxu0 0.0
    %2071 = vmatpush.msra.mxu0 0.0
    %2072 = vmatpush.msra.mxu0 0.0
    %2073 = vmatpush.msra.mxu0 0.0
    %2074 = vmatpush.msra.mxu0 0.0
    %2075 = vmatpush.msra.mxu0 0.0
    %2076 = vmatpush.msra.mxu0 0.0
    %2077 = vmatpush.msra.mxu0 0.0
    %2078 = vmatpush.msra.mxu0 0.0
    %2079 = vmatpush.msra.mxu0 0.0
    %2080 = vmatpush.msra.mxu0 0.0
    %2081 = vmatpush.msra.mxu0 0.0
    %2082 = vmatpush.msra.mxu0 0.0
    %2083 = vmatpush.msra.mxu0 0.0
    %2084 = vmatpush.msra.mxu0 %v460
    %2085 = vmatpush.msra.mxu0 %v459
    %2086 = vmatmul.f32.gmra.mxu0 %v635
    %v2087 = vpop.f32.mrf.mxu0
    %v2088 = vadd.f32 %v539, %v2087
    %2089 = vdwg.mxu0
    %2091 = vrot.lane.b32.xlu0 %v2068, 96
    %v2092 = vpop.permute.xlu0 %2091
    %v2093 = vsel %vm568, %v2092, 0
    %2095 = vmatpush.msra.mxu0 0.0
    %2096 = vmatpush.msra.mxu0 0.0
    %2097 = vmatpush.msra.mxu0 0.0
    %2098 = vmatpush.msra.mxu0 0.0
    %2099 = vmatpush.msra.mxu0 0.0
    %2100 = vmatpush.msra.mxu0 0.0
    %2101 = vmatpush.msra.mxu0 0.0
    %2102 = vmatpush.msra.mxu0 0.0
    %2103 = vmatpush.msra.mxu0 0.0
    %2104 = vmatpush.msra.mxu0 0.0
    %2105 = vmatpush.msra.mxu0 0.0
    %2106 = vmatpush.msra.mxu0 0.0
    %2107 = vmatpush.msra.mxu0 %v464
    %2108 = vmatpush.msra.mxu0 %v463
    %2109 = vmatpush.msra.mxu0 %v462
    %2110 = vmatpush.msra.mxu0 %v461
    %2111 = vmatmul.f32.gmra.mxu0 %v2093
    %v2112 = vpop.f32.mrf.mxu0
    %v2113 = vadd.f32 %v566, %v2112
    %2114 = vdwg.mxu0
    %v2115 = vadd.f32 %v2088, %v2113
    %v2116 = vxor.u32 %v2115, 2147483648
    %v2117 = vmul.f32 %v2116, 1.442695
    %v2118 = vpow.pop %v2117
    %v2119 = vadd.f32 %v2118, 1.0
    %v2120 = vrcp.pop %v2119
    %v2121 = vmul.f32 %v2119, %v2120
    %v2122 = vsub.f32 1.0, %v2121
    %v2123 = vmul.f32 %v2120, %v2122
    %v2124 = vadd.f32 %v2120, %v2123
    %vm2125 = vweird.f32 %v2119
    %vm2126 = vweird.f32 %v2120
    %vm2127 = vmor %vm2125, %vm2126
    %v2128 = vsel %vm2127, %v2120, %v2124
    %v2129 = vand.u32 2147483647, %v2119
    %vm2130 = vcmp.eq.f32.partialorder %v2129, 8.507059e+37
    %v2131 = vand.u32 %v2119, 2147483648
    %v2132 = vor.u32 1.1754944e-38, %v2131
    %v2133 = vsel %vm2130, %v2132, %v2128
    %v2134 = vmul.f32 1.0, %v2133
    %2136 = vrot.lane.b32.xlu0 %v2113, 64
    %v2137 = vpop.permute.xlu0 %2136
    %v2139 = vmul.f32 %v2134, %v2137
    %2141 = vrot.lane.b32.xlu0 %v2139, 64
    %v2142 = vpop.permute.xlu0 %2141
    %v2144 = vadd.f32 %v2088, %v2142
    %v2145 = vtanh.pop %v2144
    %v2146 = vsub.f32 1.0, %v2134
    %2148 = vrot.lane.b32.xlu0 %v2145, 96
    %v2149 = vpop.permute.xlu0 %2148
    %v2151 = vmul.f32 %v2146, %v2149
    %v2152 = vmul.f32 %v2134, %v2068
    %v2153 = vadd.f32 %v2151, %v2152
    %2154 = vmatpush.msra.mxu0 0.0
    %2155 = vmatpush.msra.mxu0 0.0
    %2156 = vmatpush.msra.mxu0 0.0
    %2157 = vmatpush.msra.mxu0 0.0
    %2158 = vmatpush.msra.mxu0 0.0
    %2159 = vmatpush.msra.mxu0 0.0
    %2160 = vmatpush.msra.mxu0 0.0
    %2161 = vmatpush.msra.mxu0 0.0
    %2162 = vmatpush.msra.mxu0 0.0
    %2163 = vmatpush.msra.mxu0 0.0
    %2164 = vmatpush.msra.mxu0 0.0
    %2165 = vmatpush.msra.mxu0 0.0
    %2166 = vmatpush.msra.mxu0 0.0
    %2167 = vmatpush.msra.mxu0 0.0
    %2168 = vmatpush.msra.mxu0 %v468
    %2169 = vmatpush.msra.mxu0 %v467
    %2170 = vmatmul.f32.gmra.mxu0 %v543
    %v2171 = vpop.f32.mrf.mxu0
    %v2172 = vadd.f32 %v632, %v2171
    %2173 = vdwg.mxu0
    %2175 = vrot.lane.b32.xlu0 %v2069, 96
    %v2176 = vpop.permute.xlu0 %2175
    %v2177 = vsel %vm568, %v2176, 0
    %2179 = vmatpush.msra.mxu0 0.0
    %2180 = vmatpush.msra.mxu0 0.0
    %2181 = vmatpush.msra.mxu0 0.0
    %2182 = vmatpush.msra.mxu0 0.0
    %2183 = vmatpush.msra.mxu0 0.0
    %2184 = vmatpush.msra.mxu0 0.0
    %2185 = vmatpush.msra.mxu0 0.0
    %2186 = vmatpush.msra.mxu0 0.0
    %2187 = vmatpush.msra.mxu0 0.0
    %2188 = vmatpush.msra.mxu0 0.0
    %2189 = vmatpush.msra.mxu0 0.0
    %2190 = vmatpush.msra.mxu0 0.0
    %2191 = vmatpush.msra.mxu0 %v472
    %2192 = vmatpush.msra.mxu0 %v471
    %2193 = vmatpush.msra.mxu0 %v470
    %2194 = vmatpush.msra.mxu0 %v469
    %2195 = vmatmul.f32.gmra.mxu0 %v2177
    %v2196 = vpop.f32.mrf.mxu0
    %v2197 = vadd.f32 %v658, %v2196
    %2198 = vdwg.mxu0
    %v2199 = vadd.f32 %v2172, %v2197
    %v2200 = vxor.u32 %v2199, 2147483648
    %v2201 = vmul.f32 %v2200, 1.442695
    %v2202 = vpow.pop %v2201
    %v2203 = vadd.f32 %v2202, 1.0
    %v2204 = vrcp.pop %v2203
    %v2205 = vmul.f32 %v2203, %v2204
    %v2206 = vsub.f32 1.0, %v2205
    %v2207 = vmul.f32 %v2204, %v2206
    %v2208 = vadd.f32 %v2204, %v2207
    %vm2209 = vweird.f32 %v2203
    %vm2210 = vweird.f32 %v2204
    %vm2211 = vmor %vm2209, %vm2210
    %v2212 = vsel %vm2211, %v2204, %v2208
    %v2213 = vand.u32 2147483647, %v2203
    %vm2214 = vcmp.eq.f32.partialorder %v2213, 8.507059e+37
    %v2215 = vand.u32 %v2203, 2147483648
    %v2216 = vor.u32 1.1754944e-38, %v2215
    %v2217 = vsel %vm2214, %v2216, %v2212
    %v2218 = vmul.f32 1.0, %v2217
    %2220 = vrot.lane.b32.xlu0 %v2197, 64
    %v2221 = vpop.permute.xlu0 %2220
    %v2223 = vmul.f32 %v2218, %v2221
    %2225 = vrot.lane.b32.xlu0 %v2223, 64
    %v2226 = vpop.permute.xlu0 %2225
    %v2228 = vadd.f32 %v2172, %v2226
    %v2229 = vtanh.pop %v2228
    %v2230 = vsub.f32 1.0, %v2218
    %2232 = vrot.lane.b32.xlu0 %v2229, 96
    %v2233 = vpop.permute.xlu0 %2232
    %v2235 = vmul.f32 %v2230, %v2233
    %v2236 = vmul.f32 %v2218, %v2069
    %v2237 = vadd.f32 %v2235, %v2236
    %v2238 = vsel %vm736, %v2153, 0.0
    %2240 = vrot.lane.b32.xlu0 %v2238, 96
    %v2241 = vpop.permute.xlu0 %2240
    %s2243 = scalar_lea.vmem [#allocation2], 56
    %2244 = vst.msk [vmem:[%s2243] sm:$0xff] %vm568, %v2241
    %v2245 = vsel %vm725, %v2237, 0.0
    %2247 = vrot.lane.b32.xlu0 %v2245, 96
    %v2248 = vpop.permute.xlu0 %2247
    %2250 = vst.msk [vmem:[#allocation3] sm:$0xff] %vm568, %v2248
    %v2251 = vsel %vm736, %v2153, %v2068
    %v2252 = vsel %vm725, %v2237, %v2069
    %v2253 = vld [vmem:[%s31] sm:$0xff]
    %v2254 = vld [vmem:[%s31 + $0x8] sm:$0xff]
    %v2255 = vld [vmem:[%s31 + $0x10] sm:$0xff]
    %v2256 = vld [vmem:[%s31 + $0x18] sm:$0xff]
    %v2257 = vld [vmem:[%s33] sm:$0xff]
    %v2258 = vld [vmem:[%s33 + $0x8] sm:$0xff]
    %v2259 = vld [vmem:[%s33 + $0x10] sm:$0xff]
    %v2260 = vld [vmem:[%s33 + $0x18] sm:$0xff]
    %2262 = vrot.lane.b32.xlu0 %v2252, 96
    %v2263 = vpop.permute.xlu0 %2262
    %v2264 = vsel %vm568, %v2263, 0
    %2266 = vmatpush.msra.mxu0 0.0
    %2267 = vmatpush.msra.mxu0 0.0
    %2268 = vmatpush.msra.mxu0 0.0
    %2269 = vmatpush.msra.mxu0 0.0
    %2270 = vmatpush.msra.mxu0 0.0
    %2271 = vmatpush.msra.mxu0 0.0
    %2272 = vmatpush.msra.mxu0 0.0
    %2273 = vmatpush.msra.mxu0 0.0
    %2274 = vmatpush.msra.mxu0 0.0
    %2275 = vmatpush.msra.mxu0 0.0
    %2276 = vmatpush.msra.mxu0 0.0
    %2277 = vmatpush.msra.mxu0 0.0
    %2278 = vmatpush.msra.mxu0 %v2260
    %2279 = vmatpush.msra.mxu0 %v2259
    %2280 = vmatpush.msra.mxu0 %v2258
    %2281 = vmatpush.msra.mxu0 %v2257
    %2282 = vmatmul.f32.gmra.mxu0 %v2264
    %v2283 = vpop.f32.mrf.mxu0
    %v2284 = vadd.f32 0.0, %v2283
    %2285 = vdwg.mxu0
    %2287 = vrot.lane.b32.xlu0 %v2251, 96
    %v2288 = vpop.permute.xlu0 %2287
    %v2289 = vsel %vm568, %v2288, 0
    %2291 = vmatpush.msra.mxu0 0.0
    %2292 = vmatpush.msra.mxu0 0.0
    %2293 = vmatpush.msra.mxu0 0.0
    %2294 = vmatpush.msra.mxu0 0.0
    %2295 = vmatpush.msra.mxu0 0.0
    %2296 = vmatpush.msra.mxu0 0.0
    %2297 = vmatpush.msra.mxu0 0.0
    %2298 = vmatpush.msra.mxu0 0.0
    %2299 = vmatpush.msra.mxu0 0.0
    %2300 = vmatpush.msra.mxu0 0.0
    %2301 = vmatpush.msra.mxu0 0.0
    %2302 = vmatpush.msra.mxu0 0.0
    %2303 = vmatpush.msra.mxu0 %v2256
    %2304 = vmatpush.msra.mxu0 %v2255
    %2305 = vmatpush.msra.mxu0 %v2254
    %2306 = vmatpush.msra.mxu0 %v2253
    %2307 = vmatmul.f32.gmra.mxu0 %v2289
    %v2308 = vpop.f32.mrf.mxu0
    %v2309 = vadd.f32 %v2284, %v2308
    %2310 = vdwg.mxu0
    %v2311 = vld [vmem:[#allocation17] sm:$0x1]
    %v2313 = vperm.slane %v2311, 0
    %v2315 = vadd.f32 %v2309, %v2313
    %v2316 = vtanh.pop %v2315
    %v2317 = vld [vmem:[#allocation2] sm:$0xff]
    %v2318 = vld [vmem:[#allocation2 + $0x8] sm:$0xff]
    %v2319 = vld [vmem:[#allocation2 + $0x10] sm:$0xff]
    %v2320 = vld [vmem:[#allocation2 + $0x18] sm:$0xff]
    %v2321 = vld [vmem:[#allocation2 + $0x20] sm:$0xff]
    %v2322 = vld [vmem:[#allocation2 + $0x28] sm:$0xff]
    %v2323 = vld [vmem:[#allocation2 + $0x30] sm:$0xff]
    %v2324 = vld [vmem:[#allocation2 + $0x38] sm:$0xff]
    %v2325 = vld [vmem:[#allocation3] sm:$0xff]
    %v2326 = vld [vmem:[#allocation3 + $0x8] sm:$0xff]
    %v2327 = vld [vmem:[#allocation3 + $0x10] sm:$0xff]
    %v2328 = vld [vmem:[#allocation3 + $0x18] sm:$0xff]
    %v2329 = vld [vmem:[#allocation3 + $0x20] sm:$0xff]
    %v2330 = vld [vmem:[#allocation3 + $0x28] sm:$0xff]
    %v2331 = vld [vmem:[#allocation3 + $0x30] sm:$0xff]
    %v2332 = vld [vmem:[#allocation3 + $0x38] sm:$0xff]
    %v2333 = vld [vmem:[%s3] sm:$0xff]
    %vm2334 = vcmp.ne.s32.totalorder %v2333, 0
    %v2335 = vld [vmem:[#allocation18] sm:$0xff]
    %v2336 = vld [vmem:[#allocation18 + $0x8] sm:$0xff]
    %v2337 = vld [vmem:[#allocation18 + $0x10] sm:$0xff]
    %v2338 = vld [vmem:[#allocation18 + $0x18] sm:$0xff]
    %v2339 = vld [vmem:[#allocation20] sm:$0xff]
    %v2340 = vld [vmem:[#allocation20 + $0x8] sm:$0xff]
    %v2341 = vld [vmem:[#allocation20 + $0x10] sm:$0xff]
    %v2342 = vld [vmem:[#allocation20 + $0x18] sm:$0xff]
    %v2344 = vsel %vm568, %v2325, 0
    %v2347 = vsel %vm568, %v2326, 0
    %v2350 = vsel %vm568, %v2327, 0
    %v2353 = vsel %vm568, %v2328, 0
    %v2356 = vsel %vm568, %v2329, 0
    %v2359 = vsel %vm568, %v2330, 0
    %v2362 = vsel %vm568, %v2331, 0
    %v2365 = vsel %vm568, %v2332, 0
    %2367 = vmatpush.msra.mxu0 0.0
    %2368 = vmatpush.msra.mxu0 0.0
    %2369 = vmatpush.msra.mxu0 0.0
    %2370 = vmatpush.msra.mxu0 0.0
    %2371 = vmatpush.msra.mxu0 0.0
    %2372 = vmatpush.msra.mxu0 0.0
    %2373 = vmatpush.msra.mxu0 0.0
    %2374 = vmatpush.msra.mxu0 0.0
    %2375 = vmatpush.msra.mxu0 0.0
    %2376 = vmatpush.msra.mxu0 0.0
    %2377 = vmatpush.msra.mxu0 0.0
    %2378 = vmatpush.msra.mxu0 0.0
    %2379 = vmatpush.msra.mxu0 %v2342
    %2380 = vmatpush.msra.mxu0 %v2341
    %2381 = vmatpush.msra.mxu0 %v2340
    %2382 = vmatpush.msra.mxu0 %v2339
    %2383 = vmatmul.f32.gmra.mxu0 %v2344
    %v2384 = vpop.f32.mrf.mxu0
    %v2385 = vadd.f32 0.0, %v2384
    %2386 = vmatmul.f32.gmra.mxu0 %v2347
    %v2387 = vpop.f32.mrf.mxu0
    %v2388 = vadd.f32 0.0, %v2387
    %2389 = vmatmul.f32.gmra.mxu0 %v2350
    %v2390 = vpop.f32.mrf.mxu0
    %v2391 = vadd.f32 0.0, %v2390
    %2392 = vmatmul.f32.gmra.mxu0 %v2353
    %v2393 = vpop.f32.mrf.mxu0
    %v2394 = vadd.f32 0.0, %v2393
    %2395 = vmatmul.f32.gmra.mxu0 %v2356
    %v2396 = vpop.f32.mrf.mxu0
    %v2397 = vadd.f32 0.0, %v2396
    %2398 = vmatmul.f32.gmra.mxu0 %v2359
    %v2399 = vpop.f32.mrf.mxu0
    %v2400 = vadd.f32 0.0, %v2399
    %2401 = vmatmul.f32.gmra.mxu0 %v2362
    %v2402 = vpop.f32.mrf.mxu0
    %v2403 = vadd.f32 0.0, %v2402
    %2404 = vmatmul.f32.gmra.mxu0 %v2365
    %v2405 = vpop.f32.mrf.mxu0
    %v2406 = vadd.f32 0.0, %v2405
    %2407 = vdwg.mxu0
    %v2409 = vsel %vm568, %v2317, 0
    %v2412 = vsel %vm568, %v2318, 0
    %v2415 = vsel %vm568, %v2319, 0
    %v2418 = vsel %vm568, %v2320, 0
    %v2421 = vsel %vm568, %v2321, 0
    %v2424 = vsel %vm568, %v2322, 0
    %v2427 = vsel %vm568, %v2323, 0
    %v2430 = vsel %vm568, %v2324, 0
    %2432 = vmatpush.msra.mxu0 0.0
    %2433 = vmatpush.msra.mxu0 0.0
    %2434 = vmatpush.msra.mxu0 0.0
    %2435 = vmatpush.msra.mxu0 0.0
    %2436 = vmatpush.msra.mxu0 0.0
    %2437 = vmatpush.msra.mxu0 0.0
    %2438 = vmatpush.msra.mxu0 0.0
    %2439 = vmatpush.msra.mxu0 0.0
    %2440 = vmatpush.msra.mxu0 0.0
    %2441 = vmatpush.msra.mxu0 0.0
    %2442 = vmatpush.msra.mxu0 0.0
    %2443 = vmatpush.msra.mxu0 0.0
    %2444 = vmatpush.msra.mxu0 %v2338
    %2445 = vmatpush.msra.mxu0 %v2337
    %2446 = vmatpush.msra.mxu0 %v2336
    %2447 = vmatpush.msra.mxu0 %v2335
    %2448 = vmatmul.f32.gmra.mxu0 %v2409
    %v2449 = vpop.f32.mrf.mxu0
    %v2450 = vadd.f32 %v2385, %v2449
    %2451 = vmatmul.f32.gmra.mxu0 %v2412
    %v2452 = vpop.f32.mrf.mxu0
    %v2453 = vadd.f32 %v2388, %v2452
    %2454 = vmatmul.f32.gmra.mxu0 %v2415
    %v2455 = vpop.f32.mrf.mxu0
    %v2456 = vadd.f32 %v2391, %v2455
    %2457 = vmatmul.f32.gmra.mxu0 %v2418
    %v2458 = vpop.f32.mrf.mxu0
    %v2459 = vadd.f32 %v2394, %v2458
    %2460 = vmatmul.f32.gmra.mxu0 %v2421
    %v2461 = vpop.f32.mrf.mxu0
    %v2462 = vadd.f32 %v2397, %v2461
    %2463 = vmatmul.f32.gmra.mxu0 %v2424
    %v2464 = vpop.f32.mrf.mxu0
    %v2465 = vadd.f32 %v2400, %v2464
    %2466 = vmatmul.f32.gmra.mxu0 %v2427
    %v2467 = vpop.f32.mrf.mxu0
    %v2468 = vadd.f32 %v2403, %v2467
    %2469 = vmatmul.f32.gmra.mxu0 %v2430
    %v2470 = vpop.f32.mrf.mxu0
    %v2471 = vadd.f32 %v2406, %v2470
    %2472 = vdwg.mxu0
    %v2473 = vld [vmem:[#allocation21] sm:$0x1]
    %v2475 = vperm.slane %v2473, 0
    %v2477 = vadd.f32 %v2450, %v2475
    %v2478 = vadd.f32 %v2453, %v2475
    %v2479 = vadd.f32 %v2456, %v2475
    %v2480 = vadd.f32 %v2459, %v2475
    %v2481 = vadd.f32 %v2462, %v2475
    %v2482 = vadd.f32 %v2465, %v2475
    %v2483 = vadd.f32 %v2468, %v2475
    %v2484 = vadd.f32 %v2471, %v2475
    %v2485 = vld [vmem:[#allocation23] sm:$0x1]
    %v2486 = vld [vmem:[%s37] sm:$0xff]
    %v2487 = vld [vmem:[%s37 + $0x8] sm:$0xff]
    %v2488 = vld [vmem:[%s37 + $0x10] sm:$0xff]
    %v2489 = vld [vmem:[%s37 + $0x18] sm:$0xff]
    %v2490 = vld [vmem:[%s13] sm:$0xff]
    %v2491 = vld [vmem:[%s13 + $0x8] sm:$0xff]
    %v2492 = vld [vmem:[%s13 + $0x10] sm:$0xff]
    %v2493 = vld [vmem:[#allocation24] sm:$0xff]
    %v2494 = vld [vmem:[#allocation24 + $0x8] sm:$0xff]
    %v2495 = vld [vmem:[#allocation26] sm:$0xff]
    %v2496 = vld [vmem:[#allocation26 + $0x8] sm:$0xff]
    %v2497 = vld [vmem:[#allocation26 + $0x10] sm:$0xff]
    %v2498 = vld [vmem:[#allocation26 + $0x18] sm:$0xff]
    %v2499 = vld [vmem:[#allocation27] sm:$0xff]
    %v2500 = vld [vmem:[#allocation27 + $0x8] sm:$0xff]
    %v2501 = vld [vmem:[#allocation27 + $0x10] sm:$0xff]
    %v2502 = vld [vmem:[#allocation27 + $0x18] sm:$0xff]
    %v2503 = vld [vmem:[#allocation29] sm:$0xff]
    %v2504 = vld [vmem:[#allocation29 + $0x8] sm:$0xff]
    %v2505 = vld [vmem:[#allocation29 + $0x10] sm:$0xff]
    %v2506 = vld [vmem:[#allocation29 + $0x18] sm:$0xff]
    %v2507 = vld [vmem:[#allocation30] sm:$0x1]
    %v2508 = vld [vmem:[%s57] sm:$0x1]
    %v2509 = vld [vmem:[#allocation32] sm:$0xff]
    %v2510 = vld [vmem:[#allocation32 + $0x8] sm:$0xff]
    %v2511 = vld [vmem:[#allocation32 + $0x10] sm:$0xff]
    %v2512 = vld [vmem:[#allocation32 + $0x18] sm:$0xff]
    %v2513 = vld [vmem:[#allocation33] sm:$0xff]
    %v2514 = vld [vmem:[#allocation33 + $0x8] sm:$0xff]
    %v2515 = vld [vmem:[#allocation33 + $0x10] sm:$0xff]
    %v2516 = vld [vmem:[#allocation33 + $0x18] sm:$0xff]
    %v2517 = vld [vmem:[#allocation35] sm:$0xff]
    %v2518 = vld [vmem:[#allocation35 + $0x8] sm:$0xff]
    %v2519 = vld [vmem:[#allocation35 + $0x10] sm:$0xff]
    %v2520 = vld [vmem:[#allocation35 + $0x18] sm:$0xff]
    %v2521 = vld [vmem:[#allocation36] sm:$0xff]
    %v2522 = vld [vmem:[#allocation36 + $0x8] sm:$0xff]
    %v2523 = vld [vmem:[%s67] sm:$0x1]
    %vm2524 = vcmp.lt.s32.totalorder %v458, 24
    %2525 = vset.pattern.permute.xlu0 0
    %2526 = vperm.xlu0 %2525, %v452
    %v2527 = vpop.permute.xlu0 %2526
    %vm2528 = vcmp.eq.s32.totalorder %v2527, %v458
    %v2529 = vsel %vm2528, 1, 0
    %v2530 = vcvt.s32.f32 %v2529
    %2531 = vst [vmem:[#allocation38] sm:$0xff] 0.0
    %vm2532 = vcmask 195584
    %v2534 = vsel %vm2532, %v2530, 0
    %2536 = vmatpush.msra.mxu0 0.0
    %2537 = vmatpush.msra.mxu0 0.0
    %2538 = vmatpush.msra.mxu0 0.0
    %2539 = vmatpush.msra.mxu0 0.0
    %2540 = vmatpush.msra.mxu0 0.0
    %2541 = vmatpush.msra.mxu0 0.0
    %2542 = vmatpush.msra.mxu0 0.0
    %2543 = vmatpush.msra.mxu0 0.0
    %2544 = vmatpush.msra.mxu0 0.0
    %2545 = vmatpush.msra.mxu0 0.0
    %2546 = vmatpush.msra.mxu0 0.0
    %2547 = vmatpush.msra.mxu0 0.0
    %2548 = vmatpush.msra.mxu0 0.0
    %2549 = vmatpush.msra.mxu0 %v2492
    %2550 = vmatpush.msra.mxu0 %v2491
    %2551 = vmatpush.msra.mxu0 %v2490
    %2552 = vmatmul.f32.gmra.mxu0 %v2534
    %v2553 = vpop.f32.mrf.mxu0
    %v2554 = vadd.f32 0.0, %v2553
    %2555 = vdwg.mxu0
    %v2557 = vsel %vm568, %v2316, 0
    %2559 = vmatpush.msra.mxu0 0.0
    %2560 = vmatpush.msra.mxu0 0.0
    %2561 = vmatpush.msra.mxu0 0.0
    %2562 = vmatpush.msra.mxu0 0.0
    %2563 = vmatpush.msra.mxu0 0.0
    %2564 = vmatpush.msra.mxu0 0.0
    %2565 = vmatpush.msra.mxu0 0.0
    %2566 = vmatpush.msra.mxu0 0.0
    %2567 = vmatpush.msra.mxu0 0.0
    %2568 = vmatpush.msra.mxu0 0.0
    %2569 = vmatpush.msra.mxu0 0.0
    %2570 = vmatpush.msra.mxu0 0.0
    %2571 = vmatpush.msra.mxu0 %v2489
    %2572 = vmatpush.msra.mxu0 %v2488
    %2573 = vmatpush.msra.mxu0 %v2487
    %2574 = vmatpush.msra.mxu0 %v2486
    %2575 = vmatmul.f32.gmra.mxu0 %v2557
    %v2576 = vpop.f32.mrf.mxu0
    %v2577 = vadd.f32 0.0, %v2576
    %2578 = vdwg.mxu0
    %v2579 = vadd.f32 %v2577, %v2477
    %v2580 = vadd.f32 %v2577, %v2478
    %v2581 = vadd.f32 %v2577, %v2479
    %v2582 = vadd.f32 %v2577, %v2480
    %v2583 = vadd.f32 %v2577, %v2481
    %v2584 = vadd.f32 %v2577, %v2482
    %v2585 = vadd.f32 %v2577, %v2483
    %v2586 = vadd.f32 %v2577, %v2484
    %v2587 = vtanh.pop %v2579
    %v2588 = vtanh.pop %v2580
    %v2589 = vtanh.pop %v2581
    %v2590 = vtanh.pop %v2582
    %v2591 = vtanh.pop %v2583
    %v2592 = vtanh.pop %v2584
    %v2593 = vtanh.pop %v2585
    %v2594 = vtanh.pop %v2586
    %v2596 = vperm.slane %v2485, 0
    %v2598 = vmul.f32 %v2587, %v2596
    %v2599 = vmul.f32 %v2588, %v2596
    %v2600 = vmul.f32 %v2589, %v2596
    %v2601 = vmul.f32 %v2590, %v2596
    %v2602 = vmul.f32 %v2591, %v2596
    %v2603 = vmul.f32 %v2592, %v2596
    %v2604 = vmul.f32 %v2593, %v2596
    %v2605 = vmul.f32 %v2594, %v2596
    %v2606 = vsel %vm568, %v2598, 0.0
    %2607 = vadd.xlane.f32.xlu0 %v2606
    %v2608 = vpop.xlane.xlu0 %2607
    %v2609 = vsel %vm568, %v2599, 0.0
    %2610 = vadd.xlane.f32.xlu0 %v2609
    %v2611 = vpop.xlane.xlu0 %2610
    %v2612 = vsel %vm568, %v2600, 0.0
    %2613 = vadd.xlane.f32.xlu0 %v2612
    %v2614 = vpop.xlane.xlu0 %2613
    %v2615 = vsel %vm568, %v2601, 0.0
    %2616 = vadd.xlane.f32.xlu0 %v2615
    %v2617 = vpop.xlane.xlu0 %2616
    %v2618 = vsel %vm568, %v2602, 0.0
    %2619 = vadd.xlane.f32.xlu0 %v2618
    %v2620 = vpop.xlane.xlu0 %2619
    %v2621 = vsel %vm568, %v2603, 0.0
    %2622 = vadd.xlane.f32.xlu0 %v2621
    %v2623 = vpop.xlane.xlu0 %2622
    %v2624 = vsel %vm568, %v2604, 0.0
    %2625 = vadd.xlane.f32.xlu0 %v2624
    %v2626 = vpop.xlane.xlu0 %2625
    %v2627 = vsel %vm568, %v2605, 0.0
    %2628 = vadd.xlane.f32.xlu0 %v2627
    %v2629 = vpop.xlane.xlu0 %2628
    %v2638 = vperm.slane %v2608, %v458
    %v2639 = vperm.slane %v2611, %v458
    %v2640 = vperm.slane %v2614, %v458
    %v2641 = vperm.slane %v2617, %v458
    %v2642 = vperm.slane %v2620, %v458
    %v2643 = vperm.slane %v2623, %v458
    %v2644 = vperm.slane %v2626, %v458
    %v2645 = vperm.slane %v2629, %v458
    %vm2646 = vcmask 1041409
    %v2647 = vsel %vm2646, %v2639, %v2638
    %vm2648 = vcmask 1042434
    %v2649 = vsel %vm2648, %v2640, %v2647
    %vm2650 = vcmask 1043459
    %v2651 = vsel %vm2650, %v2641, %v2649
    %vm2652 = vcmask 1044484
    %v2653 = vsel %vm2652, %v2642, %v2651
    %vm2654 = vcmask 1045509
    %v2655 = vsel %vm2654, %v2643, %v2653
    %vm2656 = vcmask 1046534
    %v2657 = vsel %vm2656, %v2644, %v2655
    %vm2658 = vcmask 1047559
    %v2659 = vsel %vm2658, %v2645, %v2657
    %v2661 = vsel %vm2334, %v2659, -1e+10
    %vm2662 = vcmask 64512
    %v2663 = vsel %vm2662, %v2661, -inf
    %v2664 = vrot.slane %v2663, 4
    %v2665 = vmax.f32 %v2663, %v2664
    %v2666 = vrot.slane %v2665, 2
    %v2667 = vmax.f32 %v2665, %v2666
    %v2668 = vrot.slane %v2667, 1
    %v2669 = vmax.f32 %v2667, %v2668
    %v2670 = vsub.f32 %v2661, %v2669
    %v2671 = vmul.f32 %v2670, 1.442695
    %v2672 = vpow.pop %v2671
    %v2673 = vsel %vm2662, %v2672, 0.0
    %v2674 = vrot.slane %v2673, 4
    %v2675 = vadd.f32 %v2673, %v2674
    %v2676 = vrot.slane %v2675, 2
    %v2677 = vadd.f32 %v2675, %v2676
    %v2678 = vrot.slane %v2677, 1
    %v2679 = vadd.f32 %v2677, %v2678
    %v2680 = vrcp.pop %v2679
    %v2681 = vmul.f32 %v2672, %v2680
    %v2682 = vperm.slane %v2681, 0
    %v2683 = vlaneseq
    %v2684 = vshrl.u32 %v2683, 7
    %2686 = vset.pattern.permute.xlu0 %v2684
    %2687 = vperm.xlu0 %2686, %v2682
    %v2688 = vpop.permute.xlu0 %2687
    %v2689 = vperm.slane %v2681, 1
    %v2690 = vlaneseq
    %v2691 = vshrl.u32 %v2690, 7
    %2693 = vset.pattern.permute.xlu0 %v2691
    %2694 = vperm.xlu0 %2693, %v2689
    %v2695 = vpop.permute.xlu0 %2694
    %v2696 = vperm.slane %v2681, 2
    %v2697 = vlaneseq
    %v2698 = vshrl.u32 %v2697, 7
    %2700 = vset.pattern.permute.xlu0 %v2698
    %2701 = vperm.xlu0 %2700, %v2696
    %v2702 = vpop.permute.xlu0 %2701
    %v2703 = vperm.slane %v2681, 3
    %v2704 = vlaneseq
    %v2705 = vshrl.u32 %v2704, 7
    %2707 = vset.pattern.permute.xlu0 %v2705
    %2708 = vperm.xlu0 %2707, %v2703
    %v2709 = vpop.permute.xlu0 %2708
    %v2710 = vperm.slane %v2681, 4
    %v2711 = vlaneseq
    %v2712 = vshrl.u32 %v2711, 7
    %2714 = vset.pattern.permute.xlu0 %v2712
    %2715 = vperm.xlu0 %2714, %v2710
    %v2716 = vpop.permute.xlu0 %2715
    %v2717 = vperm.slane %v2681, 5
    %v2718 = vlaneseq
    %v2719 = vshrl.u32 %v2718, 7
    %2721 = vset.pattern.permute.xlu0 %v2719
    %2722 = vperm.xlu0 %2721, %v2717
    %v2723 = vpop.permute.xlu0 %2722
    %v2724 = vperm.slane %v2681, 6
    %v2725 = vlaneseq
    %v2726 = vshrl.u32 %v2725, 7
    %2728 = vset.pattern.permute.xlu0 %v2726
    %2729 = vperm.xlu0 %2728, %v2724
    %v2730 = vpop.permute.xlu0 %2729
    %v2731 = vperm.slane %v2681, 7
    %v2732 = vlaneseq
    %v2733 = vshrl.u32 %v2732, 7
    %2735 = vset.pattern.permute.xlu0 %v2733
    %2736 = vperm.xlu0 %2735, %v2731
    %v2737 = vpop.permute.xlu0 %2736
    %v2738 = vmul.f32 %v2688, %v2317
    %v2739 = vmul.f32 %v2695, %v2318
    %v2740 = vmul.f32 %v2702, %v2319
    %v2741 = vmul.f32 %v2709, %v2320
    %v2742 = vmul.f32 %v2716, %v2321
    %v2743 = vmul.f32 %v2723, %v2322
    %v2744 = vmul.f32 %v2730, %v2323
    %v2745 = vmul.f32 %v2737, %v2324
    %v2746 = vsel %vm568, %v2738, 0.0
    %v2747 = vsel %vm568, %v2739, 0.0
    %v2748 = vadd.f32 %v2746, %v2747
    %v2749 = vsel %vm568, %v2740, 0.0
    %v2750 = vadd.f32 %v2748, %v2749
    %v2751 = vsel %vm568, %v2741, 0.0
    %v2752 = vadd.f32 %v2750, %v2751
    %v2753 = vsel %vm568, %v2742, 0.0
    %v2754 = vadd.f32 %v2752, %v2753
    %v2755 = vsel %vm568, %v2743, 0.0
    %v2756 = vadd.f32 %v2754, %v2755
    %v2757 = vsel %vm568, %v2744, 0.0
    %v2758 = vadd.f32 %v2756, %v2757
    %v2759 = vsel %vm568, %v2745, 0.0
    %v2760 = vadd.f32 %v2758, %v2759
    %v2761 = vmul.f32 %v2688, %v2325
    %v2762 = vmul.f32 %v2695, %v2326
    %v2763 = vmul.f32 %v2702, %v2327
    %v2764 = vmul.f32 %v2709, %v2328
    %v2765 = vmul.f32 %v2716, %v2329
    %v2766 = vmul.f32 %v2723, %v2330
    %v2767 = vmul.f32 %v2730, %v2331
    %v2768 = vmul.f32 %v2737, %v2332
    %v2769 = vsel %vm568, %v2761, 0.0
    %v2770 = vsel %vm568, %v2762, 0.0
    %v2771 = vadd.f32 %v2769, %v2770
    %v2772 = vsel %vm568, %v2763, 0.0
    %v2773 = vadd.f32 %v2771, %v2772
    %v2774 = vsel %vm568, %v2764, 0.0
    %v2775 = vadd.f32 %v2773, %v2774
    %v2776 = vsel %vm568, %v2765, 0.0
    %v2777 = vadd.f32 %v2775, %v2776
    %v2778 = vsel %vm568, %v2766, 0.0
    %v2779 = vadd.f32 %v2777, %v2778
    %v2780 = vsel %vm568, %v2767, 0.0
    %v2781 = vadd.f32 %v2779, %v2780
    %v2782 = vsel %vm568, %v2768, 0.0
    %v2783 = vadd.f32 %v2781, %v2782
    %v2785 = vsel %vm568, %v2760, 0
    %2787 = vmatpush.msra.mxu0 0.0
    %2788 = vmatpush.msra.mxu0 0.0
    %2789 = vmatpush.msra.mxu0 0.0
    %2790 = vmatpush.msra.mxu0 0.0
    %2791 = vmatpush.msra.mxu0 0.0
    %2792 = vmatpush.msra.mxu0 0.0
    %2793 = vmatpush.msra.mxu0 0.0
    %2794 = vmatpush.msra.mxu0 0.0
    %2795 = vmatpush.msra.mxu0 0.0
    %2796 = vmatpush.msra.mxu0 0.0
    %2797 = vmatpush.msra.mxu0 0.0
    %2798 = vmatpush.msra.mxu0 0.0
    %2799 = vmatpush.msra.mxu0 %v2498
    %2800 = vmatpush.msra.mxu0 %v2497
    %2801 = vmatpush.msra.mxu0 %v2496
    %2802 = vmatpush.msra.mxu0 %v2495
    %2803 = vmatmul.f32.gmra.mxu0 %v2785
    %v2804 = vpop.f32.mrf.mxu0
    %v2805 = vadd.f32 0.0, %v2804
    %2806 = vdwg.mxu0
    %v2808 = vsel %vm541, %v2554, 0
    %2810 = vmatpush.msra.mxu0 0.0
    %2811 = vmatpush.msra.mxu0 0.0
    %2812 = vmatpush.msra.mxu0 0.0
    %2813 = vmatpush.msra.mxu0 0.0
    %2814 = vmatpush.msra.mxu0 0.0
    %2815 = vmatpush.msra.mxu0 0.0
    %2816 = vmatpush.msra.mxu0 0.0
    %2817 = vmatpush.msra.mxu0 0.0
    %2818 = vmatpush.msra.mxu0 0.0
    %2819 = vmatpush.msra.mxu0 0.0
    %2820 = vmatpush.msra.mxu0 0.0
    %2821 = vmatpush.msra.mxu0 0.0
    %2822 = vmatpush.msra.mxu0 0.0
    %2823 = vmatpush.msra.mxu0 0.0
    %2824 = vmatpush.msra.mxu0 %v2494
    %2825 = vmatpush.msra.mxu0 %v2493
    %2826 = vmatmul.f32.gmra.mxu0 %v2808
    %v2827 = vpop.f32.mrf.mxu0
    %v2828 = vadd.f32 %v2805, %v2827
    %2829 = vdwg.mxu0
    %v2831 = vsel %vm568, %v2783, 0
    %2833 = vmatpush.msra.mxu0 0.0
    %2834 = vmatpush.msra.mxu0 0.0
    %2835 = vmatpush.msra.mxu0 0.0
    %2836 = vmatpush.msra.mxu0 0.0
    %2837 = vmatpush.msra.mxu0 0.0
    %2838 = vmatpush.msra.mxu0 0.0
    %2839 = vmatpush.msra.mxu0 0.0
    %2840 = vmatpush.msra.mxu0 0.0
    %2841 = vmatpush.msra.mxu0 0.0
    %2842 = vmatpush.msra.mxu0 0.0
    %2843 = vmatpush.msra.mxu0 0.0
    %2844 = vmatpush.msra.mxu0 0.0
    %2845 = vmatpush.msra.mxu0 %v2502
    %2846 = vmatpush.msra.mxu0 %v2501
    %2847 = vmatpush.msra.mxu0 %v2500
    %2848 = vmatpush.msra.mxu0 %v2499
    %2849 = vmatmul.f32.gmra.mxu0 %v2831
    %v2850 = vpop.f32.mrf.mxu0
    %v2851 = vadd.f32 0.0, %v2850
    %2852 = vdwg.mxu0
    %v2853 = vadd.f32 %v2828, %v2851
    %v2855 = vperm.slane %v2507, 0
    %v2857 = vadd.f32 %v2853, %v2855
    %v2859 = vperm.slane %v2508, 0
    %2861 = vmatpush.msra.mxu0 0.0
    %2862 = vmatpush.msra.mxu0 0.0
    %2863 = vmatpush.msra.mxu0 0.0
    %2864 = vmatpush.msra.mxu0 0.0
    %2865 = vmatpush.msra.mxu0 0.0
    %2866 = vmatpush.msra.mxu0 0.0
    %2867 = vmatpush.msra.mxu0 0.0
    %2868 = vmatpush.msra.mxu0 0.0
    %2869 = vmatpush.msra.mxu0 0.0
    %2870 = vmatpush.msra.mxu0 0.0
    %2871 = vmatpush.msra.mxu0 0.0
    %2872 = vmatpush.msra.mxu0 0.0
    %2873 = vmatpush.msra.mxu0 %v2506
    %2874 = vmatpush.msra.mxu0 %v2505
    %2875 = vmatpush.msra.mxu0 %v2504
    %2876 = vmatpush.msra.mxu0 %v2503
    %2877 = vmatmul.f32.gmra.mxu0 %v2557
    %v2878 = vpop.f32.mrf.mxu0
    %v2879 = vadd.f32 %v2859, %v2878
    %2880 = vdwg.mxu0
    %v2881 = vadd.f32 %v2857, %v2879
    %v2882 = vxor.u32 %v2881, 2147483648
    %v2883 = vmul.f32 %v2882, 1.442695
    %v2884 = vpow.pop %v2883
    %v2885 = vadd.f32 %v2884, 1.0
    %v2886 = vrcp.pop %v2885
    %v2887 = vmul.f32 %v2885, %v2886
    %v2888 = vsub.f32 1.0, %v2887
    %v2889 = vmul.f32 %v2886, %v2888
    %v2890 = vadd.f32 %v2886, %v2889
    %vm2891 = vweird.f32 %v2885
    %vm2892 = vweird.f32 %v2886
    %vm2893 = vmor %vm2891, %vm2892
    %v2894 = vsel %vm2893, %v2886, %v2890
    %v2895 = vand.u32 2147483647, %v2885
    %vm2896 = vcmp.eq.f32.partialorder %v2895, 8.507059e+37
    %v2897 = vand.u32 %v2885, 2147483648
    %v2898 = vor.u32 1.1754944e-38, %v2897
    %v2899 = vsel %vm2896, %v2898, %v2894
    %v2900 = vmul.f32 1.0, %v2899
    %2902 = vrot.lane.b32.xlu0 %v2879, 64
    %v2903 = vpop.permute.xlu0 %2902
    %v2905 = vmul.f32 %v2900, %v2903
    %2907 = vrot.lane.b32.xlu0 %v2905, 64
    %v2908 = vpop.permute.xlu0 %2907
    %v2910 = vadd.f32 %v2857, %v2908
    %v2911 = vtanh.pop %v2910
    %v2912 = vsub.f32 1.0, %v2900
    %2914 = vrot.lane.b32.xlu0 %v2911, 96
    %v2915 = vpop.permute.xlu0 %2914
    %v2917 = vmul.f32 %v2912, %v2915
    %2918 = vrot.lane.b32.xlu0 %v2316, 32
    %v2919 = vpop.permute.xlu0 %2918
    %v2921 = vmul.f32 %v2900, %v2919
    %v2922 = vadd.f32 %v2917, %v2921
    %2923 = vmatpush.msra.mxu0 0.0
    %2924 = vmatpush.msra.mxu0 0.0
    %2925 = vmatpush.msra.mxu0 0.0
    %2926 = vmatpush.msra.mxu0 0.0
    %2927 = vmatpush.msra.mxu0 0.0
    %2928 = vmatpush.msra.mxu0 0.0
    %2929 = vmatpush.msra.mxu0 0.0
    %2930 = vmatpush.msra.mxu0 0.0
    %2931 = vmatpush.msra.mxu0 0.0
    %2932 = vmatpush.msra.mxu0 0.0
    %2933 = vmatpush.msra.mxu0 0.0
    %2934 = vmatpush.msra.mxu0 0.0
    %2935 = vmatpush.msra.mxu0 %v2516
    %2936 = vmatpush.msra.mxu0 %v2515
    %2937 = vmatpush.msra.mxu0 %v2514
    %2938 = vmatpush.msra.mxu0 %v2513
    %2939 = vmatmul.f32.gmra.mxu0 %v2785
    %v2940 = vpop.f32.mrf.mxu0
    %v2941 = vadd.f32 0.0, %v2940
    %2942 = vdwg.mxu0
    %2944 = vrot.lane.b32.xlu0 %v2922, 96
    %v2945 = vpop.permute.xlu0 %2944
    %v2946 = vsel %vm568, %v2945, 0
    %2948 = vmatpush.msra.mxu0 0.0
    %2949 = vmatpush.msra.mxu0 0.0
    %2950 = vmatpush.msra.mxu0 0.0
    %2951 = vmatpush.msra.mxu0 0.0
    %2952 = vmatpush.msra.mxu0 0.0
    %2953 = vmatpush.msra.mxu0 0.0
    %2954 = vmatpush.msra.mxu0 0.0
    %2955 = vmatpush.msra.mxu0 0.0
    %2956 = vmatpush.msra.mxu0 0.0
    %2957 = vmatpush.msra.mxu0 0.0
    %2958 = vmatpush.msra.mxu0 0.0
    %2959 = vmatpush.msra.mxu0 0.0
    %2960 = vmatpush.msra.mxu0 %v2512
    %2961 = vmatpush.msra.mxu0 %v2511
    %2962 = vmatpush.msra.mxu0 %v2510
    %2963 = vmatpush.msra.mxu0 %v2509
    %2964 = vmatmul.f32.gmra.mxu0 %v2946
    %v2965 = vpop.f32.mrf.mxu0
    %v2966 = vadd.f32 %v2941, %v2965
    %2967 = vdwg.mxu0
    %2968 = vmatpush.msra.mxu0 0.0
    %2969 = vmatpush.msra.mxu0 0.0
    %2970 = vmatpush.msra.mxu0 0.0
    %2971 = vmatpush.msra.mxu0 0.0
    %2972 = vmatpush.msra.mxu0 0.0
    %2973 = vmatpush.msra.mxu0 0.0
    %2974 = vmatpush.msra.mxu0 0.0
    %2975 = vmatpush.msra.mxu0 0.0
    %2976 = vmatpush.msra.mxu0 0.0
    %2977 = vmatpush.msra.mxu0 0.0
    %2978 = vmatpush.msra.mxu0 0.0
    %2979 = vmatpush.msra.mxu0 0.0
    %2980 = vmatpush.msra.mxu0 %v2520
    %2981 = vmatpush.msra.mxu0 %v2519
    %2982 = vmatpush.msra.mxu0 %v2518
    %2983 = vmatpush.msra.mxu0 %v2517
    %2984 = vmatmul.f32.gmra.mxu0 %v2831
    %v2985 = vpop.f32.mrf.mxu0
    %v2986 = vadd.f32 0.0, %v2985
    %2987 = vdwg.mxu0
    %v2988 = vadd.f32 %v2966, %v2986
    %2989 = vmatpush.msra.mxu0 0.0
    %2990 = vmatpush.msra.mxu0 0.0
    %2991 = vmatpush.msra.mxu0 0.0
    %2992 = vmatpush.msra.mxu0 0.0
    %2993 = vmatpush.msra.mxu0 0.0
    %2994 = vmatpush.msra.mxu0 0.0
    %2995 = vmatpush.msra.mxu0 0.0
    %2996 = vmatpush.msra.mxu0 0.0
    %2997 = vmatpush.msra.mxu0 0.0
    %2998 = vmatpush.msra.mxu0 0.0
    %2999 = vmatpush.msra.mxu0 0.0
    %3000 = vmatpush.msra.mxu0 0.0
    %3001 = vmatpush.msra.mxu0 0.0
    %3002 = vmatpush.msra.mxu0 0.0
    %3003 = vmatpush.msra.mxu0 %v2522
    %3004 = vmatpush.msra.mxu0 %v2521
    %3005 = vmatmul.f32.gmra.mxu0 %v2808
    %v3006 = vpop.f32.mrf.mxu0
    %v3007 = vadd.f32 0.0, %v3006
    %3008 = vdwg.mxu0
    %v3009 = vadd.f32 %v2988, %v3007
    %v3011 = vperm.slane %v2523, 0
    %v3013 = vadd.f32 %v3009, %v3011
    %s3014 = scalar_lea.vmem [#allocation38], 8
    %3015 = vst [vmem:[%s3014] sm:$0xff] %v3013
    %v3016 = vsel %vm2524, %v3013, -1e+30
    %3017 = vmax.xlane.f32.xlu0 %v3016
    %v3018 = vpop.xlane.xlu0 %3017
    %vm3019 = vcmp.eq.f32.partialorder %v3016, %v3018
    %vm3020 = vmand %vm3019, %vm2524
    %v3021 = vsel %vm3020, %v458, 128
    %v3022 = vand.u32 %v3021, 65535
    %v3023 = vshra.s32 %v3021, 16
    %v3024 = vcvt.s32.f32 %v3022
    %v3025 = vcvt.s32.f32 %v3023
    %3026 = vmin.xlane.f32.xlu0 %v3025
    %v3027 = vpop.xlane.xlu0 %3026
    %vm3028 = vcmp.eq.f32.partialorder %v3025, %v3027
    %v3029 = vsel %vm3028, %v3024, inf
    %3030 = vmin.xlane.f32.xlu0 %v3029
    %v3031 = vpop.xlane.xlu0 %3030
    %v3032 = vcvt.f32.s32 %v3031
    %v3033 = vcvt.f32.s32 %v3027
    %v3034 = vshll.u32 %v3033, 16
    %v3035 = vadd.s32 %v3034, %v3032
    %vm3036 = vcmp.eq.s32.totalorder %v458, %v3035
    %v3037 = vsel %vm3036, 1, 0
    %v3038 = vcvt.s32.f32 %v3037
    %3039 = vset.pattern.permute.xlu0 1
    %3040 = vperm.xlu0 %3039, %v452
    %v3041 = vpop.permute.xlu0 %3040
    %vm3042 = vcmp.eq.s32.totalorder %v3041, %v458
    %v3043 = vsel %vm3042, 1, 0
    %v3044 = vcvt.s32.f32 %v3043
    %s3045 = sld [smem:[#allocation4 + $0x1]]
    %p3046 = scmp.ne.s32.totalorder %s3045, 0
    %s3047 = scalar_select %p3046, 1, 0
    %v3048 = vstv %s3047
    %vm3049 = vcmp.eq.s32.totalorder %v3048, 1
    %v3050 = vsel %vm3049, %v3044, %v3038
    %v3052 = vsel %vm2532, %v3050, 0
    %3054 = vmatpush.msra.mxu0 0.0
    %3055 = vmatpush.msra.mxu0 0.0
    %3056 = vmatpush.msra.mxu0 0.0
    %3057 = vmatpush.msra.mxu0 0.0
    %3058 = vmatpush.msra.mxu0 0.0
    %3059 = vmatpush.msra.mxu0 0.0
    %3060 = vmatpush.msra.mxu0 0.0
    %3061 = vmatpush.msra.mxu0 0.0
    %3062 = vmatpush.msra.mxu0 0.0
    %3063 = vmatpush.msra.mxu0 0.0
    %3064 = vmatpush.msra.mxu0 0.0
    %3065 = vmatpush.msra.mxu0 0.0
    %3066 = vmatpush.msra.mxu0 0.0
    %3067 = vmatpush.msra.mxu0 %v2492
    %3068 = vmatpush.msra.mxu0 %v2491
    %3069 = vmatpush.msra.mxu0 %v2490
    %3070 = vmatmul.f32.gmra.mxu0 %v3052
    %v3071 = vpop.f32.mrf.mxu0
    %v3072 = vadd.f32 0.0, %v3071
    %3073 = vdwg.mxu0
    %3074 = vmatpush.msra.mxu0 0.0
    %3075 = vmatpush.msra.mxu0 0.0
    %3076 = vmatpush.msra.mxu0 0.0
    %3077 = vmatpush.msra.mxu0 0.0
    %3078 = vmatpush.msra.mxu0 0.0
    %3079 = vmatpush.msra.mxu0 0.0
    %3080 = vmatpush.msra.mxu0 0.0
    %3081 = vmatpush.msra.mxu0 0.0
    %3082 = vmatpush.msra.mxu0 0.0
    %3083 = vmatpush.msra.mxu0 0.0
    %3084 = vmatpush.msra.mxu0 0.0
    %3085 = vmatpush.msra.mxu0 0.0
    %3086 = vmatpush.msra.mxu0 %v2489
    %3087 = vmatpush.msra.mxu0 %v2488
    %3088 = vmatpush.msra.mxu0 %v2487
    %3089 = vmatpush.msra.mxu0 %v2486
    %3090 = vmatmul.f32.gmra.mxu0 %v2946
    %v3091 = vpop.f32.mrf.mxu0
    %v3092 = vadd.f32 0.0, %v3091
    %3093 = vdwg.mxu0
    %v3094 = vadd.f32 %v3092, %v2477
    %v3095 = vadd.f32 %v3092, %v2478
    %v3096 = vadd.f32 %v3092, %v2479
    %v3097 = vadd.f32 %v3092, %v2480
    %v3098 = vadd.f32 %v3092, %v2481
    %v3099 = vadd.f32 %v3092, %v2482
    %v3100 = vadd.f32 %v3092, %v2483
    %v3101 = vadd.f32 %v3092, %v2484
    %v3102 = vtanh.pop %v3094
    %v3103 = vtanh.pop %v3095
    %v3104 = vtanh.pop %v3096
    %v3105 = vtanh.pop %v3097
    %v3106 = vtanh.pop %v3098
    %v3107 = vtanh.pop %v3099
    %v3108 = vtanh.pop %v3100
    %v3109 = vtanh.pop %v3101
    %v3110 = vmul.f32 %v3102, %v2596
    %v3111 = vmul.f32 %v3103, %v2596
    %v3112 = vmul.f32 %v3104, %v2596
    %v3113 = vmul.f32 %v3105, %v2596
    %v3114 = vmul.f32 %v3106, %v2596
    %v3115 = vmul.f32 %v3107, %v2596
    %v3116 = vmul.f32 %v3108, %v2596
    %v3117 = vmul.f32 %v3109, %v2596
    %v3118 = vsel %vm568, %v3110, 0.0
    %3119 = vadd.xlane.f32.xlu0 %v3118
    %v3120 = vpop.xlane.xlu0 %3119
    %v3121 = vsel %vm568, %v3111, 0.0
    %3122 = vadd.xlane.f32.xlu0 %v3121
    %v3123 = vpop.xlane.xlu0 %3122
    %v3124 = vsel %vm568, %v3112, 0.0
    %3125 = vadd.xlane.f32.xlu0 %v3124
    %v3126 = vpop.xlane.xlu0 %3125
    %v3127 = vsel %vm568, %v3113, 0.0
    %3128 = vadd.xlane.f32.xlu0 %v3127
    %v3129 = vpop.xlane.xlu0 %3128
    %v3130 = vsel %vm568, %v3114, 0.0
    %3131 = vadd.xlane.f32.xlu0 %v3130
    %v3132 = vpop.xlane.xlu0 %3131
    %v3133 = vsel %vm568, %v3115, 0.0
    %3134 = vadd.xlane.f32.xlu0 %v3133
    %v3135 = vpop.xlane.xlu0 %3134
    %v3136 = vsel %vm568, %v3116, 0.0
    %3137 = vadd.xlane.f32.xlu0 %v3136
    %v3138 = vpop.xlane.xlu0 %3137
    %v3139 = vsel %vm568, %v3117, 0.0
    %3140 = vadd.xlane.f32.xlu0 %v3139
    %v3141 = vpop.xlane.xlu0 %3140
    %v3150 = vperm.slane %v3120, %v458
    %v3151 = vperm.slane %v3123, %v458
    %v3152 = vperm.slane %v3126, %v458
    %v3153 = vperm.slane %v3129, %v458
    %v3154 = vperm.slane %v3132, %v458
    %v3155 = vperm.slane %v3135, %v458
    %v3156 = vperm.slane %v3138, %v458
    %v3157 = vperm.slane %v3141, %v458
    %v3158 = vsel %vm2646, %v3151, %v3150
    %v3159 = vsel %vm2648, %v3152, %v3158
    %v3160 = vsel %vm2650, %v3153, %v3159
    %v3161 = vsel %vm2652, %v3154, %v3160
    %v3162 = vsel %vm2654, %v3155, %v3161
    %v3163 = vsel %vm2656, %v3156, %v3162
    %v3164 = vsel %vm2658, %v3157, %v3163
    %v3166 = vsel %vm2334, %v3164, -1e+10
    %v3167 = vsel %vm2662, %v3166, -inf
    %v3168 = vrot.slane %v3167, 4
    %v3169 = vmax.f32 %v3167, %v3168
    %v3170 = vrot.slane %v3169, 2
    %v3171 = vmax.f32 %v3169, %v3170
    %v3172 = vrot.slane %v3171, 1
    %v3173 = vmax.f32 %v3171, %v3172
    %v3174 = vsub.f32 %v3166, %v3173
    %v3175 = vmul.f32 %v3174, 1.442695
    %v3176 = vpow.pop %v3175
    %v3177 = vsel %vm2662, %v3176, 0.0
    %v3178 = vrot.slane %v3177, 4
    %v3179 = vadd.f32 %v3177, %v3178
    %v3180 = vrot.slane %v3179, 2
    %v3181 = vadd.f32 %v3179, %v3180
    %v3182 = vrot.slane %v3181, 1
    %v3183 = vadd.f32 %v3181, %v3182
    %v3184 = vrcp.pop %v3183
    %v3185 = vmul.f32 %v3176, %v3184
    %v3186 = vperm.slane %v3185, 0
    %v3187 = vlaneseq
    %v3188 = vshrl.u32 %v3187, 7
    %3190 = vset.pattern.permute.xlu0 %v3188
    %3191 = vperm.xlu0 %3190, %v3186
    %v3192 = vpop.permute.xlu0 %3191
    %v3193 = vperm.slane %v3185, 1
    %v3194 = vlaneseq
    %v3195 = vshrl.u32 %v3194, 7
    %3197 = vset.pattern.permute.xlu0 %v3195
    %3198 = vperm.xlu0 %3197, %v3193
    %v3199 = vpop.permute.xlu0 %3198
    %v3200 = vperm.slane %v3185, 2
    %v3201 = vlaneseq
    %v3202 = vshrl.u32 %v3201, 7
    %3204 = vset.pattern.permute.xlu0 %v3202
    %3205 = vperm.xlu0 %3204, %v3200
    %v3206 = vpop.permute.xlu0 %3205
    %v3207 = vperm.slane %v3185, 3
    %v3208 = vlaneseq
    %v3209 = vshrl.u32 %v3208, 7
    %3211 = vset.pattern.permute.xlu0 %v3209
    %3212 = vperm.xlu0 %3211, %v3207
    %v3213 = vpop.permute.xlu0 %3212
    %v3214 = vperm.slane %v3185, 4
    %v3215 = vlaneseq
    %v3216 = vshrl.u32 %v3215, 7
    %3218 = vset.pattern.permute.xlu0 %v3216
    %3219 = vperm.xlu0 %3218, %v3214
    %v3220 = vpop.permute.xlu0 %3219
    %v3221 = vperm.slane %v3185, 5
    %v3222 = vlaneseq
    %v3223 = vshrl.u32 %v3222, 7
    %3225 = vset.pattern.permute.xlu0 %v3223
    %3226 = vperm.xlu0 %3225, %v3221
    %v3227 = vpop.permute.xlu0 %3226
    %v3228 = vperm.slane %v3185, 6
    %v3229 = vlaneseq
    %v3230 = vshrl.u32 %v3229, 7
    %3232 = vset.pattern.permute.xlu0 %v3230
    %3233 = vperm.xlu0 %3232, %v3228
    %v3234 = vpop.permute.xlu0 %3233
    %v3235 = vperm.slane %v3185, 7
    %v3236 = vlaneseq
    %v3237 = vshrl.u32 %v3236, 7
    %3239 = vset.pattern.permute.xlu0 %v3237
    %3240 = vperm.xlu0 %3239, %v3235
    %v3241 = vpop.permute.xlu0 %3240
    %v3242 = vmul.f32 %v3192, %v2317
    %v3243 = vmul.f32 %v3199, %v2318
    %v3244 = vmul.f32 %v3206, %v2319
    %v3245 = vmul.f32 %v3213, %v2320
    %v3246 = vmul.f32 %v3220, %v2321
    %v3247 = vmul.f32 %v3227, %v2322
    %v3248 = vmul.f32 %v3234, %v2323
    %v3249 = vmul.f32 %v3241, %v2324
    %v3250 = vsel %vm568, %v3242, 0.0
    %v3251 = vsel %vm568, %v3243, 0.0
    %v3252 = vadd.f32 %v3250, %v3251
    %v3253 = vsel %vm568, %v3244, 0.0
    %v3254 = vadd.f32 %v3252, %v3253
    %v3255 = vsel %vm568, %v3245, 0.0
    %v3256 = vadd.f32 %v3254, %v3255
    %v3257 = vsel %vm568, %v3246, 0.0
    %v3258 = vadd.f32 %v3256, %v3257
    %v3259 = vsel %vm568, %v3247, 0.0
    %v3260 = vadd.f32 %v3258, %v3259
    %v3261 = vsel %vm568, %v3248, 0.0
    %v3262 = vadd.f32 %v3260, %v3261
    %v3263 = vsel %vm568, %v3249, 0.0
    %v3264 = vadd.f32 %v3262, %v3263
    %v3265 = vmul.f32 %v3192, %v2325
    %v3266 = vmul.f32 %v3199, %v2326
    %v3267 = vmul.f32 %v3206, %v2327
    %v3268 = vmul.f32 %v3213, %v2328
    %v3269 = vmul.f32 %v3220, %v2329
    %v3270 = vmul.f32 %v3227, %v2330
    %v3271 = vmul.f32 %v3234, %v2331
    %v3272 = vmul.f32 %v3241, %v2332
    %v3273 = vsel %vm568, %v3265, 0.0
    %v3274 = vsel %vm568, %v3266, 0.0
    %v3275 = vadd.f32 %v3273, %v3274
    %v3276 = vsel %vm568, %v3267, 0.0
    %v3277 = vadd.f32 %v3275, %v3276
    %v3278 = vsel %vm568, %v3268, 0.0
    %v3279 = vadd.f32 %v3277, %v3278
    %v3280 = vsel %vm568, %v3269, 0.0
    %v3281 = vadd.f32 %v3279, %v3280
    %v3282 = vsel %vm568, %v3270, 0.0
    %v3283 = vadd.f32 %v3281, %v3282
    %v3284 = vsel %vm568, %v3271, 0.0
    %v3285 = vadd.f32 %v3283, %v3284
    %v3286 = vsel %vm568, %v3272, 0.0
    %v3287 = vadd.f32 %v3285, %v3286
    %v3289 = vsel %vm568, %v3264, 0
    %3291 = vmatpush.msra.mxu0 0.0
    %3292 = vmatpush.msra.mxu0 0.0
    %3293 = vmatpush.msra.mxu0 0.0
    %3294 = vmatpush.msra.mxu0 0.0
    %3295 = vmatpush.msra.mxu0 0.0
    %3296 = vmatpush.msra.mxu0 0.0
    %3297 = vmatpush.msra.mxu0 0.0
    %3298 = vmatpush.msra.mxu0 0.0
    %3299 = vmatpush.msra.mxu0 0.0
    %3300 = vmatpush.msra.mxu0 0.0
    %3301 = vmatpush.msra.mxu0 0.0
    %3302 = vmatpush.msra.mxu0 0.0
    %3303 = vmatpush.msra.mxu0 %v2498
    %3304 = vmatpush.msra.mxu0 %v2497
    %3305 = vmatpush.msra.mxu0 %v2496
    %3306 = vmatpush.msra.mxu0 %v2495
    %3307 = vmatmul.f32.gmra.mxu0 %v3289
    %v3308 = vpop.f32.mrf.mxu0
    %v3309 = vadd.f32 0.0, %v3308
    %3310 = vdwg.mxu0
    %v3312 = vsel %vm541, %v3072, 0
    %3314 = vmatpush.msra.mxu0 0.0
    %3315 = vmatpush.msra.mxu0 0.0
    %3316 = vmatpush.msra.mxu0 0.0
    %3317 = vmatpush.msra.mxu0 0.0
    %3318 = vmatpush.msra.mxu0 0.0
    %3319 = vmatpush.msra.mxu0 0.0
    %3320 = vmatpush.msra.mxu0 0.0
    %3321 = vmatpush.msra.mxu0 0.0
    %3322 = vmatpush.msra.mxu0 0.0
    %3323 = vmatpush.msra.mxu0 0.0
    %3324 = vmatpush.msra.mxu0 0.0
    %3325 = vmatpush.msra.mxu0 0.0
    %3326 = vmatpush.msra.mxu0 0.0
    %3327 = vmatpush.msra.mxu0 0.0
    %3328 = vmatpush.msra.mxu0 %v2494
    %3329 = vmatpush.msra.mxu0 %v2493
    %3330 = vmatmul.f32.gmra.mxu0 %v3312
    %v3331 = vpop.f32.mrf.mxu0
    %v3332 = vadd.f32 %v3309, %v3331
    %3333 = vdwg.mxu0
    %v3335 = vsel %vm568, %v3287, 0
    %3337 = vmatpush.msra.mxu0 0.0
    %3338 = vmatpush.msra.mxu0 0.0
    %3339 = vmatpush.msra.mxu0 0.0
    %3340 = vmatpush.msra.mxu0 0.0
    %3341 = vmatpush.msra.mxu0 0.0
    %3342 = vmatpush.msra.mxu0 0.0
    %3343 = vmatpush.msra.mxu0 0.0
    %3344 = vmatpush.msra.mxu0 0.0
    %3345 = vmatpush.msra.mxu0 0.0
    %3346 = vmatpush.msra.mxu0 0.0
    %3347 = vmatpush.msra.mxu0 0.0
    %3348 = vmatpush.msra.mxu0 0.0
    %3349 = vmatpush.msra.mxu0 %v2502
    %3350 = vmatpush.msra.mxu0 %v2501
    %3351 = vmatpush.msra.mxu0 %v2500
    %3352 = vmatpush.msra.mxu0 %v2499
    %3353 = vmatmul.f32.gmra.mxu0 %v3335
    %v3354 = vpop.f32.mrf.mxu0
    %v3355 = vadd.f32 0.0, %v3354
    %3356 = vdwg.mxu0
    %v3357 = vadd.f32 %v3332, %v3355
    %v3358 = vadd.f32 %v3357, %v2855
    %3359 = vmatpush.msra.mxu0 0.0
    %3360 = vmatpush.msra.mxu0 0.0
    %3361 = vmatpush.msra.mxu0 0.0
    %3362 = vmatpush.msra.mxu0 0.0
    %3363 = vmatpush.msra.mxu0 0.0
    %3364 = vmatpush.msra.mxu0 0.0
    %3365 = vmatpush.msra.mxu0 0.0
    %3366 = vmatpush.msra.mxu0 0.0
    %3367 = vmatpush.msra.mxu0 0.0
    %3368 = vmatpush.msra.mxu0 0.0
    %3369 = vmatpush.msra.mxu0 0.0
    %3370 = vmatpush.msra.mxu0 0.0
    %3371 = vmatpush.msra.mxu0 %v2506
    %3372 = vmatpush.msra.mxu0 %v2505
    %3373 = vmatpush.msra.mxu0 %v2504
    %3374 = vmatpush.msra.mxu0 %v2503
    %3375 = vmatmul.f32.gmra.mxu0 %v2946
    %v3376 = vpop.f32.mrf.mxu0
    %v3377 = vadd.f32 %v2859, %v3376
    %3378 = vdwg.mxu0
    %v3379 = vadd.f32 %v3358, %v3377
    %v3380 = vxor.u32 %v3379, 2147483648
    %v3381 = vmul.f32 %v3380, 1.442695
    %v3382 = vpow.pop %v3381
    %v3383 = vadd.f32 %v3382, 1.0
    %v3384 = vrcp.pop %v3383
    %v3385 = vmul.f32 %v3383, %v3384
    %v3386 = vsub.f32 1.0, %v3385
    %v3387 = vmul.f32 %v3384, %v3386
    %v3388 = vadd.f32 %v3384, %v3387
    %vm3389 = vweird.f32 %v3383
    %vm3390 = vweird.f32 %v3384
    %vm3391 = vmor %vm3389, %vm3390
    %v3392 = vsel %vm3391, %v3384, %v3388
    %v3393 = vand.u32 2147483647, %v3383
    %vm3394 = vcmp.eq.f32.partialorder %v3393, 8.507059e+37
    %v3395 = vand.u32 %v3383, 2147483648
    %v3396 = vor.u32 1.1754944e-38, %v3395
    %v3397 = vsel %vm3394, %v3396, %v3392
    %v3398 = vmul.f32 1.0, %v3397
    %3400 = vrot.lane.b32.xlu0 %v3377, 64
    %v3401 = vpop.permute.xlu0 %3400
    %v3403 = vmul.f32 %v3398, %v3401
    %3405 = vrot.lane.b32.xlu0 %v3403, 64
    %v3406 = vpop.permute.xlu0 %3405
    %v3408 = vadd.f32 %v3358, %v3406
    %v3409 = vtanh.pop %v3408
    %v3410 = vsub.f32 1.0, %v3398
    %3412 = vrot.lane.b32.xlu0 %v3409, 96
    %v3413 = vpop.permute.xlu0 %3412
    %v3415 = vmul.f32 %v3410, %v3413
    %v3416 = vmul.f32 %v3398, %v2922
    %v3417 = vadd.f32 %v3415, %v3416
    %3418 = vmatpush.msra.mxu0 0.0
    %3419 = vmatpush.msra.mxu0 0.0
    %3420 = vmatpush.msra.mxu0 0.0
    %3421 = vmatpush.msra.mxu0 0.0
    %3422 = vmatpush.msra.mxu0 0.0
    %3423 = vmatpush.msra.mxu0 0.0
    %3424 = vmatpush.msra.mxu0 0.0
    %3425 = vmatpush.msra.mxu0 0.0
    %3426 = vmatpush.msra.mxu0 0.0
    %3427 = vmatpush.msra.mxu0 0.0
    %3428 = vmatpush.msra.mxu0 0.0
    %3429 = vmatpush.msra.mxu0 0.0
    %3430 = vmatpush.msra.mxu0 %v2516
    %3431 = vmatpush.msra.mxu0 %v2515
    %3432 = vmatpush.msra.mxu0 %v2514
    %3433 = vmatpush.msra.mxu0 %v2513
    %3434 = vmatmul.f32.gmra.mxu0 %v3289
    %v3435 = vpop.f32.mrf.mxu0
    %v3436 = vadd.f32 0.0, %v3435
    %3437 = vdwg.mxu0
    %3439 = vrot.lane.b32.xlu0 %v3417, 96
    %v3440 = vpop.permute.xlu0 %3439
    %v3441 = vsel %vm568, %v3440, 0
    %3443 = vmatpush.msra.mxu0 0.0
    %3444 = vmatpush.msra.mxu0 0.0
    %3445 = vmatpush.msra.mxu0 0.0
    %3446 = vmatpush.msra.mxu0 0.0
    %3447 = vmatpush.msra.mxu0 0.0
    %3448 = vmatpush.msra.mxu0 0.0
    %3449 = vmatpush.msra.mxu0 0.0
    %3450 = vmatpush.msra.mxu0 0.0
    %3451 = vmatpush.msra.mxu0 0.0
    %3452 = vmatpush.msra.mxu0 0.0
    %3453 = vmatpush.msra.mxu0 0.0
    %3454 = vmatpush.msra.mxu0 0.0
    %3455 = vmatpush.msra.mxu0 %v2512
    %3456 = vmatpush.msra.mxu0 %v2511
    %3457 = vmatpush.msra.mxu0 %v2510
    %3458 = vmatpush.msra.mxu0 %v2509
    %3459 = vmatmul.f32.gmra.mxu0 %v3441
    %v3460 = vpop.f32.mrf.mxu0
    %v3461 = vadd.f32 %v3436, %v3460
    %3462 = vdwg.mxu0
    %3463 = vmatpush.msra.mxu0 0.0
    %3464 = vmatpush.msra.mxu0 0.0
    %3465 = vmatpush.msra.mxu0 0.0
    %3466 = vmatpush.msra.mxu0 0.0
    %3467 = vmatpush.msra.mxu0 0.0
    %3468 = vmatpush.msra.mxu0 0.0
    %3469 = vmatpush.msra.mxu0 0.0
    %3470 = vmatpush.msra.mxu0 0.0
    %3471 = vmatpush.msra.mxu0 0.0
    %3472 = vmatpush.msra.mxu0 0.0
    %3473 = vmatpush.msra.mxu0 0.0
    %3474 = vmatpush.msra.mxu0 0.0
    %3475 = vmatpush.msra.mxu0 %v2520
    %3476 = vmatpush.msra.mxu0 %v2519
    %3477 = vmatpush.msra.mxu0 %v2518
    %3478 = vmatpush.msra.mxu0 %v2517
    %3479 = vmatmul.f32.gmra.mxu0 %v3335
    %v3480 = vpop.f32.mrf.mxu0
    %v3481 = vadd.f32 0.0, %v3480
    %3482 = vdwg.mxu0
    %v3483 = vadd.f32 %v3461, %v3481
    %3484 = vmatpush.msra.mxu0 0.0
    %3485 = vmatpush.msra.mxu0 0.0
    %3486 = vmatpush.msra.mxu0 0.0
    %3487 = vmatpush.msra.mxu0 0.0
    %3488 = vmatpush.msra.mxu0 0.0
    %3489 = vmatpush.msra.mxu0 0.0
    %3490 = vmatpush.msra.mxu0 0.0
    %3491 = vmatpush.msra.mxu0 0.0
    %3492 = vmatpush.msra.mxu0 0.0
    %3493 = vmatpush.msra.mxu0 0.0
    %3494 = vmatpush.msra.mxu0 0.0
    %3495 = vmatpush.msra.mxu0 0.0
    %3496 = vmatpush.msra.mxu0 0.0
    %3497 = vmatpush.msra.mxu0 0.0
    %3498 = vmatpush.msra.mxu0 %v2522
    %3499 = vmatpush.msra.mxu0 %v2521
    %3500 = vmatmul.f32.gmra.mxu0 %v3312
    %v3501 = vpop.f32.mrf.mxu0
    %v3502 = vadd.f32 0.0, %v3501
    %3503 = vdwg.mxu0
    %v3504 = vadd.f32 %v3483, %v3502
    %v3505 = vadd.f32 %v3504, %v3011
    %s3506 = scalar_lea.vmem [#allocation38], 16
    %3507 = vst [vmem:[%s3506] sm:$0xff] %v3505
    %v3508 = vsel %vm2524, %v3505, -1e+30
    %3509 = vmax.xlane.f32.xlu0 %v3508
    %v3510 = vpop.xlane.xlu0 %3509
    %vm3511 = vcmp.eq.f32.partialorder %v3508, %v3510
    %vm3512 = vmand %vm3511, %vm2524
    %v3513 = vsel %vm3512, %v458, 128
    %v3514 = vand.u32 %v3513, 65535
    %v3515 = vshra.s32 %v3513, 16
    %v3516 = vcvt.s32.f32 %v3514
    %v3517 = vcvt.s32.f32 %v3515
    %3518 = vmin.xlane.f32.xlu0 %v3517
    %v3519 = vpop.xlane.xlu0 %3518
    %vm3520 = vcmp.eq.f32.partialorder %v3517, %v3519
    %v3521 = vsel %vm3520, %v3516, inf
    %3522 = vmin.xlane.f32.xlu0 %v3521
    %v3523 = vpop.xlane.xlu0 %3522
    %v3524 = vcvt.f32.s32 %v3523
    %v3525 = vcvt.f32.s32 %v3519
    %v3526 = vshll.u32 %v3525, 16
    %v3527 = vadd.s32 %v3526, %v3524
    %vm3528 = vcmp.eq.s32.totalorder %v458, %v3527
    %v3529 = vsel %vm3528, 1, 0
    %v3530 = vcvt.s32.f32 %v3529
    %3531 = vset.pattern.permute.xlu0 2
    %3532 = vperm.xlu0 %3531, %v452
    %v3533 = vpop.permute.xlu0 %3532
    %vm3534 = vcmp.eq.s32.totalorder %v3533, %v458
    %v3535 = vsel %vm3534, 1, 0
    %v3536 = vcvt.s32.f32 %v3535
    %s3537 = sld [smem:[#allocation4 + $0x2]]
    %p3538 = scmp.ne.s32.totalorder %s3537, 0
    %s3539 = scalar_select %p3538, 1, 0
    %v3540 = vstv %s3539
    %vm3541 = vcmp.eq.s32.totalorder %v3540, 1
    %v3542 = vsel %vm3541, %v3536, %v3530
    %v3544 = vsel %vm2532, %v3542, 0
    %3546 = vmatpush.msra.mxu0 0.0
    %3547 = vmatpush.msra.mxu0 0.0
    %3548 = vmatpush.msra.mxu0 0.0
    %3549 = vmatpush.msra.mxu0 0.0
    %3550 = vmatpush.msra.mxu0 0.0
    %3551 = vmatpush.msra.mxu0 0.0
    %3552 = vmatpush.msra.mxu0 0.0
    %3553 = vmatpush.msra.mxu0 0.0
    %3554 = vmatpush.msra.mxu0 0.0
    %3555 = vmatpush.msra.mxu0 0.0
    %3556 = vmatpush.msra.mxu0 0.0
    %3557 = vmatpush.msra.mxu0 0.0
    %3558 = vmatpush.msra.mxu0 0.0
    %3559 = vmatpush.msra.mxu0 %v2492
    %3560 = vmatpush.msra.mxu0 %v2491
    %3561 = vmatpush.msra.mxu0 %v2490
    %3562 = vmatmul.f32.gmra.mxu0 %v3544
    %v3563 = vpop.f32.mrf.mxu0
    %v3564 = vadd.f32 0.0, %v3563
    %3565 = vdwg.mxu0
    %3566 = vmatpush.msra.mxu0 0.0
    %3567 = vmatpush.msra.mxu0 0.0
    %3568 = vmatpush.msra.mxu0 0.0
    %3569 = vmatpush.msra.mxu0 0.0
    %3570 = vmatpush.msra.mxu0 0.0
    %3571 = vmatpush.msra.mxu0 0.0
    %3572 = vmatpush.msra.mxu0 0.0
    %3573 = vmatpush.msra.mxu0 0.0
    %3574 = vmatpush.msra.mxu0 0.0
    %3575 = vmatpush.msra.mxu0 0.0
    %3576 = vmatpush.msra.mxu0 0.0
    %3577 = vmatpush.msra.mxu0 0.0
    %3578 = vmatpush.msra.mxu0 %v2489
    %3579 = vmatpush.msra.mxu0 %v2488
    %3580 = vmatpush.msra.mxu0 %v2487
    %3581 = vmatpush.msra.mxu0 %v2486
    %3582 = vmatmul.f32.gmra.mxu0 %v3441
    %v3583 = vpop.f32.mrf.mxu0
    %v3584 = vadd.f32 0.0, %v3583
    %3585 = vdwg.mxu0
    %v3586 = vadd.f32 %v3584, %v2477
    %v3587 = vadd.f32 %v3584, %v2478
    %v3588 = vadd.f32 %v3584, %v2479
    %v3589 = vadd.f32 %v3584, %v2480
    %v3590 = vadd.f32 %v3584, %v2481
    %v3591 = vadd.f32 %v3584, %v2482
    %v3592 = vadd.f32 %v3584, %v2483
    %v3593 = vadd.f32 %v3584, %v2484
    %v3594 = vtanh.pop %v3586
    %v3595 = vtanh.pop %v3587
    %v3596 = vtanh.pop %v3588
    %v3597 = vtanh.pop %v3589
    %v3598 = vtanh.pop %v3590
    %v3599 = vtanh.pop %v3591
    %v3600 = vtanh.pop %v3592
    %v3601 = vtanh.pop %v3593
    %v3602 = vmul.f32 %v3594, %v2596
    %v3603 = vmul.f32 %v3595, %v2596
    %v3604 = vmul.f32 %v3596, %v2596
    %v3605 = vmul.f32 %v3597, %v2596
    %v3606 = vmul.f32 %v3598, %v2596
    %v3607 = vmul.f32 %v3599, %v2596
    %v3608 = vmul.f32 %v3600, %v2596
    %v3609 = vmul.f32 %v3601, %v2596
    %v3610 = vsel %vm568, %v3602, 0.0
    %3611 = vadd.xlane.f32.xlu0 %v3610
    %v3612 = vpop.xlane.xlu0 %3611
    %v3613 = vsel %vm568, %v3603, 0.0
    %3614 = vadd.xlane.f32.xlu0 %v3613
    %v3615 = vpop.xlane.xlu0 %3614
    %v3616 = vsel %vm568, %v3604, 0.0
    %3617 = vadd.xlane.f32.xlu0 %v3616
    %v3618 = vpop.xlane.xlu0 %3617
    %v3619 = vsel %vm568, %v3605, 0.0
    %3620 = vadd.xlane.f32.xlu0 %v3619
    %v3621 = vpop.xlane.xlu0 %3620
    %v3622 = vsel %vm568, %v3606, 0.0
    %3623 = vadd.xlane.f32.xlu0 %v3622
    %v3624 = vpop.xlane.xlu0 %3623
    %v3625 = vsel %vm568, %v3607, 0.0
    %3626 = vadd.xlane.f32.xlu0 %v3625
    %v3627 = vpop.xlane.xlu0 %3626
    %v3628 = vsel %vm568, %v3608, 0.0
    %3629 = vadd.xlane.f32.xlu0 %v3628
    %v3630 = vpop.xlane.xlu0 %3629
    %v3631 = vsel %vm568, %v3609, 0.0
    %3632 = vadd.xlane.f32.xlu0 %v3631
    %v3633 = vpop.xlane.xlu0 %3632
    %v3642 = vperm.slane %v3612, %v458
    %v3643 = vperm.slane %v3615, %v458
    %v3644 = vperm.slane %v3618, %v458
    %v3645 = vperm.slane %v3621, %v458
    %v3646 = vperm.slane %v3624, %v458
    %v3647 = vperm.slane %v3627, %v458
    %v3648 = vperm.slane %v3630, %v458
    %v3649 = vperm.slane %v3633, %v458
    %v3650 = vsel %vm2646, %v3643, %v3642
    %v3651 = vsel %vm2648, %v3644, %v3650
    %v3652 = vsel %vm2650, %v3645, %v3651
    %v3653 = vsel %vm2652, %v3646, %v3652
    %v3654 = vsel %vm2654, %v3647, %v3653
    %v3655 = vsel %vm2656, %v3648, %v3654
    %v3656 = vsel %vm2658, %v3649, %v3655
    %v3658 = vsel %vm2334, %v3656, -1e+10
    %v3659 = vsel %vm2662, %v3658, -inf
    %v3660 = vrot.slane %v3659, 4
    %v3661 = vmax.f32 %v3659, %v3660
    %v3662 = vrot.slane %v3661, 2
    %v3663 = vmax.f32 %v3661, %v3662
    %v3664 = vrot.slane %v3663, 1
    %v3665 = vmax.f32 %v3663, %v3664
    %v3666 = vsub.f32 %v3658, %v3665
    %v3667 = vmul.f32 %v3666, 1.442695
    %v3668 = vpow.pop %v3667
    %v3669 = vsel %vm2662, %v3668, 0.0
    %v3670 = vrot.slane %v3669, 4
    %v3671 = vadd.f32 %v3669, %v3670
    %v3672 = vrot.slane %v3671, 2
    %v3673 = vadd.f32 %v3671, %v3672
    %v3674 = vrot.slane %v3673, 1
    %v3675 = vadd.f32 %v3673, %v3674
    %v3676 = vrcp.pop %v3675
    %v3677 = vmul.f32 %v3668, %v3676
    %v3678 = vperm.slane %v3677, 0
    %v3679 = vlaneseq
    %v3680 = vshrl.u32 %v3679, 7
    %3682 = vset.pattern.permute.xlu0 %v3680
    %3683 = vperm.xlu0 %3682, %v3678
    %v3684 = vpop.permute.xlu0 %3683
    %v3685 = vperm.slane %v3677, 1
    %v3686 = vlaneseq
    %v3687 = vshrl.u32 %v3686, 7
    %3689 = vset.pattern.permute.xlu0 %v3687
    %3690 = vperm.xlu0 %3689, %v3685
    %v3691 = vpop.permute.xlu0 %3690
    %v3692 = vperm.slane %v3677, 2
    %v3693 = vlaneseq
    %v3694 = vshrl.u32 %v3693, 7
    %3696 = vset.pattern.permute.xlu0 %v3694
    %3697 = vperm.xlu0 %3696, %v3692
    %v3698 = vpop.permute.xlu0 %3697
    %v3699 = vperm.slane %v3677, 3
    %v3700 = vlaneseq
    %v3701 = vshrl.u32 %v3700, 7
    %3703 = vset.pattern.permute.xlu0 %v3701
    %3704 = vperm.xlu0 %3703, %v3699
    %v3705 = vpop.permute.xlu0 %3704
    %v3706 = vperm.slane %v3677, 4
    %v3707 = vlaneseq
    %v3708 = vshrl.u32 %v3707, 7
    %3710 = vset.pattern.permute.xlu0 %v3708
    %3711 = vperm.xlu0 %3710, %v3706
    %v3712 = vpop.permute.xlu0 %3711
    %v3713 = vperm.slane %v3677, 5
    %v3714 = vlaneseq
    %v3715 = vshrl.u32 %v3714, 7
    %3717 = vset.pattern.permute.xlu0 %v3715
    %3718 = vperm.xlu0 %3717, %v3713
    %v3719 = vpop.permute.xlu0 %3718
    %v3720 = vperm.slane %v3677, 6
    %v3721 = vlaneseq
    %v3722 = vshrl.u32 %v3721, 7
    %3724 = vset.pattern.permute.xlu0 %v3722
    %3725 = vperm.xlu0 %3724, %v3720
    %v3726 = vpop.permute.xlu0 %3725
    %v3727 = vperm.slane %v3677, 7
    %v3728 = vlaneseq
    %v3729 = vshrl.u32 %v3728, 7
    %3731 = vset.pattern.permute.xlu0 %v3729
    %3732 = vperm.xlu0 %3731, %v3727
    %v3733 = vpop.permute.xlu0 %3732
    %v3734 = vmul.f32 %v3684, %v2317
    %v3735 = vmul.f32 %v3691, %v2318
    %v3736 = vmul.f32 %v3698, %v2319
    %v3737 = vmul.f32 %v3705, %v2320
    %v3738 = vmul.f32 %v3712, %v2321
    %v3739 = vmul.f32 %v3719, %v2322
    %v3740 = vmul.f32 %v3726, %v2323
    %v3741 = vmul.f32 %v3733, %v2324
    %v3742 = vsel %vm568, %v3734, 0.0
    %v3743 = vsel %vm568, %v3735, 0.0
    %v3744 = vadd.f32 %v3742, %v3743
    %v3745 = vsel %vm568, %v3736, 0.0
    %v3746 = vadd.f32 %v3744, %v3745
    %v3747 = vsel %vm568, %v3737, 0.0
    %v3748 = vadd.f32 %v3746, %v3747
    %v3749 = vsel %vm568, %v3738, 0.0
    %v3750 = vadd.f32 %v3748, %v3749
    %v3751 = vsel %vm568, %v3739, 0.0
    %v3752 = vadd.f32 %v3750, %v3751
    %v3753 = vsel %vm568, %v3740, 0.0
    %v3754 = vadd.f32 %v3752, %v3753
    %v3755 = vsel %vm568, %v3741, 0.0
    %v3756 = vadd.f32 %v3754, %v3755
    %v3757 = vmul.f32 %v3684, %v2325
    %v3758 = vmul.f32 %v3691, %v2326
    %v3759 = vmul.f32 %v3698, %v2327
    %v3760 = vmul.f32 %v3705, %v2328
    %v3761 = vmul.f32 %v3712, %v2329
    %v3762 = vmul.f32 %v3719, %v2330
    %v3763 = vmul.f32 %v3726, %v2331
    %v3764 = vmul.f32 %v3733, %v2332
    %v3765 = vsel %vm568, %v3757, 0.0
    %v3766 = vsel %vm568, %v3758, 0.0
    %v3767 = vadd.f32 %v3765, %v3766
    %v3768 = vsel %vm568, %v3759, 0.0
    %v3769 = vadd.f32 %v3767, %v3768
    %v3770 = vsel %vm568, %v3760, 0.0
    %v3771 = vadd.f32 %v3769, %v3770
    %v3772 = vsel %vm568, %v3761, 0.0
    %v3773 = vadd.f32 %v3771, %v3772
    %v3774 = vsel %vm568, %v3762, 0.0
    %v3775 = vadd.f32 %v3773, %v3774
    %v3776 = vsel %vm568, %v3763, 0.0
    %v3777 = vadd.f32 %v3775, %v3776
    %v3778 = vsel %vm568, %v3764, 0.0
    %v3779 = vadd.f32 %v3777, %v3778
    %v3781 = vsel %vm568, %v3756, 0
    %3783 = vmatpush.msra.mxu0 0.0
    %3784 = vmatpush.msra.mxu0 0.0
    %3785 = vmatpush.msra.mxu0 0.0
    %3786 = vmatpush.msra.mxu0 0.0
    %3787 = vmatpush.msra.mxu0 0.0
    %3788 = vmatpush.msra.mxu0 0.0
    %3789 = vmatpush.msra.mxu0 0.0
    %3790 = vmatpush.msra.mxu0 0.0
    %3791 = vmatpush.msra.mxu0 0.0
    %3792 = vmatpush.msra.mxu0 0.0
    %3793 = vmatpush.msra.mxu0 0.0
    %3794 = vmatpush.msra.mxu0 0.0
    %3795 = vmatpush.msra.mxu0 %v2498
    %3796 = vmatpush.msra.mxu0 %v2497
    %3797 = vmatpush.msra.mxu0 %v2496
    %3798 = vmatpush.msra.mxu0 %v2495
    %3799 = vmatmul.f32.gmra.mxu0 %v3781
    %v3800 = vpop.f32.mrf.mxu0
    %v3801 = vadd.f32 0.0, %v3800
    %3802 = vdwg.mxu0
    %v3804 = vsel %vm541, %v3564, 0
    %3806 = vmatpush.msra.mxu0 0.0
    %3807 = vmatpush.msra.mxu0 0.0
    %3808 = vmatpush.msra.mxu0 0.0
    %3809 = vmatpush.msra.mxu0 0.0
    %3810 = vmatpush.msra.mxu0 0.0
    %3811 = vmatpush.msra.mxu0 0.0
    %3812 = vmatpush.msra.mxu0 0.0
    %3813 = vmatpush.msra.mxu0 0.0
    %3814 = vmatpush.msra.mxu0 0.0
    %3815 = vmatpush.msra.mxu0 0.0
    %3816 = vmatpush.msra.mxu0 0.0
    %3817 = vmatpush.msra.mxu0 0.0
    %3818 = vmatpush.msra.mxu0 0.0
    %3819 = vmatpush.msra.mxu0 0.0
    %3820 = vmatpush.msra.mxu0 %v2494
    %3821 = vmatpush.msra.mxu0 %v2493
    %3822 = vmatmul.f32.gmra.mxu0 %v3804
    %v3823 = vpop.f32.mrf.mxu0
    %v3824 = vadd.f32 %v3801, %v3823
    %3825 = vdwg.mxu0
    %v3827 = vsel %vm568, %v3779, 0
    %3829 = vmatpush.msra.mxu0 0.0
    %3830 = vmatpush.msra.mxu0 0.0
    %3831 = vmatpush.msra.mxu0 0.0
    %3832 = vmatpush.msra.mxu0 0.0
    %3833 = vmatpush.msra.mxu0 0.0
    %3834 = vmatpush.msra.mxu0 0.0
    %3835 = vmatpush.msra.mxu0 0.0
    %3836 = vmatpush.msra.mxu0 0.0
    %3837 = vmatpush.msra.mxu0 0.0
    %3838 = vmatpush.msra.mxu0 0.0
    %3839 = vmatpush.msra.mxu0 0.0
    %3840 = vmatpush.msra.mxu0 0.0
    %3841 = vmatpush.msra.mxu0 %v2502
    %3842 = vmatpush.msra.mxu0 %v2501
    %3843 = vmatpush.msra.mxu0 %v2500
    %3844 = vmatpush.msra.mxu0 %v2499
    %3845 = vmatmul.f32.gmra.mxu0 %v3827
    %v3846 = vpop.f32.mrf.mxu0
    %v3847 = vadd.f32 0.0, %v3846
    %3848 = vdwg.mxu0
    %v3849 = vadd.f32 %v3824, %v3847
    %v3850 = vadd.f32 %v3849, %v2855
    %3851 = vmatpush.msra.mxu0 0.0
    %3852 = vmatpush.msra.mxu0 0.0
    %3853 = vmatpush.msra.mxu0 0.0
    %3854 = vmatpush.msra.mxu0 0.0
    %3855 = vmatpush.msra.mxu0 0.0
    %3856 = vmatpush.msra.mxu0 0.0
    %3857 = vmatpush.msra.mxu0 0.0
    %3858 = vmatpush.msra.mxu0 0.0
    %3859 = vmatpush.msra.mxu0 0.0
    %3860 = vmatpush.msra.mxu0 0.0
    %3861 = vmatpush.msra.mxu0 0.0
    %3862 = vmatpush.msra.mxu0 0.0
    %3863 = vmatpush.msra.mxu0 %v2506
    %3864 = vmatpush.msra.mxu0 %v2505
    %3865 = vmatpush.msra.mxu0 %v2504
    %3866 = vmatpush.msra.mxu0 %v2503
    %3867 = vmatmul.f32.gmra.mxu0 %v3441
    %v3868 = vpop.f32.mrf.mxu0
    %v3869 = vadd.f32 %v2859, %v3868
    %3870 = vdwg.mxu0
    %v3871 = vadd.f32 %v3850, %v3869
    %v3872 = vxor.u32 %v3871, 2147483648
    %v3873 = vmul.f32 %v3872, 1.442695
    %v3874 = vpow.pop %v3873
    %v3875 = vadd.f32 %v3874, 1.0
    %v3876 = vrcp.pop %v3875
    %v3877 = vmul.f32 %v3875, %v3876
    %v3878 = vsub.f32 1.0, %v3877
    %v3879 = vmul.f32 %v3876, %v3878
    %v3880 = vadd.f32 %v3876, %v3879
    %vm3881 = vweird.f32 %v3875
    %vm3882 = vweird.f32 %v3876
    %vm3883 = vmor %vm3881, %vm3882
    %v3884 = vsel %vm3883, %v3876, %v3880
    %v3885 = vand.u32 2147483647, %v3875
    %vm3886 = vcmp.eq.f32.partialorder %v3885, 8.507059e+37
    %v3887 = vand.u32 %v3875, 2147483648
    %v3888 = vor.u32 1.1754944e-38, %v3887
    %v3889 = vsel %vm3886, %v3888, %v3884
    %v3890 = vmul.f32 1.0, %v3889
    %3892 = vrot.lane.b32.xlu0 %v3869, 64
    %v3893 = vpop.permute.xlu0 %3892
    %v3895 = vmul.f32 %v3890, %v3893
    %3897 = vrot.lane.b32.xlu0 %v3895, 64
    %v3898 = vpop.permute.xlu0 %3897
    %v3900 = vadd.f32 %v3850, %v3898
    %v3901 = vtanh.pop %v3900
    %v3902 = vsub.f32 1.0, %v3890
    %3904 = vrot.lane.b32.xlu0 %v3901, 96
    %v3905 = vpop.permute.xlu0 %3904
    %v3907 = vmul.f32 %v3902, %v3905
    %v3908 = vmul.f32 %v3890, %v3417
    %v3909 = vadd.f32 %v3907, %v3908
    %3910 = vmatpush.msra.mxu0 0.0
    %3911 = vmatpush.msra.mxu0 0.0
    %3912 = vmatpush.msra.mxu0 0.0
    %3913 = vmatpush.msra.mxu0 0.0
    %3914 = vmatpush.msra.mxu0 0.0
    %3915 = vmatpush.msra.mxu0 0.0
    %3916 = vmatpush.msra.mxu0 0.0
    %3917 = vmatpush.msra.mxu0 0.0
    %3918 = vmatpush.msra.mxu0 0.0
    %3919 = vmatpush.msra.mxu0 0.0
    %3920 = vmatpush.msra.mxu0 0.0
    %3921 = vmatpush.msra.mxu0 0.0
    %3922 = vmatpush.msra.mxu0 %v2516
    %3923 = vmatpush.msra.mxu0 %v2515
    %3924 = vmatpush.msra.mxu0 %v2514
    %3925 = vmatpush.msra.mxu0 %v2513
    %3926 = vmatmul.f32.gmra.mxu0 %v3781
    %v3927 = vpop.f32.mrf.mxu0
    %v3928 = vadd.f32 0.0, %v3927
    %3929 = vdwg.mxu0
    %3931 = vrot.lane.b32.xlu0 %v3909, 96
    %v3932 = vpop.permute.xlu0 %3931
    %v3933 = vsel %vm568, %v3932, 0
    %3935 = vmatpush.msra.mxu0 0.0
    %3936 = vmatpush.msra.mxu0 0.0
    %3937 = vmatpush.msra.mxu0 0.0
    %3938 = vmatpush.msra.mxu0 0.0
    %3939 = vmatpush.msra.mxu0 0.0
    %3940 = vmatpush.msra.mxu0 0.0
    %3941 = vmatpush.msra.mxu0 0.0
    %3942 = vmatpush.msra.mxu0 0.0
    %3943 = vmatpush.msra.mxu0 0.0
    %3944 = vmatpush.msra.mxu0 0.0
    %3945 = vmatpush.msra.mxu0 0.0
    %3946 = vmatpush.msra.mxu0 0.0
    %3947 = vmatpush.msra.mxu0 %v2512
    %3948 = vmatpush.msra.mxu0 %v2511
    %3949 = vmatpush.msra.mxu0 %v2510
    %3950 = vmatpush.msra.mxu0 %v2509
    %3951 = vmatmul.f32.gmra.mxu0 %v3933
    %v3952 = vpop.f32.mrf.mxu0
    %v3953 = vadd.f32 %v3928, %v3952
    %3954 = vdwg.mxu0
    %3955 = vmatpush.msra.mxu0 0.0
    %3956 = vmatpush.msra.mxu0 0.0
    %3957 = vmatpush.msra.mxu0 0.0
    %3958 = vmatpush.msra.mxu0 0.0
    %3959 = vmatpush.msra.mxu0 0.0
    %3960 = vmatpush.msra.mxu0 0.0
    %3961 = vmatpush.msra.mxu0 0.0
    %3962 = vmatpush.msra.mxu0 0.0
    %3963 = vmatpush.msra.mxu0 0.0
    %3964 = vmatpush.msra.mxu0 0.0
    %3965 = vmatpush.msra.mxu0 0.0
    %3966 = vmatpush.msra.mxu0 0.0
    %3967 = vmatpush.msra.mxu0 %v2520
    %3968 = vmatpush.msra.mxu0 %v2519
    %3969 = vmatpush.msra.mxu0 %v2518
    %3970 = vmatpush.msra.mxu0 %v2517
    %3971 = vmatmul.f32.gmra.mxu0 %v3827
    %v3972 = vpop.f32.mrf.mxu0
    %v3973 = vadd.f32 0.0, %v3972
    %3974 = vdwg.mxu0
    %v3975 = vadd.f32 %v3953, %v3973
    %3976 = vmatpush.msra.mxu0 0.0
    %3977 = vmatpush.msra.mxu0 0.0
    %3978 = vmatpush.msra.mxu0 0.0
    %3979 = vmatpush.msra.mxu0 0.0
    %3980 = vmatpush.msra.mxu0 0.0
    %3981 = vmatpush.msra.mxu0 0.0
    %3982 = vmatpush.msra.mxu0 0.0
    %3983 = vmatpush.msra.mxu0 0.0
    %3984 = vmatpush.msra.mxu0 0.0
    %3985 = vmatpush.msra.mxu0 0.0
    %3986 = vmatpush.msra.mxu0 0.0
    %3987 = vmatpush.msra.mxu0 0.0
    %3988 = vmatpush.msra.mxu0 0.0
    %3989 = vmatpush.msra.mxu0 0.0
    %3990 = vmatpush.msra.mxu0 %v2522
    %3991 = vmatpush.msra.mxu0 %v2521
    %3992 = vmatmul.f32.gmra.mxu0 %v3804
    %v3993 = vpop.f32.mrf.mxu0
    %v3994 = vadd.f32 0.0, %v3993
    %3995 = vdwg.mxu0
    %v3996 = vadd.f32 %v3975, %v3994
    %v3997 = vadd.f32 %v3996, %v3011
    %s3998 = scalar_lea.vmem [#allocation38], 24
    %3999 = vst [vmem:[%s3998] sm:$0xff] %v3997
    %v4000 = vsel %vm2524, %v3997, -1e+30
    %4001 = vmax.xlane.f32.xlu0 %v4000
    %v4002 = vpop.xlane.xlu0 %4001
    %vm4003 = vcmp.eq.f32.partialorder %v4000, %v4002
    %vm4004 = vmand %vm4003, %vm2524
    %v4005 = vsel %vm4004, %v458, 128
    %v4006 = vand.u32 %v4005, 65535
    %v4007 = vshra.s32 %v4005, 16
    %v4008 = vcvt.s32.f32 %v4006
    %v4009 = vcvt.s32.f32 %v4007
    %4010 = vmin.xlane.f32.xlu0 %v4009
    %v4011 = vpop.xlane.xlu0 %4010
    %vm4012 = vcmp.eq.f32.partialorder %v4009, %v4011
    %v4013 = vsel %vm4012, %v4008, inf
    %4014 = vmin.xlane.f32.xlu0 %v4013
    %v4015 = vpop.xlane.xlu0 %4014
    %v4016 = vcvt.f32.s32 %v4015
    %v4017 = vcvt.f32.s32 %v4011
    %v4018 = vshll.u32 %v4017, 16
    %v4019 = vadd.s32 %v4018, %v4016
    %vm4020 = vcmp.eq.s32.totalorder %v458, %v4019
    %v4021 = vsel %vm4020, 1, 0
    %v4022 = vcvt.s32.f32 %v4021
    %4023 = vset.pattern.permute.xlu0 3
    %4024 = vperm.xlu0 %4023, %v452
    %v4025 = vpop.permute.xlu0 %4024
    %vm4026 = vcmp.eq.s32.totalorder %v4025, %v458
    %v4027 = vsel %vm4026, 1, 0
    %v4028 = vcvt.s32.f32 %v4027
    %s4029 = sld [smem:[#allocation4 + $0x3]]
    %p4030 = scmp.ne.s32.totalorder %s4029, 0
    %s4031 = scalar_select %p4030, 1, 0
    %v4032 = vstv %s4031
    %vm4033 = vcmp.eq.s32.totalorder %v4032, 1
    %v4034 = vsel %vm4033, %v4028, %v4022
    %v4036 = vsel %vm2532, %v4034, 0
    %4038 = vmatpush.msra.mxu0 0.0
    %4039 = vmatpush.msra.mxu0 0.0
    %4040 = vmatpush.msra.mxu0 0.0
    %4041 = vmatpush.msra.mxu0 0.0
    %4042 = vmatpush.msra.mxu0 0.0
    %4043 = vmatpush.msra.mxu0 0.0
    %4044 = vmatpush.msra.mxu0 0.0
    %4045 = vmatpush.msra.mxu0 0.0
    %4046 = vmatpush.msra.mxu0 0.0
    %4047 = vmatpush.msra.mxu0 0.0
    %4048 = vmatpush.msra.mxu0 0.0
    %4049 = vmatpush.msra.mxu0 0.0
    %4050 = vmatpush.msra.mxu0 0.0
    %4051 = vmatpush.msra.mxu0 %v2492
    %4052 = vmatpush.msra.mxu0 %v2491
    %4053 = vmatpush.msra.mxu0 %v2490
    %4054 = vmatmul.f32.gmra.mxu0 %v4036
    %v4055 = vpop.f32.mrf.mxu0
    %v4056 = vadd.f32 0.0, %v4055
    %4057 = vdwg.mxu0
    %4058 = vmatpush.msra.mxu0 0.0
    %4059 = vmatpush.msra.mxu0 0.0
    %4060 = vmatpush.msra.mxu0 0.0
    %4061 = vmatpush.msra.mxu0 0.0
    %4062 = vmatpush.msra.mxu0 0.0
    %4063 = vmatpush.msra.mxu0 0.0
    %4064 = vmatpush.msra.mxu0 0.0
    %4065 = vmatpush.msra.mxu0 0.0
    %4066 = vmatpush.msra.mxu0 0.0
    %4067 = vmatpush.msra.mxu0 0.0
    %4068 = vmatpush.msra.mxu0 0.0
    %4069 = vmatpush.msra.mxu0 0.0
    %4070 = vmatpush.msra.mxu0 %v2489
    %4071 = vmatpush.msra.mxu0 %v2488
    %4072 = vmatpush.msra.mxu0 %v2487
    %4073 = vmatpush.msra.mxu0 %v2486
    %4074 = vmatmul.f32.gmra.mxu0 %v3933
    %v4075 = vpop.f32.mrf.mxu0
    %v4076 = vadd.f32 0.0, %v4075
    %4077 = vdwg.mxu0
    %v4078 = vadd.f32 %v4076, %v2477
    %v4079 = vadd.f32 %v4076, %v2478
    %v4080 = vadd.f32 %v4076, %v2479
    %v4081 = vadd.f32 %v4076, %v2480
    %v4082 = vadd.f32 %v4076, %v2481
    %v4083 = vadd.f32 %v4076, %v2482
    %v4084 = vadd.f32 %v4076, %v2483
    %v4085 = vadd.f32 %v4076, %v2484
    %v4086 = vtanh.pop %v4078
    %v4087 = vtanh.pop %v4079
    %v4088 = vtanh.pop %v4080
    %v4089 = vtanh.pop %v4081
    %v4090 = vtanh.pop %v4082
    %v4091 = vtanh.pop %v4083
    %v4092 = vtanh.pop %v4084
    %v4093 = vtanh.pop %v4085
    %v4094 = vmul.f32 %v4086, %v2596
    %v4095 = vmul.f32 %v4087, %v2596
    %v4096 = vmul.f32 %v4088, %v2596
    %v4097 = vmul.f32 %v4089, %v2596
    %v4098 = vmul.f32 %v4090, %v2596
    %v4099 = vmul.f32 %v4091, %v2596
    %v4100 = vmul.f32 %v4092, %v2596
    %v4101 = vmul.f32 %v4093, %v2596
    %v4102 = vsel %vm568, %v4094, 0.0
    %4103 = vadd.xlane.f32.xlu0 %v4102
    %v4104 = vpop.xlane.xlu0 %4103
    %v4105 = vsel %vm568, %v4095, 0.0
    %4106 = vadd.xlane.f32.xlu0 %v4105
    %v4107 = vpop.xlane.xlu0 %4106
    %v4108 = vsel %vm568, %v4096, 0.0
    %4109 = vadd.xlane.f32.xlu0 %v4108
    %v4110 = vpop.xlane.xlu0 %4109
    %v4111 = vsel %vm568, %v4097, 0.0
    %4112 = vadd.xlane.f32.xlu0 %v4111
    %v4113 = vpop.xlane.xlu0 %4112
    %v4114 = vsel %vm568, %v4098, 0.0
    %4115 = vadd.xlane.f32.xlu0 %v4114
    %v4116 = vpop.xlane.xlu0 %4115
    %v4117 = vsel %vm568, %v4099, 0.0
    %4118 = vadd.xlane.f32.xlu0 %v4117
    %v4119 = vpop.xlane.xlu0 %4118
    %v4120 = vsel %vm568, %v4100, 0.0
    %4121 = vadd.xlane.f32.xlu0 %v4120
    %v4122 = vpop.xlane.xlu0 %4121
    %v4123 = vsel %vm568, %v4101, 0.0
    %4124 = vadd.xlane.f32.xlu0 %v4123
    %v4125 = vpop.xlane.xlu0 %4124
    %v4134 = vperm.slane %v4104, %v458
    %v4135 = vperm.slane %v4107, %v458
    %v4136 = vperm.slane %v4110, %v458
    %v4137 = vperm.slane %v4113, %v458
    %v4138 = vperm.slane %v4116, %v458
    %v4139 = vperm.slane %v4119, %v458
    %v4140 = vperm.slane %v4122, %v458
    %v4141 = vperm.slane %v4125, %v458
    %v4142 = vsel %vm2646, %v4135, %v4134
    %v4143 = vsel %vm2648, %v4136, %v4142
    %v4144 = vsel %vm2650, %v4137, %v4143
    %v4145 = vsel %vm2652, %v4138, %v4144
    %v4146 = vsel %vm2654, %v4139, %v4145
    %v4147 = vsel %vm2656, %v4140, %v4146
    %v4148 = vsel %vm2658, %v4141, %v4147
    %v4150 = vsel %vm2334, %v4148, -1e+10
    %v4151 = vsel %vm2662, %v4150, -inf
    %v4152 = vrot.slane %v4151, 4
    %v4153 = vmax.f32 %v4151, %v4152
    %v4154 = vrot.slane %v4153, 2
    %v4155 = vmax.f32 %v4153, %v4154
    %v4156 = vrot.slane %v4155, 1
    %v4157 = vmax.f32 %v4155, %v4156
    %v4158 = vsub.f32 %v4150, %v4157
    %v4159 = vmul.f32 %v4158, 1.442695
    %v4160 = vpow.pop %v4159
    %v4161 = vsel %vm2662, %v4160, 0.0
    %v4162 = vrot.slane %v4161, 4
    %v4163 = vadd.f32 %v4161, %v4162
    %v4164 = vrot.slane %v4163, 2
    %v4165 = vadd.f32 %v4163, %v4164
    %v4166 = vrot.slane %v4165, 1
    %v4167 = vadd.f32 %v4165, %v4166
    %v4168 = vrcp.pop %v4167
    %v4169 = vmul.f32 %v4160, %v4168
    %v4170 = vperm.slane %v4169, 0
    %v4171 = vlaneseq
    %v4172 = vshrl.u32 %v4171, 7
    %4174 = vset.pattern.permute.xlu0 %v4172
    %4175 = vperm.xlu0 %4174, %v4170
    %v4176 = vpop.permute.xlu0 %4175
    %v4177 = vperm.slane %v4169, 1
    %v4178 = vlaneseq
    %v4179 = vshrl.u32 %v4178, 7
    %4181 = vset.pattern.permute.xlu0 %v4179
    %4182 = vperm.xlu0 %4181, %v4177
    %v4183 = vpop.permute.xlu0 %4182
    %v4184 = vperm.slane %v4169, 2
    %v4185 = vlaneseq
    %v4186 = vshrl.u32 %v4185, 7
    %4188 = vset.pattern.permute.xlu0 %v4186
    %4189 = vperm.xlu0 %4188, %v4184
    %v4190 = vpop.permute.xlu0 %4189
    %v4191 = vperm.slane %v4169, 3
    %v4192 = vlaneseq
    %v4193 = vshrl.u32 %v4192, 7
    %4195 = vset.pattern.permute.xlu0 %v4193
    %4196 = vperm.xlu0 %4195, %v4191
    %v4197 = vpop.permute.xlu0 %4196
    %v4198 = vperm.slane %v4169, 4
    %v4199 = vlaneseq
    %v4200 = vshrl.u32 %v4199, 7
    %4202 = vset.pattern.permute.xlu0 %v4200
    %4203 = vperm.xlu0 %4202, %v4198
    %v4204 = vpop.permute.xlu0 %4203
    %v4205 = vperm.slane %v4169, 5
    %v4206 = vlaneseq
    %v4207 = vshrl.u32 %v4206, 7
    %4209 = vset.pattern.permute.xlu0 %v4207
    %4210 = vperm.xlu0 %4209, %v4205
    %v4211 = vpop.permute.xlu0 %4210
    %v4212 = vperm.slane %v4169, 6
    %v4213 = vlaneseq
    %v4214 = vshrl.u32 %v4213, 7
    %4216 = vset.pattern.permute.xlu0 %v4214
    %4217 = vperm.xlu0 %4216, %v4212
    %v4218 = vpop.permute.xlu0 %4217
    %v4219 = vperm.slane %v4169, 7
    %v4220 = vlaneseq
    %v4221 = vshrl.u32 %v4220, 7
    %4223 = vset.pattern.permute.xlu0 %v4221
    %4224 = vperm.xlu0 %4223, %v4219
    %v4225 = vpop.permute.xlu0 %4224
    %v4226 = vmul.f32 %v4176, %v2317
    %v4227 = vmul.f32 %v4183, %v2318
    %v4228 = vmul.f32 %v4190, %v2319
    %v4229 = vmul.f32 %v4197, %v2320
    %v4230 = vmul.f32 %v4204, %v2321
    %v4231 = vmul.f32 %v4211, %v2322
    %v4232 = vmul.f32 %v4218, %v2323
    %v4233 = vmul.f32 %v4225, %v2324
    %v4234 = vsel %vm568, %v4226, 0.0
    %v4235 = vsel %vm568, %v4227, 0.0
    %v4236 = vadd.f32 %v4234, %v4235
    %v4237 = vsel %vm568, %v4228, 0.0
    %v4238 = vadd.f32 %v4236, %v4237
    %v4239 = vsel %vm568, %v4229, 0.0
    %v4240 = vadd.f32 %v4238, %v4239
    %v4241 = vsel %vm568, %v4230, 0.0
    %v4242 = vadd.f32 %v4240, %v4241
    %v4243 = vsel %vm568, %v4231, 0.0
    %v4244 = vadd.f32 %v4242, %v4243
    %v4245 = vsel %vm568, %v4232, 0.0
    %v4246 = vadd.f32 %v4244, %v4245
    %v4247 = vsel %vm568, %v4233, 0.0
    %v4248 = vadd.f32 %v4246, %v4247
    %v4249 = vmul.f32 %v4176, %v2325
    %v4250 = vmul.f32 %v4183, %v2326
    %v4251 = vmul.f32 %v4190, %v2327
    %v4252 = vmul.f32 %v4197, %v2328
    %v4253 = vmul.f32 %v4204, %v2329
    %v4254 = vmul.f32 %v4211, %v2330
    %v4255 = vmul.f32 %v4218, %v2331
    %v4256 = vmul.f32 %v4225, %v2332
    %v4257 = vsel %vm568, %v4249, 0.0
    %v4258 = vsel %vm568, %v4250, 0.0
    %v4259 = vadd.f32 %v4257, %v4258
    %v4260 = vsel %vm568, %v4251, 0.0
    %v4261 = vadd.f32 %v4259, %v4260
    %v4262 = vsel %vm568, %v4252, 0.0
    %v4263 = vadd.f32 %v4261, %v4262
    %v4264 = vsel %vm568, %v4253, 0.0
    %v4265 = vadd.f32 %v4263, %v4264
    %v4266 = vsel %vm568, %v4254, 0.0
    %v4267 = vadd.f32 %v4265, %v4266
    %v4268 = vsel %vm568, %v4255, 0.0
    %v4269 = vadd.f32 %v4267, %v4268
    %v4270 = vsel %vm568, %v4256, 0.0
    %v4271 = vadd.f32 %v4269, %v4270
    %v4273 = vsel %vm568, %v4248, 0
    %4275 = vmatpush.msra.mxu0 0.0
    %4276 = vmatpush.msra.mxu0 0.0
    %4277 = vmatpush.msra.mxu0 0.0
    %4278 = vmatpush.msra.mxu0 0.0
    %4279 = vmatpush.msra.mxu0 0.0
    %4280 = vmatpush.msra.mxu0 0.0
    %4281 = vmatpush.msra.mxu0 0.0
    %4282 = vmatpush.msra.mxu0 0.0
    %4283 = vmatpush.msra.mxu0 0.0
    %4284 = vmatpush.msra.mxu0 0.0
    %4285 = vmatpush.msra.mxu0 0.0
    %4286 = vmatpush.msra.mxu0 0.0
    %4287 = vmatpush.msra.mxu0 %v2498
    %4288 = vmatpush.msra.mxu0 %v2497
    %4289 = vmatpush.msra.mxu0 %v2496
    %4290 = vmatpush.msra.mxu0 %v2495
    %4291 = vmatmul.f32.gmra.mxu0 %v4273
    %v4292 = vpop.f32.mrf.mxu0
    %v4293 = vadd.f32 0.0, %v4292
    %4294 = vdwg.mxu0
    %v4296 = vsel %vm541, %v4056, 0
    %4298 = vmatpush.msra.mxu0 0.0
    %4299 = vmatpush.msra.mxu0 0.0
    %4300 = vmatpush.msra.mxu0 0.0
    %4301 = vmatpush.msra.mxu0 0.0
    %4302 = vmatpush.msra.mxu0 0.0
    %4303 = vmatpush.msra.mxu0 0.0
    %4304 = vmatpush.msra.mxu0 0.0
    %4305 = vmatpush.msra.mxu0 0.0
    %4306 = vmatpush.msra.mxu0 0.0
    %4307 = vmatpush.msra.mxu0 0.0
    %4308 = vmatpush.msra.mxu0 0.0
    %4309 = vmatpush.msra.mxu0 0.0
    %4310 = vmatpush.msra.mxu0 0.0
    %4311 = vmatpush.msra.mxu0 0.0
    %4312 = vmatpush.msra.mxu0 %v2494
    %4313 = vmatpush.msra.mxu0 %v2493
    %4314 = vmatmul.f32.gmra.mxu0 %v4296
    %v4315 = vpop.f32.mrf.mxu0
    %v4316 = vadd.f32 %v4293, %v4315
    %4317 = vdwg.mxu0
    %v4319 = vsel %vm568, %v4271, 0
    %4321 = vmatpush.msra.mxu0 0.0
    %4322 = vmatpush.msra.mxu0 0.0
    %4323 = vmatpush.msra.mxu0 0.0
    %4324 = vmatpush.msra.mxu0 0.0
    %4325 = vmatpush.msra.mxu0 0.0
    %4326 = vmatpush.msra.mxu0 0.0
    %4327 = vmatpush.msra.mxu0 0.0
    %4328 = vmatpush.msra.mxu0 0.0
    %4329 = vmatpush.msra.mxu0 0.0
    %4330 = vmatpush.msra.mxu0 0.0
    %4331 = vmatpush.msra.mxu0 0.0
    %4332 = vmatpush.msra.mxu0 0.0
    %4333 = vmatpush.msra.mxu0 %v2502
    %4334 = vmatpush.msra.mxu0 %v2501
    %4335 = vmatpush.msra.mxu0 %v2500
    %4336 = vmatpush.msra.mxu0 %v2499
    %4337 = vmatmul.f32.gmra.mxu0 %v4319
    %v4338 = vpop.f32.mrf.mxu0
    %v4339 = vadd.f32 0.0, %v4338
    %4340 = vdwg.mxu0
    %v4341 = vadd.f32 %v4316, %v4339
    %v4342 = vadd.f32 %v4341, %v2855
    %4343 = vmatpush.msra.mxu0 0.0
    %4344 = vmatpush.msra.mxu0 0.0
    %4345 = vmatpush.msra.mxu0 0.0
    %4346 = vmatpush.msra.mxu0 0.0
    %4347 = vmatpush.msra.mxu0 0.0
    %4348 = vmatpush.msra.mxu0 0.0
    %4349 = vmatpush.msra.mxu0 0.0
    %4350 = vmatpush.msra.mxu0 0.0
    %4351 = vmatpush.msra.mxu0 0.0
    %4352 = vmatpush.msra.mxu0 0.0
    %4353 = vmatpush.msra.mxu0 0.0
    %4354 = vmatpush.msra.mxu0 0.0
    %4355 = vmatpush.msra.mxu0 %v2506
    %4356 = vmatpush.msra.mxu0 %v2505
    %4357 = vmatpush.msra.mxu0 %v2504
    %4358 = vmatpush.msra.mxu0 %v2503
    %4359 = vmatmul.f32.gmra.mxu0 %v3933
    %v4360 = vpop.f32.mrf.mxu0
    %v4361 = vadd.f32 %v2859, %v4360
    %4362 = vdwg.mxu0
    %v4363 = vadd.f32 %v4342, %v4361
    %v4364 = vxor.u32 %v4363, 2147483648
    %v4365 = vmul.f32 %v4364, 1.442695
    %v4366 = vpow.pop %v4365
    %v4367 = vadd.f32 %v4366, 1.0
    %v4368 = vrcp.pop %v4367
    %v4369 = vmul.f32 %v4367, %v4368
    %v4370 = vsub.f32 1.0, %v4369
    %v4371 = vmul.f32 %v4368, %v4370
    %v4372 = vadd.f32 %v4368, %v4371
    %vm4373 = vweird.f32 %v4367
    %vm4374 = vweird.f32 %v4368
    %vm4375 = vmor %vm4373, %vm4374
    %v4376 = vsel %vm4375, %v4368, %v4372
    %v4377 = vand.u32 2147483647, %v4367
    %vm4378 = vcmp.eq.f32.partialorder %v4377, 8.507059e+37
    %v4379 = vand.u32 %v4367, 2147483648
    %v4380 = vor.u32 1.1754944e-38, %v4379
    %v4381 = vsel %vm4378, %v4380, %v4376
    %v4382 = vmul.f32 1.0, %v4381
    %4384 = vrot.lane.b32.xlu0 %v4361, 64
    %v4385 = vpop.permute.xlu0 %4384
    %v4387 = vmul.f32 %v4382, %v4385
    %4389 = vrot.lane.b32.xlu0 %v4387, 64
    %v4390 = vpop.permute.xlu0 %4389
    %v4392 = vadd.f32 %v4342, %v4390
    %v4393 = vtanh.pop %v4392
    %v4394 = vsub.f32 1.0, %v4382
    %4396 = vrot.lane.b32.xlu0 %v4393, 96
    %v4397 = vpop.permute.xlu0 %4396
    %v4399 = vmul.f32 %v4394, %v4397
    %v4400 = vmul.f32 %v4382, %v3909
    %v4401 = vadd.f32 %v4399, %v4400
    %4402 = vmatpush.msra.mxu0 0.0
    %4403 = vmatpush.msra.mxu0 0.0
    %4404 = vmatpush.msra.mxu0 0.0
    %4405 = vmatpush.msra.mxu0 0.0
    %4406 = vmatpush.msra.mxu0 0.0
    %4407 = vmatpush.msra.mxu0 0.0
    %4408 = vmatpush.msra.mxu0 0.0
    %4409 = vmatpush.msra.mxu0 0.0
    %4410 = vmatpush.msra.mxu0 0.0
    %4411 = vmatpush.msra.mxu0 0.0
    %4412 = vmatpush.msra.mxu0 0.0
    %4413 = vmatpush.msra.mxu0 0.0
    %4414 = vmatpush.msra.mxu0 %v2516
    %4415 = vmatpush.msra.mxu0 %v2515
    %4416 = vmatpush.msra.mxu0 %v2514
    %4417 = vmatpush.msra.mxu0 %v2513
    %4418 = vmatmul.f32.gmra.mxu0 %v4273
    %v4419 = vpop.f32.mrf.mxu0
    %v4420 = vadd.f32 0.0, %v4419
    %4421 = vdwg.mxu0
    %4423 = vrot.lane.b32.xlu0 %v4401, 96
    %v4424 = vpop.permute.xlu0 %4423
    %v4425 = vsel %vm568, %v4424, 0
    %4427 = vmatpush.msra.mxu0 0.0
    %4428 = vmatpush.msra.mxu0 0.0
    %4429 = vmatpush.msra.mxu0 0.0
    %4430 = vmatpush.msra.mxu0 0.0
    %4431 = vmatpush.msra.mxu0 0.0
    %4432 = vmatpush.msra.mxu0 0.0
    %4433 = vmatpush.msra.mxu0 0.0
    %4434 = vmatpush.msra.mxu0 0.0
    %4435 = vmatpush.msra.mxu0 0.0
    %4436 = vmatpush.msra.mxu0 0.0
    %4437 = vmatpush.msra.mxu0 0.0
    %4438 = vmatpush.msra.mxu0 0.0
    %4439 = vmatpush.msra.mxu0 %v2512
    %4440 = vmatpush.msra.mxu0 %v2511
    %4441 = vmatpush.msra.mxu0 %v2510
    %4442 = vmatpush.msra.mxu0 %v2509
    %4443 = vmatmul.f32.gmra.mxu0 %v4425
    %v4444 = vpop.f32.mrf.mxu0
    %v4445 = vadd.f32 %v4420, %v4444
    %4446 = vdwg.mxu0
    %4447 = vmatpush.msra.mxu0 0.0
    %4448 = vmatpush.msra.mxu0 0.0
    %4449 = vmatpush.msra.mxu0 0.0
    %4450 = vmatpush.msra.mxu0 0.0
    %4451 = vmatpush.msra.mxu0 0.0
    %4452 = vmatpush.msra.mxu0 0.0
    %4453 = vmatpush.msra.mxu0 0.0
    %4454 = vmatpush.msra.mxu0 0.0
    %4455 = vmatpush.msra.mxu0 0.0
    %4456 = vmatpush.msra.mxu0 0.0
    %4457 = vmatpush.msra.mxu0 0.0
    %4458 = vmatpush.msra.mxu0 0.0
    %4459 = vmatpush.msra.mxu0 %v2520
    %4460 = vmatpush.msra.mxu0 %v2519
    %4461 = vmatpush.msra.mxu0 %v2518
    %4462 = vmatpush.msra.mxu0 %v2517
    %4463 = vmatmul.f32.gmra.mxu0 %v4319
    %v4464 = vpop.f32.mrf.mxu0
    %v4465 = vadd.f32 0.0, %v4464
    %4466 = vdwg.mxu0
    %v4467 = vadd.f32 %v4445, %v4465
    %4468 = vmatpush.msra.mxu0 0.0
    %4469 = vmatpush.msra.mxu0 0.0
    %4470 = vmatpush.msra.mxu0 0.0
    %4471 = vmatpush.msra.mxu0 0.0
    %4472 = vmatpush.msra.mxu0 0.0
    %4473 = vmatpush.msra.mxu0 0.0
    %4474 = vmatpush.msra.mxu0 0.0
    %4475 = vmatpush.msra.mxu0 0.0
    %4476 = vmatpush.msra.mxu0 0.0
    %4477 = vmatpush.msra.mxu0 0.0
    %4478 = vmatpush.msra.mxu0 0.0
    %4479 = vmatpush.msra.mxu0 0.0
    %4480 = vmatpush.msra.mxu0 0.0
    %4481 = vmatpush.msra.mxu0 0.0
    %4482 = vmatpush.msra.mxu0 %v2522
    %4483 = vmatpush.msra.mxu0 %v2521
    %4484 = vmatmul.f32.gmra.mxu0 %v4296
    %v4485 = vpop.f32.mrf.mxu0
    %v4486 = vadd.f32 0.0, %v4485
    %4487 = vdwg.mxu0
    %v4488 = vadd.f32 %v4467, %v4486
    %v4489 = vadd.f32 %v4488, %v3011
    %s4490 = scalar_lea.vmem [#allocation38], 32
    %4491 = vst [vmem:[%s4490] sm:$0xff] %v4489
    %v4492 = vsel %vm2524, %v4489, -1e+30
    %4493 = vmax.xlane.f32.xlu0 %v4492
    %v4494 = vpop.xlane.xlu0 %4493
    %vm4495 = vcmp.eq.f32.partialorder %v4492, %v4494
    %vm4496 = vmand %vm4495, %vm2524
    %v4497 = vsel %vm4496, %v458, 128
    %v4498 = vand.u32 %v4497, 65535
    %v4499 = vshra.s32 %v4497, 16
    %v4500 = vcvt.s32.f32 %v4498
    %v4501 = vcvt.s32.f32 %v4499
    %4502 = vmin.xlane.f32.xlu0 %v4501
    %v4503 = vpop.xlane.xlu0 %4502
    %vm4504 = vcmp.eq.f32.partialorder %v4501, %v4503
    %v4505 = vsel %vm4504, %v4500, inf
    %4506 = vmin.xlane.f32.xlu0 %v4505
    %v4507 = vpop.xlane.xlu0 %4506
    %v4508 = vcvt.f32.s32 %v4507
    %v4509 = vcvt.f32.s32 %v4503
    %v4510 = vshll.u32 %v4509, 16
    %v4511 = vadd.s32 %v4510, %v4508
    %vm4512 = vcmp.eq.s32.totalorder %v458, %v4511
    %v4513 = vsel %vm4512, 1, 0
    %v4514 = vcvt.s32.f32 %v4513
    %4515 = vset.pattern.permute.xlu0 4
    %4516 = vperm.xlu0 %4515, %v452
    %v4517 = vpop.permute.xlu0 %4516
    %vm4518 = vcmp.eq.s32.totalorder %v4517, %v458
    %v4519 = vsel %vm4518, 1, 0
    %v4520 = vcvt.s32.f32 %v4519
    %s4521 = sld [smem:[#allocation4 + $0x4]]
    %p4522 = scmp.ne.s32.totalorder %s4521, 0
    %s4523 = scalar_select %p4522, 1, 0
    %v4524 = vstv %s4523
    %vm4525 = vcmp.eq.s32.totalorder %v4524, 1
    %v4526 = vsel %vm4525, %v4520, %v4514
    %v4528 = vsel %vm2532, %v4526, 0
    %4530 = vmatpush.msra.mxu0 0.0
    %4531 = vmatpush.msra.mxu0 0.0
    %4532 = vmatpush.msra.mxu0 0.0
    %4533 = vmatpush.msra.mxu0 0.0
    %4534 = vmatpush.msra.mxu0 0.0
    %4535 = vmatpush.msra.mxu0 0.0
    %4536 = vmatpush.msra.mxu0 0.0
    %4537 = vmatpush.msra.mxu0 0.0
    %4538 = vmatpush.msra.mxu0 0.0
    %4539 = vmatpush.msra.mxu0 0.0
    %4540 = vmatpush.msra.mxu0 0.0
    %4541 = vmatpush.msra.mxu0 0.0
    %4542 = vmatpush.msra.mxu0 0.0
    %4543 = vmatpush.msra.mxu0 %v2492
    %4544 = vmatpush.msra.mxu0 %v2491
    %4545 = vmatpush.msra.mxu0 %v2490
    %4546 = vmatmul.f32.gmra.mxu0 %v4528
    %v4547 = vpop.f32.mrf.mxu0
    %v4548 = vadd.f32 0.0, %v4547
    %4549 = vdwg.mxu0
    %4550 = vmatpush.msra.mxu0 0.0
    %4551 = vmatpush.msra.mxu0 0.0
    %4552 = vmatpush.msra.mxu0 0.0
    %4553 = vmatpush.msra.mxu0 0.0
    %4554 = vmatpush.msra.mxu0 0.0
    %4555 = vmatpush.msra.mxu0 0.0
    %4556 = vmatpush.msra.mxu0 0.0
    %4557 = vmatpush.msra.mxu0 0.0
    %4558 = vmatpush.msra.mxu0 0.0
    %4559 = vmatpush.msra.mxu0 0.0
    %4560 = vmatpush.msra.mxu0 0.0
    %4561 = vmatpush.msra.mxu0 0.0
    %4562 = vmatpush.msra.mxu0 %v2489
    %4563 = vmatpush.msra.mxu0 %v2488
    %4564 = vmatpush.msra.mxu0 %v2487
    %4565 = vmatpush.msra.mxu0 %v2486
    %4566 = vmatmul.f32.gmra.mxu0 %v4425
    %v4567 = vpop.f32.mrf.mxu0
    %v4568 = vadd.f32 0.0, %v4567
    %4569 = vdwg.mxu0
    %v4570 = vadd.f32 %v4568, %v2477
    %v4571 = vadd.f32 %v4568, %v2478
    %v4572 = vadd.f32 %v4568, %v2479
    %v4573 = vadd.f32 %v4568, %v2480
    %v4574 = vadd.f32 %v4568, %v2481
    %v4575 = vadd.f32 %v4568, %v2482
    %v4576 = vadd.f32 %v4568, %v2483
    %v4577 = vadd.f32 %v4568, %v2484
    %v4578 = vtanh.pop %v4570
    %v4579 = vtanh.pop %v4571
    %v4580 = vtanh.pop %v4572
    %v4581 = vtanh.pop %v4573
    %v4582 = vtanh.pop %v4574
    %v4583 = vtanh.pop %v4575
    %v4584 = vtanh.pop %v4576
    %v4585 = vtanh.pop %v4577
    %v4586 = vmul.f32 %v4578, %v2596
    %v4587 = vmul.f32 %v4579, %v2596
    %v4588 = vmul.f32 %v4580, %v2596
    %v4589 = vmul.f32 %v4581, %v2596
    %v4590 = vmul.f32 %v4582, %v2596
    %v4591 = vmul.f32 %v4583, %v2596
    %v4592 = vmul.f32 %v4584, %v2596
    %v4593 = vmul.f32 %v4585, %v2596
    %v4594 = vsel %vm568, %v4586, 0.0
    %4595 = vadd.xlane.f32.xlu0 %v4594
    %v4596 = vpop.xlane.xlu0 %4595
    %v4597 = vsel %vm568, %v4587, 0.0
    %4598 = vadd.xlane.f32.xlu0 %v4597
    %v4599 = vpop.xlane.xlu0 %4598
    %v4600 = vsel %vm568, %v4588, 0.0
    %4601 = vadd.xlane.f32.xlu0 %v4600
    %v4602 = vpop.xlane.xlu0 %4601
    %v4603 = vsel %vm568, %v4589, 0.0
    %4604 = vadd.xlane.f32.xlu0 %v4603
    %v4605 = vpop.xlane.xlu0 %4604
    %v4606 = vsel %vm568, %v4590, 0.0
    %4607 = vadd.xlane.f32.xlu0 %v4606
    %v4608 = vpop.xlane.xlu0 %4607
    %v4609 = vsel %vm568, %v4591, 0.0
    %4610 = vadd.xlane.f32.xlu0 %v4609
    %v4611 = vpop.xlane.xlu0 %4610
    %v4612 = vsel %vm568, %v4592, 0.0
    %4613 = vadd.xlane.f32.xlu0 %v4612
    %v4614 = vpop.xlane.xlu0 %4613
    %v4615 = vsel %vm568, %v4593, 0.0
    %4616 = vadd.xlane.f32.xlu0 %v4615
    %v4617 = vpop.xlane.xlu0 %4616
    %v4626 = vperm.slane %v4596, %v458
    %v4627 = vperm.slane %v4599, %v458
    %v4628 = vperm.slane %v4602, %v458
    %v4629 = vperm.slane %v4605, %v458
    %v4630 = vperm.slane %v4608, %v458
    %v4631 = vperm.slane %v4611, %v458
    %v4632 = vperm.slane %v4614, %v458
    %v4633 = vperm.slane %v4617, %v458
    %v4634 = vsel %vm2646, %v4627, %v4626
    %v4635 = vsel %vm2648, %v4628, %v4634
    %v4636 = vsel %vm2650, %v4629, %v4635
    %v4637 = vsel %vm2652, %v4630, %v4636
    %v4638 = vsel %vm2654, %v4631, %v4637
    %v4639 = vsel %vm2656, %v4632, %v4638
    %v4640 = vsel %vm2658, %v4633, %v4639
    %v4642 = vsel %vm2334, %v4640, -1e+10
    %v4643 = vsel %vm2662, %v4642, -inf
    %v4644 = vrot.slane %v4643, 4
    %v4645 = vmax.f32 %v4643, %v4644
    %v4646 = vrot.slane %v4645, 2
    %v4647 = vmax.f32 %v4645, %v4646
    %v4648 = vrot.slane %v4647, 1
    %v4649 = vmax.f32 %v4647, %v4648
    %v4650 = vsub.f32 %v4642, %v4649
    %v4651 = vmul.f32 %v4650, 1.442695
    %v4652 = vpow.pop %v4651
    %v4653 = vsel %vm2662, %v4652, 0.0
    %v4654 = vrot.slane %v4653, 4
    %v4655 = vadd.f32 %v4653, %v4654
    %v4656 = vrot.slane %v4655, 2
    %v4657 = vadd.f32 %v4655, %v4656
    %v4658 = vrot.slane %v4657, 1
    %v4659 = vadd.f32 %v4657, %v4658
    %v4660 = vrcp.pop %v4659
    %v4661 = vmul.f32 %v4652, %v4660
    %v4662 = vperm.slane %v4661, 0
    %v4663 = vlaneseq
    %v4664 = vshrl.u32 %v4663, 7
    %4666 = vset.pattern.permute.xlu0 %v4664
    %4667 = vperm.xlu0 %4666, %v4662
    %v4668 = vpop.permute.xlu0 %4667
    %v4669 = vperm.slane %v4661, 1
    %v4670 = vlaneseq
    %v4671 = vshrl.u32 %v4670, 7
    %4673 = vset.pattern.permute.xlu0 %v4671
    %4674 = vperm.xlu0 %4673, %v4669
    %v4675 = vpop.permute.xlu0 %4674
    %v4676 = vperm.slane %v4661, 2
    %v4677 = vlaneseq
    %v4678 = vshrl.u32 %v4677, 7
    %4680 = vset.pattern.permute.xlu0 %v4678
    %4681 = vperm.xlu0 %4680, %v4676
    %v4682 = vpop.permute.xlu0 %4681
    %v4683 = vperm.slane %v4661, 3
    %v4684 = vlaneseq
    %v4685 = vshrl.u32 %v4684, 7
    %4687 = vset.pattern.permute.xlu0 %v4685
    %4688 = vperm.xlu0 %4687, %v4683
    %v4689 = vpop.permute.xlu0 %4688
    %v4690 = vperm.slane %v4661, 4
    %v4691 = vlaneseq
    %v4692 = vshrl.u32 %v4691, 7
    %4694 = vset.pattern.permute.xlu0 %v4692
    %4695 = vperm.xlu0 %4694, %v4690
    %v4696 = vpop.permute.xlu0 %4695
    %v4697 = vperm.slane %v4661, 5
    %v4698 = vlaneseq
    %v4699 = vshrl.u32 %v4698, 7
    %4701 = vset.pattern.permute.xlu0 %v4699
    %4702 = vperm.xlu0 %4701, %v4697
    %v4703 = vpop.permute.xlu0 %4702
    %v4704 = vperm.slane %v4661, 6
    %v4705 = vlaneseq
    %v4706 = vshrl.u32 %v4705, 7
    %4708 = vset.pattern.permute.xlu0 %v4706
    %4709 = vperm.xlu0 %4708, %v4704
    %v4710 = vpop.permute.xlu0 %4709
    %v4711 = vperm.slane %v4661, 7
    %v4712 = vlaneseq
    %v4713 = vshrl.u32 %v4712, 7
    %4715 = vset.pattern.permute.xlu0 %v4713
    %4716 = vperm.xlu0 %4715, %v4711
    %v4717 = vpop.permute.xlu0 %4716
    %v4718 = vmul.f32 %v4668, %v2317
    %v4719 = vmul.f32 %v4675, %v2318
    %v4720 = vmul.f32 %v4682, %v2319
    %v4721 = vmul.f32 %v4689, %v2320
    %v4722 = vmul.f32 %v4696, %v2321
    %v4723 = vmul.f32 %v4703, %v2322
    %v4724 = vmul.f32 %v4710, %v2323
    %v4725 = vmul.f32 %v4717, %v2324
    %v4726 = vsel %vm568, %v4718, 0.0
    %v4727 = vsel %vm568, %v4719, 0.0
    %v4728 = vadd.f32 %v4726, %v4727
    %v4729 = vsel %vm568, %v4720, 0.0
    %v4730 = vadd.f32 %v4728, %v4729
    %v4731 = vsel %vm568, %v4721, 0.0
    %v4732 = vadd.f32 %v4730, %v4731
    %v4733 = vsel %vm568, %v4722, 0.0
    %v4734 = vadd.f32 %v4732, %v4733
    %v4735 = vsel %vm568, %v4723, 0.0
    %v4736 = vadd.f32 %v4734, %v4735
    %v4737 = vsel %vm568, %v4724, 0.0
    %v4738 = vadd.f32 %v4736, %v4737
    %v4739 = vsel %vm568, %v4725, 0.0
    %v4740 = vadd.f32 %v4738, %v4739
    %v4741 = vmul.f32 %v4668, %v2325
    %v4742 = vmul.f32 %v4675, %v2326
    %v4743 = vmul.f32 %v4682, %v2327
    %v4744 = vmul.f32 %v4689, %v2328
    %v4745 = vmul.f32 %v4696, %v2329
    %v4746 = vmul.f32 %v4703, %v2330
    %v4747 = vmul.f32 %v4710, %v2331
    %v4748 = vmul.f32 %v4717, %v2332
    %v4749 = vsel %vm568, %v4741, 0.0
    %v4750 = vsel %vm568, %v4742, 0.0
    %v4751 = vadd.f32 %v4749, %v4750
    %v4752 = vsel %vm568, %v4743, 0.0
    %v4753 = vadd.f32 %v4751, %v4752
    %v4754 = vsel %vm568, %v4744, 0.0
    %v4755 = vadd.f32 %v4753, %v4754
    %v4756 = vsel %vm568, %v4745, 0.0
    %v4757 = vadd.f32 %v4755, %v4756
    %v4758 = vsel %vm568, %v4746, 0.0
    %v4759 = vadd.f32 %v4757, %v4758
    %v4760 = vsel %vm568, %v4747, 0.0
    %v4761 = vadd.f32 %v4759, %v4760
    %v4762 = vsel %vm568, %v4748, 0.0
    %v4763 = vadd.f32 %v4761, %v4762
    %v4765 = vsel %vm568, %v4740, 0
    %4767 = vmatpush.msra.mxu0 0.0
    %4768 = vmatpush.msra.mxu0 0.0
    %4769 = vmatpush.msra.mxu0 0.0
    %4770 = vmatpush.msra.mxu0 0.0
    %4771 = vmatpush.msra.mxu0 0.0
    %4772 = vmatpush.msra.mxu0 0.0
    %4773 = vmatpush.msra.mxu0 0.0
    %4774 = vmatpush.msra.mxu0 0.0
    %4775 = vmatpush.msra.mxu0 0.0
    %4776 = vmatpush.msra.mxu0 0.0
    %4777 = vmatpush.msra.mxu0 0.0
    %4778 = vmatpush.msra.mxu0 0.0
    %4779 = vmatpush.msra.mxu0 %v2498
    %4780 = vmatpush.msra.mxu0 %v2497
    %4781 = vmatpush.msra.mxu0 %v2496
    %4782 = vmatpush.msra.mxu0 %v2495
    %4783 = vmatmul.f32.gmra.mxu0 %v4765
    %v4784 = vpop.f32.mrf.mxu0
    %v4785 = vadd.f32 0.0, %v4784
    %4786 = vdwg.mxu0
    %v4788 = vsel %vm541, %v4548, 0
    %4790 = vmatpush.msra.mxu0 0.0
    %4791 = vmatpush.msra.mxu0 0.0
    %4792 = vmatpush.msra.mxu0 0.0
    %4793 = vmatpush.msra.mxu0 0.0
    %4794 = vmatpush.msra.mxu0 0.0
    %4795 = vmatpush.msra.mxu0 0.0
    %4796 = vmatpush.msra.mxu0 0.0
    %4797 = vmatpush.msra.mxu0 0.0
    %4798 = vmatpush.msra.mxu0 0.0
    %4799 = vmatpush.msra.mxu0 0.0
    %4800 = vmatpush.msra.mxu0 0.0
    %4801 = vmatpush.msra.mxu0 0.0
    %4802 = vmatpush.msra.mxu0 0.0
    %4803 = vmatpush.msra.mxu0 0.0
    %4804 = vmatpush.msra.mxu0 %v2494
    %4805 = vmatpush.msra.mxu0 %v2493
    %4806 = vmatmul.f32.gmra.mxu0 %v4788
    %v4807 = vpop.f32.mrf.mxu0
    %v4808 = vadd.f32 %v4785, %v4807
    %4809 = vdwg.mxu0
    %v4811 = vsel %vm568, %v4763, 0
    %4813 = vmatpush.msra.mxu0 0.0
    %4814 = vmatpush.msra.mxu0 0.0
    %4815 = vmatpush.msra.mxu0 0.0
    %4816 = vmatpush.msra.mxu0 0.0
    %4817 = vmatpush.msra.mxu0 0.0
    %4818 = vmatpush.msra.mxu0 0.0
    %4819 = vmatpush.msra.mxu0 0.0
    %4820 = vmatpush.msra.mxu0 0.0
    %4821 = vmatpush.msra.mxu0 0.0
    %4822 = vmatpush.msra.mxu0 0.0
    %4823 = vmatpush.msra.mxu0 0.0
    %4824 = vmatpush.msra.mxu0 0.0
    %4825 = vmatpush.msra.mxu0 %v2502
    %4826 = vmatpush.msra.mxu0 %v2501
    %4827 = vmatpush.msra.mxu0 %v2500
    %4828 = vmatpush.msra.mxu0 %v2499
    %4829 = vmatmul.f32.gmra.mxu0 %v4811
    %v4830 = vpop.f32.mrf.mxu0
    %v4831 = vadd.f32 0.0, %v4830
    %4832 = vdwg.mxu0
    %v4833 = vadd.f32 %v4808, %v4831
    %v4834 = vadd.f32 %v4833, %v2855
    %4835 = vmatpush.msra.mxu0 0.0
    %4836 = vmatpush.msra.mxu0 0.0
    %4837 = vmatpush.msra.mxu0 0.0
    %4838 = vmatpush.msra.mxu0 0.0
    %4839 = vmatpush.msra.mxu0 0.0
    %4840 = vmatpush.msra.mxu0 0.0
    %4841 = vmatpush.msra.mxu0 0.0
    %4842 = vmatpush.msra.mxu0 0.0
    %4843 = vmatpush.msra.mxu0 0.0
    %4844 = vmatpush.msra.mxu0 0.0
    %4845 = vmatpush.msra.mxu0 0.0
    %4846 = vmatpush.msra.mxu0 0.0
    %4847 = vmatpush.msra.mxu0 %v2506
    %4848 = vmatpush.msra.mxu0 %v2505
    %4849 = vmatpush.msra.mxu0 %v2504
    %4850 = vmatpush.msra.mxu0 %v2503
    %4851 = vmatmul.f32.gmra.mxu0 %v4425
    %v4852 = vpop.f32.mrf.mxu0
    %v4853 = vadd.f32 %v2859, %v4852
    %4854 = vdwg.mxu0
    %v4855 = vadd.f32 %v4834, %v4853
    %v4856 = vxor.u32 %v4855, 2147483648
    %v4857 = vmul.f32 %v4856, 1.442695
    %v4858 = vpow.pop %v4857
    %v4859 = vadd.f32 %v4858, 1.0
    %v4860 = vrcp.pop %v4859
    %v4861 = vmul.f32 %v4859, %v4860
    %v4862 = vsub.f32 1.0, %v4861
    %v4863 = vmul.f32 %v4860, %v4862
    %v4864 = vadd.f32 %v4860, %v4863
    %vm4865 = vweird.f32 %v4859
    %vm4866 = vweird.f32 %v4860
    %vm4867 = vmor %vm4865, %vm4866
    %v4868 = vsel %vm4867, %v4860, %v4864
    %v4869 = vand.u32 2147483647, %v4859
    %vm4870 = vcmp.eq.f32.partialorder %v4869, 8.507059e+37
    %v4871 = vand.u32 %v4859, 2147483648
    %v4872 = vor.u32 1.1754944e-38, %v4871
    %v4873 = vsel %vm4870, %v4872, %v4868
    %v4874 = vmul.f32 1.0, %v4873
    %4876 = vrot.lane.b32.xlu0 %v4853, 64
    %v4877 = vpop.permute.xlu0 %4876
    %v4879 = vmul.f32 %v4874, %v4877
    %4881 = vrot.lane.b32.xlu0 %v4879, 64
    %v4882 = vpop.permute.xlu0 %4881
    %v4884 = vadd.f32 %v4834, %v4882
    %v4885 = vtanh.pop %v4884
    %v4886 = vsub.f32 1.0, %v4874
    %4888 = vrot.lane.b32.xlu0 %v4885, 96
    %v4889 = vpop.permute.xlu0 %4888
    %v4891 = vmul.f32 %v4886, %v4889
    %v4892 = vmul.f32 %v4874, %v4401
    %v4893 = vadd.f32 %v4891, %v4892
    %4894 = vmatpush.msra.mxu0 0.0
    %4895 = vmatpush.msra.mxu0 0.0
    %4896 = vmatpush.msra.mxu0 0.0
    %4897 = vmatpush.msra.mxu0 0.0
    %4898 = vmatpush.msra.mxu0 0.0
    %4899 = vmatpush.msra.mxu0 0.0
    %4900 = vmatpush.msra.mxu0 0.0
    %4901 = vmatpush.msra.mxu0 0.0
    %4902 = vmatpush.msra.mxu0 0.0
    %4903 = vmatpush.msra.mxu0 0.0
    %4904 = vmatpush.msra.mxu0 0.0
    %4905 = vmatpush.msra.mxu0 0.0
    %4906 = vmatpush.msra.mxu0 %v2516
    %4907 = vmatpush.msra.mxu0 %v2515
    %4908 = vmatpush.msra.mxu0 %v2514
    %4909 = vmatpush.msra.mxu0 %v2513
    %4910 = vmatmul.f32.gmra.mxu0 %v4765
    %v4911 = vpop.f32.mrf.mxu0
    %v4912 = vadd.f32 0.0, %v4911
    %4913 = vdwg.mxu0
    %4915 = vrot.lane.b32.xlu0 %v4893, 96
    %v4916 = vpop.permute.xlu0 %4915
    %v4917 = vsel %vm568, %v4916, 0
    %4919 = vmatpush.msra.mxu0 0.0
    %4920 = vmatpush.msra.mxu0 0.0
    %4921 = vmatpush.msra.mxu0 0.0
    %4922 = vmatpush.msra.mxu0 0.0
    %4923 = vmatpush.msra.mxu0 0.0
    %4924 = vmatpush.msra.mxu0 0.0
    %4925 = vmatpush.msra.mxu0 0.0
    %4926 = vmatpush.msra.mxu0 0.0
    %4927 = vmatpush.msra.mxu0 0.0
    %4928 = vmatpush.msra.mxu0 0.0
    %4929 = vmatpush.msra.mxu0 0.0
    %4930 = vmatpush.msra.mxu0 0.0
    %4931 = vmatpush.msra.mxu0 %v2512
    %4932 = vmatpush.msra.mxu0 %v2511
    %4933 = vmatpush.msra.mxu0 %v2510
    %4934 = vmatpush.msra.mxu0 %v2509
    %4935 = vmatmul.f32.gmra.mxu0 %v4917
    %v4936 = vpop.f32.mrf.mxu0
    %v4937 = vadd.f32 %v4912, %v4936
    %4938 = vdwg.mxu0
    %4939 = vmatpush.msra.mxu0 0.0
    %4940 = vmatpush.msra.mxu0 0.0
    %4941 = vmatpush.msra.mxu0 0.0
    %4942 = vmatpush.msra.mxu0 0.0
    %4943 = vmatpush.msra.mxu0 0.0
    %4944 = vmatpush.msra.mxu0 0.0
    %4945 = vmatpush.msra.mxu0 0.0
    %4946 = vmatpush.msra.mxu0 0.0
    %4947 = vmatpush.msra.mxu0 0.0
    %4948 = vmatpush.msra.mxu0 0.0
    %4949 = vmatpush.msra.mxu0 0.0
    %4950 = vmatpush.msra.mxu0 0.0
    %4951 = vmatpush.msra.mxu0 %v2520
    %4952 = vmatpush.msra.mxu0 %v2519
    %4953 = vmatpush.msra.mxu0 %v2518
    %4954 = vmatpush.msra.mxu0 %v2517
    %4955 = vmatmul.f32.gmra.mxu0 %v4811
    %v4956 = vpop.f32.mrf.mxu0
    %v4957 = vadd.f32 0.0, %v4956
    %4958 = vdwg.mxu0
    %v4959 = vadd.f32 %v4937, %v4957
    %4960 = vmatpush.msra.mxu0 0.0
    %4961 = vmatpush.msra.mxu0 0.0
    %4962 = vmatpush.msra.mxu0 0.0
    %4963 = vmatpush.msra.mxu0 0.0
    %4964 = vmatpush.msra.mxu0 0.0
    %4965 = vmatpush.msra.mxu0 0.0
    %4966 = vmatpush.msra.mxu0 0.0
    %4967 = vmatpush.msra.mxu0 0.0
    %4968 = vmatpush.msra.mxu0 0.0
    %4969 = vmatpush.msra.mxu0 0.0
    %4970 = vmatpush.msra.mxu0 0.0
    %4971 = vmatpush.msra.mxu0 0.0
    %4972 = vmatpush.msra.mxu0 0.0
    %4973 = vmatpush.msra.mxu0 0.0
    %4974 = vmatpush.msra.mxu0 %v2522
    %4975 = vmatpush.msra.mxu0 %v2521
    %4976 = vmatmul.f32.gmra.mxu0 %v4788
    %v4977 = vpop.f32.mrf.mxu0
    %v4978 = vadd.f32 0.0, %v4977
    %4979 = vdwg.mxu0
    %v4980 = vadd.f32 %v4959, %v4978
    %v4981 = vadd.f32 %v4980, %v3011
    %s4982 = scalar_lea.vmem [#allocation38], 40
    %4983 = vst [vmem:[%s4982] sm:$0xff] %v4981
    %v4984 = vsel %vm2524, %v4981, -1e+30
    %4985 = vmax.xlane.f32.xlu0 %v4984
    %v4986 = vpop.xlane.xlu0 %4985
    %vm4987 = vcmp.eq.f32.partialorder %v4984, %v4986
    %vm4988 = vmand %vm4987, %vm2524
    %v4989 = vsel %vm4988, %v458, 128
    %v4990 = vand.u32 %v4989, 65535
    %v4991 = vshra.s32 %v4989, 16
    %v4992 = vcvt.s32.f32 %v4990
    %v4993 = vcvt.s32.f32 %v4991
    %4994 = vmin.xlane.f32.xlu0 %v4993
    %v4995 = vpop.xlane.xlu0 %4994
    %vm4996 = vcmp.eq.f32.partialorder %v4993, %v4995
    %v4997 = vsel %vm4996, %v4992, inf
    %4998 = vmin.xlane.f32.xlu0 %v4997
    %v4999 = vpop.xlane.xlu0 %4998
    %v5000 = vcvt.f32.s32 %v4999
    %v5001 = vcvt.f32.s32 %v4995
    %v5002 = vshll.u32 %v5001, 16
    %v5003 = vadd.s32 %v5002, %v5000
    %vm5004 = vcmp.eq.s32.totalorder %v458, %v5003
    %v5005 = vsel %vm5004, 1, 0
    %v5006 = vcvt.s32.f32 %v5005
    %5007 = vset.pattern.permute.xlu0 5
    %5008 = vperm.xlu0 %5007, %v452
    %v5009 = vpop.permute.xlu0 %5008
    %vm5010 = vcmp.eq.s32.totalorder %v5009, %v458
    %v5011 = vsel %vm5010, 1, 0
    %v5012 = vcvt.s32.f32 %v5011
    %s5013 = sld [smem:[#allocation4 + $0x5]]
    %p5014 = scmp.ne.s32.totalorder %s5013, 0
    %s5015 = scalar_select %p5014, 1, 0
    %v5016 = vstv %s5015
    %vm5017 = vcmp.eq.s32.totalorder %v5016, 1
    %v5018 = vsel %vm5017, %v5012, %v5006
    %v5020 = vsel %vm2532, %v5018, 0
    %5022 = vmatpush.msra.mxu0 0.0
    %5023 = vmatpush.msra.mxu0 0.0
    %5024 = vmatpush.msra.mxu0 0.0
    %5025 = vmatpush.msra.mxu0 0.0
    %5026 = vmatpush.msra.mxu0 0.0
    %5027 = vmatpush.msra.mxu0 0.0
    %5028 = vmatpush.msra.mxu0 0.0
    %5029 = vmatpush.msra.mxu0 0.0
    %5030 = vmatpush.msra.mxu0 0.0
    %5031 = vmatpush.msra.mxu0 0.0
    %5032 = vmatpush.msra.mxu0 0.0
    %5033 = vmatpush.msra.mxu0 0.0
    %5034 = vmatpush.msra.mxu0 0.0
    %5035 = vmatpush.msra.mxu0 %v2492
    %5036 = vmatpush.msra.mxu0 %v2491
    %5037 = vmatpush.msra.mxu0 %v2490
    %5038 = vmatmul.f32.gmra.mxu0 %v5020
    %v5039 = vpop.f32.mrf.mxu0
    %v5040 = vadd.f32 0.0, %v5039
    %5041 = vdwg.mxu0
    %5042 = vmatpush.msra.mxu0 0.0
    %5043 = vmatpush.msra.mxu0 0.0
    %5044 = vmatpush.msra.mxu0 0.0
    %5045 = vmatpush.msra.mxu0 0.0
    %5046 = vmatpush.msra.mxu0 0.0
    %5047 = vmatpush.msra.mxu0 0.0
    %5048 = vmatpush.msra.mxu0 0.0
    %5049 = vmatpush.msra.mxu0 0.0
    %5050 = vmatpush.msra.mxu0 0.0
    %5051 = vmatpush.msra.mxu0 0.0
    %5052 = vmatpush.msra.mxu0 0.0
    %5053 = vmatpush.msra.mxu0 0.0
    %5054 = vmatpush.msra.mxu0 %v2489
    %5055 = vmatpush.msra.mxu0 %v2488
    %5056 = vmatpush.msra.mxu0 %v2487
    %5057 = vmatpush.msra.mxu0 %v2486
    %5058 = vmatmul.f32.gmra.mxu0 %v4917
    %v5059 = vpop.f32.mrf.mxu0
    %v5060 = vadd.f32 0.0, %v5059
    %5061 = vdwg.mxu0
    %v5062 = vadd.f32 %v5060, %v2477
    %v5063 = vadd.f32 %v5060, %v2478
    %v5064 = vadd.f32 %v5060, %v2479
    %v5065 = vadd.f32 %v5060, %v2480
    %v5066 = vadd.f32 %v5060, %v2481
    %v5067 = vadd.f32 %v5060, %v2482
    %v5068 = vadd.f32 %v5060, %v2483
    %v5069 = vadd.f32 %v5060, %v2484
    %v5070 = vtanh.pop %v5062
    %v5071 = vtanh.pop %v5063
    %v5072 = vtanh.pop %v5064
    %v5073 = vtanh.pop %v5065
    %v5074 = vtanh.pop %v5066
    %v5075 = vtanh.pop %v5067
    %v5076 = vtanh.pop %v5068
    %v5077 = vtanh.pop %v5069
    %v5078 = vmul.f32 %v5070, %v2596
    %v5079 = vmul.f32 %v5071, %v2596
    %v5080 = vmul.f32 %v5072, %v2596
    %v5081 = vmul.f32 %v5073, %v2596
    %v5082 = vmul.f32 %v5074, %v2596
    %v5083 = vmul.f32 %v5075, %v2596
    %v5084 = vmul.f32 %v5076, %v2596
    %v5085 = vmul.f32 %v5077, %v2596
    %v5086 = vsel %vm568, %v5078, 0.0
    %5087 = vadd.xlane.f32.xlu0 %v5086
    %v5088 = vpop.xlane.xlu0 %5087
    %v5089 = vsel %vm568, %v5079, 0.0
    %5090 = vadd.xlane.f32.xlu0 %v5089
    %v5091 = vpop.xlane.xlu0 %5090
    %v5092 = vsel %vm568, %v5080, 0.0
    %5093 = vadd.xlane.f32.xlu0 %v5092
    %v5094 = vpop.xlane.xlu0 %5093
    %v5095 = vsel %vm568, %v5081, 0.0
    %5096 = vadd.xlane.f32.xlu0 %v5095
    %v5097 = vpop.xlane.xlu0 %5096
    %v5098 = vsel %vm568, %v5082, 0.0
    %5099 = vadd.xlane.f32.xlu0 %v5098
    %v5100 = vpop.xlane.xlu0 %5099
    %v5101 = vsel %vm568, %v5083, 0.0
    %5102 = vadd.xlane.f32.xlu0 %v5101
    %v5103 = vpop.xlane.xlu0 %5102
    %v5104 = vsel %vm568, %v5084, 0.0
    %5105 = vadd.xlane.f32.xlu0 %v5104
    %v5106 = vpop.xlane.xlu0 %5105
    %v5107 = vsel %vm568, %v5085, 0.0
    %5108 = vadd.xlane.f32.xlu0 %v5107
    %v5109 = vpop.xlane.xlu0 %5108
    %v5118 = vperm.slane %v5088, %v458
    %v5119 = vperm.slane %v5091, %v458
    %v5120 = vperm.slane %v5094, %v458
    %v5121 = vperm.slane %v5097, %v458
    %v5122 = vperm.slane %v5100, %v458
    %v5123 = vperm.slane %v5103, %v458
    %v5124 = vperm.slane %v5106, %v458
    %v5125 = vperm.slane %v5109, %v458
    %v5126 = vsel %vm2646, %v5119, %v5118
    %v5127 = vsel %vm2648, %v5120, %v5126
    %v5128 = vsel %vm2650, %v5121, %v5127
    %v5129 = vsel %vm2652, %v5122, %v5128
    %v5130 = vsel %vm2654, %v5123, %v5129
    %v5131 = vsel %vm2656, %v5124, %v5130
    %v5132 = vsel %vm2658, %v5125, %v5131
    %v5134 = vsel %vm2334, %v5132, -1e+10
    %v5135 = vsel %vm2662, %v5134, -inf
    %v5136 = vrot.slane %v5135, 4
    %v5137 = vmax.f32 %v5135, %v5136
    %v5138 = vrot.slane %v5137, 2
    %v5139 = vmax.f32 %v5137, %v5138
    %v5140 = vrot.slane %v5139, 1
    %v5141 = vmax.f32 %v5139, %v5140
    %v5142 = vsub.f32 %v5134, %v5141
    %v5143 = vmul.f32 %v5142, 1.442695
    %v5144 = vpow.pop %v5143
    %v5145 = vsel %vm2662, %v5144, 0.0
    %v5146 = vrot.slane %v5145, 4
    %v5147 = vadd.f32 %v5145, %v5146
    %v5148 = vrot.slane %v5147, 2
    %v5149 = vadd.f32 %v5147, %v5148
    %v5150 = vrot.slane %v5149, 1
    %v5151 = vadd.f32 %v5149, %v5150
    %v5152 = vrcp.pop %v5151
    %v5153 = vmul.f32 %v5144, %v5152
    %v5154 = vperm.slane %v5153, 0
    %v5155 = vlaneseq
    %v5156 = vshrl.u32 %v5155, 7
    %5158 = vset.pattern.permute.xlu0 %v5156
    %5159 = vperm.xlu0 %5158, %v5154
    %v5160 = vpop.permute.xlu0 %5159
    %v5161 = vperm.slane %v5153, 1
    %v5162 = vlaneseq
    %v5163 = vshrl.u32 %v5162, 7
    %5165 = vset.pattern.permute.xlu0 %v5163
    %5166 = vperm.xlu0 %5165, %v5161
    %v5167 = vpop.permute.xlu0 %5166
    %v5168 = vperm.slane %v5153, 2
    %v5169 = vlaneseq
    %v5170 = vshrl.u32 %v5169, 7
    %5172 = vset.pattern.permute.xlu0 %v5170
    %5173 = vperm.xlu0 %5172, %v5168
    %v5174 = vpop.permute.xlu0 %5173
    %v5175 = vperm.slane %v5153, 3
    %v5176 = vlaneseq
    %v5177 = vshrl.u32 %v5176, 7
    %5179 = vset.pattern.permute.xlu0 %v5177
    %5180 = vperm.xlu0 %5179, %v5175
    %v5181 = vpop.permute.xlu0 %5180
    %v5182 = vperm.slane %v5153, 4
    %v5183 = vlaneseq
    %v5184 = vshrl.u32 %v5183, 7
    %5186 = vset.pattern.permute.xlu0 %v5184
    %5187 = vperm.xlu0 %5186, %v5182
    %v5188 = vpop.permute.xlu0 %5187
    %v5189 = vperm.slane %v5153, 5
    %v5190 = vlaneseq
    %v5191 = vshrl.u32 %v5190, 7
    %5193 = vset.pattern.permute.xlu0 %v5191
    %5194 = vperm.xlu0 %5193, %v5189
    %v5195 = vpop.permute.xlu0 %5194
    %v5196 = vperm.slane %v5153, 6
    %v5197 = vlaneseq
    %v5198 = vshrl.u32 %v5197, 7
    %5200 = vset.pattern.permute.xlu0 %v5198
    %5201 = vperm.xlu0 %5200, %v5196
    %v5202 = vpop.permute.xlu0 %5201
    %v5203 = vperm.slane %v5153, 7
    %v5204 = vlaneseq
    %v5205 = vshrl.u32 %v5204, 7
    %5207 = vset.pattern.permute.xlu0 %v5205
    %5208 = vperm.xlu0 %5207, %v5203
    %v5209 = vpop.permute.xlu0 %5208
    %v5210 = vmul.f32 %v5160, %v2317
    %v5211 = vmul.f32 %v5167, %v2318
    %v5212 = vmul.f32 %v5174, %v2319
    %v5213 = vmul.f32 %v5181, %v2320
    %v5214 = vmul.f32 %v5188, %v2321
    %v5215 = vmul.f32 %v5195, %v2322
    %v5216 = vmul.f32 %v5202, %v2323
    %v5217 = vmul.f32 %v5209, %v2324
    %v5218 = vsel %vm568, %v5210, 0.0
    %v5219 = vsel %vm568, %v5211, 0.0
    %v5220 = vadd.f32 %v5218, %v5219
    %v5221 = vsel %vm568, %v5212, 0.0
    %v5222 = vadd.f32 %v5220, %v5221
    %v5223 = vsel %vm568, %v5213, 0.0
    %v5224 = vadd.f32 %v5222, %v5223
    %v5225 = vsel %vm568, %v5214, 0.0
    %v5226 = vadd.f32 %v5224, %v5225
    %v5227 = vsel %vm568, %v5215, 0.0
    %v5228 = vadd.f32 %v5226, %v5227
    %v5229 = vsel %vm568, %v5216, 0.0
    %v5230 = vadd.f32 %v5228, %v5229
    %v5231 = vsel %vm568, %v5217, 0.0
    %v5232 = vadd.f32 %v5230, %v5231
    %v5233 = vmul.f32 %v5160, %v2325
    %v5234 = vmul.f32 %v5167, %v2326
    %v5235 = vmul.f32 %v5174, %v2327
    %v5236 = vmul.f32 %v5181, %v2328
    %v5237 = vmul.f32 %v5188, %v2329
    %v5238 = vmul.f32 %v5195, %v2330
    %v5239 = vmul.f32 %v5202, %v2331
    %v5240 = vmul.f32 %v5209, %v2332
    %v5241 = vsel %vm568, %v5233, 0.0
    %v5242 = vsel %vm568, %v5234, 0.0
    %v5243 = vadd.f32 %v5241, %v5242
    %v5244 = vsel %vm568, %v5235, 0.0
    %v5245 = vadd.f32 %v5243, %v5244
    %v5246 = vsel %vm568, %v5236, 0.0
    %v5247 = vadd.f32 %v5245, %v5246
    %v5248 = vsel %vm568, %v5237, 0.0
    %v5249 = vadd.f32 %v5247, %v5248
    %v5250 = vsel %vm568, %v5238, 0.0
    %v5251 = vadd.f32 %v5249, %v5250
    %v5252 = vsel %vm568, %v5239, 0.0
    %v5253 = vadd.f32 %v5251, %v5252
    %v5254 = vsel %vm568, %v5240, 0.0
    %v5255 = vadd.f32 %v5253, %v5254
    %v5257 = vsel %vm568, %v5232, 0
    %5259 = vmatpush.msra.mxu0 0.0
    %5260 = vmatpush.msra.mxu0 0.0
    %5261 = vmatpush.msra.mxu0 0.0
    %5262 = vmatpush.msra.mxu0 0.0
    %5263 = vmatpush.msra.mxu0 0.0
    %5264 = vmatpush.msra.mxu0 0.0
    %5265 = vmatpush.msra.mxu0 0.0
    %5266 = vmatpush.msra.mxu0 0.0
    %5267 = vmatpush.msra.mxu0 0.0
    %5268 = vmatpush.msra.mxu0 0.0
    %5269 = vmatpush.msra.mxu0 0.0
    %5270 = vmatpush.msra.mxu0 0.0
    %5271 = vmatpush.msra.mxu0 %v2498
    %5272 = vmatpush.msra.mxu0 %v2497
    %5273 = vmatpush.msra.mxu0 %v2496
    %5274 = vmatpush.msra.mxu0 %v2495
    %5275 = vmatmul.f32.gmra.mxu0 %v5257
    %v5276 = vpop.f32.mrf.mxu0
    %v5277 = vadd.f32 0.0, %v5276
    %5278 = vdwg.mxu0
    %v5280 = vsel %vm541, %v5040, 0
    %5282 = vmatpush.msra.mxu0 0.0
    %5283 = vmatpush.msra.mxu0 0.0
    %5284 = vmatpush.msra.mxu0 0.0
    %5285 = vmatpush.msra.mxu0 0.0
    %5286 = vmatpush.msra.mxu0 0.0
    %5287 = vmatpush.msra.mxu0 0.0
    %5288 = vmatpush.msra.mxu0 0.0
    %5289 = vmatpush.msra.mxu0 0.0
    %5290 = vmatpush.msra.mxu0 0.0
    %5291 = vmatpush.msra.mxu0 0.0
    %5292 = vmatpush.msra.mxu0 0.0
    %5293 = vmatpush.msra.mxu0 0.0
    %5294 = vmatpush.msra.mxu0 0.0
    %5295 = vmatpush.msra.mxu0 0.0
    %5296 = vmatpush.msra.mxu0 %v2494
    %5297 = vmatpush.msra.mxu0 %v2493
    %5298 = vmatmul.f32.gmra.mxu0 %v5280
    %v5299 = vpop.f32.mrf.mxu0
    %v5300 = vadd.f32 %v5277, %v5299
    %5301 = vdwg.mxu0
    %v5303 = vsel %vm568, %v5255, 0
    %5305 = vmatpush.msra.mxu0 0.0
    %5306 = vmatpush.msra.mxu0 0.0
    %5307 = vmatpush.msra.mxu0 0.0
    %5308 = vmatpush.msra.mxu0 0.0
    %5309 = vmatpush.msra.mxu0 0.0
    %5310 = vmatpush.msra.mxu0 0.0
    %5311 = vmatpush.msra.mxu0 0.0
    %5312 = vmatpush.msra.mxu0 0.0
    %5313 = vmatpush.msra.mxu0 0.0
    %5314 = vmatpush.msra.mxu0 0.0
    %5315 = vmatpush.msra.mxu0 0.0
    %5316 = vmatpush.msra.mxu0 0.0
    %5317 = vmatpush.msra.mxu0 %v2502
    %5318 = vmatpush.msra.mxu0 %v2501
    %5319 = vmatpush.msra.mxu0 %v2500
    %5320 = vmatpush.msra.mxu0 %v2499
    %5321 = vmatmul.f32.gmra.mxu0 %v5303
    %v5322 = vpop.f32.mrf.mxu0
    %v5323 = vadd.f32 0.0, %v5322
    %5324 = vdwg.mxu0
    %v5325 = vadd.f32 %v5300, %v5323
    %v5326 = vadd.f32 %v5325, %v2855
    %5327 = vmatpush.msra.mxu0 0.0
    %5328 = vmatpush.msra.mxu0 0.0
    %5329 = vmatpush.msra.mxu0 0.0
    %5330 = vmatpush.msra.mxu0 0.0
    %5331 = vmatpush.msra.mxu0 0.0
    %5332 = vmatpush.msra.mxu0 0.0
    %5333 = vmatpush.msra.mxu0 0.0
    %5334 = vmatpush.msra.mxu0 0.0
    %5335 = vmatpush.msra.mxu0 0.0
    %5336 = vmatpush.msra.mxu0 0.0
    %5337 = vmatpush.msra.mxu0 0.0
    %5338 = vmatpush.msra.mxu0 0.0
    %5339 = vmatpush.msra.mxu0 %v2506
    %5340 = vmatpush.msra.mxu0 %v2505
    %5341 = vmatpush.msra.mxu0 %v2504
    %5342 = vmatpush.msra.mxu0 %v2503
    %5343 = vmatmul.f32.gmra.mxu0 %v4917
    %v5344 = vpop.f32.mrf.mxu0
    %v5345 = vadd.f32 %v2859, %v5344
    %5346 = vdwg.mxu0
    %v5347 = vadd.f32 %v5326, %v5345
    %v5348 = vxor.u32 %v5347, 2147483648
    %v5349 = vmul.f32 %v5348, 1.442695
    %v5350 = vpow.pop %v5349
    %v5351 = vadd.f32 %v5350, 1.0
    %v5352 = vrcp.pop %v5351
    %v5353 = vmul.f32 %v5351, %v5352
    %v5354 = vsub.f32 1.0, %v5353
    %v5355 = vmul.f32 %v5352, %v5354
    %v5356 = vadd.f32 %v5352, %v5355
    %vm5357 = vweird.f32 %v5351
    %vm5358 = vweird.f32 %v5352
    %vm5359 = vmor %vm5357, %vm5358
    %v5360 = vsel %vm5359, %v5352, %v5356
    %v5361 = vand.u32 2147483647, %v5351
    %vm5362 = vcmp.eq.f32.partialorder %v5361, 8.507059e+37
    %v5363 = vand.u32 %v5351, 2147483648
    %v5364 = vor.u32 1.1754944e-38, %v5363
    %v5365 = vsel %vm5362, %v5364, %v5360
    %v5366 = vmul.f32 1.0, %v5365
    %5368 = vrot.lane.b32.xlu0 %v5345, 64
    %v5369 = vpop.permute.xlu0 %5368
    %v5371 = vmul.f32 %v5366, %v5369
    %5373 = vrot.lane.b32.xlu0 %v5371, 64
    %v5374 = vpop.permute.xlu0 %5373
    %v5376 = vadd.f32 %v5326, %v5374
    %v5377 = vtanh.pop %v5376
    %v5378 = vsub.f32 1.0, %v5366
    %5380 = vrot.lane.b32.xlu0 %v5377, 96
    %v5381 = vpop.permute.xlu0 %5380
    %v5383 = vmul.f32 %v5378, %v5381
    %v5384 = vmul.f32 %v5366, %v4893
    %v5385 = vadd.f32 %v5383, %v5384
    %5386 = vmatpush.msra.mxu0 0.0
    %5387 = vmatpush.msra.mxu0 0.0
    %5388 = vmatpush.msra.mxu0 0.0
    %5389 = vmatpush.msra.mxu0 0.0
    %5390 = vmatpush.msra.mxu0 0.0
    %5391 = vmatpush.msra.mxu0 0.0
    %5392 = vmatpush.msra.mxu0 0.0
    %5393 = vmatpush.msra.mxu0 0.0
    %5394 = vmatpush.msra.mxu0 0.0
    %5395 = vmatpush.msra.mxu0 0.0
    %5396 = vmatpush.msra.mxu0 0.0
    %5397 = vmatpush.msra.mxu0 0.0
    %5398 = vmatpush.msra.mxu0 %v2516
    %5399 = vmatpush.msra.mxu0 %v2515
    %5400 = vmatpush.msra.mxu0 %v2514
    %5401 = vmatpush.msra.mxu0 %v2513
    %5402 = vmatmul.f32.gmra.mxu0 %v5257
    %v5403 = vpop.f32.mrf.mxu0
    %v5404 = vadd.f32 0.0, %v5403
    %5405 = vdwg.mxu0
    %5407 = vrot.lane.b32.xlu0 %v5385, 96
    %v5408 = vpop.permute.xlu0 %5407
    %v5409 = vsel %vm568, %v5408, 0
    %5411 = vmatpush.msra.mxu0 0.0
    %5412 = vmatpush.msra.mxu0 0.0
    %5413 = vmatpush.msra.mxu0 0.0
    %5414 = vmatpush.msra.mxu0 0.0
    %5415 = vmatpush.msra.mxu0 0.0
    %5416 = vmatpush.msra.mxu0 0.0
    %5417 = vmatpush.msra.mxu0 0.0
    %5418 = vmatpush.msra.mxu0 0.0
    %5419 = vmatpush.msra.mxu0 0.0
    %5420 = vmatpush.msra.mxu0 0.0
    %5421 = vmatpush.msra.mxu0 0.0
    %5422 = vmatpush.msra.mxu0 0.0
    %5423 = vmatpush.msra.mxu0 %v2512
    %5424 = vmatpush.msra.mxu0 %v2511
    %5425 = vmatpush.msra.mxu0 %v2510
    %5426 = vmatpush.msra.mxu0 %v2509
    %5427 = vmatmul.f32.gmra.mxu0 %v5409
    %v5428 = vpop.f32.mrf.mxu0
    %v5429 = vadd.f32 %v5404, %v5428
    %5430 = vdwg.mxu0
    %5431 = vmatpush.msra.mxu0 0.0
    %5432 = vmatpush.msra.mxu0 0.0
    %5433 = vmatpush.msra.mxu0 0.0
    %5434 = vmatpush.msra.mxu0 0.0
    %5435 = vmatpush.msra.mxu0 0.0
    %5436 = vmatpush.msra.mxu0 0.0
    %5437 = vmatpush.msra.mxu0 0.0
    %5438 = vmatpush.msra.mxu0 0.0
    %5439 = vmatpush.msra.mxu0 0.0
    %5440 = vmatpush.msra.mxu0 0.0
    %5441 = vmatpush.msra.mxu0 0.0
    %5442 = vmatpush.msra.mxu0 0.0
    %5443 = vmatpush.msra.mxu0 %v2520
    %5444 = vmatpush.msra.mxu0 %v2519
    %5445 = vmatpush.msra.mxu0 %v2518
    %5446 = vmatpush.msra.mxu0 %v2517
    %5447 = vmatmul.f32.gmra.mxu0 %v5303
    %v5448 = vpop.f32.mrf.mxu0
    %v5449 = vadd.f32 0.0, %v5448
    %5450 = vdwg.mxu0
    %v5451 = vadd.f32 %v5429, %v5449
    %5452 = vmatpush.msra.mxu0 0.0
    %5453 = vmatpush.msra.mxu0 0.0
    %5454 = vmatpush.msra.mxu0 0.0
    %5455 = vmatpush.msra.mxu0 0.0
    %5456 = vmatpush.msra.mxu0 0.0
    %5457 = vmatpush.msra.mxu0 0.0
    %5458 = vmatpush.msra.mxu0 0.0
    %5459 = vmatpush.msra.mxu0 0.0
    %5460 = vmatpush.msra.mxu0 0.0
    %5461 = vmatpush.msra.mxu0 0.0
    %5462 = vmatpush.msra.mxu0 0.0
    %5463 = vmatpush.msra.mxu0 0.0
    %5464 = vmatpush.msra.mxu0 0.0
    %5465 = vmatpush.msra.mxu0 0.0
    %5466 = vmatpush.msra.mxu0 %v2522
    %5467 = vmatpush.msra.mxu0 %v2521
    %5468 = vmatmul.f32.gmra.mxu0 %v5280
    %v5469 = vpop.f32.mrf.mxu0
    %v5470 = vadd.f32 0.0, %v5469
    %5471 = vdwg.mxu0
    %v5472 = vadd.f32 %v5451, %v5470
    %v5473 = vadd.f32 %v5472, %v3011
    %s5474 = scalar_lea.vmem [#allocation38], 48
    %5475 = vst [vmem:[%s5474] sm:$0xff] %v5473
    // Predicated region
    $region222: #{seq2seq_forward.1} parent=1 // pred_check
      _
    $region223: #{seq2seq_forward.1} parent=1 // pred_check_branch
      %5477 = sbr.rel (0) target = $region225
    $region224: #{seq2seq_forward.1} parent=1 // pred_region
      %5479 = vsyncadd [#allocation6], 0
      %s5480 = sshll.u32 [#allocation38], 4
      %s5481 = int_to_ptr.vmem [resolvable:$true] %s5480
      %s5482 = sshll.u32 %s69, 4
      %s5483 = int_to_ptr.hbm [resolvable:$true] %s5482
      %5488 = dma.vmem_to_hbm [thread:$0]  %s5481, 896, %s5483, [#allocation6], 128, 128, 8
    $region225: #{seq2seq_forward.1} parent=1 // pred_fallthru
      _
    // Predicated region
    $region226: #{seq2seq_forward.1} parent=1 // pred_check
      _
    $region227: #{seq2seq_forward.1} parent=1 // pred_check_branch
      %5490 = sbr.rel (0) target = $region229
    $region228: #{seq2seq_forward.1} parent=1 // pred_region
      %5492 = dma.done [#allocation6], 896
    $region229: #{seq2seq_forward.1} parent=1 // pred_fallthru
      _
    %5493 = vsyncpa [#allocation5], 1
    %5494 = vsyncpa [#allocation10], 1
    %5495 = vsyncpa [#allocation13], 1
    %5496 = vsyncpa [#allocation16], 1
    %5497 = vsyncpa [#allocation19], 1
    %5498 = vsyncpa [#allocation22], 1
    %5499 = vsyncpa [#allocation25], 1
    %5500 = vsyncpa [#allocation28], 1
    %5501 = vsyncpa [#allocation31], 1
    %5502 = vsyncpa [#allocation34], 1
    %5503 = vsyncpa [#allocation37], 1
    %5504 = vsyncpa [#allocation6], 1
    %5505 = vsyncpa [#allocation7], 1

</llo_original>
